<compile_context>
chip_gen: v7x
topology: tpu7x:2x2x1
jax: 0.10.0
libtpu: 0.0.40
codegen_flags: <defaults>
</compile_context>

<pallas_src>
import jax
import jax.numpy as jnp
from jax import lax
from jax.experimental import pallas as pl
from jax.experimental.pallas import tpu as pltpu

# ----- static config (small demo sizes) -----
D_MODEL = 16           # stands in for CONFIG.N_MFCC (13 is not head-divisible)
N_CLASSES = 2          # CONFIG.N_CLASSES
NUM_HEADS = 4
NUM_LAYERS = 2
HEAD_DIM = D_MODEL // NUM_HEADS
DIM_FF = 2048          # nn.TransformerEncoderLayer default dim_feedforward
FF_CHUNK = 512         # FFN processed in 4 chunks of 512
SEQ_LEN = 8            # stands in for CONFIG.MAX_SEQ_LEN
BATCH = 2
LN_EPS = 1e-5


def transformer_classifier_kernel(
    x_ref, pos_ref,
    wqkv_ref, bqkv_ref, wo_ref, bo_ref,
    ln1w_ref, ln1b_ref, f1w_ref, f1b_ref, f2w_ref, f2b_ref,
    ln2w_ref, ln2b_ref, fcw_ref, fcb_ref,
    out_ref,
):
    # x block: (1, S, D) for this grid step's batch element -> (S, D)
    x = x_ref[0] + pos_ref[...]

    def layer_norm(v, w, b):
        mu = jnp.mean(v, axis=-1, keepdims=True)
        var = jnp.mean(jnp.square(v - mu), axis=-1, keepdims=True)
        return (v - mu) * lax.rsqrt(var + LN_EPS) * w + b

    for l in range(NUM_LAYERS):
        # ---- multi-head self-attention (post-norm residual block) ----
        # fused QKV: (S, D) @ (D, 3D); 1/sqrt(Dh) already folded into Q cols.
        qkv = jnp.dot(x, wqkv_ref[l],
                      preferred_element_type=jnp.float32) + bqkv_ref[l]
        head_outs = []
        for h in range(NUM_HEADS):
            lo = h * HEAD_DIM
            qh = qkv[:, lo:lo + HEAD_DIM]
            kh = qkv[:, D_MODEL + lo:D_MODEL + lo + HEAD_DIM]
            vh = qkv[:, 2 * D_MODEL + lo:2 * D_MODEL + lo + HEAD_DIM]
            s = jnp.einsum('qd,kd->qk', qh, kh,
                           preferred_element_type=jnp.float32)
            s = s - jnp.max(s, axis=-1, keepdims=True)
            p = jnp.exp(s)
            p = p * pl.reciprocal(jnp.sum(p, axis=-1, keepdims=True),
                                  approx=True)
            head_outs.append(jnp.dot(p, vh,
                                     preferred_element_type=jnp.float32))
        ctx = jnp.concatenate(head_outs, axis=-1)                # (S, D)
        attn = jnp.dot(ctx, wo_ref[l],
                       preferred_element_type=jnp.float32) + bo_ref[l]
        x = layer_norm(x + attn, ln1w_ref[l], ln1b_ref[l])

        # ---- feed-forward: Linear -> ReLU -> Linear, chunked over FF ----
        x_bf = x.astype(jnp.bfloat16)
        ff = jnp.zeros_like(x)
        for c in range(DIM_FF // FF_CHUNK):
            co = c * FF_CHUNK
            w1c = f1w_ref[l, :, co:co + FF_CHUNK]     # (D, FF_CHUNK) bf16
            b1c = f1b_ref[l, :, co:co + FF_CHUNK]     # (1, FF_CHUNK) f32
            w2c = f2w_ref[l, co:co + FF_CHUNK, :]     # (FF_CHUNK, D) bf16
            hdn = jnp.dot(x_bf, w1c,
                          preferred_element_type=jnp.float32) + b1c
            hdn = jnp.maximum(hdn, 0.0)
            ff = ff + jnp.dot(hdn.astype(jnp.bfloat16), w2c,
                              preferred_element_type=jnp.float32)
        ff = ff + f2b_ref[l]
        x = layer_norm(x + ff, ln2w_ref[l], ln2b_ref[l])

    # mean over sequence axis, classifier head, sigmoid
    pooled = jnp.mean(x, axis=0, keepdims=True)                  # (1, D)
    logits = jnp.dot(pooled, fcw_ref[...],
                     preferred_element_type=jnp.float32) + fcb_ref[...]
    out_ref[0] = jax.nn.sigmoid(logits).astype(out_ref.dtype)


def transformer_classifier(x, kparams):
    B = x.shape[0]

    def full_spec(p):
        zeros = (0,) * p.ndim
        return pl.BlockSpec(p.shape, lambda b, _z=zeros: _z)

    in_specs = [pl.BlockSpec((1, SEQ_LEN, D_MODEL), lambda b: (b, 0, 0))]
    in_specs += [full_spec(p) for p in kparams]

    out = pl.pallas_call(
        transformer_classifier_kernel,
        out_shape=jax.ShapeDtypeStruct((B, 1, N_CLASSES), jnp.float32),
        grid=(B,),
        in_specs=in_specs,
        out_specs=pl.BlockSpec((1, 1, N_CLASSES), lambda b: (b, 0, 0)),
        compiler_params=pltpu.CompilerParams(
            dimension_semantics=("parallel",),
            vmem_limit_bytes=16 * 1024 * 1024),
    )(x, *kparams)
    return out[:, 0, :]


# ---------- pure-JAX reference (PyTorch eval-mode semantics) ----------
def reference_forward(x, tp):
    (pos, ipw, ipb, opw, opb, n1w, n1b, f1w, f1b, f2w, f2b, n2w, n2b,
     fcw, fcb) = tp
    D, H, Dh = D_MODEL, NUM_HEADS, HEAD_DIM

    def ln(v, w, b):
        mu = v.mean(-1, keepdims=True)
        var = ((v - mu) ** 2).mean(-1, keepdims=True)
        return (v - mu) / jnp.sqrt(var + LN_EPS) * w + b

    x = x + pos[None]
    B, S, _ = x.shape
    for l in range(NUM_LAYERS):
        W, b = ipw[l], ipb[l]
        q = (x @ W[:D].T + b[:D]).reshape(B, S, H, Dh)
        k = (x @ W[D:2 * D].T + b[D:2 * D]).reshape(B, S, H, Dh)
        v = (x @ W[2 * D:].T + b[2 * D:]).reshape(B, S, H, Dh)
        s = jnp.einsum('bqhd,bkhd->bhqk', q, k) / (Dh ** 0.5)
        p = jax.nn.softmax(s, axis=-1)
        o = jnp.einsum('bhqk,bkhd->bqhd', p, v).reshape(B, S, D)
        attn = o @ opw[l].T + opb[l]
        x = ln(x + attn, n1w[l], n1b[l])
        hdn = jax.nn.relu(x @ f1w[l].T + f1b[l])
        ff = hdn @ f2w[l].T + f2b[l]
        x = ln(x + ff, n2w[l], n2b[l])
    pooled = x.mean(axis=1)
    return jax.nn.sigmoid(pooled @ fcw.T + fcb)


if __name__ == "__main__":
    key = jax.random.PRNGKey(0)
    ks = iter(jax.random.split(key, 32))

    def rnd(shape, scale=0.1):
        return scale * jax.random.normal(next(ks), shape, jnp.float32)

    x = jax.random.normal(next(ks), (BATCH, SEQ_LEN, D_MODEL), jnp.float32)

    # PyTorch-shaped parameters (deterministic synthetic values).
    # positional_encoding is zeros in __init__; random here to exercise the add.
    pos = rnd((SEQ_LEN, D_MODEL))
    ipw = rnd((NUM_LAYERS, 3 * D_MODEL, D_MODEL))       # in_proj_weight
    ipb = rnd((NUM_LAYERS, 3 * D_MODEL))                # in_proj_bias
    opw = rnd((NUM_LAYERS, D_MODEL, D_MODEL))           # out_proj.weight
    opb = rnd((NUM_LAYERS, D_MODEL))                    # out_proj.bias
    n1w = 1.0 + rnd((NUM_LAYERS, D_MODEL), 0.05)        # norm1.weight
    n1b = rnd((NUM_LAYERS, D_MODEL), 0.05)              # norm1.bias
    f1w = rnd((NUM_LAYERS, DIM_FF, D_MODEL), 0.05)      # linear1.weight
    f1b = rnd((NUM_LAYERS, DIM_FF), 0.05)               # linear1.bias
    f2w = rnd((NUM_LAYERS, D_MODEL, DIM_FF), 0.05)      # linear2.weight
    f2b = rnd((NUM_LAYERS, D_MODEL), 0.05)              # linear2.bias
    n2w = 1.0 + rnd((NUM_LAYERS, D_MODEL), 0.05)        # norm2.weight
    n2b = rnd((NUM_LAYERS, D_MODEL), 0.05)              # norm2.bias
    fcw = rnd((N_CLASSES, D_MODEL))                     # fc.weight
    fcb = rnd((N_CLASSES,), 0.05)                       # fc.bias

    # ---- repack into kernel layout (all transposes/casts done here, free) ----
    L, H, Dh, D = NUM_LAYERS, NUM_HEADS, HEAD_DIM, D_MODEL
    scale = 1.0 / (Dh ** 0.5)
    wq = ipw[:, :D] * scale            # fold attention scale into Q
    wk = ipw[:, D:2 * D]
    wv = ipw[:, 2 * D:]
    bq = ipb[:, :D] * scale
    bk = ipb[:, D:2 * D]
    bv = ipb[:, 2 * D:]
    # fused QKV weight, pre-transposed to (in, out): (L, D, 3D)
    wqkv = jnp.concatenate([wq, wk, wv], axis=1).transpose(0, 2, 1)
    bqkv = jnp.concatenate([bq, bk, bv], axis=1).reshape(L, 1, 3 * D)
    wo_t = opw.transpose(0, 2, 1)      # (L, D_in=H*Dh, D_out)
    bo = opb.reshape(L, 1, D)
    kparams = (
        pos, wqkv, bqkv, wo_t, bo,
        n1w.reshape(L, 1, D), n1b.reshape(L, 1, D),
        f1w.transpose(0, 2, 1).astype(jnp.bfloat16),    # (L, D, FF)  bf16
        f1b.reshape(L, 1, DIM_FF),
        f2w.transpose(0, 2, 1).astype(jnp.bfloat16),    # (L, FF, D)  bf16
        f2b.reshape(L, 1, D),
        n2w.reshape(L, 1, D), n2b.reshape(L, 1, D),
        fcw.T,                                          # (D, N_CLASSES)
        fcb.reshape(1, N_CLASSES),
    )

    out = jax.jit(transformer_classifier)(x, kparams)
    out = jax.block_until_ready(out)

    ref = reference_forward(
        x, (pos, ipw, ipb, opw, opb, n1w, n1b, f1w, f1b, f2w, f2b,
            n2w, n2b, fcw, fcb))
    assert out.shape == (BATCH, N_CLASSES)
    # bf16 FFN weights introduce ~1e-3-level quantization noise vs. the f32
    # reference; tolerance loosened accordingly.
    assert jnp.allclose(out, ref, atol=2e-3, rtol=2e-3), (out, ref)
    print("KERNEL_OK")
</pallas_src>

<mosaic_0001>
module attributes {stable_mosaic.version = 11 : i64} {
  func.func @transformer_classifier_kernel(%arg0: i32, %arg1: memref<1x8x16xf32, #tpu.memory_space<vmem>>, %arg2: memref<8x16xf32, #tpu.memory_space<vmem>>, %arg3: memref<2x16x48xf32, #tpu.memory_space<vmem>>, %arg4: memref<2x1x48xf32, #tpu.memory_space<vmem>>, %arg5: memref<2x16x16xf32, #tpu.memory_space<vmem>>, %arg6: memref<2x1x16xf32, #tpu.memory_space<vmem>>, %arg7: memref<2x1x16xf32, #tpu.memory_space<vmem>>, %arg8: memref<2x1x16xf32, #tpu.memory_space<vmem>>, %arg9: memref<2x16x2048xbf16, #tpu.memory_space<vmem>>, %arg10: memref<2x1x2048xf32, #tpu.memory_space<vmem>>, %arg11: memref<2x2048x16xbf16, #tpu.memory_space<vmem>>, %arg12: memref<2x1x16xf32, #tpu.memory_space<vmem>>, %arg13: memref<2x1x16xf32, #tpu.memory_space<vmem>>, %arg14: memref<2x1x16xf32, #tpu.memory_space<vmem>>, %arg15: memref<16x2xf32, #tpu.memory_space<vmem>>, %arg16: memref<1x2xf32, #tpu.memory_space<vmem>>, %arg17: memref<1x1x2xf32, #tpu.memory_space<vmem>>) attributes {dimension_semantics = [#tpu.dimension_semantics<parallel>], iteration_bounds = array<i64: 2>, scalar_prefetch = 0 : i64, scratch_operands = 0 : i64, tpu.core_type = #tpu.core_type<tc>, window_params = [{transform_indices = @transform_0, window_bounds = array<i64: 1, 8, 16>}, {pipeline_mode = #tpu.pipeline_mode<synchronous>, transform_indices = @transform_1, window_bounds = array<i64: 8, 16>}, {pipeline_mode = #tpu.pipeline_mode<synchronous>, transform_indices = @transform_2, window_bounds = array<i64: 2, 16, 48>}, {pipeline_mode = #tpu.pipeline_mode<synchronous>, transform_indices = @transform_3, window_bounds = array<i64: 2, 1, 48>}, {pipeline_mode = #tpu.pipeline_mode<synchronous>, transform_indices = @transform_4, window_bounds = array<i64: 2, 16, 16>}, {pipeline_mode = #tpu.pipeline_mode<synchronous>, transform_indices = @transform_5, window_bounds = array<i64: 2, 1, 16>}, {pipeline_mode = #tpu.pipeline_mode<synchronous>, transform_indices = @transform_6, window_bounds = array<i64: 2, 1, 16>}, {pipeline_mode = #tpu.pipeline_mode<synchronous>, transform_indices = @transform_7, window_bounds = array<i64: 2, 1, 16>}, {pipeline_mode = #tpu.pipeline_mode<synchronous>, transform_indices = @transform_8, window_bounds = array<i64: 2, 16, 2048>}, {pipeline_mode = #tpu.pipeline_mode<synchronous>, transform_indices = @transform_9, window_bounds = array<i64: 2, 1, 2048>}, {pipeline_mode = #tpu.pipeline_mode<synchronous>, transform_indices = @transform_10, window_bounds = array<i64: 2, 2048, 16>}, {pipeline_mode = #tpu.pipeline_mode<synchronous>, transform_indices = @transform_11, window_bounds = array<i64: 2, 1, 16>}, {pipeline_mode = #tpu.pipeline_mode<synchronous>, transform_indices = @transform_12, window_bounds = array<i64: 2, 1, 16>}, {pipeline_mode = #tpu.pipeline_mode<synchronous>, transform_indices = @transform_13, window_bounds = array<i64: 2, 1, 16>}, {pipeline_mode = #tpu.pipeline_mode<synchronous>, transform_indices = @transform_14, window_bounds = array<i64: 16, 2>}, {pipeline_mode = #tpu.pipeline_mode<synchronous>, transform_indices = @transform_15, window_bounds = array<i64: 1, 2>}, {transform_indices = @transform_16, window_bounds = array<i64: 1, 1, 2>}]} {
    %c0 = arith.constant 0 : index
    %c0_0 = arith.constant 0 : index
    %c0_1 = arith.constant 0 : index
    %0 = vector.load %arg1[%c0, %c0_0, %c0_1] : memref<1x8x16xf32, #tpu.memory_space<vmem>>, vector<1x8x16xf32>
    %1 = vector.shape_cast %0 : vector<1x8x16xf32> to vector<8x16xf32>
    %c0_2 = arith.constant 0 : index
    %c0_3 = arith.constant 0 : index
    %2 = vector.load %arg2[%c0_2, %c0_3] : memref<8x16xf32, #tpu.memory_space<vmem>>, vector<8x16xf32>
    %3 = arith.addf %1, %2 : vector<8x16xf32>
    %c0_4 = arith.constant 0 : index
    %c0_5 = arith.constant 0 : index
    %c0_6 = arith.constant 0 : index
    %4 = vector.load %arg3[%c0_4, %c0_5, %c0_6] : memref<2x16x48xf32, #tpu.memory_space<vmem>>, vector<1x16x48xf32>
    %5 = vector.shape_cast %4 : vector<1x16x48xf32> to vector<16x48xf32>
    %cst = arith.constant dense<0.000000e+00> : vector<8x48xf32>
    %6 = tpu.matmul %3, %5, %cst {dimension_numbers = #tpu.dot_dimension_numbers<[1], [0], [0], [1], [0, 0, 1, 1], [], []>} : vector<8x16xf32>, vector<16x48xf32>, vector<8x48xf32> -> vector<8x48xf32>
    %c0_7 = arith.constant 0 : index
    %c0_8 = arith.constant 0 : index
    %c0_9 = arith.constant 0 : index
    %7 = vector.load %arg4[%c0_7, %c0_8, %c0_9] : memref<2x1x48xf32, #tpu.memory_space<vmem>>, vector<1x1x48xf32>
    %8 = vector.shape_cast %7 : vector<1x1x48xf32> to vector<1x48xf32>
    %9 = vector.broadcast %8 : vector<1x48xf32> to vector<8x48xf32>
    %10 = arith.addf %6, %9 : vector<8x48xf32>
    %11 = vector.extract_strided_slice %10 {offsets = [0, 0], sizes = [8, 4], strides = [1, 1]} : vector<8x48xf32> to vector<8x4xf32>
    %12 = vector.extract_strided_slice %10 {offsets = [0, 16], sizes = [8, 4], strides = [1, 1]} : vector<8x48xf32> to vector<8x4xf32>
    %13 = vector.extract_strided_slice %10 {offsets = [0, 32], sizes = [8, 4], strides = [1, 1]} : vector<8x48xf32> to vector<8x4xf32>
    "tpu.trace_start"() <{level = 10 : i32, message = "qd,kd->qk"}> : () -> ()
    %cst_10 = arith.constant dense<0.000000e+00> : vector<8x8xf32>
    %14 = tpu.matmul %11, %12, %cst_10 {dimension_numbers = #tpu.dot_dimension_numbers<[1], [1], [0], [0], [0, 0, 1, 0], [], []>} : vector<8x4xf32>, vector<8x4xf32>, vector<8x8xf32> -> vector<8x8xf32>
    "tpu.trace_stop"() : () -> ()
    %cst_11 = arith.constant dense<0xFF800000> : vector<8xf32>
    %15 = vector.multi_reduction <maximumf>, %14, %cst_11 [1] : vector<8x8xf32> to vector<8xf32>
    %16 = vector.shape_cast %15 : vector<8xf32> to vector<8x1xf32>
    %17 = vector.broadcast %16 : vector<8x1xf32> to vector<8x8xf32>
    %18 = arith.subf %14, %17 : vector<8x8xf32>
    %19 = math.exp %18 : vector<8x8xf32>
    %cst_12 = arith.constant dense<0.000000e+00> : vector<8xf32>
    %20 = vector.multi_reduction <add>, %19, %cst_12 [1] : vector<8x8xf32> to vector<8xf32>
    %21 = vector.shape_cast %20 : vector<8xf32> to vector<8x1xf32>
    %22 = tpu.reciprocal %21 {approx = true} : vector<8x1xf32> -> vector<8x1xf32>
    %23 = vector.broadcast %22 : vector<8x1xf32> to vector<8x8xf32>
    %24 = arith.mulf %19, %23 : vector<8x8xf32>
    %cst_13 = arith.constant dense<0.000000e+00> : vector<8x4xf32>
    %25 = tpu.matmul %24, %13, %cst_13 {dimension_numbers = #tpu.dot_dimension_numbers<[1], [0], [0], [1], [0, 0, 1, 1], [], []>} : vector<8x8xf32>, vector<8x4xf32>, vector<8x4xf32> -> vector<8x4xf32>
    %26 = vector.extract_strided_slice %10 {offsets = [0, 4], sizes = [8, 4], strides = [1, 1]} : vector<8x48xf32> to vector<8x4xf32>
    %27 = vector.extract_strided_slice %10 {offsets = [0, 20], sizes = [8, 4], strides = [1, 1]} : vector<8x48xf32> to vector<8x4xf32>
    %28 = vector.extract_strided_slice %10 {offsets = [0, 36], sizes = [8, 4], strides = [1, 1]} : vector<8x48xf32> to vector<8x4xf32>
    "tpu.trace_start"() <{level = 10 : i32, message = "qd,kd->qk"}> : () -> ()
    %cst_14 = arith.constant dense<0.000000e+00> : vector<8x8xf32>
    %29 = tpu.matmul %26, %27, %cst_14 {dimension_numbers = #tpu.dot_dimension_numbers<[1], [1], [0], [0], [0, 0, 1, 0], [], []>} : vector<8x4xf32>, vector<8x4xf32>, vector<8x8xf32> -> vector<8x8xf32>
    "tpu.trace_stop"() : () -> ()
    %cst_15 = arith.constant dense<0xFF800000> : vector<8xf32>
    %30 = vector.multi_reduction <maximumf>, %29, %cst_15 [1] : vector<8x8xf32> to vector<8xf32>
    %31 = vector.shape_cast %30 : vector<8xf32> to vector<8x1xf32>
    %32 = vector.broadcast %31 : vector<8x1xf32> to vector<8x8xf32>
    %33 = arith.subf %29, %32 : vector<8x8xf32>
    %34 = math.exp %33 : vector<8x8xf32>
    %cst_16 = arith.constant dense<0.000000e+00> : vector<8xf32>
    %35 = vector.multi_reduction <add>, %34, %cst_16 [1] : vector<8x8xf32> to vector<8xf32>
    %36 = vector.shape_cast %35 : vector<8xf32> to vector<8x1xf32>
    %37 = tpu.reciprocal %36 {approx = true} : vector<8x1xf32> -> vector<8x1xf32>
    %38 = vector.broadcast %37 : vector<8x1xf32> to vector<8x8xf32>
    %39 = arith.mulf %34, %38 : vector<8x8xf32>
    %cst_17 = arith.constant dense<0.000000e+00> : vector<8x4xf32>
    %40 = tpu.matmul %39, %28, %cst_17 {dimension_numbers = #tpu.dot_dimension_numbers<[1], [0], [0], [1], [0, 0, 1, 1], [], []>} : vector<8x8xf32>, vector<8x4xf32>, vector<8x4xf32> -> vector<8x4xf32>
    %41 = vector.extract_strided_slice %10 {offsets = [0, 8], sizes = [8, 4], strides = [1, 1]} : vector<8x48xf32> to vector<8x4xf32>
    %42 = vector.extract_strided_slice %10 {offsets = [0, 24], sizes = [8, 4], strides = [1, 1]} : vector<8x48xf32> to vector<8x4xf32>
    %43 = vector.extract_strided_slice %10 {offsets = [0, 40], sizes = [8, 4], strides = [1, 1]} : vector<8x48xf32> to vector<8x4xf32>
    "tpu.trace_start"() <{level = 10 : i32, message = "qd,kd->qk"}> : () -> ()
    %cst_18 = arith.constant dense<0.000000e+00> : vector<8x8xf32>
    %44 = tpu.matmul %41, %42, %cst_18 {dimension_numbers = #tpu.dot_dimension_numbers<[1], [1], [0], [0], [0, 0, 1, 0], [], []>} : vector<8x4xf32>, vector<8x4xf32>, vector<8x8xf32> -> vector<8x8xf32>
    "tpu.trace_stop"() : () -> ()
    %cst_19 = arith.constant dense<0xFF800000> : vector<8xf32>
    %45 = vector.multi_reduction <maximumf>, %44, %cst_19 [1] : vector<8x8xf32> to vector<8xf32>
    %46 = vector.shape_cast %45 : vector<8xf32> to vector<8x1xf32>
    %47 = vector.broadcast %46 : vector<8x1xf32> to vector<8x8xf32>
    %48 = arith.subf %44, %47 : vector<8x8xf32>
    %49 = math.exp %48 : vector<8x8xf32>
    %cst_20 = arith.constant dense<0.000000e+00> : vector<8xf32>
    %50 = vector.multi_reduction <add>, %49, %cst_20 [1] : vector<8x8xf32> to vector<8xf32>
    %51 = vector.shape_cast %50 : vector<8xf32> to vector<8x1xf32>
    %52 = tpu.reciprocal %51 {approx = true} : vector<8x1xf32> -> vector<8x1xf32>
    %53 = vector.broadcast %52 : vector<8x1xf32> to vector<8x8xf32>
    %54 = arith.mulf %49, %53 : vector<8x8xf32>
    %cst_21 = arith.constant dense<0.000000e+00> : vector<8x4xf32>
    %55 = tpu.matmul %54, %43, %cst_21 {dimension_numbers = #tpu.dot_dimension_numbers<[1], [0], [0], [1], [0, 0, 1, 1], [], []>} : vector<8x8xf32>, vector<8x4xf32>, vector<8x4xf32> -> vector<8x4xf32>
    %56 = vector.extract_strided_slice %10 {offsets = [0, 12], sizes = [8, 4], strides = [1, 1]} : vector<8x48xf32> to vector<8x4xf32>
    %57 = vector.extract_strided_slice %10 {offsets = [0, 28], sizes = [8, 4], strides = [1, 1]} : vector<8x48xf32> to vector<8x4xf32>
    %58 = vector.extract_strided_slice %10 {offsets = [0, 44], sizes = [8, 4], strides = [1, 1]} : vector<8x48xf32> to vector<8x4xf32>
    "tpu.trace_start"() <{level = 10 : i32, message = "qd,kd->qk"}> : () -> ()
    %cst_22 = arith.constant dense<0.000000e+00> : vector<8x8xf32>
    %59 = tpu.matmul %56, %57, %cst_22 {dimension_numbers = #tpu.dot_dimension_numbers<[1], [1], [0], [0], [0, 0, 1, 0], [], []>} : vector<8x4xf32>, vector<8x4xf32>, vector<8x8xf32> -> vector<8x8xf32>
    "tpu.trace_stop"() : () -> ()
    %cst_23 = arith.constant dense<0xFF800000> : vector<8xf32>
    %60 = vector.multi_reduction <maximumf>, %59, %cst_23 [1] : vector<8x8xf32> to vector<8xf32>
    %61 = vector.shape_cast %60 : vector<8xf32> to vector<8x1xf32>
    %62 = vector.broadcast %61 : vector<8x1xf32> to vector<8x8xf32>
    %63 = arith.subf %59, %62 : vector<8x8xf32>
    %64 = math.exp %63 : vector<8x8xf32>
    %cst_24 = arith.constant dense<0.000000e+00> : vector<8xf32>
    %65 = vector.multi_reduction <add>, %64, %cst_24 [1] : vector<8x8xf32> to vector<8xf32>
    %66 = vector.shape_cast %65 : vector<8xf32> to vector<8x1xf32>
    %67 = tpu.reciprocal %66 {approx = true} : vector<8x1xf32> -> vector<8x1xf32>
    %68 = vector.broadcast %67 : vector<8x1xf32> to vector<8x8xf32>
    %69 = arith.mulf %64, %68 : vector<8x8xf32>
    %cst_25 = arith.constant dense<0.000000e+00> : vector<8x4xf32>
    %70 = tpu.matmul %69, %58, %cst_25 {dimension_numbers = #tpu.dot_dimension_numbers<[1], [0], [0], [1], [0, 0, 1, 1], [], []>} : vector<8x8xf32>, vector<8x4xf32>, vector<8x4xf32> -> vector<8x4xf32>
    %71 = tpu.concatenate %25, %40, %55, %70 in 1 : vector<8x4xf32>, vector<8x4xf32>, vector<8x4xf32>, vector<8x4xf32> -> vector<8x16xf32>
    %c0_26 = arith.constant 0 : index
    %c0_27 = arith.constant 0 : index
    %c0_28 = arith.constant 0 : index
    %72 = vector.load %arg5[%c0_26, %c0_27, %c0_28] : memref<2x16x16xf32, #tpu.memory_space<vmem>>, vector<1x16x16xf32>
    %73 = vector.shape_cast %72 : vector<1x16x16xf32> to vector<16x16xf32>
    %cst_29 = arith.constant dense<0.000000e+00> : vector<8x16xf32>
    %74 = tpu.matmul %71, %73, %cst_29 {dimension_numbers = #tpu.dot_dimension_numbers<[1], [0], [0], [1], [0, 0, 1, 1], [], []>} : vector<8x16xf32>, vector<16x16xf32>, vector<8x16xf32> -> vector<8x16xf32>
    %c0_30 = arith.constant 0 : index
    %c0_31 = arith.constant 0 : index
    %c0_32 = arith.constant 0 : index
    %75 = vector.load %arg6[%c0_30, %c0_31, %c0_32] : memref<2x1x16xf32, #tpu.memory_space<vmem>>, vector<1x1x16xf32>
    %76 = vector.shape_cast %75 : vector<1x1x16xf32> to vector<1x16xf32>
    %77 = vector.broadcast %76 : vector<1x16xf32> to vector<8x16xf32>
    %78 = arith.addf %74, %77 : vector<8x16xf32>
    %79 = arith.addf %3, %78 : vector<8x16xf32>
    %c0_33 = arith.constant 0 : index
    %c0_34 = arith.constant 0 : index
    %c0_35 = arith.constant 0 : index
    %80 = vector.load %arg7[%c0_33, %c0_34, %c0_35] : memref<2x1x16xf32, #tpu.memory_space<vmem>>, vector<1x1x16xf32>
    %81 = vector.shape_cast %80 : vector<1x1x16xf32> to vector<1x16xf32>
    %c0_36 = arith.constant 0 : index
    %c0_37 = arith.constant 0 : index
    %c0_38 = arith.constant 0 : index
    %82 = vector.load %arg8[%c0_36, %c0_37, %c0_38] : memref<2x1x16xf32, #tpu.memory_space<vmem>>, vector<1x1x16xf32>
    %83 = vector.shape_cast %82 : vector<1x1x16xf32> to vector<1x16xf32>
    %cst_39 = arith.constant dense<0.000000e+00> : vector<8xf32>
    %84 = vector.multi_reduction <add>, %79, %cst_39 [1] : vector<8x16xf32> to vector<8xf32>
    %85 = vector.shape_cast %84 : vector<8xf32> to vector<8x1xf32>
    %cst_40 = arith.constant 1.600000e+01 : f32
    %86 = vector.broadcast %cst_40 : f32 to vector<8x1xf32>
    %87 = arith.divf %85, %86 : vector<8x1xf32>
    %88 = vector.broadcast %87 : vector<8x1xf32> to vector<8x16xf32>
    %89 = arith.subf %79, %88 : vector<8x16xf32>
    %90 = arith.mulf %89, %89 : vector<8x16xf32>
    %cst_41 = arith.constant dense<0.000000e+00> : vector<8xf32>
    %91 = vector.multi_reduction <add>, %90, %cst_41 [1] : vector<8x16xf32> to vector<8xf32>
    %92 = vector.shape_cast %91 : vector<8xf32> to vector<8x1xf32>
    %cst_42 = arith.constant 1.600000e+01 : f32
    %93 = vector.broadcast %cst_42 : f32 to vector<8x1xf32>
    %94 = arith.divf %92, %93 : vector<8x1xf32>
    %95 = vector.broadcast %87 : vector<8x1xf32> to vector<8x16xf32>
    %96 = arith.subf %79, %95 : vector<8x16xf32>
    %cst_43 = arith.constant 9.99999974E-6 : f32
    %97 = vector.broadcast %cst_43 : f32 to vector<8x1xf32>
    %98 = arith.addf %94, %97 : vector<8x1xf32>
    %99 = math.rsqrt %98 : vector<8x1xf32>
    %100 = vector.broadcast %99 : vector<8x1xf32> to vector<8x16xf32>
    %101 = arith.mulf %96, %100 : vector<8x16xf32>
    %102 = vector.broadcast %81 : vector<1x16xf32> to vector<8x16xf32>
    %103 = arith.mulf %101, %102 : vector<8x16xf32>
    %104 = vector.broadcast %83 : vector<1x16xf32> to vector<8x16xf32>
    %105 = arith.addf %103, %104 : vector<8x16xf32>
    %106 = arith.truncf %105 : vector<8x16xf32> to vector<8x16xbf16>
    %cst_44 = arith.constant 0.000000e+00 : f32
    %107 = vector.broadcast %cst_44 : f32 to vector<8x16xf32>
    %c0_45 = arith.constant 0 : index
    %c0_46 = arith.constant 0 : index
    %c0_47 = arith.constant 0 : index
    %108 = vector.load %arg9[%c0_45, %c0_46, %c0_47] : memref<2x16x2048xbf16, #tpu.memory_space<vmem>>, vector<1x16x512xbf16>
    %109 = vector.shape_cast %108 : vector<1x16x512xbf16> to vector<16x512xbf16>
    %c0_48 = arith.constant 0 : index
    %c0_49 = arith.constant 0 : index
    %c0_50 = arith.constant 0 : index
    %110 = vector.load %arg10[%c0_48, %c0_49, %c0_50] : memref<2x1x2048xf32, #tpu.memory_space<vmem>>, vector<1x1x512xf32>
    %111 = vector.shape_cast %110 : vector<1x1x512xf32> to vector<1x512xf32>
    %c0_51 = arith.constant 0 : index
    %c0_52 = arith.constant 0 : index
    %c0_53 = arith.constant 0 : index
    %112 = vector.load %arg11[%c0_51, %c0_52, %c0_53] : memref<2x2048x16xbf16, #tpu.memory_space<vmem>>, vector<1x512x16xbf16>
    %113 = vector.shape_cast %112 : vector<1x512x16xbf16> to vector<512x16xbf16>
    %cst_54 = arith.constant dense<0.000000e+00> : vector<8x512xf32>
    %114 = tpu.matmul %106, %109, %cst_54 {dimension_numbers = #tpu.dot_dimension_numbers<[1], [0], [0], [1], [0, 0, 1, 1], [], []>} : vector<8x16xbf16>, vector<16x512xbf16>, vector<8x512xf32> -> vector<8x512xf32>
    %115 = vector.broadcast %111 : vector<1x512xf32> to vector<8x512xf32>
    %116 = arith.addf %114, %115 : vector<8x512xf32>
    %cst_55 = arith.constant 0.000000e+00 : f32
    %117 = vector.broadcast %cst_55 : f32 to vector<8x512xf32>
    %118 = arith.maximumf %116, %117 : vector<8x512xf32>
    %119 = arith.truncf %118 : vector<8x512xf32> to vector<8x512xbf16>
    %cst_56 = arith.constant dense<0.000000e+00> : vector<8x16xf32>
    %120 = tpu.matmul %119, %113, %cst_56 {dimension_numbers = #tpu.dot_dimension_numbers<[1], [0], [0], [1], [0, 0, 1, 1], [], []>} : vector<8x512xbf16>, vector<512x16xbf16>, vector<8x16xf32> -> vector<8x16xf32>
    %121 = arith.addf %107, %120 : vector<8x16xf32>
    %c0_57 = arith.constant 0 : index
    %c0_58 = arith.constant 0 : index
    %c512 = arith.constant 512 : index
    %122 = vector.load %arg9[%c0_57, %c0_58, %c512] : memref<2x16x2048xbf16, #tpu.memory_space<vmem>>, vector<1x16x512xbf16>
    %123 = vector.shape_cast %122 : vector<1x16x512xbf16> to vector<16x512xbf16>
    %c0_59 = arith.constant 0 : index
    %c0_60 = arith.constant 0 : index
    %c512_61 = arith.constant 512 : index
    %124 = vector.load %arg10[%c0_59, %c0_60, %c512_61] : memref<2x1x2048xf32, #tpu.memory_space<vmem>>, vector<1x1x512xf32>
    %125 = vector.shape_cast %124 : vector<1x1x512xf32> to vector<1x512xf32>
    %c0_62 = arith.constant 0 : index
    %c512_63 = arith.constant 512 : index
    %c0_64 = arith.constant 0 : index
    %126 = vector.load %arg11[%c0_62, %c512_63, %c0_64] : memref<2x2048x16xbf16, #tpu.memory_space<vmem>>, vector<1x512x16xbf16>
    %127 = vector.shape_cast %126 : vector<1x512x16xbf16> to vector<512x16xbf16>
    %cst_65 = arith.constant dense<0.000000e+00> : vector<8x512xf32>
    %128 = tpu.matmul %106, %123, %cst_65 {dimension_numbers = #tpu.dot_dimension_numbers<[1], [0], [0], [1], [0, 0, 1, 1], [], []>} : vector<8x16xbf16>, vector<16x512xbf16>, vector<8x512xf32> -> vector<8x512xf32>
    %129 = vector.broadcast %125 : vector<1x512xf32> to vector<8x512xf32>
    %130 = arith.addf %128, %129 : vector<8x512xf32>
    %cst_66 = arith.constant 0.000000e+00 : f32
    %131 = vector.broadcast %cst_66 : f32 to vector<8x512xf32>
    %132 = arith.maximumf %130, %131 : vector<8x512xf32>
    %133 = arith.truncf %132 : vector<8x512xf32> to vector<8x512xbf16>
    %cst_67 = arith.constant dense<0.000000e+00> : vector<8x16xf32>
    %134 = tpu.matmul %133, %127, %cst_67 {dimension_numbers = #tpu.dot_dimension_numbers<[1], [0], [0], [1], [0, 0, 1, 1], [], []>} : vector<8x512xbf16>, vector<512x16xbf16>, vector<8x16xf32> -> vector<8x16xf32>
    %135 = arith.addf %121, %134 : vector<8x16xf32>
    %c0_68 = arith.constant 0 : index
    %c0_69 = arith.constant 0 : index
    %c1024 = arith.constant 1024 : index
    %136 = vector.load %arg9[%c0_68, %c0_69, %c1024] : memref<2x16x2048xbf16, #tpu.memory_space<vmem>>, vector<1x16x512xbf16>
    %137 = vector.shape_cast %136 : vector<1x16x512xbf16> to vector<16x512xbf16>
    %c0_70 = arith.constant 0 : index
    %c0_71 = arith.constant 0 : index
    %c1024_72 = arith.constant 1024 : index
    %138 = vector.load %arg10[%c0_70, %c0_71, %c1024_72] : memref<2x1x2048xf32, #tpu.memory_space<vmem>>, vector<1x1x512xf32>
    %139 = vector.shape_cast %138 : vector<1x1x512xf32> to vector<1x512xf32>
    %c0_73 = arith.constant 0 : index
    %c1024_74 = arith.constant 1024 : index
    %c0_75 = arith.constant 0 : index
    %140 = vector.load %arg11[%c0_73, %c1024_74, %c0_75] : memref<2x2048x16xbf16, #tpu.memory_space<vmem>>, vector<1x512x16xbf16>
    %141 = vector.shape_cast %140 : vector<1x512x16xbf16> to vector<512x16xbf16>
    %cst_76 = arith.constant dense<0.000000e+00> : vector<8x512xf32>
    %142 = tpu.matmul %106, %137, %cst_76 {dimension_numbers = #tpu.dot_dimension_numbers<[1], [0], [0], [1], [0, 0, 1, 1], [], []>} : vector<8x16xbf16>, vector<16x512xbf16>, vector<8x512xf32> -> vector<8x512xf32>
    %143 = vector.broadcast %139 : vector<1x512xf32> to vector<8x512xf32>
    %144 = arith.addf %142, %143 : vector<8x512xf32>
    %cst_77 = arith.constant 0.000000e+00 : f32
    %145 = vector.broadcast %cst_77 : f32 to vector<8x512xf32>
    %146 = arith.maximumf %144, %145 : vector<8x512xf32>
    %147 = arith.truncf %146 : vector<8x512xf32> to vector<8x512xbf16>
    %cst_78 = arith.constant dense<0.000000e+00> : vector<8x16xf32>
    %148 = tpu.matmul %147, %141, %cst_78 {dimension_numbers = #tpu.dot_dimension_numbers<[1], [0], [0], [1], [0, 0, 1, 1], [], []>} : vector<8x512xbf16>, vector<512x16xbf16>, vector<8x16xf32> -> vector<8x16xf32>
    %149 = arith.addf %135, %148 : vector<8x16xf32>
    %c0_79 = arith.constant 0 : index
    %c0_80 = arith.constant 0 : index
    %c1536 = arith.constant 1536 : index
    %150 = vector.load %arg9[%c0_79, %c0_80, %c1536] : memref<2x16x2048xbf16, #tpu.memory_space<vmem>>, vector<1x16x512xbf16>
    %151 = vector.shape_cast %150 : vector<1x16x512xbf16> to vector<16x512xbf16>
    %c0_81 = arith.constant 0 : index
    %c0_82 = arith.constant 0 : index
    %c1536_83 = arith.constant 1536 : index
    %152 = vector.load %arg10[%c0_81, %c0_82, %c1536_83] : memref<2x1x2048xf32, #tpu.memory_space<vmem>>, vector<1x1x512xf32>
    %153 = vector.shape_cast %152 : vector<1x1x512xf32> to vector<1x512xf32>
    %c0_84 = arith.constant 0 : index
    %c1536_85 = arith.constant 1536 : index
    %c0_86 = arith.constant 0 : index
    %154 = vector.load %arg11[%c0_84, %c1536_85, %c0_86] : memref<2x2048x16xbf16, #tpu.memory_space<vmem>>, vector<1x512x16xbf16>
    %155 = vector.shape_cast %154 : vector<1x512x16xbf16> to vector<512x16xbf16>
    %cst_87 = arith.constant dense<0.000000e+00> : vector<8x512xf32>
    %156 = tpu.matmul %106, %151, %cst_87 {dimension_numbers = #tpu.dot_dimension_numbers<[1], [0], [0], [1], [0, 0, 1, 1], [], []>} : vector<8x16xbf16>, vector<16x512xbf16>, vector<8x512xf32> -> vector<8x512xf32>
    %157 = vector.broadcast %153 : vector<1x512xf32> to vector<8x512xf32>
    %158 = arith.addf %156, %157 : vector<8x512xf32>
    %cst_88 = arith.constant 0.000000e+00 : f32
    %159 = vector.broadcast %cst_88 : f32 to vector<8x512xf32>
    %160 = arith.maximumf %158, %159 : vector<8x512xf32>
    %161 = arith.truncf %160 : vector<8x512xf32> to vector<8x512xbf16>
    %cst_89 = arith.constant dense<0.000000e+00> : vector<8x16xf32>
    %162 = tpu.matmul %161, %155, %cst_89 {dimension_numbers = #tpu.dot_dimension_numbers<[1], [0], [0], [1], [0, 0, 1, 1], [], []>} : vector<8x512xbf16>, vector<512x16xbf16>, vector<8x16xf32> -> vector<8x16xf32>
    %163 = arith.addf %149, %162 : vector<8x16xf32>
    %c0_90 = arith.constant 0 : index
    %c0_91 = arith.constant 0 : index
    %c0_92 = arith.constant 0 : index
    %164 = vector.load %arg12[%c0_90, %c0_91, %c0_92] : memref<2x1x16xf32, #tpu.memory_space<vmem>>, vector<1x1x16xf32>
    %165 = vector.shape_cast %164 : vector<1x1x16xf32> to vector<1x16xf32>
    %166 = vector.broadcast %165 : vector<1x16xf32> to vector<8x16xf32>
    %167 = arith.addf %163, %166 : vector<8x16xf32>
    %168 = arith.addf %105, %167 : vector<8x16xf32>
    %c0_93 = arith.constant 0 : index
    %c0_94 = arith.constant 0 : index
    %c0_95 = arith.constant 0 : index
    %169 = vector.load %arg13[%c0_93, %c0_94, %c0_95] : memref<2x1x16xf32, #tpu.memory_space<vmem>>, vector<1x1x16xf32>
    %170 = vector.shape_cast %169 : vector<1x1x16xf32> to vector<1x16xf32>
    %c0_96 = arith.constant 0 : index
    %c0_97 = arith.constant 0 : index
    %c0_98 = arith.constant 0 : index
    %171 = vector.load %arg14[%c0_96, %c0_97, %c0_98] : memref<2x1x16xf32, #tpu.memory_space<vmem>>, vector<1x1x16xf32>
    %172 = vector.shape_cast %171 : vector<1x1x16xf32> to vector<1x16xf32>
    %cst_99 = arith.constant dense<0.000000e+00> : vector<8xf32>
    %173 = vector.multi_reduction <add>, %168, %cst_99 [1] : vector<8x16xf32> to vector<8xf32>
    %174 = vector.shape_cast %173 : vector<8xf32> to vector<8x1xf32>
    %cst_100 = arith.constant 1.600000e+01 : f32
    %175 = vector.broadcast %cst_100 : f32 to vector<8x1xf32>
    %176 = arith.divf %174, %175 : vector<8x1xf32>
    %177 = vector.broadcast %176 : vector<8x1xf32> to vector<8x16xf32>
    %178 = arith.subf %168, %177 : vector<8x16xf32>
    %179 = arith.mulf %178, %178 : vector<8x16xf32>
    %cst_101 = arith.constant dense<0.000000e+00> : vector<8xf32>
    %180 = vector.multi_reduction <add>, %179, %cst_101 [1] : vector<8x16xf32> to vector<8xf32>
    %181 = vector.shape_cast %180 : vector<8xf32> to vector<8x1xf32>
    %cst_102 = arith.constant 1.600000e+01 : f32
    %182 = vector.broadcast %cst_102 : f32 to vector<8x1xf32>
    %183 = arith.divf %181, %182 : vector<8x1xf32>
    %184 = vector.broadcast %176 : vector<8x1xf32> to vector<8x16xf32>
    %185 = arith.subf %168, %184 : vector<8x16xf32>
    %cst_103 = arith.constant 9.99999974E-6 : f32
    %186 = vector.broadcast %cst_103 : f32 to vector<8x1xf32>
    %187 = arith.addf %183, %186 : vector<8x1xf32>
    %188 = math.rsqrt %187 : vector<8x1xf32>
    %189 = vector.broadcast %188 : vector<8x1xf32> to vector<8x16xf32>
    %190 = arith.mulf %185, %189 : vector<8x16xf32>
    %191 = vector.broadcast %170 : vector<1x16xf32> to vector<8x16xf32>
    %192 = arith.mulf %190, %191 : vector<8x16xf32>
    %193 = vector.broadcast %172 : vector<1x16xf32> to vector<8x16xf32>
    %194 = arith.addf %192, %193 : vector<8x16xf32>
    %c1 = arith.constant 1 : index
    %c0_104 = arith.constant 0 : index
    %c0_105 = arith.constant 0 : index
    %195 = vector.load %arg3[%c1, %c0_104, %c0_105] : memref<2x16x48xf32, #tpu.memory_space<vmem>>, vector<1x16x48xf32>
    %196 = vector.shape_cast %195 : vector<1x16x48xf32> to vector<16x48xf32>
    %cst_106 = arith.constant dense<0.000000e+00> : vector<8x48xf32>
    %197 = tpu.matmul %194, %196, %cst_106 {dimension_numbers = #tpu.dot_dimension_numbers<[1], [0], [0], [1], [0, 0, 1, 1], [], []>} : vector<8x16xf32>, vector<16x48xf32>, vector<8x48xf32> -> vector<8x48xf32>
    %c1_107 = arith.constant 1 : index
    %c0_108 = arith.constant 0 : index
    %c0_109 = arith.constant 0 : index
    %198 = vector.load %arg4[%c1_107, %c0_108, %c0_109] : memref<2x1x48xf32, #tpu.memory_space<vmem>>, vector<1x1x48xf32>
    %199 = vector.shape_cast %198 : vector<1x1x48xf32> to vector<1x48xf32>
    %200 = vector.broadcast %199 : vector<1x48xf32> to vector<8x48xf32>
    %201 = arith.addf %197, %200 : vector<8x48xf32>
    %202 = vector.extract_strided_slice %201 {offsets = [0, 0], sizes = [8, 4], strides = [1, 1]} : vector<8x48xf32> to vector<8x4xf32>
    %203 = vector.extract_strided_slice %201 {offsets = [0, 16], sizes = [8, 4], strides = [1, 1]} : vector<8x48xf32> to vector<8x4xf32>
    %204 = vector.extract_strided_slice %201 {offsets = [0, 32], sizes = [8, 4], strides = [1, 1]} : vector<8x48xf32> to vector<8x4xf32>
    "tpu.trace_start"() <{level = 10 : i32, message = "qd,kd->qk"}> : () -> ()
    %cst_110 = arith.constant dense<0.000000e+00> : vector<8x8xf32>
    %205 = tpu.matmul %202, %203, %cst_110 {dimension_numbers = #tpu.dot_dimension_numbers<[1], [1], [0], [0], [0, 0, 1, 0], [], []>} : vector<8x4xf32>, vector<8x4xf32>, vector<8x8xf32> -> vector<8x8xf32>
    "tpu.trace_stop"() : () -> ()
    %cst_111 = arith.constant dense<0xFF800000> : vector<8xf32>
    %206 = vector.multi_reduction <maximumf>, %205, %cst_111 [1] : vector<8x8xf32> to vector<8xf32>
    %207 = vector.shape_cast %206 : vector<8xf32> to vector<8x1xf32>
    %208 = vector.broadcast %207 : vector<8x1xf32> to vector<8x8xf32>
    %209 = arith.subf %205, %208 : vector<8x8xf32>
    %210 = math.exp %209 : vector<8x8xf32>
    %cst_112 = arith.constant dense<0.000000e+00> : vector<8xf32>
    %211 = vector.multi_reduction <add>, %210, %cst_112 [1] : vector<8x8xf32> to vector<8xf32>
    %212 = vector.shape_cast %211 : vector<8xf32> to vector<8x1xf32>
    %213 = tpu.reciprocal %212 {approx = true} : vector<8x1xf32> -> vector<8x1xf32>
    %214 = vector.broadcast %213 : vector<8x1xf32> to vector<8x8xf32>
    %215 = arith.mulf %210, %214 : vector<8x8xf32>
    %cst_113 = arith.constant dense<0.000000e+00> : vector<8x4xf32>
    %216 = tpu.matmul %215, %204, %cst_113 {dimension_numbers = #tpu.dot_dimension_numbers<[1], [0], [0], [1], [0, 0, 1, 1], [], []>} : vector<8x8xf32>, vector<8x4xf32>, vector<8x4xf32> -> vector<8x4xf32>
    %217 = vector.extract_strided_slice %201 {offsets = [0, 4], sizes = [8, 4], strides = [1, 1]} : vector<8x48xf32> to vector<8x4xf32>
    %218 = vector.extract_strided_slice %201 {offsets = [0, 20], sizes = [8, 4], strides = [1, 1]} : vector<8x48xf32> to vector<8x4xf32>
    %219 = vector.extract_strided_slice %201 {offsets = [0, 36], sizes = [8, 4], strides = [1, 1]} : vector<8x48xf32> to vector<8x4xf32>
    "tpu.trace_start"() <{level = 10 : i32, message = "qd,kd->qk"}> : () -> ()
    %cst_114 = arith.constant dense<0.000000e+00> : vector<8x8xf32>
    %220 = tpu.matmul %217, %218, %cst_114 {dimension_numbers = #tpu.dot_dimension_numbers<[1], [1], [0], [0], [0, 0, 1, 0], [], []>} : vector<8x4xf32>, vector<8x4xf32>, vector<8x8xf32> -> vector<8x8xf32>
    "tpu.trace_stop"() : () -> ()
    %cst_115 = arith.constant dense<0xFF800000> : vector<8xf32>
    %221 = vector.multi_reduction <maximumf>, %220, %cst_115 [1] : vector<8x8xf32> to vector<8xf32>
    %222 = vector.shape_cast %221 : vector<8xf32> to vector<8x1xf32>
    %223 = vector.broadcast %222 : vector<8x1xf32> to vector<8x8xf32>
    %224 = arith.subf %220, %223 : vector<8x8xf32>
    %225 = math.exp %224 : vector<8x8xf32>
    %cst_116 = arith.constant dense<0.000000e+00> : vector<8xf32>
    %226 = vector.multi_reduction <add>, %225, %cst_116 [1] : vector<8x8xf32> to vector<8xf32>
    %227 = vector.shape_cast %226 : vector<8xf32> to vector<8x1xf32>
    %228 = tpu.reciprocal %227 {approx = true} : vector<8x1xf32> -> vector<8x1xf32>
    %229 = vector.broadcast %228 : vector<8x1xf32> to vector<8x8xf32>
    %230 = arith.mulf %225, %229 : vector<8x8xf32>
    %cst_117 = arith.constant dense<0.000000e+00> : vector<8x4xf32>
    %231 = tpu.matmul %230, %219, %cst_117 {dimension_numbers = #tpu.dot_dimension_numbers<[1], [0], [0], [1], [0, 0, 1, 1], [], []>} : vector<8x8xf32>, vector<8x4xf32>, vector<8x4xf32> -> vector<8x4xf32>
    %232 = vector.extract_strided_slice %201 {offsets = [0, 8], sizes = [8, 4], strides = [1, 1]} : vector<8x48xf32> to vector<8x4xf32>
    %233 = vector.extract_strided_slice %201 {offsets = [0, 24], sizes = [8, 4], strides = [1, 1]} : vector<8x48xf32> to vector<8x4xf32>
    %234 = vector.extract_strided_slice %201 {offsets = [0, 40], sizes = [8, 4], strides = [1, 1]} : vector<8x48xf32> to vector<8x4xf32>
    "tpu.trace_start"() <{level = 10 : i32, message = "qd,kd->qk"}> : () -> ()
    %cst_118 = arith.constant dense<0.000000e+00> : vector<8x8xf32>
    %235 = tpu.matmul %232, %233, %cst_118 {dimension_numbers = #tpu.dot_dimension_numbers<[1], [1], [0], [0], [0, 0, 1, 0], [], []>} : vector<8x4xf32>, vector<8x4xf32>, vector<8x8xf32> -> vector<8x8xf32>
    "tpu.trace_stop"() : () -> ()
    %cst_119 = arith.constant dense<0xFF800000> : vector<8xf32>
    %236 = vector.multi_reduction <maximumf>, %235, %cst_119 [1] : vector<8x8xf32> to vector<8xf32>
    %237 = vector.shape_cast %236 : vector<8xf32> to vector<8x1xf32>
    %238 = vector.broadcast %237 : vector<8x1xf32> to vector<8x8xf32>
    %239 = arith.subf %235, %238 : vector<8x8xf32>
    %240 = math.exp %239 : vector<8x8xf32>
    %cst_120 = arith.constant dense<0.000000e+00> : vector<8xf32>
    %241 = vector.multi_reduction <add>, %240, %cst_120 [1] : vector<8x8xf32> to vector<8xf32>
    %242 = vector.shape_cast %241 : vector<8xf32> to vector<8x1xf32>
    %243 = tpu.reciprocal %242 {approx = true} : vector<8x1xf32> -> vector<8x1xf32>
    %244 = vector.broadcast %243 : vector<8x1xf32> to vector<8x8xf32>
    %245 = arith.mulf %240, %244 : vector<8x8xf32>
    %cst_121 = arith.constant dense<0.000000e+00> : vector<8x4xf32>
    %246 = tpu.matmul %245, %234, %cst_121 {dimension_numbers = #tpu.dot_dimension_numbers<[1], [0], [0], [1], [0, 0, 1, 1], [], []>} : vector<8x8xf32>, vector<8x4xf32>, vector<8x4xf32> -> vector<8x4xf32>
    %247 = vector.extract_strided_slice %201 {offsets = [0, 12], sizes = [8, 4], strides = [1, 1]} : vector<8x48xf32> to vector<8x4xf32>
    %248 = vector.extract_strided_slice %201 {offsets = [0, 28], sizes = [8, 4], strides = [1, 1]} : vector<8x48xf32> to vector<8x4xf32>
    %249 = vector.extract_strided_slice %201 {offsets = [0, 44], sizes = [8, 4], strides = [1, 1]} : vector<8x48xf32> to vector<8x4xf32>
    "tpu.trace_start"() <{level = 10 : i32, message = "qd,kd->qk"}> : () -> ()
    %cst_122 = arith.constant dense<0.000000e+00> : vector<8x8xf32>
    %250 = tpu.matmul %247, %248, %cst_122 {dimension_numbers = #tpu.dot_dimension_numbers<[1], [1], [0], [0], [0, 0, 1, 0], [], []>} : vector<8x4xf32>, vector<8x4xf32>, vector<8x8xf32> -> vector<8x8xf32>
    "tpu.trace_stop"() : () -> ()
    %cst_123 = arith.constant dense<0xFF800000> : vector<8xf32>
    %251 = vector.multi_reduction <maximumf>, %250, %cst_123 [1] : vector<8x8xf32> to vector<8xf32>
    %252 = vector.shape_cast %251 : vector<8xf32> to vector<8x1xf32>
    %253 = vector.broadcast %252 : vector<8x1xf32> to vector<8x8xf32>
    %254 = arith.subf %250, %253 : vector<8x8xf32>
    %255 = math.exp %254 : vector<8x8xf32>
    %cst_124 = arith.constant dense<0.000000e+00> : vector<8xf32>
    %256 = vector.multi_reduction <add>, %255, %cst_124 [1] : vector<8x8xf32> to vector<8xf32>
    %257 = vector.shape_cast %256 : vector<8xf32> to vector<8x1xf32>
    %258 = tpu.reciprocal %257 {approx = true} : vector<8x1xf32> -> vector<8x1xf32>
    %259 = vector.broadcast %258 : vector<8x1xf32> to vector<8x8xf32>
    %260 = arith.mulf %255, %259 : vector<8x8xf32>
    %cst_125 = arith.constant dense<0.000000e+00> : vector<8x4xf32>
    %261 = tpu.matmul %260, %249, %cst_125 {dimension_numbers = #tpu.dot_dimension_numbers<[1], [0], [0], [1], [0, 0, 1, 1], [], []>} : vector<8x8xf32>, vector<8x4xf32>, vector<8x4xf32> -> vector<8x4xf32>
    %262 = tpu.concatenate %216, %231, %246, %261 in 1 : vector<8x4xf32>, vector<8x4xf32>, vector<8x4xf32>, vector<8x4xf32> -> vector<8x16xf32>
    %c1_126 = arith.constant 1 : index
    %c0_127 = arith.constant 0 : index
    %c0_128 = arith.constant 0 : index
    %263 = vector.load %arg5[%c1_126, %c0_127, %c0_128] : memref<2x16x16xf32, #tpu.memory_space<vmem>>, vector<1x16x16xf32>
    %264 = vector.shape_cast %263 : vector<1x16x16xf32> to vector<16x16xf32>
    %cst_129 = arith.constant dense<0.000000e+00> : vector<8x16xf32>
    %265 = tpu.matmul %262, %264, %cst_129 {dimension_numbers = #tpu.dot_dimension_numbers<[1], [0], [0], [1], [0, 0, 1, 1], [], []>} : vector<8x16xf32>, vector<16x16xf32>, vector<8x16xf32> -> vector<8x16xf32>
    %c1_130 = arith.constant 1 : index
    %c0_131 = arith.constant 0 : index
    %c0_132 = arith.constant 0 : index
    %266 = vector.load %arg6[%c1_130, %c0_131, %c0_132] : memref<2x1x16xf32, #tpu.memory_space<vmem>>, vector<1x1x16xf32>
    %267 = vector.shape_cast %266 : vector<1x1x16xf32> to vector<1x16xf32>
    %268 = vector.broadcast %267 : vector<1x16xf32> to vector<8x16xf32>
    %269 = arith.addf %265, %268 : vector<8x16xf32>
    %270 = arith.addf %194, %269 : vector<8x16xf32>
    %c1_133 = arith.constant 1 : index
    %c0_134 = arith.constant 0 : index
    %c0_135 = arith.constant 0 : index
    %271 = vector.load %arg7[%c1_133, %c0_134, %c0_135] : memref<2x1x16xf32, #tpu.memory_space<vmem>>, vector<1x1x16xf32>
    %272 = vector.shape_cast %271 : vector<1x1x16xf32> to vector<1x16xf32>
    %c1_136 = arith.constant 1 : index
    %c0_137 = arith.constant 0 : index
    %c0_138 = arith.constant 0 : index
    %273 = vector.load %arg8[%c1_136, %c0_137, %c0_138] : memref<2x1x16xf32, #tpu.memory_space<vmem>>, vector<1x1x16xf32>
    %274 = vector.shape_cast %273 : vector<1x1x16xf32> to vector<1x16xf32>
    %cst_139 = arith.constant dense<0.000000e+00> : vector<8xf32>
    %275 = vector.multi_reduction <add>, %270, %cst_139 [1] : vector<8x16xf32> to vector<8xf32>
    %276 = vector.shape_cast %275 : vector<8xf32> to vector<8x1xf32>
    %cst_140 = arith.constant 1.600000e+01 : f32
    %277 = vector.broadcast %cst_140 : f32 to vector<8x1xf32>
    %278 = arith.divf %276, %277 : vector<8x1xf32>
    %279 = vector.broadcast %278 : vector<8x1xf32> to vector<8x16xf32>
    %280 = arith.subf %270, %279 : vector<8x16xf32>
    %281 = arith.mulf %280, %280 : vector<8x16xf32>
    %cst_141 = arith.constant dense<0.000000e+00> : vector<8xf32>
    %282 = vector.multi_reduction <add>, %281, %cst_141 [1] : vector<8x16xf32> to vector<8xf32>
    %283 = vector.shape_cast %282 : vector<8xf32> to vector<8x1xf32>
    %cst_142 = arith.constant 1.600000e+01 : f32
    %284 = vector.broadcast %cst_142 : f32 to vector<8x1xf32>
    %285 = arith.divf %283, %284 : vector<8x1xf32>
    %286 = vector.broadcast %278 : vector<8x1xf32> to vector<8x16xf32>
    %287 = arith.subf %270, %286 : vector<8x16xf32>
    %cst_143 = arith.constant 9.99999974E-6 : f32
    %288 = vector.broadcast %cst_143 : f32 to vector<8x1xf32>
    %289 = arith.addf %285, %288 : vector<8x1xf32>
    %290 = math.rsqrt %289 : vector<8x1xf32>
    %291 = vector.broadcast %290 : vector<8x1xf32> to vector<8x16xf32>
    %292 = arith.mulf %287, %291 : vector<8x16xf32>
    %293 = vector.broadcast %272 : vector<1x16xf32> to vector<8x16xf32>
    %294 = arith.mulf %292, %293 : vector<8x16xf32>
    %295 = vector.broadcast %274 : vector<1x16xf32> to vector<8x16xf32>
    %296 = arith.addf %294, %295 : vector<8x16xf32>
    %297 = arith.truncf %296 : vector<8x16xf32> to vector<8x16xbf16>
    %cst_144 = arith.constant 0.000000e+00 : f32
    %298 = vector.broadcast %cst_144 : f32 to vector<8x16xf32>
    %c1_145 = arith.constant 1 : index
    %c0_146 = arith.constant 0 : index
    %c0_147 = arith.constant 0 : index
    %299 = vector.load %arg9[%c1_145, %c0_146, %c0_147] : memref<2x16x2048xbf16, #tpu.memory_space<vmem>>, vector<1x16x512xbf16>
    %300 = vector.shape_cast %299 : vector<1x16x512xbf16> to vector<16x512xbf16>
    %c1_148 = arith.constant 1 : index
    %c0_149 = arith.constant 0 : index
    %c0_150 = arith.constant 0 : index
    %301 = vector.load %arg10[%c1_148, %c0_149, %c0_150] : memref<2x1x2048xf32, #tpu.memory_space<vmem>>, vector<1x1x512xf32>
    %302 = vector.shape_cast %301 : vector<1x1x512xf32> to vector<1x512xf32>
    %c1_151 = arith.constant 1 : index
    %c0_152 = arith.constant 0 : index
    %c0_153 = arith.constant 0 : index
    %303 = vector.load %arg11[%c1_151, %c0_152, %c0_153] : memref<2x2048x16xbf16, #tpu.memory_space<vmem>>, vector<1x512x16xbf16>
    %304 = vector.shape_cast %303 : vector<1x512x16xbf16> to vector<512x16xbf16>
    %cst_154 = arith.constant dense<0.000000e+00> : vector<8x512xf32>
    %305 = tpu.matmul %297, %300, %cst_154 {dimension_numbers = #tpu.dot_dimension_numbers<[1], [0], [0], [1], [0, 0, 1, 1], [], []>} : vector<8x16xbf16>, vector<16x512xbf16>, vector<8x512xf32> -> vector<8x512xf32>
    %306 = vector.broadcast %302 : vector<1x512xf32> to vector<8x512xf32>
    %307 = arith.addf %305, %306 : vector<8x512xf32>
    %cst_155 = arith.constant 0.000000e+00 : f32
    %308 = vector.broadcast %cst_155 : f32 to vector<8x512xf32>
    %309 = arith.maximumf %307, %308 : vector<8x512xf32>
    %310 = arith.truncf %309 : vector<8x512xf32> to vector<8x512xbf16>
    %cst_156 = arith.constant dense<0.000000e+00> : vector<8x16xf32>
    %311 = tpu.matmul %310, %304, %cst_156 {dimension_numbers = #tpu.dot_dimension_numbers<[1], [0], [0], [1], [0, 0, 1, 1], [], []>} : vector<8x512xbf16>, vector<512x16xbf16>, vector<8x16xf32> -> vector<8x16xf32>
    %312 = arith.addf %298, %311 : vector<8x16xf32>
    %c1_157 = arith.constant 1 : index
    %c0_158 = arith.constant 0 : index
    %c512_159 = arith.constant 512 : index
    %313 = vector.load %arg9[%c1_157, %c0_158, %c512_159] : memref<2x16x2048xbf16, #tpu.memory_space<vmem>>, vector<1x16x512xbf16>
    %314 = vector.shape_cast %313 : vector<1x16x512xbf16> to vector<16x512xbf16>
    %c1_160 = arith.constant 1 : index
    %c0_161 = arith.constant 0 : index
    %c512_162 = arith.constant 512 : index
    %315 = vector.load %arg10[%c1_160, %c0_161, %c512_162] : memref<2x1x2048xf32, #tpu.memory_space<vmem>>, vector<1x1x512xf32>
    %316 = vector.shape_cast %315 : vector<1x1x512xf32> to vector<1x512xf32>
    %c1_163 = arith.constant 1 : index
    %c512_164 = arith.constant 512 : index
    %c0_165 = arith.constant 0 : index
    %317 = vector.load %arg11[%c1_163, %c512_164, %c0_165] : memref<2x2048x16xbf16, #tpu.memory_space<vmem>>, vector<1x512x16xbf16>
    %318 = vector.shape_cast %317 : vector<1x512x16xbf16> to vector<512x16xbf16>
    %cst_166 = arith.constant dense<0.000000e+00> : vector<8x512xf32>
    %319 = tpu.matmul %297, %314, %cst_166 {dimension_numbers = #tpu.dot_dimension_numbers<[1], [0], [0], [1], [0, 0, 1, 1], [], []>} : vector<8x16xbf16>, vector<16x512xbf16>, vector<8x512xf32> -> vector<8x512xf32>
    %320 = vector.broadcast %316 : vector<1x512xf32> to vector<8x512xf32>
    %321 = arith.addf %319, %320 : vector<8x512xf32>
    %cst_167 = arith.constant 0.000000e+00 : f32
    %322 = vector.broadcast %cst_167 : f32 to vector<8x512xf32>
    %323 = arith.maximumf %321, %322 : vector<8x512xf32>
    %324 = arith.truncf %323 : vector<8x512xf32> to vector<8x512xbf16>
    %cst_168 = arith.constant dense<0.000000e+00> : vector<8x16xf32>
    %325 = tpu.matmul %324, %318, %cst_168 {dimension_numbers = #tpu.dot_dimension_numbers<[1], [0], [0], [1], [0, 0, 1, 1], [], []>} : vector<8x512xbf16>, vector<512x16xbf16>, vector<8x16xf32> -> vector<8x16xf32>
    %326 = arith.addf %312, %325 : vector<8x16xf32>
    %c1_169 = arith.constant 1 : index
    %c0_170 = arith.constant 0 : index
    %c1024_171 = arith.constant 1024 : index
    %327 = vector.load %arg9[%c1_169, %c0_170, %c1024_171] : memref<2x16x2048xbf16, #tpu.memory_space<vmem>>, vector<1x16x512xbf16>
    %328 = vector.shape_cast %327 : vector<1x16x512xbf16> to vector<16x512xbf16>
    %c1_172 = arith.constant 1 : index
    %c0_173 = arith.constant 0 : index
    %c1024_174 = arith.constant 1024 : index
    %329 = vector.load %arg10[%c1_172, %c0_173, %c1024_174] : memref<2x1x2048xf32, #tpu.memory_space<vmem>>, vector<1x1x512xf32>
    %330 = vector.shape_cast %329 : vector<1x1x512xf32> to vector<1x512xf32>
    %c1_175 = arith.constant 1 : index
    %c1024_176 = arith.constant 1024 : index
    %c0_177 = arith.constant 0 : index
    %331 = vector.load %arg11[%c1_175, %c1024_176, %c0_177] : memref<2x2048x16xbf16, #tpu.memory_space<vmem>>, vector<1x512x16xbf16>
    %332 = vector.shape_cast %331 : vector<1x512x16xbf16> to vector<512x16xbf16>
    %cst_178 = arith.constant dense<0.000000e+00> : vector<8x512xf32>
    %333 = tpu.matmul %297, %328, %cst_178 {dimension_numbers = #tpu.dot_dimension_numbers<[1], [0], [0], [1], [0, 0, 1, 1], [], []>} : vector<8x16xbf16>, vector<16x512xbf16>, vector<8x512xf32> -> vector<8x512xf32>
    %334 = vector.broadcast %330 : vector<1x512xf32> to vector<8x512xf32>
    %335 = arith.addf %333, %334 : vector<8x512xf32>
    %cst_179 = arith.constant 0.000000e+00 : f32
    %336 = vector.broadcast %cst_179 : f32 to vector<8x512xf32>
    %337 = arith.maximumf %335, %336 : vector<8x512xf32>
    %338 = arith.truncf %337 : vector<8x512xf32> to vector<8x512xbf16>
    %cst_180 = arith.constant dense<0.000000e+00> : vector<8x16xf32>
    %339 = tpu.matmul %338, %332, %cst_180 {dimension_numbers = #tpu.dot_dimension_numbers<[1], [0], [0], [1], [0, 0, 1, 1], [], []>} : vector<8x512xbf16>, vector<512x16xbf16>, vector<8x16xf32> -> vector<8x16xf32>
    %340 = arith.addf %326, %339 : vector<8x16xf32>
    %c1_181 = arith.constant 1 : index
    %c0_182 = arith.constant 0 : index
    %c1536_183 = arith.constant 1536 : index
    %341 = vector.load %arg9[%c1_181, %c0_182, %c1536_183] : memref<2x16x2048xbf16, #tpu.memory_space<vmem>>, vector<1x16x512xbf16>
    %342 = vector.shape_cast %341 : vector<1x16x512xbf16> to vector<16x512xbf16>
    %c1_184 = arith.constant 1 : index
    %c0_185 = arith.constant 0 : index
    %c1536_186 = arith.constant 1536 : index
    %343 = vector.load %arg10[%c1_184, %c0_185, %c1536_186] : memref<2x1x2048xf32, #tpu.memory_space<vmem>>, vector<1x1x512xf32>
    %344 = vector.shape_cast %343 : vector<1x1x512xf32> to vector<1x512xf32>
    %c1_187 = arith.constant 1 : index
    %c1536_188 = arith.constant 1536 : index
    %c0_189 = arith.constant 0 : index
    %345 = vector.load %arg11[%c1_187, %c1536_188, %c0_189] : memref<2x2048x16xbf16, #tpu.memory_space<vmem>>, vector<1x512x16xbf16>
    %346 = vector.shape_cast %345 : vector<1x512x16xbf16> to vector<512x16xbf16>
    %cst_190 = arith.constant dense<0.000000e+00> : vector<8x512xf32>
    %347 = tpu.matmul %297, %342, %cst_190 {dimension_numbers = #tpu.dot_dimension_numbers<[1], [0], [0], [1], [0, 0, 1, 1], [], []>} : vector<8x16xbf16>, vector<16x512xbf16>, vector<8x512xf32> -> vector<8x512xf32>
    %348 = vector.broadcast %344 : vector<1x512xf32> to vector<8x512xf32>
    %349 = arith.addf %347, %348 : vector<8x512xf32>
    %cst_191 = arith.constant 0.000000e+00 : f32
    %350 = vector.broadcast %cst_191 : f32 to vector<8x512xf32>
    %351 = arith.maximumf %349, %350 : vector<8x512xf32>
    %352 = arith.truncf %351 : vector<8x512xf32> to vector<8x512xbf16>
    %cst_192 = arith.constant dense<0.000000e+00> : vector<8x16xf32>
    %353 = tpu.matmul %352, %346, %cst_192 {dimension_numbers = #tpu.dot_dimension_numbers<[1], [0], [0], [1], [0, 0, 1, 1], [], []>} : vector<8x512xbf16>, vector<512x16xbf16>, vector<8x16xf32> -> vector<8x16xf32>
    %354 = arith.addf %340, %353 : vector<8x16xf32>
    %c1_193 = arith.constant 1 : index
    %c0_194 = arith.constant 0 : index
    %c0_195 = arith.constant 0 : index
    %355 = vector.load %arg12[%c1_193, %c0_194, %c0_195] : memref<2x1x16xf32, #tpu.memory_space<vmem>>, vector<1x1x16xf32>
    %356 = vector.shape_cast %355 : vector<1x1x16xf32> to vector<1x16xf32>
    %357 = vector.broadcast %356 : vector<1x16xf32> to vector<8x16xf32>
    %358 = arith.addf %354, %357 : vector<8x16xf32>
    %359 = arith.addf %296, %358 : vector<8x16xf32>
    %c1_196 = arith.constant 1 : index
    %c0_197 = arith.constant 0 : index
    %c0_198 = arith.constant 0 : index
    %360 = vector.load %arg13[%c1_196, %c0_197, %c0_198] : memref<2x1x16xf32, #tpu.memory_space<vmem>>, vector<1x1x16xf32>
    %361 = vector.shape_cast %360 : vector<1x1x16xf32> to vector<1x16xf32>
    %c1_199 = arith.constant 1 : index
    %c0_200 = arith.constant 0 : index
    %c0_201 = arith.constant 0 : index
    %362 = vector.load %arg14[%c1_199, %c0_200, %c0_201] : memref<2x1x16xf32, #tpu.memory_space<vmem>>, vector<1x1x16xf32>
    %363 = vector.shape_cast %362 : vector<1x1x16xf32> to vector<1x16xf32>
    %cst_202 = arith.constant dense<0.000000e+00> : vector<8xf32>
    %364 = vector.multi_reduction <add>, %359, %cst_202 [1] : vector<8x16xf32> to vector<8xf32>
    %365 = vector.shape_cast %364 : vector<8xf32> to vector<8x1xf32>
    %cst_203 = arith.constant 1.600000e+01 : f32
    %366 = vector.broadcast %cst_203 : f32 to vector<8x1xf32>
    %367 = arith.divf %365, %366 : vector<8x1xf32>
    %368 = vector.broadcast %367 : vector<8x1xf32> to vector<8x16xf32>
    %369 = arith.subf %359, %368 : vector<8x16xf32>
    %370 = arith.mulf %369, %369 : vector<8x16xf32>
    %cst_204 = arith.constant dense<0.000000e+00> : vector<8xf32>
    %371 = vector.multi_reduction <add>, %370, %cst_204 [1] : vector<8x16xf32> to vector<8xf32>
    %372 = vector.shape_cast %371 : vector<8xf32> to vector<8x1xf32>
    %cst_205 = arith.constant 1.600000e+01 : f32
    %373 = vector.broadcast %cst_205 : f32 to vector<8x1xf32>
    %374 = arith.divf %372, %373 : vector<8x1xf32>
    %375 = vector.broadcast %367 : vector<8x1xf32> to vector<8x16xf32>
    %376 = arith.subf %359, %375 : vector<8x16xf32>
    %cst_206 = arith.constant 9.99999974E-6 : f32
    %377 = vector.broadcast %cst_206 : f32 to vector<8x1xf32>
    %378 = arith.addf %374, %377 : vector<8x1xf32>
    %379 = math.rsqrt %378 : vector<8x1xf32>
    %380 = vector.broadcast %379 : vector<8x1xf32> to vector<8x16xf32>
    %381 = arith.mulf %376, %380 : vector<8x16xf32>
    %382 = vector.broadcast %361 : vector<1x16xf32> to vector<8x16xf32>
    %383 = arith.mulf %381, %382 : vector<8x16xf32>
    %384 = vector.broadcast %363 : vector<1x16xf32> to vector<8x16xf32>
    %385 = arith.addf %383, %384 : vector<8x16xf32>
    %cst_207 = arith.constant dense<0.000000e+00> : vector<16xf32>
    %386 = vector.multi_reduction <add>, %385, %cst_207 [0] : vector<8x16xf32> to vector<16xf32>
    %387 = vector.shape_cast %386 : vector<16xf32> to vector<1x16xf32>
    %cst_208 = arith.constant 8.000000e+00 : f32
    %388 = vector.broadcast %cst_208 : f32 to vector<1x16xf32>
    %389 = arith.divf %387, %388 : vector<1x16xf32>
    %c0_209 = arith.constant 0 : index
    %c0_210 = arith.constant 0 : index
    %390 = vector.load %arg15[%c0_209, %c0_210] : memref<16x2xf32, #tpu.memory_space<vmem>>, vector<16x2xf32>
    %cst_211 = arith.constant dense<0.000000e+00> : vector<1x2xf32>
    %391 = tpu.matmul %389, %390, %cst_211 {dimension_numbers = #tpu.dot_dimension_numbers<[1], [0], [0], [1], [0, 0, 1, 1], [], []>} : vector<1x16xf32>, vector<16x2xf32>, vector<1x2xf32> -> vector<1x2xf32>
    %c0_212 = arith.constant 0 : index
    %c0_213 = arith.constant 0 : index
    %392 = vector.load %arg16[%c0_212, %c0_213] : memref<1x2xf32, #tpu.memory_space<vmem>>, vector<1x2xf32>
    %393 = arith.addf %391, %392 : vector<1x2xf32>
    %394 = arith.negf %393 : vector<1x2xf32>
    %395 = math.exp %394 : vector<1x2xf32>
    %cst_214 = arith.constant 1.000000e+00 : f32
    %396 = vector.broadcast %cst_214 : f32 to vector<1x2xf32>
    %397 = arith.addf %396, %395 : vector<1x2xf32>
    %398 = arith.divf %396, %397 : vector<1x2xf32>
    %c0_215 = arith.constant 0 : index
    %c0_216 = arith.constant 0 : index
    %c0_217 = arith.constant 0 : index
    %399 = vector.load %arg17[%c0_215, %c0_216, %c0_217] : memref<1x1x2xf32, #tpu.memory_space<vmem>>, vector<1x1x2xf32>
    %400 = vector.shape_cast %399 : vector<1x1x2xf32> to vector<1x2xf32>
    %401 = vector.shape_cast %398 : vector<1x2xf32> to vector<1x1x2xf32>
    tpu.vector_store %arg17[%c0_215, %c0_216, %c0_217], %401 {strides = array<i32>} : memref<1x1x2xf32, #tpu.memory_space<vmem>>, vector<1x1x2xf32>,
    return
  }
  func.func @transform_0(%arg0: i32) -> (i32, i32, i32) {
    %c0_i32 = arith.constant 0 : i32
    %c0_i32_0 = arith.constant 0 : i32
    %c0_i32_1 = arith.constant 0 : i32
    return %arg0, %c0_i32, %c0_i32_0 : i32, i32, i32
  }
  func.func @transform_1(%arg0: i32) -> (i32, i32) {
    %c0_i32 = arith.constant 0 : i32
    %c0_i32_0 = arith.constant 0 : i32
    %c0_i32_1 = arith.constant 0 : i32
    return %c0_i32, %c0_i32_0 : i32, i32
  }
  func.func @transform_2(%arg0: i32) -> (i32, i32, i32) {
    %c0_i32 = arith.constant 0 : i32
    %c0_i32_0 = arith.constant 0 : i32
    %c0_i32_1 = arith.constant 0 : i32
    %c0_i32_2 = arith.constant 0 : i32
    return %c0_i32, %c0_i32_0, %c0_i32_1 : i32, i32, i32
  }
  func.func @transform_3(%arg0: i32) -> (i32, i32, i32) {
    %c0_i32 = arith.constant 0 : i32
    %c0_i32_0 = arith.constant 0 : i32
    %c0_i32_1 = arith.constant 0 : i32
    %c0_i32_2 = arith.constant 0 : i32
    return %c0_i32, %c0_i32_0, %c0_i32_1 : i32, i32, i32
  }
  func.func @transform_4(%arg0: i32) -> (i32, i32, i32) {
    %c0_i32 = arith.constant 0 : i32
    %c0_i32_0 = arith.constant 0 : i32
    %c0_i32_1 = arith.constant 0 : i32
    %c0_i32_2 = arith.constant 0 : i32
    return %c0_i32, %c0_i32_0, %c0_i32_1 : i32, i32, i32
  }
  func.func @transform_5(%arg0: i32) -> (i32, i32, i32) {
    %c0_i32 = arith.constant 0 : i32
    %c0_i32_0 = arith.constant 0 : i32
    %c0_i32_1 = arith.constant 0 : i32
    %c0_i32_2 = arith.constant 0 : i32
    return %c0_i32, %c0_i32_0, %c0_i32_1 : i32, i32, i32
  }
  func.func @transform_6(%arg0: i32) -> (i32, i32, i32) {
    %c0_i32 = arith.constant 0 : i32
    %c0_i32_0 = arith.constant 0 : i32
    %c0_i32_1 = arith.constant 0 : i32
    %c0_i32_2 = arith.constant 0 : i32
    return %c0_i32, %c0_i32_0, %c0_i32_1 : i32, i32, i32
  }
  func.func @transform_7(%arg0: i32) -> (i32, i32, i32) {
    %c0_i32 = arith.constant 0 : i32
    %c0_i32_0 = arith.constant 0 : i32
    %c0_i32_1 = arith.constant 0 : i32
    %c0_i32_2 = arith.constant 0 : i32
    return %c0_i32, %c0_i32_0, %c0_i32_1 : i32, i32, i32
  }
  func.func @transform_8(%arg0: i32) -> (i32, i32, i32) {
    %c0_i32 = arith.constant 0 : i32
    %c0_i32_0 = arith.constant 0 : i32
    %c0_i32_1 = arith.constant 0 : i32
    %c0_i32_2 = arith.constant 0 : i32
    return %c0_i32, %c0_i32_0, %c0_i32_1 : i32, i32, i32
  }
  func.func @transform_9(%arg0: i32) -> (i32, i32, i32) {
    %c0_i32 = arith.constant 0 : i32
    %c0_i32_0 = arith.constant 0 : i32
    %c0_i32_1 = arith.constant 0 : i32
    %c0_i32_2 = arith.constant 0 : i32
    return %c0_i32, %c0_i32_0, %c0_i32_1 : i32, i32, i32
  }
  func.func @transform_10(%arg0: i32) -> (i32, i32, i32) {
    %c0_i32 = arith.constant 0 : i32
    %c0_i32_0 = arith.constant 0 : i32
    %c0_i32_1 = arith.constant 0 : i32
    %c0_i32_2 = arith.constant 0 : i32
    return %c0_i32, %c0_i32_0, %c0_i32_1 : i32, i32, i32
  }
  func.func @transform_11(%arg0: i32) -> (i32, i32, i32) {
    %c0_i32 = arith.constant 0 : i32
    %c0_i32_0 = arith.constant 0 : i32
    %c0_i32_1 = arith.constant 0 : i32
    %c0_i32_2 = arith.constant 0 : i32
    return %c0_i32, %c0_i32_0, %c0_i32_1 : i32, i32, i32
  }
  func.func @transform_12(%arg0: i32) -> (i32, i32, i32) {
    %c0_i32 = arith.constant 0 : i32
    %c0_i32_0 = arith.constant 0 : i32
    %c0_i32_1 = arith.constant 0 : i32
    %c0_i32_2 = arith.constant 0 : i32
    return %c0_i32, %c0_i32_0, %c0_i32_1 : i32, i32, i32
  }
  func.func @transform_13(%arg0: i32) -> (i32, i32, i32) {
    %c0_i32 = arith.constant 0 : i32
    %c0_i32_0 = arith.constant 0 : i32
    %c0_i32_1 = arith.constant 0 : i32
    %c0_i32_2 = arith.constant 0 : i32
    return %c0_i32, %c0_i32_0, %c0_i32_1 : i32, i32, i32
  }
  func.func @transform_14(%arg0: i32) -> (i32, i32) {
    %c0_i32 = arith.constant 0 : i32
    %c0_i32_0 = arith.constant 0 : i32
    %c0_i32_1 = arith.constant 0 : i32
    return %c0_i32, %c0_i32_0 : i32, i32
  }
  func.func @transform_15(%arg0: i32) -> (i32, i32) {
    %c0_i32 = arith.constant 0 : i32
    %c0_i32_0 = arith.constant 0 : i32
    %c0_i32_1 = arith.constant 0 : i32
    return %c0_i32, %c0_i32_0 : i32, i32
  }
  func.func @transform_16(%arg0: i32) -> (i32, i32, i32) {
    %c0_i32 = arith.constant 0 : i32
    %c0_i32_0 = arith.constant 0 : i32
    %c0_i32_1 = arith.constant 0 : i32
    return %arg0, %c0_i32, %c0_i32_0 : i32, i32, i32
  }
}

</mosaic_0001>

<llo_original>
// kernel: transformer_classifier.1
$region0: #{transformer_classifier.1}
  #allocation0 [shape = 'u32[]', space=smem, size = 0x4, offset = 0x4, fixed_abs, tag = 'smem constant byte address 0x4 - core index']
  #allocation1 [shape = 'u32[144,128]{1,0:T(1,128)}', space=vmem, size = 0x12000, scoped, tag = 'internal scratch']
  %s0 = inlined_call_operand.vmem [shape: f32[2,8,16], index: 0, kind: input, shape index: {}]
  %s1 = inlined_call_operand.vmem [shape: f32[8,16], index: 1, kind: input, shape index: {}]
  %s2 = inlined_call_operand.vmem [shape: f32[2,16,48], index: 2, kind: input, shape index: {}]
  %s3 = inlined_call_operand.vmem [shape: f32[2,1,48], index: 3, kind: input, shape index: {}]
  %s4 = inlined_call_operand.vmem [shape: f32[2,16,16], index: 4, kind: input, shape index: {}]
  %s5 = inlined_call_operand.vmem [shape: f32[2,1,16], index: 5, kind: input, shape index: {}]
  %s6 = inlined_call_operand.vmem [shape: f32[2,1,16], index: 6, kind: input, shape index: {}]
  %s7 = inlined_call_operand.vmem [shape: f32[2,1,16], index: 7, kind: input, shape index: {}]
  %s8 = inlined_call_operand.vmem [shape: bf16[2,16,2048], index: 8, kind: input, shape index: {}]
  %s9 = inlined_call_operand.vmem [shape: f32[2,1,2048], index: 9, kind: input, shape index: {}]
  %s10 = inlined_call_operand.vmem [shape: bf16[2,2048,16], index: 10, kind: input, shape index: {}]
  %s11 = inlined_call_operand.vmem [shape: f32[2,1,16], index: 11, kind: input, shape index: {}]
  %s12 = inlined_call_operand.vmem [shape: f32[2,1,16], index: 12, kind: input, shape index: {}]
  %s13 = inlined_call_operand.vmem [shape: f32[2,1,16], index: 13, kind: input, shape index: {}]
  %s14 = inlined_call_operand.vmem [shape: f32[16,2], index: 14, kind: input, shape index: {}]
  %s15 = inlined_call_operand.vmem [shape: f32[1,2], index: 15, kind: input, shape index: {}]
  %s16 = inlined_call_operand.hbm [shape: f32[2,1,2], index: 16, kind: output, shape index: {}]
  %s17 = sld [smem:[#allocation0]]
  $region97: #{transformer_classifier.1} parent=0
    _
  %s19 = ssub.s32 1, %s17
  %s20 = scalar_select 0, %s19, %s17
  $region1: #{transformer_classifier.1} parent=0
    #allocation2 [shape = 'u8[1024]{0}', space=vmem, size = 0x400, scoped, tag = 'output window, operand 0']
    #allocation3 [shape = 's32[2]{0}', space=sflag, size = 0x8, scoped, tag = 'scoped memory for transformer_classifier.1']
    %21 = vsyncpa [#allocation3], 0
    %s22 = scalar_lea.sflag [#allocation3], 1
    %23 = vsyncpa %s22, 0
    loop: start=0, step=1, limit=4
    $region2: #{transformer_classifier.1} parent=1 // loop_pre_header
      _
    $region3: #{transformer_classifier.1} parent=1 // loop_header
      %s25 = sphi 0, %s29
      %p26 = scmp.ge.s32.totalorder %s25, 4
      %s35 = sphi 0, %s37
      %s38 = sphi 0, %s35
      %s39 = sphi 0, %s38
      %s55 = sphi 0, %s39
      %s59 = sphi 0, %s59
      %s61 = sphi 0, %s59
      %s62 = sphi 0, %s61
      %s76 = sphi 0, %s62
      %s80 = sphi 0, %s80
      %s82 = sphi 0, %s80
      %s83 = sphi 0, %s82
      %s97 = sphi 0, %s83
      %s101 = sphi 0, %s101
      %s103 = sphi 0, %s101
      %s104 = sphi 0, %s103
      %s118 = sphi 0, %s104
      %s122 = sphi 0, %s122
      %s124 = sphi 0, %s122
      %s125 = sphi 0, %s124
      %s139 = sphi 0, %s125
      %s143 = sphi 0, %s143
      %s145 = sphi 0, %s143
      %s146 = sphi 0, %s145
      %s160 = sphi 0, %s146
      %s164 = sphi 0, %s164
      %s166 = sphi 0, %s164
      %s167 = sphi 0, %s166
      %s181 = sphi 0, %s167
      %s185 = sphi 0, %s185
      %s187 = sphi 0, %s185
      %s188 = sphi 0, %s187
      %s202 = sphi 0, %s188
      %s206 = sphi 0, %s206
      %s208 = sphi 0, %s206
      %s209 = sphi 0, %s208
      %s223 = sphi 0, %s209
      %s227 = sphi 0, %s227
      %s229 = sphi 0, %s227
      %s230 = sphi 0, %s229
      %s244 = sphi 0, %s230
      %s248 = sphi 0, %s248
      %s250 = sphi 0, %s248
      %s251 = sphi 0, %s250
      %s265 = sphi 0, %s251
      %s269 = sphi 0, %s269
      %s271 = sphi 0, %s269
      %s272 = sphi 0, %s271
      %s286 = sphi 0, %s272
      %s290 = sphi 0, %s290
      %s292 = sphi 0, %s290
      %s293 = sphi 0, %s292
      %s307 = sphi 0, %s293
      %s311 = sphi 0, %s311
      %s313 = sphi 0, %s311
      %s314 = sphi 0, %s313
      %s328 = sphi 0, %s314
      %s332 = sphi 0, %s332
      %s334 = sphi 0, %s332
      %s335 = sphi 0, %s334
      %s349 = sphi 0, %s335
      %s353 = sphi 0, %s353
      %s355 = sphi 0, %s353
      %s356 = sphi 0, %s355
      %s370 = sphi 0, %s356
      %s376 = sphi 0, %s378
      %s379 = sphi 0, %s376
      %s380 = sphi 0, %s379
      %s396 = sphi 0, %s380
    $region4: #{transformer_classifier.1} parent=1 // loop_header_branch
      %28 = sbr.rel (%p26) target = $region8
    $region5: #{transformer_classifier.1} parent=1 // loop_body
      %s30 = ssub.s32 %s25, 1
      %s31 = ssub.s32 %s25, 2
      %s32 = sadd.s32 %s25, 1
      %s33 = ssub.s32 %s25, %s32
      %p34 = scmp.eq.s32.totalorder %s33, 0
      %s36 = sadd.s32 %s35, 1
      %s37 = scalar_select %p34, %s35, %s36
      %p40 = pneg %p34
      %p41 = scmp.eq.s32.totalorder %s25, 1
      %p42 = por %p40, %p41
      %p43 = scmp.ne.s32.totalorder %s35, %s38
      %p44 = scmp.eq.s32.totalorder %s25, 0
      %p45 = por %p43, %p44
      %p46 = scmp.ne.s32.totalorder %s35, %s38
      %p47 = scmp.eq.s32.totalorder %s30, 1
      %p48 = por %p46, %p47
      %p49 = scmp.ne.s32.totalorder %s38, %s39
      %p50 = scmp.eq.s32.totalorder %s30, 0
      %p51 = por %p49, %p50
      %p52 = scmp.ne.s32.totalorder %s38, %s39
      %p53 = scmp.eq.s32.totalorder %s31, 1
      %p54 = por %p52, %p53
      %p56 = scmp.ne.s32.totalorder %s39, %s55
      %p57 = scmp.eq.s32.totalorder %s31, 0
      %p58 = por %p56, %p57
      %s60 = sadd.s32 %s59, 1
      %p63 = scmp.eq.s32.totalorder %s25, 1
      %p64 = scmp.ne.s32.totalorder %s59, %s61
      %p65 = scmp.eq.s32.totalorder %s25, 0
      %p66 = por %p64, %p65
      %p67 = scmp.ne.s32.totalorder %s59, %s61
      %p68 = scmp.eq.s32.totalorder %s30, 1
      %p69 = por %p67, %p68
      %p70 = scmp.ne.s32.totalorder %s61, %s62
      %p71 = scmp.eq.s32.totalorder %s30, 0
      %p72 = por %p70, %p71
      %p73 = scmp.ne.s32.totalorder %s61, %s62
      %p74 = scmp.eq.s32.totalorder %s31, 1
      %p75 = por %p73, %p74
      %p77 = scmp.ne.s32.totalorder %s62, %s76
      %p78 = scmp.eq.s32.totalorder %s31, 0
      %p79 = por %p77, %p78
      %s81 = sadd.s32 %s80, 1
      %p84 = scmp.eq.s32.totalorder %s25, 1
      %p85 = scmp.ne.s32.totalorder %s80, %s82
      %p86 = scmp.eq.s32.totalorder %s25, 0
      %p87 = por %p85, %p86
      %p88 = scmp.ne.s32.totalorder %s80, %s82
      %p89 = scmp.eq.s32.totalorder %s30, 1
      %p90 = por %p88, %p89
      %p91 = scmp.ne.s32.totalorder %s82, %s83
      %p92 = scmp.eq.s32.totalorder %s30, 0
      %p93 = por %p91, %p92
      %p94 = scmp.ne.s32.totalorder %s82, %s83
      %p95 = scmp.eq.s32.totalorder %s31, 1
      %p96 = por %p94, %p95
      %p98 = scmp.ne.s32.totalorder %s83, %s97
      %p99 = scmp.eq.s32.totalorder %s31, 0
      %p100 = por %p98, %p99
      %s102 = sadd.s32 %s101, 1
      %p105 = scmp.eq.s32.totalorder %s25, 1
      %p106 = scmp.ne.s32.totalorder %s101, %s103
      %p107 = scmp.eq.s32.totalorder %s25, 0
      %p108 = por %p106, %p107
      %p109 = scmp.ne.s32.totalorder %s101, %s103
      %p110 = scmp.eq.s32.totalorder %s30, 1
      %p111 = por %p109, %p110
      %p112 = scmp.ne.s32.totalorder %s103, %s104
      %p113 = scmp.eq.s32.totalorder %s30, 0
      %p114 = por %p112, %p113
      %p115 = scmp.ne.s32.totalorder %s103, %s104
      %p116 = scmp.eq.s32.totalorder %s31, 1
      %p117 = por %p115, %p116
      %p119 = scmp.ne.s32.totalorder %s104, %s118
      %p120 = scmp.eq.s32.totalorder %s31, 0
      %p121 = por %p119, %p120
      %s123 = sadd.s32 %s122, 1
      %p126 = scmp.eq.s32.totalorder %s25, 1
      %p127 = scmp.ne.s32.totalorder %s122, %s124
      %p128 = scmp.eq.s32.totalorder %s25, 0
      %p129 = por %p127, %p128
      %p130 = scmp.ne.s32.totalorder %s122, %s124
      %p131 = scmp.eq.s32.totalorder %s30, 1
      %p132 = por %p130, %p131
      %p133 = scmp.ne.s32.totalorder %s124, %s125
      %p134 = scmp.eq.s32.totalorder %s30, 0
      %p135 = por %p133, %p134
      %p136 = scmp.ne.s32.totalorder %s124, %s125
      %p137 = scmp.eq.s32.totalorder %s31, 1
      %p138 = por %p136, %p137
      %p140 = scmp.ne.s32.totalorder %s125, %s139
      %p141 = scmp.eq.s32.totalorder %s31, 0
      %p142 = por %p140, %p141
      %s144 = sadd.s32 %s143, 1
      %p147 = scmp.eq.s32.totalorder %s25, 1
      %p148 = scmp.ne.s32.totalorder %s143, %s145
      %p149 = scmp.eq.s32.totalorder %s25, 0
      %p150 = por %p148, %p149
      %p151 = scmp.ne.s32.totalorder %s143, %s145
      %p152 = scmp.eq.s32.totalorder %s30, 1
      %p153 = por %p151, %p152
      %p154 = scmp.ne.s32.totalorder %s145, %s146
      %p155 = scmp.eq.s32.totalorder %s30, 0
      %p156 = por %p154, %p155
      %p157 = scmp.ne.s32.totalorder %s145, %s146
      %p158 = scmp.eq.s32.totalorder %s31, 1
      %p159 = por %p157, %p158
      %p161 = scmp.ne.s32.totalorder %s146, %s160
      %p162 = scmp.eq.s32.totalorder %s31, 0
      %p163 = por %p161, %p162
      %s165 = sadd.s32 %s164, 1
      %p168 = scmp.eq.s32.totalorder %s25, 1
      %p169 = scmp.ne.s32.totalorder %s164, %s166
      %p170 = scmp.eq.s32.totalorder %s25, 0
      %p171 = por %p169, %p170
      %p172 = scmp.ne.s32.totalorder %s164, %s166
      %p173 = scmp.eq.s32.totalorder %s30, 1
      %p174 = por %p172, %p173
      %p175 = scmp.ne.s32.totalorder %s166, %s167
      %p176 = scmp.eq.s32.totalorder %s30, 0
      %p177 = por %p175, %p176
      %p178 = scmp.ne.s32.totalorder %s166, %s167
      %p179 = scmp.eq.s32.totalorder %s31, 1
      %p180 = por %p178, %p179
      %p182 = scmp.ne.s32.totalorder %s167, %s181
      %p183 = scmp.eq.s32.totalorder %s31, 0
      %p184 = por %p182, %p183
      %s186 = sadd.s32 %s185, 1
      %p189 = scmp.eq.s32.totalorder %s25, 1
      %p190 = scmp.ne.s32.totalorder %s185, %s187
      %p191 = scmp.eq.s32.totalorder %s25, 0
      %p192 = por %p190, %p191
      %p193 = scmp.ne.s32.totalorder %s185, %s187
      %p194 = scmp.eq.s32.totalorder %s30, 1
      %p195 = por %p193, %p194
      %p196 = scmp.ne.s32.totalorder %s187, %s188
      %p197 = scmp.eq.s32.totalorder %s30, 0
      %p198 = por %p196, %p197
      %p199 = scmp.ne.s32.totalorder %s187, %s188
      %p200 = scmp.eq.s32.totalorder %s31, 1
      %p201 = por %p199, %p200
      %p203 = scmp.ne.s32.totalorder %s188, %s202
      %p204 = scmp.eq.s32.totalorder %s31, 0
      %p205 = por %p203, %p204
      %s207 = sadd.s32 %s206, 1
      %p210 = scmp.eq.s32.totalorder %s25, 1
      %p211 = scmp.ne.s32.totalorder %s206, %s208
      %p212 = scmp.eq.s32.totalorder %s25, 0
      %p213 = por %p211, %p212
      %p214 = scmp.ne.s32.totalorder %s206, %s208
      %p215 = scmp.eq.s32.totalorder %s30, 1
      %p216 = por %p214, %p215
      %p217 = scmp.ne.s32.totalorder %s208, %s209
      %p218 = scmp.eq.s32.totalorder %s30, 0
      %p219 = por %p217, %p218
      %p220 = scmp.ne.s32.totalorder %s208, %s209
      %p221 = scmp.eq.s32.totalorder %s31, 1
      %p222 = por %p220, %p221
      %p224 = scmp.ne.s32.totalorder %s209, %s223
      %p225 = scmp.eq.s32.totalorder %s31, 0
      %p226 = por %p224, %p225
      %s228 = sadd.s32 %s227, 1
      %p231 = scmp.eq.s32.totalorder %s25, 1
      %p232 = scmp.ne.s32.totalorder %s227, %s229
      %p233 = scmp.eq.s32.totalorder %s25, 0
      %p234 = por %p232, %p233
      %p235 = scmp.ne.s32.totalorder %s227, %s229
      %p236 = scmp.eq.s32.totalorder %s30, 1
      %p237 = por %p235, %p236
      %p238 = scmp.ne.s32.totalorder %s229, %s230
      %p239 = scmp.eq.s32.totalorder %s30, 0
      %p240 = por %p238, %p239
      %p241 = scmp.ne.s32.totalorder %s229, %s230
      %p242 = scmp.eq.s32.totalorder %s31, 1
      %p243 = por %p241, %p242
      %p245 = scmp.ne.s32.totalorder %s230, %s244
      %p246 = scmp.eq.s32.totalorder %s31, 0
      %p247 = por %p245, %p246
      %s249 = sadd.s32 %s248, 1
      %p252 = scmp.eq.s32.totalorder %s25, 1
      %p253 = scmp.ne.s32.totalorder %s248, %s250
      %p254 = scmp.eq.s32.totalorder %s25, 0
      %p255 = por %p253, %p254
      %p256 = scmp.ne.s32.totalorder %s248, %s250
      %p257 = scmp.eq.s32.totalorder %s30, 1
      %p258 = por %p256, %p257
      %p259 = scmp.ne.s32.totalorder %s250, %s251
      %p260 = scmp.eq.s32.totalorder %s30, 0
      %p261 = por %p259, %p260
      %p262 = scmp.ne.s32.totalorder %s250, %s251
      %p263 = scmp.eq.s32.totalorder %s31, 1
      %p264 = por %p262, %p263
      %p266 = scmp.ne.s32.totalorder %s251, %s265
      %p267 = scmp.eq.s32.totalorder %s31, 0
      %p268 = por %p266, %p267
      %s270 = sadd.s32 %s269, 1
      %p273 = scmp.eq.s32.totalorder %s25, 1
      %p274 = scmp.ne.s32.totalorder %s269, %s271
      %p275 = scmp.eq.s32.totalorder %s25, 0
      %p276 = por %p274, %p275
      %p277 = scmp.ne.s32.totalorder %s269, %s271
      %p278 = scmp.eq.s32.totalorder %s30, 1
      %p279 = por %p277, %p278
      %p280 = scmp.ne.s32.totalorder %s271, %s272
      %p281 = scmp.eq.s32.totalorder %s30, 0
      %p282 = por %p280, %p281
      %p283 = scmp.ne.s32.totalorder %s271, %s272
      %p284 = scmp.eq.s32.totalorder %s31, 1
      %p285 = por %p283, %p284
      %p287 = scmp.ne.s32.totalorder %s272, %s286
      %p288 = scmp.eq.s32.totalorder %s31, 0
      %p289 = por %p287, %p288
      %s291 = sadd.s32 %s290, 1
      %p294 = scmp.eq.s32.totalorder %s25, 1
      %p295 = scmp.ne.s32.totalorder %s290, %s292
      %p296 = scmp.eq.s32.totalorder %s25, 0
      %p297 = por %p295, %p296
      %p298 = scmp.ne.s32.totalorder %s290, %s292
      %p299 = scmp.eq.s32.totalorder %s30, 1
      %p300 = por %p298, %p299
      %p301 = scmp.ne.s32.totalorder %s292, %s293
      %p302 = scmp.eq.s32.totalorder %s30, 0
      %p303 = por %p301, %p302
      %p304 = scmp.ne.s32.totalorder %s292, %s293
      %p305 = scmp.eq.s32.totalorder %s31, 1
      %p306 = por %p304, %p305
      %p308 = scmp.ne.s32.totalorder %s293, %s307
      %p309 = scmp.eq.s32.totalorder %s31, 0
      %p310 = por %p308, %p309
      %s312 = sadd.s32 %s311, 1
      %p315 = scmp.eq.s32.totalorder %s25, 1
      %p316 = scmp.ne.s32.totalorder %s311, %s313
      %p317 = scmp.eq.s32.totalorder %s25, 0
      %p318 = por %p316, %p317
      %p319 = scmp.ne.s32.totalorder %s311, %s313
      %p320 = scmp.eq.s32.totalorder %s30, 1
      %p321 = por %p319, %p320
      %p322 = scmp.ne.s32.totalorder %s313, %s314
      %p323 = scmp.eq.s32.totalorder %s30, 0
      %p324 = por %p322, %p323
      %p325 = scmp.ne.s32.totalorder %s313, %s314
      %p326 = scmp.eq.s32.totalorder %s31, 1
      %p327 = por %p325, %p326
      %p329 = scmp.ne.s32.totalorder %s314, %s328
      %p330 = scmp.eq.s32.totalorder %s31, 0
      %p331 = por %p329, %p330
      %s333 = sadd.s32 %s332, 1
      %p336 = scmp.eq.s32.totalorder %s25, 1
      %p337 = scmp.ne.s32.totalorder %s332, %s334
      %p338 = scmp.eq.s32.totalorder %s25, 0
      %p339 = por %p337, %p338
      %p340 = scmp.ne.s32.totalorder %s332, %s334
      %p341 = scmp.eq.s32.totalorder %s30, 1
      %p342 = por %p340, %p341
      %p343 = scmp.ne.s32.totalorder %s334, %s335
      %p344 = scmp.eq.s32.totalorder %s30, 0
      %p345 = por %p343, %p344
      %p346 = scmp.ne.s32.totalorder %s334, %s335
      %p347 = scmp.eq.s32.totalorder %s31, 1
      %p348 = por %p346, %p347
      %p350 = scmp.ne.s32.totalorder %s335, %s349
      %p351 = scmp.eq.s32.totalorder %s31, 0
      %p352 = por %p350, %p351
      %s354 = sadd.s32 %s353, 1
      %p357 = scmp.eq.s32.totalorder %s25, 1
      %p358 = scmp.ne.s32.totalorder %s353, %s355
      %p359 = scmp.eq.s32.totalorder %s25, 0
      %p360 = por %p358, %p359
      %p361 = scmp.ne.s32.totalorder %s353, %s355
      %p362 = scmp.eq.s32.totalorder %s30, 1
      %p363 = por %p361, %p362
      %p364 = scmp.ne.s32.totalorder %s355, %s356
      %p365 = scmp.eq.s32.totalorder %s30, 0
      %p366 = por %p364, %p365
      %p367 = scmp.ne.s32.totalorder %s355, %s356
      %p368 = scmp.eq.s32.totalorder %s31, 1
      %p369 = por %p367, %p368
      %p371 = scmp.ne.s32.totalorder %s356, %s370
      %p372 = scmp.eq.s32.totalorder %s31, 0
      %p373 = por %p371, %p372
      %s374 = ssub.s32 %s25, %s32
      %p375 = scmp.eq.s32.totalorder %s374, 0
      %s377 = sadd.s32 %s376, 1
      %s378 = scalar_select %p375, %s376, %s377
      %p381 = pneg %p375
      %p382 = scmp.eq.s32.totalorder %s25, 1
      %p383 = por %p381, %p382
      %p384 = scmp.ne.s32.totalorder %s376, %s379
      %p385 = scmp.eq.s32.totalorder %s25, 0
      %p386 = por %p384, %p385
      %p387 = scmp.ne.s32.totalorder %s376, %s379
      %p388 = scmp.eq.s32.totalorder %s30, 1
      %p389 = por %p387, %p388
      %p390 = scmp.ne.s32.totalorder %s379, %s380
      %p391 = scmp.eq.s32.totalorder %s30, 0
      %p392 = por %p390, %p391
      %p393 = scmp.ne.s32.totalorder %s379, %s380
      %p394 = scmp.eq.s32.totalorder %s31, 1
      %p395 = por %p393, %p394
      %p397 = scmp.ne.s32.totalorder %s380, %s396
      %p398 = scmp.eq.s32.totalorder %s31, 0
      %p399 = por %p397, %p398
      %p400 = scmp.le.s32.totalorder 1, %s25
      %p401 = scmp.lt.s32.totalorder %s25, 3
      %p402 = pnand %p400, %p401
      %p403 = pneg %p402
      // Predicated region
      $region9: #{transformer_classifier.1} parent=5 // pred_check
        _
      $region10: #{transformer_classifier.1} parent=5 // pred_check_branch
        %405 = sbr.rel (%p402) target = $region12
      $region11: #{transformer_classifier.1} parent=5 // pred_region
        %s406 = ssub.s32 %s25, 1
        // Predicated region
        $region13: #{transformer_classifier.1} parent=11 // pred_check
          %p407 = pneg %p72
        $region14: #{transformer_classifier.1} parent=11 // pred_check_branch
          %409 = sbr.rel (%p407) target = $region16
        $region15: #{transformer_classifier.1} parent=11 // pred_region
          _
        $region16: #{transformer_classifier.1} parent=11 // pred_fallthru
          _
        // Predicated region
        $region17: #{transformer_classifier.1} parent=11 // pred_check
          %p410 = pneg %p93
        $region18: #{transformer_classifier.1} parent=11 // pred_check_branch
          %412 = sbr.rel (%p410) target = $region20
        $region19: #{transformer_classifier.1} parent=11 // pred_region
          _
        $region20: #{transformer_classifier.1} parent=11 // pred_fallthru
          _
        // Predicated region
        $region21: #{transformer_classifier.1} parent=11 // pred_check
          %p413 = pneg %p114
        $region22: #{transformer_classifier.1} parent=11 // pred_check_branch
          %415 = sbr.rel (%p413) target = $region24
        $region23: #{transformer_classifier.1} parent=11 // pred_region
          _
        $region24: #{transformer_classifier.1} parent=11 // pred_fallthru
          _
        // Predicated region
        $region25: #{transformer_classifier.1} parent=11 // pred_check
          %p416 = pneg %p135
        $region26: #{transformer_classifier.1} parent=11 // pred_check_branch
          %418 = sbr.rel (%p416) target = $region28
        $region27: #{transformer_classifier.1} parent=11 // pred_region
          _
        $region28: #{transformer_classifier.1} parent=11 // pred_fallthru
          _
        // Predicated region
        $region29: #{transformer_classifier.1} parent=11 // pred_check
          %p419 = pneg %p156
        $region30: #{transformer_classifier.1} parent=11 // pred_check_branch
          %421 = sbr.rel (%p419) target = $region32
        $region31: #{transformer_classifier.1} parent=11 // pred_region
          _
        $region32: #{transformer_classifier.1} parent=11 // pred_fallthru
          _
        // Predicated region
        $region33: #{transformer_classifier.1} parent=11 // pred_check
          %p422 = pneg %p177
        $region34: #{transformer_classifier.1} parent=11 // pred_check_branch
          %424 = sbr.rel (%p422) target = $region36
        $region35: #{transformer_classifier.1} parent=11 // pred_region
          _
        $region36: #{transformer_classifier.1} parent=11 // pred_fallthru
          _
        // Predicated region
        $region37: #{transformer_classifier.1} parent=11 // pred_check
          %p425 = pneg %p198
        $region38: #{transformer_classifier.1} parent=11 // pred_check_branch
          %427 = sbr.rel (%p425) target = $region40
        $region39: #{transformer_classifier.1} parent=11 // pred_region
          _
        $region40: #{transformer_classifier.1} parent=11 // pred_fallthru
          _
        // Predicated region
        $region41: #{transformer_classifier.1} parent=11 // pred_check
          %p428 = pneg %p219
        $region42: #{transformer_classifier.1} parent=11 // pred_check_branch
          %430 = sbr.rel (%p428) target = $region44
        $region43: #{transformer_classifier.1} parent=11 // pred_region
          _
        $region44: #{transformer_classifier.1} parent=11 // pred_fallthru
          _
        // Predicated region
        $region45: #{transformer_classifier.1} parent=11 // pred_check
          %p431 = pneg %p240
        $region46: #{transformer_classifier.1} parent=11 // pred_check_branch
          %433 = sbr.rel (%p431) target = $region48
        $region47: #{transformer_classifier.1} parent=11 // pred_region
          _
        $region48: #{transformer_classifier.1} parent=11 // pred_fallthru
          _
        // Predicated region
        $region49: #{transformer_classifier.1} parent=11 // pred_check
          %p434 = pneg %p261
        $region50: #{transformer_classifier.1} parent=11 // pred_check_branch
          %436 = sbr.rel (%p434) target = $region52
        $region51: #{transformer_classifier.1} parent=11 // pred_region
          _
        $region52: #{transformer_classifier.1} parent=11 // pred_fallthru
          _
        // Predicated region
        $region53: #{transformer_classifier.1} parent=11 // pred_check
          %p437 = pneg %p282
        $region54: #{transformer_classifier.1} parent=11 // pred_check_branch
          %439 = sbr.rel (%p437) target = $region56
        $region55: #{transformer_classifier.1} parent=11 // pred_region
          _
        $region56: #{transformer_classifier.1} parent=11 // pred_fallthru
          _
        // Predicated region
        $region57: #{transformer_classifier.1} parent=11 // pred_check
          %p440 = pneg %p303
        $region58: #{transformer_classifier.1} parent=11 // pred_check_branch
          %442 = sbr.rel (%p440) target = $region60
        $region59: #{transformer_classifier.1} parent=11 // pred_region
          _
        $region60: #{transformer_classifier.1} parent=11 // pred_fallthru
          _
        // Predicated region
        $region61: #{transformer_classifier.1} parent=11 // pred_check
          %p443 = pneg %p324
        $region62: #{transformer_classifier.1} parent=11 // pred_check_branch
          %445 = sbr.rel (%p443) target = $region64
        $region63: #{transformer_classifier.1} parent=11 // pred_region
          _
        $region64: #{transformer_classifier.1} parent=11 // pred_fallthru
          _
        // Predicated region
        $region65: #{transformer_classifier.1} parent=11 // pred_check
          %p446 = pneg %p345
        $region66: #{transformer_classifier.1} parent=11 // pred_check_branch
          %448 = sbr.rel (%p446) target = $region68
        $region67: #{transformer_classifier.1} parent=11 // pred_region
          _
        $region68: #{transformer_classifier.1} parent=11 // pred_fallthru
          _
        // Predicated region
        $region69: #{transformer_classifier.1} parent=11 // pred_check
          %p449 = pneg %p366
        $region70: #{transformer_classifier.1} parent=11 // pred_check_branch
          %451 = sbr.rel (%p449) target = $region72
        $region71: #{transformer_classifier.1} parent=11 // pred_region
          _
        $region72: #{transformer_classifier.1} parent=11 // pred_fallthru
          _
      $region12: #{transformer_classifier.1} parent=5 // pred_fallthru
        _
      %p452 = scmp.lt.s32.totalorder %s25, 2
      // Predicated region
      $region73: #{transformer_classifier.1} parent=5 // pred_check
        %p453 = pneg %p452
      $region74: #{transformer_classifier.1} parent=5 // pred_check_branch
        %455 = sbr.rel (%p453) target = $region76
      $region75: #{transformer_classifier.1} parent=5 // pred_region
        // Predicated region
        $region77: #{transformer_classifier.1} parent=75 // pred_check
          %p456 = pneg %p45
        $region78: #{transformer_classifier.1} parent=75 // pred_check_branch
          %458 = sbr.rel (%p456) target = $region80
        $region79: #{transformer_classifier.1} parent=75 // pred_region
          %p459 = scmp.lt.s32.totalorder %s25, 1
          %s460 = scalar_select %p459, %s25, 1
          %s461 = smul.addr %s460, 8
          %s462 = scalar_lea.vmem %s0, %s461
        $region80: #{transformer_classifier.1} parent=75 // pred_fallthru
          _
      $region76: #{transformer_classifier.1} parent=5 // pred_fallthru
        _
      %p463 = scmp.le.s32.totalorder 1, %s25
      %p464 = scmp.lt.s32.totalorder %s25, 3
      %p465 = pnand %p463, %p464
      %p466 = pneg %p465
      // Predicated region
      $region81: #{transformer_classifier.1} parent=5 // pred_check
        _
      $region82: #{transformer_classifier.1} parent=5 // pred_check_branch
        %468 = sbr.rel (%p465) target = $region84
      $region83: #{transformer_classifier.1} parent=5 // pred_region
        %s469 = ssub.s32 %s25, 1
        %p470 = scmp.lt.s32.totalorder %s30, 1
        %s471 = scalar_select %p470, %s30, 1
        %s472 = smul.addr %s471, 8
        %s473 = scalar_lea.vmem %s0, %s472
        %p474 = pneg %p51
        %p475 = pneg %p48
        %p476 = pneg %p72
        %p477 = pneg %p69
        %p478 = pneg %p93
        %p479 = pneg %p90
        %p480 = pneg %p114
        %p481 = pneg %p111
        %p482 = pneg %p135
        %p483 = pneg %p132
        %p484 = pneg %p156
        %p485 = pneg %p153
        %p486 = pneg %p177
        %p487 = pneg %p174
        %p488 = pneg %p198
        %p489 = pneg %p195
        %p490 = pneg %p219
        %p491 = pneg %p216
        %p492 = pneg %p240
        %p493 = pneg %p237
        %p494 = pneg %p261
        %p495 = pneg %p258
        %p496 = pneg %p282
        %p497 = pneg %p279
        %p498 = pneg %p303
        %p499 = pneg %p300
        %p500 = pneg %p324
        %p501 = pneg %p321
        %p502 = pneg %p345
        %p503 = pneg %p342
        %p504 = pneg %p366
        %p505 = pneg %p363
        %p506 = pneg %p392
        %p507 = pneg %p389
        %s508 = sand.u32 %s379, 1
        %s509 = scalar_lea.sflag [#allocation3], %s508
        %s510 = sand.u32 %s379, 1
        %s511 = scalar_lea.vmem [#allocation2], %s510
        %p512 = scmp.lt.s32.totalorder %s30, 1
        %s513 = scalar_select %p512, %s30, 1
        %s514 = smul.addr %s513, 8
        %s515 = scalar_lea.vmem %s0, %s514
        %v517 = vld [vmem:[%s515] sm:$0xff]
        %v518 = vld [vmem:[%s1] sm:$0xff]
        %v519 = vadd.f32 %v517, %v518
        %v520 = vld [vmem:[%s2] sm:$0xff]
        %v521 = vld [vmem:[%s2 + $0x8] sm:$0xff]
        %v522 = vld [vmem:[%s3] sm:$0x1]
        %v524 = vlaneseq
        %v525 = vshrl.u32 %v524, 7
        %v526 = vsub.s32 0, %v525
        %v527 = vrot.slane %v522, %v526
        %vm529 = vcmask 130048
        %v531 = vsel %vm529, %v519, 0
        %533 = vmatprep.subr.mxu0 0.0
        %534 = vmatpush1.msra.mxu0 %v520
        %535 = vmatprep.subr.mxu0 0.0
        %536 = vmatpush1.msra.mxu0 %v521
        %537 = vmatprep.subr.mxu0 0.0
        %538 = vmatpush1.msra.mxu0 0.0
        %539 = vmatprep.subr.mxu0 0.0
        %540 = vmatpush1.msra.mxu0 0.0
        %541 = vmatprep.subr.mxu0 0.0
        %542 = vmatpush1.msra.mxu0 0.0
        %543 = vmatprep.subr.mxu0 0.0
        %544 = vmatpush1.msra.mxu0 0.0
        %545 = vmatprep.subr.mxu0 0.0
        %546 = vmatpush1.msra.mxu0 0.0
        %547 = vmatprep.subr.mxu0 0.0
        %548 = vmatpush1.msra.mxu0 0.0
        %549 = vmatprep.subr.mxu0 0.0
        %550 = vmatpush1.msra.mxu0 0.0
        %551 = vmatprep.subr.mxu0 0.0
        %552 = vmatpush1.msra.mxu0 0.0
        %553 = vmatprep.subr.mxu0 0.0
        %554 = vmatpush1.msra.mxu0 0.0
        %555 = vmatprep.subr.mxu0 0.0
        %556 = vmatpush1.msra.mxu0 0.0
        %557 = vmatprep.subr.mxu0 0.0
        %558 = vmatpush1.msra.mxu0 0.0
        %559 = vmatprep.subr.mxu0 0.0
        %560 = vmatpush1.msra.mxu0 0.0
        %561 = vmatprep.subr.mxu0 0.0
        %562 = vmatpush1.msra.mxu0 0.0
        %563 = vmatprep.subr.mxu0 0.0
        %564 = vmatpush1.msra.mxu0 0.0
        %565 = vmatprep.subr.mxu0 0.0
        %566 = vmatpush1.msra.mxu0 0.0
        %567 = vmatprep.subr.mxu0 0.0
        %568 = vmatpush1.msra.mxu0 0.0
        %569 = vmatprep.subr.mxu0 0.0
        %570 = vmatpush1.msra.mxu0 0.0
        %571 = vmatprep.subr.mxu0 0.0
        %572 = vmatpush1.msra.mxu0 0.0
        %573 = vmatprep.subr.mxu0 0.0
        %574 = vmatpush1.msra.mxu0 0.0
        %575 = vmatprep.subr.mxu0 0.0
        %576 = vmatpush1.msra.mxu0 0.0
        %577 = vmatprep.subr.mxu0 0.0
        %578 = vmatpush1.msra.mxu0 0.0
        %579 = vmatprep.subr.mxu0 0.0
        %580 = vmatpush1.msra.mxu0 0.0
        %581 = vmatprep.subr.mxu0 0.0
        %582 = vmatpush1.msra.mxu0 0.0
        %583 = vmatprep.subr.mxu0 0.0
        %584 = vmatpush1.msra.mxu0 0.0
        %585 = vmatprep.subr.mxu0 0.0
        %586 = vmatpush1.msra.mxu0 0.0
        %587 = vmatprep.subr.mxu0 0.0
        %588 = vmatpush1.msra.mxu0 0.0
        %589 = vmatprep.subr.mxu0 0.0
        %590 = vmatpush1.msra.mxu0 0.0
        %591 = vmatprep.subr.mxu0 0.0
        %592 = vmatpush1.msra.mxu0 0.0
        %593 = vmatprep.subr.mxu0 0.0
        %594 = vmatpush1.msra.mxu0 0.0
        %595 = vmatprep.subr.mxu0 0.0
        %596 = vmatpush1.msra.mxu0 0.0
        %597 = vmatprep.mubr.f32.mxu0 0.0
        %598 = vmatmul.mubr.f32.gmra.mrb[0].mxu0 %v531
        %v599 = vpop.f32.mrb[0].mxu0
        %v600 = vadd.f32 %v527, %v599
        %v601 = vpop.f32.mrb[0].mxu0
        %602 = vdwg.mxu0
        %604 = vrot.lane.b32.xlu0 %v600, 112
        %v605 = vpop.permute.xlu0 %604
        %vm606 = vcmask 31744
        %v607 = vsel %vm606, %v600, 0
        %v609 = vsel %vm606, %v605, 0
        %611 = vmatprep.subr.mxu0 0.0
        %612 = vmatpush1.xpose.msra.mxu0 %v609
        %613 = vmatprep.subr.mxu0 0.0
        %614 = vmatpush1.xpose.msra.mxu0 0.0
        %615 = vmatprep.subr.mxu0 0.0
        %616 = vmatpush1.xpose.msra.mxu0 0.0
        %617 = vmatprep.subr.mxu0 0.0
        %618 = vmatpush1.xpose.msra.mxu0 0.0
        %619 = vmatprep.subr.mxu0 0.0
        %620 = vmatpush1.xpose.msra.mxu0 0.0
        %621 = vmatprep.subr.mxu0 0.0
        %622 = vmatpush1.xpose.msra.mxu0 0.0
        %623 = vmatprep.subr.mxu0 0.0
        %624 = vmatpush1.xpose.msra.mxu0 0.0
        %625 = vmatprep.subr.mxu0 0.0
        %626 = vmatpush1.xpose.msra.mxu0 0.0
        %627 = vmatprep.subr.mxu0 0.0
        %628 = vmatpush1.xpose.msra.mxu0 0.0
        %629 = vmatprep.subr.mxu0 0.0
        %630 = vmatpush1.xpose.msra.mxu0 0.0
        %631 = vmatprep.subr.mxu0 0.0
        %632 = vmatpush1.xpose.msra.mxu0 0.0
        %633 = vmatprep.subr.mxu0 0.0
        %634 = vmatpush1.xpose.msra.mxu0 0.0
        %635 = vmatprep.subr.mxu0 0.0
        %636 = vmatpush1.xpose.msra.mxu0 0.0
        %637 = vmatprep.subr.mxu0 0.0
        %638 = vmatpush1.xpose.msra.mxu0 0.0
        %639 = vmatprep.subr.mxu0 0.0
        %640 = vmatpush1.xpose.msra.mxu0 0.0
        %641 = vmatprep.subr.mxu0 0.0
        %642 = vmatpush1.xpose.msra.mxu0 0.0
        %643 = vmatprep.subr.mxu0 0.0
        %644 = vmatpush1.xpose.msra.mxu0 0.0
        %645 = vmatprep.subr.mxu0 0.0
        %646 = vmatpush1.xpose.msra.mxu0 0.0
        %647 = vmatprep.subr.mxu0 0.0
        %648 = vmatpush1.xpose.msra.mxu0 0.0
        %649 = vmatprep.subr.mxu0 0.0
        %650 = vmatpush1.xpose.msra.mxu0 0.0
        %651 = vmatprep.subr.mxu0 0.0
        %652 = vmatpush1.xpose.msra.mxu0 0.0
        %653 = vmatprep.subr.mxu0 0.0
        %654 = vmatpush1.xpose.msra.mxu0 0.0
        %655 = vmatprep.subr.mxu0 0.0
        %656 = vmatpush1.xpose.msra.mxu0 0.0
        %657 = vmatprep.subr.mxu0 0.0
        %658 = vmatpush1.xpose.msra.mxu0 0.0
        %659 = vmatprep.subr.mxu0 0.0
        %660 = vmatpush1.xpose.msra.mxu0 0.0
        %661 = vmatprep.subr.mxu0 0.0
        %662 = vmatpush1.xpose.msra.mxu0 0.0
        %663 = vmatprep.subr.mxu0 0.0
        %664 = vmatpush1.xpose.msra.mxu0 0.0
        %665 = vmatprep.subr.mxu0 0.0
        %666 = vmatpush1.xpose.msra.mxu0 0.0
        %667 = vmatprep.subr.mxu0 0.0
        %668 = vmatpush1.xpose.msra.mxu0 0.0
        %669 = vmatprep.subr.mxu0 0.0
        %670 = vmatpush1.xpose.msra.mxu0 0.0
        %671 = vmatprep.subr.mxu0 0.0
        %672 = vmatpush1.xpose.msra.mxu0 0.0
        %673 = vmatprep.subr.mxu0 0.0
        %674 = vmatpush1.xpose.msra.mxu0 0.0
        %675 = vmatprep.mubr.f32.mxu0 0.0
        %676 = vmatmul.mubr.f32.gmra.mrb[0].mxu0 %v607
        %v677 = vpop.f32.mrb[0].mxu0
        %v678 = vadd.f32 0.0, %v677
        %v679 = vpop.f32.mrb[0].mxu0
        %680 = vdwg.mxu0
        %vm681 = vcmask 64512
        %v682 = vsel %vm681, %v678, -inf
        %683 = vmax.xlane.f32.xlu0 %v682
        %v684 = vpop.xlane.xlu0 %683
        %v685 = vsub.f32 %v678, %v684
        %v686 = vmul.f32 %v685, 1.442695
        %v687 = vpow.pop %v686
        %v688 = vsel %vm681, %v687, 0.0
        %689 = vadd.xlane.f32.xlu0 %v688
        %v690 = vpop.xlane.xlu0 %689
        %v691 = vrcp.pop %v690
        %v692 = vmul.f32 %v687, %v691
        %693 = vrot.lane.b32.xlu0 %v600, 96
        %v694 = vpop.permute.xlu0 %693
        %v697 = vsel %vm681, %v692, 0
        %699 = vmatprep.subr.mxu0 0.0
        %700 = vmatpush1.msra.mxu0 %v694
        %701 = vmatprep.subr.mxu0 0.0
        %702 = vmatpush1.msra.mxu0 0.0
        %703 = vmatprep.subr.mxu0 0.0
        %704 = vmatpush1.msra.mxu0 0.0
        %705 = vmatprep.subr.mxu0 0.0
        %706 = vmatpush1.msra.mxu0 0.0
        %707 = vmatprep.subr.mxu0 0.0
        %708 = vmatpush1.msra.mxu0 0.0
        %709 = vmatprep.subr.mxu0 0.0
        %710 = vmatpush1.msra.mxu0 0.0
        %711 = vmatprep.subr.mxu0 0.0
        %712 = vmatpush1.msra.mxu0 0.0
        %713 = vmatprep.subr.mxu0 0.0
        %714 = vmatpush1.msra.mxu0 0.0
        %715 = vmatprep.subr.mxu0 0.0
        %716 = vmatpush1.msra.mxu0 0.0
        %717 = vmatprep.subr.mxu0 0.0
        %718 = vmatpush1.msra.mxu0 0.0
        %719 = vmatprep.subr.mxu0 0.0
        %720 = vmatpush1.msra.mxu0 0.0
        %721 = vmatprep.subr.mxu0 0.0
        %722 = vmatpush1.msra.mxu0 0.0
        %723 = vmatprep.subr.mxu0 0.0
        %724 = vmatpush1.msra.mxu0 0.0
        %725 = vmatprep.subr.mxu0 0.0
        %726 = vmatpush1.msra.mxu0 0.0
        %727 = vmatprep.subr.mxu0 0.0
        %728 = vmatpush1.msra.mxu0 0.0
        %729 = vmatprep.subr.mxu0 0.0
        %730 = vmatpush1.msra.mxu0 0.0
        %731 = vmatprep.subr.mxu0 0.0
        %732 = vmatpush1.msra.mxu0 0.0
        %733 = vmatprep.subr.mxu0 0.0
        %734 = vmatpush1.msra.mxu0 0.0
        %735 = vmatprep.subr.mxu0 0.0
        %736 = vmatpush1.msra.mxu0 0.0
        %737 = vmatprep.subr.mxu0 0.0
        %738 = vmatpush1.msra.mxu0 0.0
        %739 = vmatprep.subr.mxu0 0.0
        %740 = vmatpush1.msra.mxu0 0.0
        %741 = vmatprep.subr.mxu0 0.0
        %742 = vmatpush1.msra.mxu0 0.0
        %743 = vmatprep.subr.mxu0 0.0
        %744 = vmatpush1.msra.mxu0 0.0
        %745 = vmatprep.subr.mxu0 0.0
        %746 = vmatpush1.msra.mxu0 0.0
        %747 = vmatprep.subr.mxu0 0.0
        %748 = vmatpush1.msra.mxu0 0.0
        %749 = vmatprep.subr.mxu0 0.0
        %750 = vmatpush1.msra.mxu0 0.0
        %751 = vmatprep.subr.mxu0 0.0
        %752 = vmatpush1.msra.mxu0 0.0
        %753 = vmatprep.subr.mxu0 0.0
        %754 = vmatpush1.msra.mxu0 0.0
        %755 = vmatprep.subr.mxu0 0.0
        %756 = vmatpush1.msra.mxu0 0.0
        %757 = vmatprep.subr.mxu0 0.0
        %758 = vmatpush1.msra.mxu0 0.0
        %759 = vmatprep.subr.mxu0 0.0
        %760 = vmatpush1.msra.mxu0 0.0
        %761 = vmatprep.subr.mxu0 0.0
        %762 = vmatpush1.msra.mxu0 0.0
        %763 = vmatprep.mubr.f32.mxu0 0.0
        %764 = vmatmul.mubr.f32.gmra.mrb[0].mxu0 %v697
        %v765 = vpop.f32.mrb[0].mxu0
        %v766 = vadd.f32 0.0, %v765
        %v767 = vpop.f32.mrb[0].mxu0
        %768 = vdwg.mxu0
        %769 = vrot.lane.b32.xlu0 %v600, 124
        %v770 = vpop.permute.xlu0 %769
        %771 = vrot.lane.b32.xlu0 %v600, 108
        %v772 = vpop.permute.xlu0 %771
        %v773 = vsel %vm606, %v770, 0
        %v775 = vsel %vm606, %v772, 0
        %777 = vmatprep.subr.mxu0 0.0
        %778 = vmatpush1.xpose.msra.mxu0 %v775
        %779 = vmatprep.subr.mxu0 0.0
        %780 = vmatpush1.xpose.msra.mxu0 0.0
        %781 = vmatprep.subr.mxu0 0.0
        %782 = vmatpush1.xpose.msra.mxu0 0.0
        %783 = vmatprep.subr.mxu0 0.0
        %784 = vmatpush1.xpose.msra.mxu0 0.0
        %785 = vmatprep.subr.mxu0 0.0
        %786 = vmatpush1.xpose.msra.mxu0 0.0
        %787 = vmatprep.subr.mxu0 0.0
        %788 = vmatpush1.xpose.msra.mxu0 0.0
        %789 = vmatprep.subr.mxu0 0.0
        %790 = vmatpush1.xpose.msra.mxu0 0.0
        %791 = vmatprep.subr.mxu0 0.0
        %792 = vmatpush1.xpose.msra.mxu0 0.0
        %793 = vmatprep.subr.mxu0 0.0
        %794 = vmatpush1.xpose.msra.mxu0 0.0
        %795 = vmatprep.subr.mxu0 0.0
        %796 = vmatpush1.xpose.msra.mxu0 0.0
        %797 = vmatprep.subr.mxu0 0.0
        %798 = vmatpush1.xpose.msra.mxu0 0.0
        %799 = vmatprep.subr.mxu0 0.0
        %800 = vmatpush1.xpose.msra.mxu0 0.0
        %801 = vmatprep.subr.mxu0 0.0
        %802 = vmatpush1.xpose.msra.mxu0 0.0
        %803 = vmatprep.subr.mxu0 0.0
        %804 = vmatpush1.xpose.msra.mxu0 0.0
        %805 = vmatprep.subr.mxu0 0.0
        %806 = vmatpush1.xpose.msra.mxu0 0.0
        %807 = vmatprep.subr.mxu0 0.0
        %808 = vmatpush1.xpose.msra.mxu0 0.0
        %809 = vmatprep.subr.mxu0 0.0
        %810 = vmatpush1.xpose.msra.mxu0 0.0
        %811 = vmatprep.subr.mxu0 0.0
        %812 = vmatpush1.xpose.msra.mxu0 0.0
        %813 = vmatprep.subr.mxu0 0.0
        %814 = vmatpush1.xpose.msra.mxu0 0.0
        %815 = vmatprep.subr.mxu0 0.0
        %816 = vmatpush1.xpose.msra.mxu0 0.0
        %817 = vmatprep.subr.mxu0 0.0
        %818 = vmatpush1.xpose.msra.mxu0 0.0
        %819 = vmatprep.subr.mxu0 0.0
        %820 = vmatpush1.xpose.msra.mxu0 0.0
        %821 = vmatprep.subr.mxu0 0.0
        %822 = vmatpush1.xpose.msra.mxu0 0.0
        %823 = vmatprep.subr.mxu0 0.0
        %824 = vmatpush1.xpose.msra.mxu0 0.0
        %825 = vmatprep.subr.mxu0 0.0
        %826 = vmatpush1.xpose.msra.mxu0 0.0
        %827 = vmatprep.subr.mxu0 0.0
        %828 = vmatpush1.xpose.msra.mxu0 0.0
        %829 = vmatprep.subr.mxu0 0.0
        %830 = vmatpush1.xpose.msra.mxu0 0.0
        %831 = vmatprep.subr.mxu0 0.0
        %832 = vmatpush1.xpose.msra.mxu0 0.0
        %833 = vmatprep.subr.mxu0 0.0
        %834 = vmatpush1.xpose.msra.mxu0 0.0
        %835 = vmatprep.subr.mxu0 0.0
        %836 = vmatpush1.xpose.msra.mxu0 0.0
        %837 = vmatprep.subr.mxu0 0.0
        %838 = vmatpush1.xpose.msra.mxu0 0.0
        %839 = vmatprep.subr.mxu0 0.0
        %840 = vmatpush1.xpose.msra.mxu0 0.0
        %841 = vmatprep.mubr.f32.mxu0 0.0
        %842 = vmatmul.mubr.f32.gmra.mrb[0].mxu0 %v773
        %v843 = vpop.f32.mrb[0].mxu0
        %v844 = vadd.f32 0.0, %v843
        %v845 = vpop.f32.mrb[0].mxu0
        %846 = vdwg.mxu0
        %v847 = vsel %vm681, %v844, -inf
        %848 = vmax.xlane.f32.xlu0 %v847
        %v849 = vpop.xlane.xlu0 %848
        %v850 = vsub.f32 %v844, %v849
        %v851 = vmul.f32 %v850, 1.442695
        %v852 = vpow.pop %v851
        %v853 = vsel %vm681, %v852, 0.0
        %854 = vadd.xlane.f32.xlu0 %v853
        %v855 = vpop.xlane.xlu0 %854
        %v856 = vrcp.pop %v855
        %v857 = vmul.f32 %v852, %v856
        %858 = vrot.lane.b32.xlu0 %v600, 92
        %v859 = vpop.permute.xlu0 %858
        %v862 = vsel %vm681, %v857, 0
        %864 = vmatprep.subr.mxu0 0.0
        %865 = vmatpush1.msra.mxu0 %v859
        %866 = vmatprep.subr.mxu0 0.0
        %867 = vmatpush1.msra.mxu0 0.0
        %868 = vmatprep.subr.mxu0 0.0
        %869 = vmatpush1.msra.mxu0 0.0
        %870 = vmatprep.subr.mxu0 0.0
        %871 = vmatpush1.msra.mxu0 0.0
        %872 = vmatprep.subr.mxu0 0.0
        %873 = vmatpush1.msra.mxu0 0.0
        %874 = vmatprep.subr.mxu0 0.0
        %875 = vmatpush1.msra.mxu0 0.0
        %876 = vmatprep.subr.mxu0 0.0
        %877 = vmatpush1.msra.mxu0 0.0
        %878 = vmatprep.subr.mxu0 0.0
        %879 = vmatpush1.msra.mxu0 0.0
        %880 = vmatprep.subr.mxu0 0.0
        %881 = vmatpush1.msra.mxu0 0.0
        %882 = vmatprep.subr.mxu0 0.0
        %883 = vmatpush1.msra.mxu0 0.0
        %884 = vmatprep.subr.mxu0 0.0
        %885 = vmatpush1.msra.mxu0 0.0
        %886 = vmatprep.subr.mxu0 0.0
        %887 = vmatpush1.msra.mxu0 0.0
        %888 = vmatprep.subr.mxu0 0.0
        %889 = vmatpush1.msra.mxu0 0.0
        %890 = vmatprep.subr.mxu0 0.0
        %891 = vmatpush1.msra.mxu0 0.0
        %892 = vmatprep.subr.mxu0 0.0
        %893 = vmatpush1.msra.mxu0 0.0
        %894 = vmatprep.subr.mxu0 0.0
        %895 = vmatpush1.msra.mxu0 0.0
        %896 = vmatprep.subr.mxu0 0.0
        %897 = vmatpush1.msra.mxu0 0.0
        %898 = vmatprep.subr.mxu0 0.0
        %899 = vmatpush1.msra.mxu0 0.0
        %900 = vmatprep.subr.mxu0 0.0
        %901 = vmatpush1.msra.mxu0 0.0
        %902 = vmatprep.subr.mxu0 0.0
        %903 = vmatpush1.msra.mxu0 0.0
        %904 = vmatprep.subr.mxu0 0.0
        %905 = vmatpush1.msra.mxu0 0.0
        %906 = vmatprep.subr.mxu0 0.0
        %907 = vmatpush1.msra.mxu0 0.0
        %908 = vmatprep.subr.mxu0 0.0
        %909 = vmatpush1.msra.mxu0 0.0
        %910 = vmatprep.subr.mxu0 0.0
        %911 = vmatpush1.msra.mxu0 0.0
        %912 = vmatprep.subr.mxu0 0.0
        %913 = vmatpush1.msra.mxu0 0.0
        %914 = vmatprep.subr.mxu0 0.0
        %915 = vmatpush1.msra.mxu0 0.0
        %916 = vmatprep.subr.mxu0 0.0
        %917 = vmatpush1.msra.mxu0 0.0
        %918 = vmatprep.subr.mxu0 0.0
        %919 = vmatpush1.msra.mxu0 0.0
        %920 = vmatprep.subr.mxu0 0.0
        %921 = vmatpush1.msra.mxu0 0.0
        %922 = vmatprep.subr.mxu0 0.0
        %923 = vmatpush1.msra.mxu0 0.0
        %924 = vmatprep.subr.mxu0 0.0
        %925 = vmatpush1.msra.mxu0 0.0
        %926 = vmatprep.subr.mxu0 0.0
        %927 = vmatpush1.msra.mxu0 0.0
        %928 = vmatprep.mubr.f32.mxu0 0.0
        %929 = vmatmul.mubr.f32.gmra.mrb[0].mxu0 %v862
        %v930 = vpop.f32.mrb[0].mxu0
        %v931 = vadd.f32 0.0, %v930
        %v932 = vpop.f32.mrb[0].mxu0
        %933 = vdwg.mxu0
        %934 = vrot.lane.b32.xlu0 %v600, 120
        %v935 = vpop.permute.xlu0 %934
        %936 = vrot.lane.b32.xlu0 %v600, 104
        %v937 = vpop.permute.xlu0 %936
        %v938 = vsel %vm606, %v935, 0
        %v940 = vsel %vm606, %v937, 0
        %942 = vmatprep.subr.mxu0 0.0
        %943 = vmatpush1.xpose.msra.mxu0 %v940
        %944 = vmatprep.subr.mxu0 0.0
        %945 = vmatpush1.xpose.msra.mxu0 0.0
        %946 = vmatprep.subr.mxu0 0.0
        %947 = vmatpush1.xpose.msra.mxu0 0.0
        %948 = vmatprep.subr.mxu0 0.0
        %949 = vmatpush1.xpose.msra.mxu0 0.0
        %950 = vmatprep.subr.mxu0 0.0
        %951 = vmatpush1.xpose.msra.mxu0 0.0
        %952 = vmatprep.subr.mxu0 0.0
        %953 = vmatpush1.xpose.msra.mxu0 0.0
        %954 = vmatprep.subr.mxu0 0.0
        %955 = vmatpush1.xpose.msra.mxu0 0.0
        %956 = vmatprep.subr.mxu0 0.0
        %957 = vmatpush1.xpose.msra.mxu0 0.0
        %958 = vmatprep.subr.mxu0 0.0
        %959 = vmatpush1.xpose.msra.mxu0 0.0
        %960 = vmatprep.subr.mxu0 0.0
        %961 = vmatpush1.xpose.msra.mxu0 0.0
        %962 = vmatprep.subr.mxu0 0.0
        %963 = vmatpush1.xpose.msra.mxu0 0.0
        %964 = vmatprep.subr.mxu0 0.0
        %965 = vmatpush1.xpose.msra.mxu0 0.0
        %966 = vmatprep.subr.mxu0 0.0
        %967 = vmatpush1.xpose.msra.mxu0 0.0
        %968 = vmatprep.subr.mxu0 0.0
        %969 = vmatpush1.xpose.msra.mxu0 0.0
        %970 = vmatprep.subr.mxu0 0.0
        %971 = vmatpush1.xpose.msra.mxu0 0.0
        %972 = vmatprep.subr.mxu0 0.0
        %973 = vmatpush1.xpose.msra.mxu0 0.0
        %974 = vmatprep.subr.mxu0 0.0
        %975 = vmatpush1.xpose.msra.mxu0 0.0
        %976 = vmatprep.subr.mxu0 0.0
        %977 = vmatpush1.xpose.msra.mxu0 0.0
        %978 = vmatprep.subr.mxu0 0.0
        %979 = vmatpush1.xpose.msra.mxu0 0.0
        %980 = vmatprep.subr.mxu0 0.0
        %981 = vmatpush1.xpose.msra.mxu0 0.0
        %982 = vmatprep.subr.mxu0 0.0
        %983 = vmatpush1.xpose.msra.mxu0 0.0
        %984 = vmatprep.subr.mxu0 0.0
        %985 = vmatpush1.xpose.msra.mxu0 0.0
        %986 = vmatprep.subr.mxu0 0.0
        %987 = vmatpush1.xpose.msra.mxu0 0.0
        %988 = vmatprep.subr.mxu0 0.0
        %989 = vmatpush1.xpose.msra.mxu0 0.0
        %990 = vmatprep.subr.mxu0 0.0
        %991 = vmatpush1.xpose.msra.mxu0 0.0
        %992 = vmatprep.subr.mxu0 0.0
        %993 = vmatpush1.xpose.msra.mxu0 0.0
        %994 = vmatprep.subr.mxu0 0.0
        %995 = vmatpush1.xpose.msra.mxu0 0.0
        %996 = vmatprep.subr.mxu0 0.0
        %997 = vmatpush1.xpose.msra.mxu0 0.0
        %998 = vmatprep.subr.mxu0 0.0
        %999 = vmatpush1.xpose.msra.mxu0 0.0
        %1000 = vmatprep.subr.mxu0 0.0
        %1001 = vmatpush1.xpose.msra.mxu0 0.0
        %1002 = vmatprep.subr.mxu0 0.0
        %1003 = vmatpush1.xpose.msra.mxu0 0.0
        %1004 = vmatprep.subr.mxu0 0.0
        %1005 = vmatpush1.xpose.msra.mxu0 0.0
        %1006 = vmatprep.mubr.f32.mxu0 0.0
        %1007 = vmatmul.mubr.f32.gmra.mrb[0].mxu0 %v938
        %v1008 = vpop.f32.mrb[0].mxu0
        %v1009 = vadd.f32 0.0, %v1008
        %v1010 = vpop.f32.mrb[0].mxu0
        %1011 = vdwg.mxu0
        %v1012 = vsel %vm681, %v1009, -inf
        %1013 = vmax.xlane.f32.xlu0 %v1012
        %v1014 = vpop.xlane.xlu0 %1013
        %v1015 = vsub.f32 %v1009, %v1014
        %v1016 = vmul.f32 %v1015, 1.442695
        %v1017 = vpow.pop %v1016
        %v1018 = vsel %vm681, %v1017, 0.0
        %1019 = vadd.xlane.f32.xlu0 %v1018
        %v1020 = vpop.xlane.xlu0 %1019
        %v1021 = vrcp.pop %v1020
        %v1022 = vmul.f32 %v1017, %v1021
        %1023 = vrot.lane.b32.xlu0 %v600, 88
        %v1024 = vpop.permute.xlu0 %1023
        %v1027 = vsel %vm681, %v1022, 0
        %1029 = vmatprep.subr.mxu0 0.0
        %1030 = vmatpush1.msra.mxu0 %v1024
        %1031 = vmatprep.subr.mxu0 0.0
        %1032 = vmatpush1.msra.mxu0 0.0
        %1033 = vmatprep.subr.mxu0 0.0
        %1034 = vmatpush1.msra.mxu0 0.0
        %1035 = vmatprep.subr.mxu0 0.0
        %1036 = vmatpush1.msra.mxu0 0.0
        %1037 = vmatprep.subr.mxu0 0.0
        %1038 = vmatpush1.msra.mxu0 0.0
        %1039 = vmatprep.subr.mxu0 0.0
        %1040 = vmatpush1.msra.mxu0 0.0
        %1041 = vmatprep.subr.mxu0 0.0
        %1042 = vmatpush1.msra.mxu0 0.0
        %1043 = vmatprep.subr.mxu0 0.0
        %1044 = vmatpush1.msra.mxu0 0.0
        %1045 = vmatprep.subr.mxu0 0.0
        %1046 = vmatpush1.msra.mxu0 0.0
        %1047 = vmatprep.subr.mxu0 0.0
        %1048 = vmatpush1.msra.mxu0 0.0
        %1049 = vmatprep.subr.mxu0 0.0
        %1050 = vmatpush1.msra.mxu0 0.0
        %1051 = vmatprep.subr.mxu0 0.0
        %1052 = vmatpush1.msra.mxu0 0.0
        %1053 = vmatprep.subr.mxu0 0.0
        %1054 = vmatpush1.msra.mxu0 0.0
        %1055 = vmatprep.subr.mxu0 0.0
        %1056 = vmatpush1.msra.mxu0 0.0
        %1057 = vmatprep.subr.mxu0 0.0
        %1058 = vmatpush1.msra.mxu0 0.0
        %1059 = vmatprep.subr.mxu0 0.0
        %1060 = vmatpush1.msra.mxu0 0.0
        %1061 = vmatprep.subr.mxu0 0.0
        %1062 = vmatpush1.msra.mxu0 0.0
        %1063 = vmatprep.subr.mxu0 0.0
        %1064 = vmatpush1.msra.mxu0 0.0
        %1065 = vmatprep.subr.mxu0 0.0
        %1066 = vmatpush1.msra.mxu0 0.0
        %1067 = vmatprep.subr.mxu0 0.0
        %1068 = vmatpush1.msra.mxu0 0.0
        %1069 = vmatprep.subr.mxu0 0.0
        %1070 = vmatpush1.msra.mxu0 0.0
        %1071 = vmatprep.subr.mxu0 0.0
        %1072 = vmatpush1.msra.mxu0 0.0
        %1073 = vmatprep.subr.mxu0 0.0
        %1074 = vmatpush1.msra.mxu0 0.0
        %1075 = vmatprep.subr.mxu0 0.0
        %1076 = vmatpush1.msra.mxu0 0.0
        %1077 = vmatprep.subr.mxu0 0.0
        %1078 = vmatpush1.msra.mxu0 0.0
        %1079 = vmatprep.subr.mxu0 0.0
        %1080 = vmatpush1.msra.mxu0 0.0
        %1081 = vmatprep.subr.mxu0 0.0
        %1082 = vmatpush1.msra.mxu0 0.0
        %1083 = vmatprep.subr.mxu0 0.0
        %1084 = vmatpush1.msra.mxu0 0.0
        %1085 = vmatprep.subr.mxu0 0.0
        %1086 = vmatpush1.msra.mxu0 0.0
        %1087 = vmatprep.subr.mxu0 0.0
        %1088 = vmatpush1.msra.mxu0 0.0
        %1089 = vmatprep.subr.mxu0 0.0
        %1090 = vmatpush1.msra.mxu0 0.0
        %1091 = vmatprep.subr.mxu0 0.0
        %1092 = vmatpush1.msra.mxu0 0.0
        %1093 = vmatprep.mubr.f32.mxu0 0.0
        %1094 = vmatmul.mubr.f32.gmra.mrb[0].mxu0 %v1027
        %v1095 = vpop.f32.mrb[0].mxu0
        %v1096 = vadd.f32 0.0, %v1095
        %v1097 = vpop.f32.mrb[0].mxu0
        %1098 = vdwg.mxu0
        %1099 = vrot.lane.b32.xlu0 %v600, 116
        %v1100 = vpop.permute.xlu0 %1099
        %1101 = vrot.lane.b32.xlu0 %v600, 100
        %v1102 = vpop.permute.xlu0 %1101
        %v1103 = vsel %vm606, %v1100, 0
        %v1105 = vsel %vm606, %v1102, 0
        %1107 = vmatprep.subr.mxu0 0.0
        %1108 = vmatpush1.xpose.msra.mxu0 %v1105
        %1109 = vmatprep.subr.mxu0 0.0
        %1110 = vmatpush1.xpose.msra.mxu0 0.0
        %1111 = vmatprep.subr.mxu0 0.0
        %1112 = vmatpush1.xpose.msra.mxu0 0.0
        %1113 = vmatprep.subr.mxu0 0.0
        %1114 = vmatpush1.xpose.msra.mxu0 0.0
        %1115 = vmatprep.subr.mxu0 0.0
        %1116 = vmatpush1.xpose.msra.mxu0 0.0
        %1117 = vmatprep.subr.mxu0 0.0
        %1118 = vmatpush1.xpose.msra.mxu0 0.0
        %1119 = vmatprep.subr.mxu0 0.0
        %1120 = vmatpush1.xpose.msra.mxu0 0.0
        %1121 = vmatprep.subr.mxu0 0.0
        %1122 = vmatpush1.xpose.msra.mxu0 0.0
        %1123 = vmatprep.subr.mxu0 0.0
        %1124 = vmatpush1.xpose.msra.mxu0 0.0
        %1125 = vmatprep.subr.mxu0 0.0
        %1126 = vmatpush1.xpose.msra.mxu0 0.0
        %1127 = vmatprep.subr.mxu0 0.0
        %1128 = vmatpush1.xpose.msra.mxu0 0.0
        %1129 = vmatprep.subr.mxu0 0.0
        %1130 = vmatpush1.xpose.msra.mxu0 0.0
        %1131 = vmatprep.subr.mxu0 0.0
        %1132 = vmatpush1.xpose.msra.mxu0 0.0
        %1133 = vmatprep.subr.mxu0 0.0
        %1134 = vmatpush1.xpose.msra.mxu0 0.0
        %1135 = vmatprep.subr.mxu0 0.0
        %1136 = vmatpush1.xpose.msra.mxu0 0.0
        %1137 = vmatprep.subr.mxu0 0.0
        %1138 = vmatpush1.xpose.msra.mxu0 0.0
        %1139 = vmatprep.subr.mxu0 0.0
        %1140 = vmatpush1.xpose.msra.mxu0 0.0
        %1141 = vmatprep.subr.mxu0 0.0
        %1142 = vmatpush1.xpose.msra.mxu0 0.0
        %1143 = vmatprep.subr.mxu0 0.0
        %1144 = vmatpush1.xpose.msra.mxu0 0.0
        %1145 = vmatprep.subr.mxu0 0.0
        %1146 = vmatpush1.xpose.msra.mxu0 0.0
        %1147 = vmatprep.subr.mxu0 0.0
        %1148 = vmatpush1.xpose.msra.mxu0 0.0
        %1149 = vmatprep.subr.mxu0 0.0
        %1150 = vmatpush1.xpose.msra.mxu0 0.0
        %1151 = vmatprep.subr.mxu0 0.0
        %1152 = vmatpush1.xpose.msra.mxu0 0.0
        %1153 = vmatprep.subr.mxu0 0.0
        %1154 = vmatpush1.xpose.msra.mxu0 0.0
        %1155 = vmatprep.subr.mxu0 0.0
        %1156 = vmatpush1.xpose.msra.mxu0 0.0
        %1157 = vmatprep.subr.mxu0 0.0
        %1158 = vmatpush1.xpose.msra.mxu0 0.0
        %1159 = vmatprep.subr.mxu0 0.0
        %1160 = vmatpush1.xpose.msra.mxu0 0.0
        %1161 = vmatprep.subr.mxu0 0.0
        %1162 = vmatpush1.xpose.msra.mxu0 0.0
        %1163 = vmatprep.subr.mxu0 0.0
        %1164 = vmatpush1.xpose.msra.mxu0 0.0
        %1165 = vmatprep.subr.mxu0 0.0
        %1166 = vmatpush1.xpose.msra.mxu0 0.0
        %1167 = vmatprep.subr.mxu0 0.0
        %1168 = vmatpush1.xpose.msra.mxu0 0.0
        %1169 = vmatprep.subr.mxu0 0.0
        %1170 = vmatpush1.xpose.msra.mxu0 0.0
        %1171 = vmatprep.mubr.f32.mxu0 0.0
        %1172 = vmatmul.mubr.f32.gmra.mrb[0].mxu0 %v1103
        %v1173 = vpop.f32.mrb[0].mxu0
        %v1174 = vadd.f32 0.0, %v1173
        %v1175 = vpop.f32.mrb[0].mxu0
        %1176 = vdwg.mxu0
        %v1177 = vsel %vm681, %v1174, -inf
        %1178 = vmax.xlane.f32.xlu0 %v1177
        %v1179 = vpop.xlane.xlu0 %1178
        %v1180 = vsub.f32 %v1174, %v1179
        %v1181 = vmul.f32 %v1180, 1.442695
        %v1182 = vpow.pop %v1181
        %v1183 = vsel %vm681, %v1182, 0.0
        %1184 = vadd.xlane.f32.xlu0 %v1183
        %v1185 = vpop.xlane.xlu0 %1184
        %v1186 = vrcp.pop %v1185
        %v1187 = vmul.f32 %v1182, %v1186
        %1188 = vrot.lane.b32.xlu0 %v600, 84
        %v1189 = vpop.permute.xlu0 %1188
        %v1192 = vsel %vm681, %v1187, 0
        %1194 = vmatprep.subr.mxu0 0.0
        %1195 = vmatpush1.msra.mxu0 %v1189
        %1196 = vmatprep.subr.mxu0 0.0
        %1197 = vmatpush1.msra.mxu0 0.0
        %1198 = vmatprep.subr.mxu0 0.0
        %1199 = vmatpush1.msra.mxu0 0.0
        %1200 = vmatprep.subr.mxu0 0.0
        %1201 = vmatpush1.msra.mxu0 0.0
        %1202 = vmatprep.subr.mxu0 0.0
        %1203 = vmatpush1.msra.mxu0 0.0
        %1204 = vmatprep.subr.mxu0 0.0
        %1205 = vmatpush1.msra.mxu0 0.0
        %1206 = vmatprep.subr.mxu0 0.0
        %1207 = vmatpush1.msra.mxu0 0.0
        %1208 = vmatprep.subr.mxu0 0.0
        %1209 = vmatpush1.msra.mxu0 0.0
        %1210 = vmatprep.subr.mxu0 0.0
        %1211 = vmatpush1.msra.mxu0 0.0
        %1212 = vmatprep.subr.mxu0 0.0
        %1213 = vmatpush1.msra.mxu0 0.0
        %1214 = vmatprep.subr.mxu0 0.0
        %1215 = vmatpush1.msra.mxu0 0.0
        %1216 = vmatprep.subr.mxu0 0.0
        %1217 = vmatpush1.msra.mxu0 0.0
        %1218 = vmatprep.subr.mxu0 0.0
        %1219 = vmatpush1.msra.mxu0 0.0
        %1220 = vmatprep.subr.mxu0 0.0
        %1221 = vmatpush1.msra.mxu0 0.0
        %1222 = vmatprep.subr.mxu0 0.0
        %1223 = vmatpush1.msra.mxu0 0.0
        %1224 = vmatprep.subr.mxu0 0.0
        %1225 = vmatpush1.msra.mxu0 0.0
        %1226 = vmatprep.subr.mxu0 0.0
        %1227 = vmatpush1.msra.mxu0 0.0
        %1228 = vmatprep.subr.mxu0 0.0
        %1229 = vmatpush1.msra.mxu0 0.0
        %1230 = vmatprep.subr.mxu0 0.0
        %1231 = vmatpush1.msra.mxu0 0.0
        %1232 = vmatprep.subr.mxu0 0.0
        %1233 = vmatpush1.msra.mxu0 0.0
        %1234 = vmatprep.subr.mxu0 0.0
        %1235 = vmatpush1.msra.mxu0 0.0
        %1236 = vmatprep.subr.mxu0 0.0
        %1237 = vmatpush1.msra.mxu0 0.0
        %1238 = vmatprep.subr.mxu0 0.0
        %1239 = vmatpush1.msra.mxu0 0.0
        %1240 = vmatprep.subr.mxu0 0.0
        %1241 = vmatpush1.msra.mxu0 0.0
        %1242 = vmatprep.subr.mxu0 0.0
        %1243 = vmatpush1.msra.mxu0 0.0
        %1244 = vmatprep.subr.mxu0 0.0
        %1245 = vmatpush1.msra.mxu0 0.0
        %1246 = vmatprep.subr.mxu0 0.0
        %1247 = vmatpush1.msra.mxu0 0.0
        %1248 = vmatprep.subr.mxu0 0.0
        %1249 = vmatpush1.msra.mxu0 0.0
        %1250 = vmatprep.subr.mxu0 0.0
        %1251 = vmatpush1.msra.mxu0 0.0
        %1252 = vmatprep.subr.mxu0 0.0
        %1253 = vmatpush1.msra.mxu0 0.0
        %1254 = vmatprep.subr.mxu0 0.0
        %1255 = vmatpush1.msra.mxu0 0.0
        %1256 = vmatprep.subr.mxu0 0.0
        %1257 = vmatpush1.msra.mxu0 0.0
        %1258 = vmatprep.mubr.f32.mxu0 0.0
        %1259 = vmatmul.mubr.f32.gmra.mrb[0].mxu0 %v1192
        %v1260 = vpop.f32.mrb[0].mxu0
        %v1261 = vadd.f32 0.0, %v1260
        %v1262 = vpop.f32.mrb[0].mxu0
        %1263 = vdwg.mxu0
        %1265 = vrot.lane.b32.xlu0 %v931, 4
        %v1266 = vpop.permute.xlu0 %1265
        %1269 = vrot.lane.b32.xlu0 %v1096, 8
        %v1270 = vpop.permute.xlu0 %1269
        %1273 = vrot.lane.b32.xlu0 %v1261, 12
        %v1274 = vpop.permute.xlu0 %1273
        %v1276 = vsel %vm606, %v766, %v1266
        %v1277 = vsel %vm681, %v1276, %v1270
        %vm1278 = vcmask 97280
        %v1279 = vsel %vm1278, %v1277, %v1274
        %v1280 = vld [vmem:[%s4] sm:$0xff]
        %v1281 = vld [vmem:[%s4 + $0x8] sm:$0xff]
        %v1282 = vld [vmem:[%s5] sm:$0x1]
        %v1284 = vlaneseq
        %v1285 = vshrl.u32 %v1284, 7
        %v1286 = vsub.s32 0, %v1285
        %v1287 = vrot.slane %v1282, %v1286
        %v1290 = vsel %vm529, %v1279, 0
        %1292 = vmatprep.subr.mxu0 0.0
        %1293 = vmatpush1.msra.mxu0 %v1280
        %1294 = vmatprep.subr.mxu0 0.0
        %1295 = vmatpush1.msra.mxu0 %v1281
        %1296 = vmatprep.subr.mxu0 0.0
        %1297 = vmatpush1.msra.mxu0 0.0
        %1298 = vmatprep.subr.mxu0 0.0
        %1299 = vmatpush1.msra.mxu0 0.0
        %1300 = vmatprep.subr.mxu0 0.0
        %1301 = vmatpush1.msra.mxu0 0.0
        %1302 = vmatprep.subr.mxu0 0.0
        %1303 = vmatpush1.msra.mxu0 0.0
        %1304 = vmatprep.subr.mxu0 0.0
        %1305 = vmatpush1.msra.mxu0 0.0
        %1306 = vmatprep.subr.mxu0 0.0
        %1307 = vmatpush1.msra.mxu0 0.0
        %1308 = vmatprep.subr.mxu0 0.0
        %1309 = vmatpush1.msra.mxu0 0.0
        %1310 = vmatprep.subr.mxu0 0.0
        %1311 = vmatpush1.msra.mxu0 0.0
        %1312 = vmatprep.subr.mxu0 0.0
        %1313 = vmatpush1.msra.mxu0 0.0
        %1314 = vmatprep.subr.mxu0 0.0
        %1315 = vmatpush1.msra.mxu0 0.0
        %1316 = vmatprep.subr.mxu0 0.0
        %1317 = vmatpush1.msra.mxu0 0.0
        %1318 = vmatprep.subr.mxu0 0.0
        %1319 = vmatpush1.msra.mxu0 0.0
        %1320 = vmatprep.subr.mxu0 0.0
        %1321 = vmatpush1.msra.mxu0 0.0
        %1322 = vmatprep.subr.mxu0 0.0
        %1323 = vmatpush1.msra.mxu0 0.0
        %1324 = vmatprep.subr.mxu0 0.0
        %1325 = vmatpush1.msra.mxu0 0.0
        %1326 = vmatprep.subr.mxu0 0.0
        %1327 = vmatpush1.msra.mxu0 0.0
        %1328 = vmatprep.subr.mxu0 0.0
        %1329 = vmatpush1.msra.mxu0 0.0
        %1330 = vmatprep.subr.mxu0 0.0
        %1331 = vmatpush1.msra.mxu0 0.0
        %1332 = vmatprep.subr.mxu0 0.0
        %1333 = vmatpush1.msra.mxu0 0.0
        %1334 = vmatprep.subr.mxu0 0.0
        %1335 = vmatpush1.msra.mxu0 0.0
        %1336 = vmatprep.subr.mxu0 0.0
        %1337 = vmatpush1.msra.mxu0 0.0
        %1338 = vmatprep.subr.mxu0 0.0
        %1339 = vmatpush1.msra.mxu0 0.0
        %1340 = vmatprep.subr.mxu0 0.0
        %1341 = vmatpush1.msra.mxu0 0.0
        %1342 = vmatprep.subr.mxu0 0.0
        %1343 = vmatpush1.msra.mxu0 0.0
        %1344 = vmatprep.subr.mxu0 0.0
        %1345 = vmatpush1.msra.mxu0 0.0
        %1346 = vmatprep.subr.mxu0 0.0
        %1347 = vmatpush1.msra.mxu0 0.0
        %1348 = vmatprep.subr.mxu0 0.0
        %1349 = vmatpush1.msra.mxu0 0.0
        %1350 = vmatprep.subr.mxu0 0.0
        %1351 = vmatpush1.msra.mxu0 0.0
        %1352 = vmatprep.subr.mxu0 0.0
        %1353 = vmatpush1.msra.mxu0 0.0
        %1354 = vmatprep.subr.mxu0 0.0
        %1355 = vmatpush1.msra.mxu0 0.0
        %1356 = vmatprep.mubr.f32.mxu0 0.0
        %1357 = vmatmul.mubr.f32.gmra.mrb[0].mxu0 %v1290
        %v1358 = vpop.f32.mrb[0].mxu0
        %v1359 = vadd.f32 %v1287, %v1358
        %v1360 = vpop.f32.mrb[0].mxu0
        %1361 = vdwg.mxu0
        %v1362 = vadd.f32 %v519, %v1359
        %v1363 = vld [vmem:[%s6] sm:$0x1]
        %v1364 = vld [vmem:[%s7] sm:$0x1]
        %v1365 = vsel %vm529, %v1362, 0.0
        %1366 = vadd.xlane.f32.xlu0 %v1365
        %v1367 = vpop.xlane.xlu0 %1366
        %v1368 = vrcp.pop 16.0
        %v1369 = vmul.f32 %v1367, %v1368
        %v1370 = vsub.f32 %v1362, %v1369
        %v1371 = vmul.f32 %v1370, %v1370
        %v1372 = vsel %vm529, %v1371, 0.0
        %1373 = vadd.xlane.f32.xlu0 %v1372
        %v1374 = vpop.xlane.xlu0 %1373
        %v1375 = vmul.f32 %v1374, %v1368
        %v1376 = vadd.f32 %v1375, 1e-05
        %v1377 = vrsqrt.pop %v1376
        %v1378 = vmul.f32 %v1370, %v1377
        %v1380 = vlaneseq
        %v1381 = vshrl.u32 %v1380, 7
        %v1382 = vsub.s32 0, %v1381
        %v1383 = vrot.slane %v1363, %v1382
        %v1385 = vmul.f32 %v1378, %v1383
        %v1387 = vlaneseq
        %v1388 = vshrl.u32 %v1387, 7
        %v1389 = vsub.s32 0, %v1388
        %v1390 = vrot.slane %v1364, %v1389
        %v1392 = vadd.f32 %v1385, %v1390
        %v1393 = vpack.c.bf16 %v1392, %v1392
        %v1394 = vld [vmem:[%s8] sm:$0xff]
        %v1395 = vld [vmem:[%s8 + $0x8] sm:$0xff]
        %v1396 = vld [vmem:[%s8 + $0x40] sm:$0xff]
        %v1397 = vld [vmem:[%s8 + $0x48] sm:$0xff]
        %v1398 = vld [vmem:[%s9] sm:$0xf]
        %v1399 = vld [vmem:[%s10] sm:$0xf]
        %v1400 = vld [vmem:[%s10 + $0x4] sm:$0xf]
        %v1401 = vld [vmem:[%s10 + $0x8] sm:$0xf]
        %v1402 = vld [vmem:[%s10 + $0xc] sm:$0xf]
        %v1403 = vld [vmem:[%s10 + $0x10] sm:$0xf]
        %v1404 = vld [vmem:[%s10 + $0x14] sm:$0xf]
        %v1405 = vld [vmem:[%s10 + $0x18] sm:$0xf]
        %v1406 = vld [vmem:[%s10 + $0x1c] sm:$0xf]
        %v1407 = vld [vmem:[%s10 + $0x20] sm:$0xf]
        %v1408 = vld [vmem:[%s10 + $0x24] sm:$0xf]
        %v1409 = vld [vmem:[%s10 + $0x28] sm:$0xf]
        %v1410 = vld [vmem:[%s10 + $0x2c] sm:$0xf]
        %v1411 = vld [vmem:[%s10 + $0x30] sm:$0xf]
        %v1412 = vld [vmem:[%s10 + $0x34] sm:$0xf]
        %v1413 = vld [vmem:[%s10 + $0x38] sm:$0xf]
        %v1414 = vld [vmem:[%s10 + $0x3c] sm:$0xf]
        %v1415 = vld [vmem:[%s10 + $0x40] sm:$0xf]
        %v1416 = vld [vmem:[%s10 + $0x44] sm:$0xf]
        %v1417 = vld [vmem:[%s10 + $0x48] sm:$0xf]
        %v1418 = vld [vmem:[%s10 + $0x4c] sm:$0xf]
        %v1419 = vld [vmem:[%s10 + $0x50] sm:$0xf]
        %v1420 = vld [vmem:[%s10 + $0x54] sm:$0xf]
        %v1421 = vld [vmem:[%s10 + $0x58] sm:$0xf]
        %v1422 = vld [vmem:[%s10 + $0x5c] sm:$0xf]
        %v1423 = vld [vmem:[%s10 + $0x60] sm:$0xf]
        %v1424 = vld [vmem:[%s10 + $0x64] sm:$0xf]
        %v1425 = vld [vmem:[%s10 + $0x68] sm:$0xf]
        %v1426 = vld [vmem:[%s10 + $0x6c] sm:$0xf]
        %v1427 = vld [vmem:[%s10 + $0x70] sm:$0xf]
        %v1428 = vld [vmem:[%s10 + $0x74] sm:$0xf]
        %v1429 = vld [vmem:[%s10 + $0x78] sm:$0xf]
        %v1430 = vld [vmem:[%s10 + $0x7c] sm:$0xf]
        %v1431 = vld [vmem:[%s10 + $0x80] sm:$0xf]
        %v1432 = vld [vmem:[%s10 + $0x84] sm:$0xf]
        %v1433 = vld [vmem:[%s10 + $0x88] sm:$0xf]
        %v1434 = vld [vmem:[%s10 + $0x8c] sm:$0xf]
        %v1435 = vld [vmem:[%s10 + $0x90] sm:$0xf]
        %v1436 = vld [vmem:[%s10 + $0x94] sm:$0xf]
        %v1437 = vld [vmem:[%s10 + $0x98] sm:$0xf]
        %v1438 = vld [vmem:[%s10 + $0x9c] sm:$0xf]
        %v1439 = vld [vmem:[%s10 + $0xa0] sm:$0xf]
        %v1440 = vld [vmem:[%s10 + $0xa4] sm:$0xf]
        %v1441 = vld [vmem:[%s10 + $0xa8] sm:$0xf]
        %v1442 = vld [vmem:[%s10 + $0xac] sm:$0xf]
        %v1443 = vld [vmem:[%s10 + $0xb0] sm:$0xf]
        %v1444 = vld [vmem:[%s10 + $0xb4] sm:$0xf]
        %v1445 = vld [vmem:[%s10 + $0xb8] sm:$0xf]
        %v1446 = vld [vmem:[%s10 + $0xbc] sm:$0xf]
        %v1447 = vld [vmem:[%s10 + $0xc0] sm:$0xf]
        %v1448 = vld [vmem:[%s10 + $0xc4] sm:$0xf]
        %v1449 = vld [vmem:[%s10 + $0xc8] sm:$0xf]
        %v1450 = vld [vmem:[%s10 + $0xcc] sm:$0xf]
        %v1451 = vld [vmem:[%s10 + $0xd0] sm:$0xf]
        %v1452 = vld [vmem:[%s10 + $0xd4] sm:$0xf]
        %v1453 = vld [vmem:[%s10 + $0xd8] sm:$0xf]
        %v1454 = vld [vmem:[%s10 + $0xdc] sm:$0xf]
        %v1455 = vld [vmem:[%s10 + $0xe0] sm:$0xf]
        %v1456 = vld [vmem:[%s10 + $0xe4] sm:$0xf]
        %v1457 = vld [vmem:[%s10 + $0xe8] sm:$0xf]
        %v1458 = vld [vmem:[%s10 + $0xec] sm:$0xf]
        %v1459 = vld [vmem:[%s10 + $0xf0] sm:$0xf]
        %v1460 = vld [vmem:[%s10 + $0xf4] sm:$0xf]
        %v1461 = vld [vmem:[%s10 + $0xf8] sm:$0xf]
        %v1462 = vld [vmem:[%s10 + $0xfc] sm:$0xf]
        %v1464 = vlaneseq
        %v1465 = vshrl.u32 %v1464, 7
        %v1466 = vsub.s32 0, %v1465
        %v1467 = vrot.slane %v1398, %v1466
        %v1468 = vlaneseq
        %v1469 = vshrl.u32 %v1468, 7
        %v1470 = vsub.s32 1, %v1469
        %v1471 = vrot.slane %v1398, %v1470
        %v1472 = vlaneseq
        %v1473 = vshrl.u32 %v1472, 7
        %v1474 = vsub.s32 2, %v1473
        %v1475 = vrot.slane %v1398, %v1474
        %v1476 = vlaneseq
        %v1477 = vshrl.u32 %v1476, 7
        %v1478 = vsub.s32 3, %v1477
        %v1479 = vrot.slane %v1398, %v1478
        %v1488 = vunpack.c.l.b16 %v1394
        %v1489 = vunpack.c.h.b16 %v1394
        %v1490 = vunpack.c.l.b16 %v1395
        %v1491 = vunpack.c.h.b16 %v1395
        %v1492 = vunpack.c.l.b16 %v1396
        %v1493 = vunpack.c.h.b16 %v1396
        %v1494 = vunpack.c.l.b16 %v1397
        %v1495 = vunpack.c.h.b16 %v1397
        %v1496 = vpack.c.b16 %v1492, %v1488
        %v1497 = vpack.c.b16 %v1493, %v1489
        %v1498 = vpack.c.b16 %v1494, %v1490
        %v1499 = vpack.c.b16 %v1495, %v1491
        %v1505 = vsel %vm529, %v1393, 0
        %1507 = vmatprep.subr.bf16.mxu0 %v1497
        %1508 = vmatpush1.bf16.msra.mxu0 %v1496
        %1509 = vmatprep.subr.bf16.mxu0 0
        %1510 = vmatpush1.bf16.msra.mxu0 0
        %1511 = vmatprep.subr.bf16.mxu0 0
        %1512 = vmatpush1.bf16.msra.mxu0 0
        %1513 = vmatprep.subr.bf16.mxu0 0
        %1514 = vmatpush1.bf16.msra.mxu0 0
        %1515 = vmatprep.subr.bf16.mxu0 0
        %1516 = vmatpush1.bf16.msra.mxu0 0
        %1517 = vmatprep.subr.bf16.mxu0 0
        %1518 = vmatpush1.bf16.msra.mxu0 0
        %1519 = vmatprep.subr.bf16.mxu0 0
        %1520 = vmatpush1.bf16.msra.mxu0 0
        %1521 = vmatprep.subr.bf16.mxu0 0
        %1522 = vmatpush1.bf16.msra.mxu0 0
        %1523 = vmatprep.subr.bf16.mxu0 0
        %1524 = vmatpush1.bf16.msra.mxu0 0
        %1525 = vmatprep.subr.bf16.mxu0 0
        %1526 = vmatpush1.bf16.msra.mxu0 0
        %1527 = vmatprep.subr.bf16.mxu0 0
        %1528 = vmatpush1.bf16.msra.mxu0 0
        %1529 = vmatprep.subr.bf16.mxu0 0
        %1530 = vmatpush1.bf16.msra.mxu0 0
        %1531 = vmatprep.subr.bf16.mxu0 0
        %1532 = vmatpush1.bf16.msra.mxu0 0
        %1533 = vmatprep.subr.bf16.mxu0 0
        %1534 = vmatpush1.bf16.msra.mxu0 0
        %1535 = vmatprep.subr.bf16.mxu0 0
        %1536 = vmatpush1.bf16.msra.mxu0 0
        %1537 = vmatprep.subr.bf16.mxu0 0
        %1538 = vmatpush1.bf16.msra.mxu0 0
        %1539 = vmatprep.mubr.bf16.mxu0 0
        %1540 = vmatmul.mubr.bf16.gmra.mrb[0].mxu0 %v1505
        %v1541 = vpop.f32.mrb[0].mxu0
        %v1542 = vadd.f32 %v1467, %v1541
        %v1543 = vpop.f32.mrb[0].mxu0
        %v1544 = vadd.f32 %v1471, %v1543
        %v1545 = vpop.f32.mrb[0].mxu0
        %v1546 = vpop.f32.mrb[0].mxu0
        %1547 = vdwg.mxu0
        %1548 = vmatprep.subr.bf16.mxu0 %v1499
        %1549 = vmatpush1.bf16.msra.mxu0 %v1498
        %1550 = vmatprep.subr.bf16.mxu0 0
        %1551 = vmatpush1.bf16.msra.mxu0 0
        %1552 = vmatprep.subr.bf16.mxu0 0
        %1553 = vmatpush1.bf16.msra.mxu0 0
        %1554 = vmatprep.subr.bf16.mxu0 0
        %1555 = vmatpush1.bf16.msra.mxu0 0
        %1556 = vmatprep.subr.bf16.mxu0 0
        %1557 = vmatpush1.bf16.msra.mxu0 0
        %1558 = vmatprep.subr.bf16.mxu0 0
        %1559 = vmatpush1.bf16.msra.mxu0 0
        %1560 = vmatprep.subr.bf16.mxu0 0
        %1561 = vmatpush1.bf16.msra.mxu0 0
        %1562 = vmatprep.subr.bf16.mxu0 0
        %1563 = vmatpush1.bf16.msra.mxu0 0
        %1564 = vmatprep.subr.bf16.mxu0 0
        %1565 = vmatpush1.bf16.msra.mxu0 0
        %1566 = vmatprep.subr.bf16.mxu0 0
        %1567 = vmatpush1.bf16.msra.mxu0 0
        %1568 = vmatprep.subr.bf16.mxu0 0
        %1569 = vmatpush1.bf16.msra.mxu0 0
        %1570 = vmatprep.subr.bf16.mxu0 0
        %1571 = vmatpush1.bf16.msra.mxu0 0
        %1572 = vmatprep.subr.bf16.mxu0 0
        %1573 = vmatpush1.bf16.msra.mxu0 0
        %1574 = vmatprep.subr.bf16.mxu0 0
        %1575 = vmatpush1.bf16.msra.mxu0 0
        %1576 = vmatprep.subr.bf16.mxu0 0
        %1577 = vmatpush1.bf16.msra.mxu0 0
        %1578 = vmatprep.subr.bf16.mxu0 0
        %1579 = vmatpush1.bf16.msra.mxu0 0
        %1580 = vmatprep.mubr.bf16.mxu0 0
        %1581 = vmatmul.mubr.bf16.gmra.mrb[0].mxu0 %v1505
        %v1582 = vpop.f32.mrb[0].mxu0
        %v1583 = vadd.f32 %v1475, %v1582
        %v1584 = vpop.f32.mrb[0].mxu0
        %v1585 = vadd.f32 %v1479, %v1584
        %v1586 = vpop.f32.mrb[0].mxu0
        %v1587 = vpop.f32.mrb[0].mxu0
        %1588 = vdwg.mxu0
        %v1589 = vmax.f32 %v1542, 0.0
        %v1590 = vmax.f32 %v1544, 0.0
        %v1591 = vmax.f32 %v1583, 0.0
        %v1592 = vmax.f32 %v1585, 0.0
        %v1593 = vpack.c.bf16 %v1589, %v1589
        %v1594 = vpack.c.bf16 %v1590, %v1590
        %v1595 = vpack.c.bf16 %v1591, %v1591
        %v1596 = vpack.c.bf16 %v1592, %v1592
        %v1597 = vld [vmem:[%s8 + $0x10] sm:$0xff]
        %v1598 = vld [vmem:[%s8 + $0x18] sm:$0xff]
        %v1599 = vld [vmem:[%s8 + $0x50] sm:$0xff]
        %v1600 = vld [vmem:[%s8 + $0x58] sm:$0xff]
        %v1601 = vld [vmem:[%s9 + $0x4] sm:$0xf]
        %v1602 = vld [vmem:[%s10 + $0x100] sm:$0xf]
        %v1603 = vld [vmem:[%s10 + $0x104] sm:$0xf]
        %v1604 = vld [vmem:[%s10 + $0x108] sm:$0xf]
        %v1605 = vld [vmem:[%s10 + $0x10c] sm:$0xf]
        %v1606 = vld [vmem:[%s10 + $0x110] sm:$0xf]
        %v1607 = vld [vmem:[%s10 + $0x114] sm:$0xf]
        %v1608 = vld [vmem:[%s10 + $0x118] sm:$0xf]
        %v1609 = vld [vmem:[%s10 + $0x11c] sm:$0xf]
        %v1610 = vld [vmem:[%s10 + $0x120] sm:$0xf]
        %v1611 = vld [vmem:[%s10 + $0x124] sm:$0xf]
        %v1612 = vld [vmem:[%s10 + $0x128] sm:$0xf]
        %v1613 = vld [vmem:[%s10 + $0x12c] sm:$0xf]
        %v1614 = vld [vmem:[%s10 + $0x130] sm:$0xf]
        %v1615 = vld [vmem:[%s10 + $0x134] sm:$0xf]
        %v1616 = vld [vmem:[%s10 + $0x138] sm:$0xf]
        %v1617 = vld [vmem:[%s10 + $0x13c] sm:$0xf]
        %v1618 = vld [vmem:[%s10 + $0x140] sm:$0xf]
        %v1619 = vld [vmem:[%s10 + $0x144] sm:$0xf]
        %v1620 = vld [vmem:[%s10 + $0x148] sm:$0xf]
        %v1621 = vld [vmem:[%s10 + $0x14c] sm:$0xf]
        %v1622 = vld [vmem:[%s10 + $0x150] sm:$0xf]
        %v1623 = vld [vmem:[%s10 + $0x154] sm:$0xf]
        %v1624 = vld [vmem:[%s10 + $0x158] sm:$0xf]
        %v1625 = vld [vmem:[%s10 + $0x15c] sm:$0xf]
        %v1626 = vld [vmem:[%s10 + $0x160] sm:$0xf]
        %v1627 = vld [vmem:[%s10 + $0x164] sm:$0xf]
        %v1628 = vld [vmem:[%s10 + $0x168] sm:$0xf]
        %v1629 = vld [vmem:[%s10 + $0x16c] sm:$0xf]
        %v1630 = vld [vmem:[%s10 + $0x170] sm:$0xf]
        %v1631 = vld [vmem:[%s10 + $0x174] sm:$0xf]
        %v1632 = vld [vmem:[%s10 + $0x178] sm:$0xf]
        %v1633 = vld [vmem:[%s10 + $0x17c] sm:$0xf]
        %v1634 = vld [vmem:[%s10 + $0x180] sm:$0xf]
        %v1635 = vld [vmem:[%s10 + $0x184] sm:$0xf]
        %v1636 = vld [vmem:[%s10 + $0x188] sm:$0xf]
        %v1637 = vld [vmem:[%s10 + $0x18c] sm:$0xf]
        %v1638 = vld [vmem:[%s10 + $0x190] sm:$0xf]
        %v1639 = vld [vmem:[%s10 + $0x194] sm:$0xf]
        %v1640 = vld [vmem:[%s10 + $0x198] sm:$0xf]
        %v1641 = vld [vmem:[%s10 + $0x19c] sm:$0xf]
        %v1642 = vld [vmem:[%s10 + $0x1a0] sm:$0xf]
        %v1643 = vld [vmem:[%s10 + $0x1a4] sm:$0xf]
        %v1644 = vld [vmem:[%s10 + $0x1a8] sm:$0xf]
        %v1645 = vld [vmem:[%s10 + $0x1ac] sm:$0xf]
        %v1646 = vld [vmem:[%s10 + $0x1b0] sm:$0xf]
        %v1647 = vld [vmem:[%s10 + $0x1b4] sm:$0xf]
        %v1648 = vld [vmem:[%s10 + $0x1b8] sm:$0xf]
        %v1649 = vld [vmem:[%s10 + $0x1bc] sm:$0xf]
        %v1650 = vld [vmem:[%s10 + $0x1c0] sm:$0xf]
        %v1651 = vld [vmem:[%s10 + $0x1c4] sm:$0xf]
        %v1652 = vld [vmem:[%s10 + $0x1c8] sm:$0xf]
        %v1653 = vld [vmem:[%s10 + $0x1cc] sm:$0xf]
        %v1654 = vld [vmem:[%s10 + $0x1d0] sm:$0xf]
        %v1655 = vld [vmem:[%s10 + $0x1d4] sm:$0xf]
        %v1656 = vld [vmem:[%s10 + $0x1d8] sm:$0xf]
        %v1657 = vld [vmem:[%s10 + $0x1dc] sm:$0xf]
        %v1658 = vld [vmem:[%s10 + $0x1e0] sm:$0xf]
        %v1659 = vld [vmem:[%s10 + $0x1e4] sm:$0xf]
        %v1660 = vld [vmem:[%s10 + $0x1e8] sm:$0xf]
        %v1661 = vld [vmem:[%s10 + $0x1ec] sm:$0xf]
        %v1662 = vld [vmem:[%s10 + $0x1f0] sm:$0xf]
        %v1663 = vld [vmem:[%s10 + $0x1f4] sm:$0xf]
        %v1664 = vld [vmem:[%s10 + $0x1f8] sm:$0xf]
        %v1665 = vld [vmem:[%s10 + $0x1fc] sm:$0xf]
        %v1667 = vlaneseq
        %v1668 = vshrl.u32 %v1667, 7
        %v1669 = vsub.s32 0, %v1668
        %v1670 = vrot.slane %v1601, %v1669
        %v1671 = vlaneseq
        %v1672 = vshrl.u32 %v1671, 7
        %v1673 = vsub.s32 1, %v1672
        %v1674 = vrot.slane %v1601, %v1673
        %v1675 = vlaneseq
        %v1676 = vshrl.u32 %v1675, 7
        %v1677 = vsub.s32 2, %v1676
        %v1678 = vrot.slane %v1601, %v1677
        %v1679 = vlaneseq
        %v1680 = vshrl.u32 %v1679, 7
        %v1681 = vsub.s32 3, %v1680
        %v1682 = vrot.slane %v1601, %v1681
        %v1691 = vunpack.c.l.b16 %v1597
        %v1692 = vunpack.c.h.b16 %v1597
        %v1693 = vunpack.c.l.b16 %v1598
        %v1694 = vunpack.c.h.b16 %v1598
        %v1695 = vunpack.c.l.b16 %v1599
        %v1696 = vunpack.c.h.b16 %v1599
        %v1697 = vunpack.c.l.b16 %v1600
        %v1698 = vunpack.c.h.b16 %v1600
        %v1699 = vpack.c.b16 %v1695, %v1691
        %v1700 = vpack.c.b16 %v1696, %v1692
        %v1701 = vpack.c.b16 %v1697, %v1693
        %v1702 = vpack.c.b16 %v1698, %v1694
        %1707 = vmatprep.subr.bf16.mxu0 %v1700
        %1708 = vmatpush1.bf16.msra.mxu0 %v1699
        %1709 = vmatprep.subr.bf16.mxu0 0
        %1710 = vmatpush1.bf16.msra.mxu0 0
        %1711 = vmatprep.subr.bf16.mxu0 0
        %1712 = vmatpush1.bf16.msra.mxu0 0
        %1713 = vmatprep.subr.bf16.mxu0 0
        %1714 = vmatpush1.bf16.msra.mxu0 0
        %1715 = vmatprep.subr.bf16.mxu0 0
        %1716 = vmatpush1.bf16.msra.mxu0 0
        %1717 = vmatprep.subr.bf16.mxu0 0
        %1718 = vmatpush1.bf16.msra.mxu0 0
        %1719 = vmatprep.subr.bf16.mxu0 0
        %1720 = vmatpush1.bf16.msra.mxu0 0
        %1721 = vmatprep.subr.bf16.mxu0 0
        %1722 = vmatpush1.bf16.msra.mxu0 0
        %1723 = vmatprep.subr.bf16.mxu0 0
        %1724 = vmatpush1.bf16.msra.mxu0 0
        %1725 = vmatprep.subr.bf16.mxu0 0
        %1726 = vmatpush1.bf16.msra.mxu0 0
        %1727 = vmatprep.subr.bf16.mxu0 0
        %1728 = vmatpush1.bf16.msra.mxu0 0
        %1729 = vmatprep.subr.bf16.mxu0 0
        %1730 = vmatpush1.bf16.msra.mxu0 0
        %1731 = vmatprep.subr.bf16.mxu0 0
        %1732 = vmatpush1.bf16.msra.mxu0 0
        %1733 = vmatprep.subr.bf16.mxu0 0
        %1734 = vmatpush1.bf16.msra.mxu0 0
        %1735 = vmatprep.subr.bf16.mxu0 0
        %1736 = vmatpush1.bf16.msra.mxu0 0
        %1737 = vmatprep.subr.bf16.mxu0 0
        %1738 = vmatpush1.bf16.msra.mxu0 0
        %1739 = vmatprep.mubr.bf16.mxu0 0
        %1740 = vmatmul.mubr.bf16.gmra.mrb[0].mxu0 %v1505
        %v1741 = vpop.f32.mrb[0].mxu0
        %v1742 = vadd.f32 %v1670, %v1741
        %v1743 = vpop.f32.mrb[0].mxu0
        %v1744 = vadd.f32 %v1674, %v1743
        %v1745 = vpop.f32.mrb[0].mxu0
        %v1746 = vpop.f32.mrb[0].mxu0
        %1747 = vdwg.mxu0
        %1748 = vmatprep.subr.bf16.mxu0 %v1702
        %1749 = vmatpush1.bf16.msra.mxu0 %v1701
        %1750 = vmatprep.subr.bf16.mxu0 0
        %1751 = vmatpush1.bf16.msra.mxu0 0
        %1752 = vmatprep.subr.bf16.mxu0 0
        %1753 = vmatpush1.bf16.msra.mxu0 0
        %1754 = vmatprep.subr.bf16.mxu0 0
        %1755 = vmatpush1.bf16.msra.mxu0 0
        %1756 = vmatprep.subr.bf16.mxu0 0
        %1757 = vmatpush1.bf16.msra.mxu0 0
        %1758 = vmatprep.subr.bf16.mxu0 0
        %1759 = vmatpush1.bf16.msra.mxu0 0
        %1760 = vmatprep.subr.bf16.mxu0 0
        %1761 = vmatpush1.bf16.msra.mxu0 0
        %1762 = vmatprep.subr.bf16.mxu0 0
        %1763 = vmatpush1.bf16.msra.mxu0 0
        %1764 = vmatprep.subr.bf16.mxu0 0
        %1765 = vmatpush1.bf16.msra.mxu0 0
        %1766 = vmatprep.subr.bf16.mxu0 0
        %1767 = vmatpush1.bf16.msra.mxu0 0
        %1768 = vmatprep.subr.bf16.mxu0 0
        %1769 = vmatpush1.bf16.msra.mxu0 0
        %1770 = vmatprep.subr.bf16.mxu0 0
        %1771 = vmatpush1.bf16.msra.mxu0 0
        %1772 = vmatprep.subr.bf16.mxu0 0
        %1773 = vmatpush1.bf16.msra.mxu0 0
        %1774 = vmatprep.subr.bf16.mxu0 0
        %1775 = vmatpush1.bf16.msra.mxu0 0
        %1776 = vmatprep.subr.bf16.mxu0 0
        %1777 = vmatpush1.bf16.msra.mxu0 0
        %1778 = vmatprep.subr.bf16.mxu0 0
        %1779 = vmatpush1.bf16.msra.mxu0 0
        %1780 = vmatprep.mubr.bf16.mxu0 0
        %1781 = vmatmul.mubr.bf16.gmra.mrb[0].mxu0 %v1505
        %v1782 = vpop.f32.mrb[0].mxu0
        %v1783 = vadd.f32 %v1678, %v1782
        %v1784 = vpop.f32.mrb[0].mxu0
        %v1785 = vadd.f32 %v1682, %v1784
        %v1786 = vpop.f32.mrb[0].mxu0
        %v1787 = vpop.f32.mrb[0].mxu0
        %1788 = vdwg.mxu0
        %v1789 = vmax.f32 %v1742, 0.0
        %v1790 = vmax.f32 %v1744, 0.0
        %v1791 = vmax.f32 %v1783, 0.0
        %v1792 = vmax.f32 %v1785, 0.0
        %v1793 = vpack.c.bf16 %v1789, %v1789
        %v1794 = vpack.c.bf16 %v1790, %v1790
        %v1795 = vpack.c.bf16 %v1791, %v1791
        %v1796 = vpack.c.bf16 %v1792, %v1792
        %v1861 = vunpack.c.l.b16 %v1602
        %v1862 = vunpack.c.l.b16 %v1603
        %v1863 = vunpack.c.l.b16 %v1604
        %v1864 = vunpack.c.l.b16 %v1605
        %v1865 = vunpack.c.l.b16 %v1606
        %v1866 = vunpack.c.l.b16 %v1607
        %v1867 = vunpack.c.l.b16 %v1608
        %v1868 = vunpack.c.l.b16 %v1609
        %v1869 = vunpack.c.l.b16 %v1610
        %v1870 = vunpack.c.l.b16 %v1611
        %v1871 = vunpack.c.l.b16 %v1612
        %v1872 = vunpack.c.l.b16 %v1613
        %v1873 = vunpack.c.l.b16 %v1614
        %v1874 = vunpack.c.l.b16 %v1615
        %v1875 = vunpack.c.l.b16 %v1616
        %v1876 = vunpack.c.l.b16 %v1617
        %v1877 = vunpack.c.l.b16 %v1618
        %v1878 = vunpack.c.l.b16 %v1619
        %v1879 = vunpack.c.l.b16 %v1620
        %v1880 = vunpack.c.l.b16 %v1621
        %v1881 = vunpack.c.l.b16 %v1622
        %v1882 = vunpack.c.l.b16 %v1623
        %v1883 = vunpack.c.l.b16 %v1624
        %v1884 = vunpack.c.l.b16 %v1625
        %v1885 = vunpack.c.l.b16 %v1626
        %v1886 = vunpack.c.l.b16 %v1627
        %v1887 = vunpack.c.l.b16 %v1628
        %v1888 = vunpack.c.l.b16 %v1629
        %v1889 = vunpack.c.l.b16 %v1630
        %v1890 = vunpack.c.l.b16 %v1631
        %v1891 = vunpack.c.l.b16 %v1632
        %v1892 = vunpack.c.l.b16 %v1633
        %v1893 = vunpack.c.l.b16 %v1634
        %v1894 = vunpack.c.l.b16 %v1635
        %v1895 = vunpack.c.l.b16 %v1636
        %v1896 = vunpack.c.l.b16 %v1637
        %v1897 = vunpack.c.l.b16 %v1638
        %v1898 = vunpack.c.l.b16 %v1639
        %v1899 = vunpack.c.l.b16 %v1640
        %v1900 = vunpack.c.l.b16 %v1641
        %v1901 = vunpack.c.l.b16 %v1642
        %v1902 = vunpack.c.l.b16 %v1643
        %v1903 = vunpack.c.l.b16 %v1644
        %v1904 = vunpack.c.l.b16 %v1645
        %v1905 = vunpack.c.l.b16 %v1646
        %v1906 = vunpack.c.l.b16 %v1647
        %v1907 = vunpack.c.l.b16 %v1648
        %v1908 = vunpack.c.l.b16 %v1649
        %v1909 = vunpack.c.l.b16 %v1650
        %v1910 = vunpack.c.l.b16 %v1651
        %v1911 = vunpack.c.l.b16 %v1652
        %v1912 = vunpack.c.l.b16 %v1653
        %v1913 = vunpack.c.l.b16 %v1654
        %v1914 = vunpack.c.l.b16 %v1655
        %v1915 = vunpack.c.l.b16 %v1656
        %v1916 = vunpack.c.l.b16 %v1657
        %v1917 = vunpack.c.l.b16 %v1658
        %v1918 = vunpack.c.l.b16 %v1659
        %v1919 = vunpack.c.l.b16 %v1660
        %v1920 = vunpack.c.l.b16 %v1661
        %v1921 = vunpack.c.l.b16 %v1662
        %v1922 = vunpack.c.l.b16 %v1663
        %v1923 = vunpack.c.l.b16 %v1664
        %v1924 = vunpack.c.l.b16 %v1665
        %v1925 = vpack.c.b16 %v1862, %v1861
        %v1926 = vpack.c.b16 %v1864, %v1863
        %v1927 = vpack.c.b16 %v1866, %v1865
        %v1928 = vpack.c.b16 %v1868, %v1867
        %v1929 = vpack.c.b16 %v1870, %v1869
        %v1930 = vpack.c.b16 %v1872, %v1871
        %v1931 = vpack.c.b16 %v1874, %v1873
        %v1932 = vpack.c.b16 %v1876, %v1875
        %v1933 = vpack.c.b16 %v1878, %v1877
        %v1934 = vpack.c.b16 %v1880, %v1879
        %v1935 = vpack.c.b16 %v1882, %v1881
        %v1936 = vpack.c.b16 %v1884, %v1883
        %v1937 = vpack.c.b16 %v1886, %v1885
        %v1938 = vpack.c.b16 %v1888, %v1887
        %v1939 = vpack.c.b16 %v1890, %v1889
        %v1940 = vpack.c.b16 %v1892, %v1891
        %v1941 = vpack.c.b16 %v1894, %v1893
        %v1942 = vpack.c.b16 %v1896, %v1895
        %v1943 = vpack.c.b16 %v1898, %v1897
        %v1944 = vpack.c.b16 %v1900, %v1899
        %v1945 = vpack.c.b16 %v1902, %v1901
        %v1946 = vpack.c.b16 %v1904, %v1903
        %v1947 = vpack.c.b16 %v1906, %v1905
        %v1948 = vpack.c.b16 %v1908, %v1907
        %v1949 = vpack.c.b16 %v1910, %v1909
        %v1950 = vpack.c.b16 %v1912, %v1911
        %v1951 = vpack.c.b16 %v1914, %v1913
        %v1952 = vpack.c.b16 %v1916, %v1915
        %v1953 = vpack.c.b16 %v1918, %v1917
        %v1954 = vpack.c.b16 %v1920, %v1919
        %v1955 = vpack.c.b16 %v1922, %v1921
        %v1956 = vpack.c.b16 %v1924, %v1923
        %1989 = vmatprep.subr.bf16.mxu0 0
        %1990 = vmatpush1.bf16.msra.mxu0 %v1925
        %1991 = vmatprep.subr.bf16.mxu0 0
        %1992 = vmatpush1.bf16.msra.mxu0 %v1926
        %1993 = vmatprep.subr.bf16.mxu0 0
        %1994 = vmatpush1.bf16.msra.mxu0 %v1927
        %1995 = vmatprep.subr.bf16.mxu0 0
        %1996 = vmatpush1.bf16.msra.mxu0 %v1928
        %1997 = vmatprep.subr.bf16.mxu0 0
        %1998 = vmatpush1.bf16.msra.mxu0 %v1929
        %1999 = vmatprep.subr.bf16.mxu0 0
        %2000 = vmatpush1.bf16.msra.mxu0 %v1930
        %2001 = vmatprep.subr.bf16.mxu0 0
        %2002 = vmatpush1.bf16.msra.mxu0 %v1931
        %2003 = vmatprep.subr.bf16.mxu0 0
        %2004 = vmatpush1.bf16.msra.mxu0 %v1932
        %2005 = vmatprep.subr.bf16.mxu0 0
        %2006 = vmatpush1.bf16.msra.mxu0 %v1933
        %2007 = vmatprep.subr.bf16.mxu0 0
        %2008 = vmatpush1.bf16.msra.mxu0 %v1934
        %2009 = vmatprep.subr.bf16.mxu0 0
        %2010 = vmatpush1.bf16.msra.mxu0 %v1935
        %2011 = vmatprep.subr.bf16.mxu0 0
        %2012 = vmatpush1.bf16.msra.mxu0 %v1936
        %2013 = vmatprep.subr.bf16.mxu0 0
        %2014 = vmatpush1.bf16.msra.mxu0 %v1937
        %2015 = vmatprep.subr.bf16.mxu0 0
        %2016 = vmatpush1.bf16.msra.mxu0 %v1938
        %2017 = vmatprep.subr.bf16.mxu0 0
        %2018 = vmatpush1.bf16.msra.mxu0 %v1939
        %2019 = vmatprep.subr.bf16.mxu0 0
        %2020 = vmatpush1.bf16.msra.mxu0 %v1940
        %2021 = vmatprep.mubr.bf16.mxu0 %v1794
        %2022 = vmatmul.mubr.bf16.gmra.mrb[0].mxu0 %v1793
        %v2023 = vpop.f32.mrb[0].mxu0
        %v2024 = vadd.f32 0.0, %v2023
        %v2025 = vpop.f32.mrb[0].mxu0
        %v2026 = vpop.f32.mrb[0].mxu0
        %v2027 = vpop.f32.mrb[0].mxu0
        %2028 = vdwg.mxu0
        %2029 = vmatprep.subr.bf16.mxu0 0
        %2030 = vmatpush1.bf16.msra.mxu0 %v1941
        %2031 = vmatprep.subr.bf16.mxu0 0
        %2032 = vmatpush1.bf16.msra.mxu0 %v1942
        %2033 = vmatprep.subr.bf16.mxu0 0
        %2034 = vmatpush1.bf16.msra.mxu0 %v1943
        %2035 = vmatprep.subr.bf16.mxu0 0
        %2036 = vmatpush1.bf16.msra.mxu0 %v1944
        %2037 = vmatprep.subr.bf16.mxu0 0
        %2038 = vmatpush1.bf16.msra.mxu0 %v1945
        %2039 = vmatprep.subr.bf16.mxu0 0
        %2040 = vmatpush1.bf16.msra.mxu0 %v1946
        %2041 = vmatprep.subr.bf16.mxu0 0
        %2042 = vmatpush1.bf16.msra.mxu0 %v1947
        %2043 = vmatprep.subr.bf16.mxu0 0
        %2044 = vmatpush1.bf16.msra.mxu0 %v1948
        %2045 = vmatprep.subr.bf16.mxu0 0
        %2046 = vmatpush1.bf16.msra.mxu0 %v1949
        %2047 = vmatprep.subr.bf16.mxu0 0
        %2048 = vmatpush1.bf16.msra.mxu0 %v1950
        %2049 = vmatprep.subr.bf16.mxu0 0
        %2050 = vmatpush1.bf16.msra.mxu0 %v1951
        %2051 = vmatprep.subr.bf16.mxu0 0
        %2052 = vmatpush1.bf16.msra.mxu0 %v1952
        %2053 = vmatprep.subr.bf16.mxu0 0
        %2054 = vmatpush1.bf16.msra.mxu0 %v1953
        %2055 = vmatprep.subr.bf16.mxu0 0
        %2056 = vmatpush1.bf16.msra.mxu0 %v1954
        %2057 = vmatprep.subr.bf16.mxu0 0
        %2058 = vmatpush1.bf16.msra.mxu0 %v1955
        %2059 = vmatprep.subr.bf16.mxu0 0
        %2060 = vmatpush1.bf16.msra.mxu0 %v1956
        %2061 = vmatprep.mubr.bf16.mxu0 %v1796
        %2062 = vmatmul.mubr.bf16.gmra.mrb[0].mxu0 %v1795
        %v2063 = vpop.f32.mrb[0].mxu0
        %v2064 = vadd.f32 %v2024, %v2063
        %v2065 = vpop.f32.mrb[0].mxu0
        %v2066 = vpop.f32.mrb[0].mxu0
        %v2067 = vpop.f32.mrb[0].mxu0
        %2068 = vdwg.mxu0
        %v2133 = vunpack.c.l.b16 %v1399
        %v2134 = vunpack.c.l.b16 %v1400
        %v2135 = vunpack.c.l.b16 %v1401
        %v2136 = vunpack.c.l.b16 %v1402
        %v2137 = vunpack.c.l.b16 %v1403
        %v2138 = vunpack.c.l.b16 %v1404
        %v2139 = vunpack.c.l.b16 %v1405
        %v2140 = vunpack.c.l.b16 %v1406
        %v2141 = vunpack.c.l.b16 %v1407
        %v2142 = vunpack.c.l.b16 %v1408
        %v2143 = vunpack.c.l.b16 %v1409
        %v2144 = vunpack.c.l.b16 %v1410
        %v2145 = vunpack.c.l.b16 %v1411
        %v2146 = vunpack.c.l.b16 %v1412
        %v2147 = vunpack.c.l.b16 %v1413
        %v2148 = vunpack.c.l.b16 %v1414
        %v2149 = vunpack.c.l.b16 %v1415
        %v2150 = vunpack.c.l.b16 %v1416
        %v2151 = vunpack.c.l.b16 %v1417
        %v2152 = vunpack.c.l.b16 %v1418
        %v2153 = vunpack.c.l.b16 %v1419
        %v2154 = vunpack.c.l.b16 %v1420
        %v2155 = vunpack.c.l.b16 %v1421
        %v2156 = vunpack.c.l.b16 %v1422
        %v2157 = vunpack.c.l.b16 %v1423
        %v2158 = vunpack.c.l.b16 %v1424
        %v2159 = vunpack.c.l.b16 %v1425
        %v2160 = vunpack.c.l.b16 %v1426
        %v2161 = vunpack.c.l.b16 %v1427
        %v2162 = vunpack.c.l.b16 %v1428
        %v2163 = vunpack.c.l.b16 %v1429
        %v2164 = vunpack.c.l.b16 %v1430
        %v2165 = vunpack.c.l.b16 %v1431
        %v2166 = vunpack.c.l.b16 %v1432
        %v2167 = vunpack.c.l.b16 %v1433
        %v2168 = vunpack.c.l.b16 %v1434
        %v2169 = vunpack.c.l.b16 %v1435
        %v2170 = vunpack.c.l.b16 %v1436
        %v2171 = vunpack.c.l.b16 %v1437
        %v2172 = vunpack.c.l.b16 %v1438
        %v2173 = vunpack.c.l.b16 %v1439
        %v2174 = vunpack.c.l.b16 %v1440
        %v2175 = vunpack.c.l.b16 %v1441
        %v2176 = vunpack.c.l.b16 %v1442
        %v2177 = vunpack.c.l.b16 %v1443
        %v2178 = vunpack.c.l.b16 %v1444
        %v2179 = vunpack.c.l.b16 %v1445
        %v2180 = vunpack.c.l.b16 %v1446
        %v2181 = vunpack.c.l.b16 %v1447
        %v2182 = vunpack.c.l.b16 %v1448
        %v2183 = vunpack.c.l.b16 %v1449
        %v2184 = vunpack.c.l.b16 %v1450
        %v2185 = vunpack.c.l.b16 %v1451
        %v2186 = vunpack.c.l.b16 %v1452
        %v2187 = vunpack.c.l.b16 %v1453
        %v2188 = vunpack.c.l.b16 %v1454
        %v2189 = vunpack.c.l.b16 %v1455
        %v2190 = vunpack.c.l.b16 %v1456
        %v2191 = vunpack.c.l.b16 %v1457
        %v2192 = vunpack.c.l.b16 %v1458
        %v2193 = vunpack.c.l.b16 %v1459
        %v2194 = vunpack.c.l.b16 %v1460
        %v2195 = vunpack.c.l.b16 %v1461
        %v2196 = vunpack.c.l.b16 %v1462
        %v2197 = vpack.c.b16 %v2134, %v2133
        %v2198 = vpack.c.b16 %v2136, %v2135
        %v2199 = vpack.c.b16 %v2138, %v2137
        %v2200 = vpack.c.b16 %v2140, %v2139
        %v2201 = vpack.c.b16 %v2142, %v2141
        %v2202 = vpack.c.b16 %v2144, %v2143
        %v2203 = vpack.c.b16 %v2146, %v2145
        %v2204 = vpack.c.b16 %v2148, %v2147
        %v2205 = vpack.c.b16 %v2150, %v2149
        %v2206 = vpack.c.b16 %v2152, %v2151
        %v2207 = vpack.c.b16 %v2154, %v2153
        %v2208 = vpack.c.b16 %v2156, %v2155
        %v2209 = vpack.c.b16 %v2158, %v2157
        %v2210 = vpack.c.b16 %v2160, %v2159
        %v2211 = vpack.c.b16 %v2162, %v2161
        %v2212 = vpack.c.b16 %v2164, %v2163
        %v2213 = vpack.c.b16 %v2166, %v2165
        %v2214 = vpack.c.b16 %v2168, %v2167
        %v2215 = vpack.c.b16 %v2170, %v2169
        %v2216 = vpack.c.b16 %v2172, %v2171
        %v2217 = vpack.c.b16 %v2174, %v2173
        %v2218 = vpack.c.b16 %v2176, %v2175
        %v2219 = vpack.c.b16 %v2178, %v2177
        %v2220 = vpack.c.b16 %v2180, %v2179
        %v2221 = vpack.c.b16 %v2182, %v2181
        %v2222 = vpack.c.b16 %v2184, %v2183
        %v2223 = vpack.c.b16 %v2186, %v2185
        %v2224 = vpack.c.b16 %v2188, %v2187
        %v2225 = vpack.c.b16 %v2190, %v2189
        %v2226 = vpack.c.b16 %v2192, %v2191
        %v2227 = vpack.c.b16 %v2194, %v2193
        %v2228 = vpack.c.b16 %v2196, %v2195
        %2261 = vmatprep.subr.bf16.mxu0 0
        %2262 = vmatpush1.bf16.msra.mxu0 %v2197
        %2263 = vmatprep.subr.bf16.mxu0 0
        %2264 = vmatpush1.bf16.msra.mxu0 %v2198
        %2265 = vmatprep.subr.bf16.mxu0 0
        %2266 = vmatpush1.bf16.msra.mxu0 %v2199
        %2267 = vmatprep.subr.bf16.mxu0 0
        %2268 = vmatpush1.bf16.msra.mxu0 %v2200
        %2269 = vmatprep.subr.bf16.mxu0 0
        %2270 = vmatpush1.bf16.msra.mxu0 %v2201
        %2271 = vmatprep.subr.bf16.mxu0 0
        %2272 = vmatpush1.bf16.msra.mxu0 %v2202
        %2273 = vmatprep.subr.bf16.mxu0 0
        %2274 = vmatpush1.bf16.msra.mxu0 %v2203
        %2275 = vmatprep.subr.bf16.mxu0 0
        %2276 = vmatpush1.bf16.msra.mxu0 %v2204
        %2277 = vmatprep.subr.bf16.mxu0 0
        %2278 = vmatpush1.bf16.msra.mxu0 %v2205
        %2279 = vmatprep.subr.bf16.mxu0 0
        %2280 = vmatpush1.bf16.msra.mxu0 %v2206
        %2281 = vmatprep.subr.bf16.mxu0 0
        %2282 = vmatpush1.bf16.msra.mxu0 %v2207
        %2283 = vmatprep.subr.bf16.mxu0 0
        %2284 = vmatpush1.bf16.msra.mxu0 %v2208
        %2285 = vmatprep.subr.bf16.mxu0 0
        %2286 = vmatpush1.bf16.msra.mxu0 %v2209
        %2287 = vmatprep.subr.bf16.mxu0 0
        %2288 = vmatpush1.bf16.msra.mxu0 %v2210
        %2289 = vmatprep.subr.bf16.mxu0 0
        %2290 = vmatpush1.bf16.msra.mxu0 %v2211
        %2291 = vmatprep.subr.bf16.mxu0 0
        %2292 = vmatpush1.bf16.msra.mxu0 %v2212
        %2293 = vmatprep.mubr.bf16.mxu0 %v1594
        %2294 = vmatmul.mubr.bf16.gmra.mrb[0].mxu0 %v1593
        %v2295 = vpop.f32.mrb[0].mxu0
        %v2296 = vadd.f32 %v2064, %v2295
        %v2297 = vpop.f32.mrb[0].mxu0
        %v2298 = vpop.f32.mrb[0].mxu0
        %v2299 = vpop.f32.mrb[0].mxu0
        %2300 = vdwg.mxu0
        %2301 = vmatprep.subr.bf16.mxu0 0
        %2302 = vmatpush1.bf16.msra.mxu0 %v2213
        %2303 = vmatprep.subr.bf16.mxu0 0
        %2304 = vmatpush1.bf16.msra.mxu0 %v2214
        %2305 = vmatprep.subr.bf16.mxu0 0
        %2306 = vmatpush1.bf16.msra.mxu0 %v2215
        %2307 = vmatprep.subr.bf16.mxu0 0
        %2308 = vmatpush1.bf16.msra.mxu0 %v2216
        %2309 = vmatprep.subr.bf16.mxu0 0
        %2310 = vmatpush1.bf16.msra.mxu0 %v2217
        %2311 = vmatprep.subr.bf16.mxu0 0
        %2312 = vmatpush1.bf16.msra.mxu0 %v2218
        %2313 = vmatprep.subr.bf16.mxu0 0
        %2314 = vmatpush1.bf16.msra.mxu0 %v2219
        %2315 = vmatprep.subr.bf16.mxu0 0
        %2316 = vmatpush1.bf16.msra.mxu0 %v2220
        %2317 = vmatprep.subr.bf16.mxu0 0
        %2318 = vmatpush1.bf16.msra.mxu0 %v2221
        %2319 = vmatprep.subr.bf16.mxu0 0
        %2320 = vmatpush1.bf16.msra.mxu0 %v2222
        %2321 = vmatprep.subr.bf16.mxu0 0
        %2322 = vmatpush1.bf16.msra.mxu0 %v2223
        %2323 = vmatprep.subr.bf16.mxu0 0
        %2324 = vmatpush1.bf16.msra.mxu0 %v2224
        %2325 = vmatprep.subr.bf16.mxu0 0
        %2326 = vmatpush1.bf16.msra.mxu0 %v2225
        %2327 = vmatprep.subr.bf16.mxu0 0
        %2328 = vmatpush1.bf16.msra.mxu0 %v2226
        %2329 = vmatprep.subr.bf16.mxu0 0
        %2330 = vmatpush1.bf16.msra.mxu0 %v2227
        %2331 = vmatprep.subr.bf16.mxu0 0
        %2332 = vmatpush1.bf16.msra.mxu0 %v2228
        %2333 = vmatprep.mubr.bf16.mxu0 %v1596
        %2334 = vmatmul.mubr.bf16.gmra.mrb[0].mxu0 %v1595
        %v2335 = vpop.f32.mrb[0].mxu0
        %v2336 = vadd.f32 %v2296, %v2335
        %v2337 = vpop.f32.mrb[0].mxu0
        %v2338 = vpop.f32.mrb[0].mxu0
        %v2339 = vpop.f32.mrb[0].mxu0
        %2340 = vdwg.mxu0
        %v2341 = vld [vmem:[%s8 + $0x20] sm:$0xff]
        %v2342 = vld [vmem:[%s8 + $0x28] sm:$0xff]
        %v2343 = vld [vmem:[%s8 + $0x60] sm:$0xff]
        %v2344 = vld [vmem:[%s8 + $0x68] sm:$0xff]
        %v2345 = vld [vmem:[%s9 + $0x8] sm:$0xf]
        %v2346 = vld [vmem:[%s10 + $0x200] sm:$0xf]
        %v2347 = vld [vmem:[%s10 + $0x204] sm:$0xf]
        %v2348 = vld [vmem:[%s10 + $0x208] sm:$0xf]
        %v2349 = vld [vmem:[%s10 + $0x20c] sm:$0xf]
        %v2350 = vld [vmem:[%s10 + $0x210] sm:$0xf]
        %v2351 = vld [vmem:[%s10 + $0x214] sm:$0xf]
        %v2352 = vld [vmem:[%s10 + $0x218] sm:$0xf]
        %v2353 = vld [vmem:[%s10 + $0x21c] sm:$0xf]
        %v2354 = vld [vmem:[%s10 + $0x220] sm:$0xf]
        %v2355 = vld [vmem:[%s10 + $0x224] sm:$0xf]
        %v2356 = vld [vmem:[%s10 + $0x228] sm:$0xf]
        %v2357 = vld [vmem:[%s10 + $0x22c] sm:$0xf]
        %v2358 = vld [vmem:[%s10 + $0x230] sm:$0xf]
        %v2359 = vld [vmem:[%s10 + $0x234] sm:$0xf]
        %v2360 = vld [vmem:[%s10 + $0x238] sm:$0xf]
        %v2361 = vld [vmem:[%s10 + $0x23c] sm:$0xf]
        %v2362 = vld [vmem:[%s10 + $0x240] sm:$0xf]
        %v2363 = vld [vmem:[%s10 + $0x244] sm:$0xf]
        %v2364 = vld [vmem:[%s10 + $0x248] sm:$0xf]
        %v2365 = vld [vmem:[%s10 + $0x24c] sm:$0xf]
        %v2366 = vld [vmem:[%s10 + $0x250] sm:$0xf]
        %v2367 = vld [vmem:[%s10 + $0x254] sm:$0xf]
        %v2368 = vld [vmem:[%s10 + $0x258] sm:$0xf]
        %v2369 = vld [vmem:[%s10 + $0x25c] sm:$0xf]
        %v2370 = vld [vmem:[%s10 + $0x260] sm:$0xf]
        %v2371 = vld [vmem:[%s10 + $0x264] sm:$0xf]
        %v2372 = vld [vmem:[%s10 + $0x268] sm:$0xf]
        %v2373 = vld [vmem:[%s10 + $0x26c] sm:$0xf]
        %v2374 = vld [vmem:[%s10 + $0x270] sm:$0xf]
        %v2375 = vld [vmem:[%s10 + $0x274] sm:$0xf]
        %v2376 = vld [vmem:[%s10 + $0x278] sm:$0xf]
        %v2377 = vld [vmem:[%s10 + $0x27c] sm:$0xf]
        %v2378 = vld [vmem:[%s10 + $0x280] sm:$0xf]
        %v2379 = vld [vmem:[%s10 + $0x284] sm:$0xf]
        %v2380 = vld [vmem:[%s10 + $0x288] sm:$0xf]
        %v2381 = vld [vmem:[%s10 + $0x28c] sm:$0xf]
        %v2382 = vld [vmem:[%s10 + $0x290] sm:$0xf]
        %v2383 = vld [vmem:[%s10 + $0x294] sm:$0xf]
        %v2384 = vld [vmem:[%s10 + $0x298] sm:$0xf]
        %v2385 = vld [vmem:[%s10 + $0x29c] sm:$0xf]
        %v2386 = vld [vmem:[%s10 + $0x2a0] sm:$0xf]
        %v2387 = vld [vmem:[%s10 + $0x2a4] sm:$0xf]
        %v2388 = vld [vmem:[%s10 + $0x2a8] sm:$0xf]
        %v2389 = vld [vmem:[%s10 + $0x2ac] sm:$0xf]
        %v2390 = vld [vmem:[%s10 + $0x2b0] sm:$0xf]
        %v2391 = vld [vmem:[%s10 + $0x2b4] sm:$0xf]
        %v2392 = vld [vmem:[%s10 + $0x2b8] sm:$0xf]
        %v2393 = vld [vmem:[%s10 + $0x2bc] sm:$0xf]
        %v2394 = vld [vmem:[%s10 + $0x2c0] sm:$0xf]
        %v2395 = vld [vmem:[%s10 + $0x2c4] sm:$0xf]
        %v2396 = vld [vmem:[%s10 + $0x2c8] sm:$0xf]
        %v2397 = vld [vmem:[%s10 + $0x2cc] sm:$0xf]
        %v2398 = vld [vmem:[%s10 + $0x2d0] sm:$0xf]
        %v2399 = vld [vmem:[%s10 + $0x2d4] sm:$0xf]
        %v2400 = vld [vmem:[%s10 + $0x2d8] sm:$0xf]
        %v2401 = vld [vmem:[%s10 + $0x2dc] sm:$0xf]
        %v2402 = vld [vmem:[%s10 + $0x2e0] sm:$0xf]
        %v2403 = vld [vmem:[%s10 + $0x2e4] sm:$0xf]
        %v2404 = vld [vmem:[%s10 + $0x2e8] sm:$0xf]
        %v2405 = vld [vmem:[%s10 + $0x2ec] sm:$0xf]
        %v2406 = vld [vmem:[%s10 + $0x2f0] sm:$0xf]
        %v2407 = vld [vmem:[%s10 + $0x2f4] sm:$0xf]
        %v2408 = vld [vmem:[%s10 + $0x2f8] sm:$0xf]
        %v2409 = vld [vmem:[%s10 + $0x2fc] sm:$0xf]
        %v2411 = vlaneseq
        %v2412 = vshrl.u32 %v2411, 7
        %v2413 = vsub.s32 0, %v2412
        %v2414 = vrot.slane %v2345, %v2413
        %v2415 = vlaneseq
        %v2416 = vshrl.u32 %v2415, 7
        %v2417 = vsub.s32 1, %v2416
        %v2418 = vrot.slane %v2345, %v2417
        %v2419 = vlaneseq
        %v2420 = vshrl.u32 %v2419, 7
        %v2421 = vsub.s32 2, %v2420
        %v2422 = vrot.slane %v2345, %v2421
        %v2423 = vlaneseq
        %v2424 = vshrl.u32 %v2423, 7
        %v2425 = vsub.s32 3, %v2424
        %v2426 = vrot.slane %v2345, %v2425
        %v2435 = vunpack.c.l.b16 %v2341
        %v2436 = vunpack.c.h.b16 %v2341
        %v2437 = vunpack.c.l.b16 %v2342
        %v2438 = vunpack.c.h.b16 %v2342
        %v2439 = vunpack.c.l.b16 %v2343
        %v2440 = vunpack.c.h.b16 %v2343
        %v2441 = vunpack.c.l.b16 %v2344
        %v2442 = vunpack.c.h.b16 %v2344
        %v2443 = vpack.c.b16 %v2439, %v2435
        %v2444 = vpack.c.b16 %v2440, %v2436
        %v2445 = vpack.c.b16 %v2441, %v2437
        %v2446 = vpack.c.b16 %v2442, %v2438
        %2451 = vmatprep.subr.bf16.mxu0 %v2444
        %2452 = vmatpush1.bf16.msra.mxu0 %v2443
        %2453 = vmatprep.subr.bf16.mxu0 0
        %2454 = vmatpush1.bf16.msra.mxu0 0
        %2455 = vmatprep.subr.bf16.mxu0 0
        %2456 = vmatpush1.bf16.msra.mxu0 0
        %2457 = vmatprep.subr.bf16.mxu0 0
        %2458 = vmatpush1.bf16.msra.mxu0 0
        %2459 = vmatprep.subr.bf16.mxu0 0
        %2460 = vmatpush1.bf16.msra.mxu0 0
        %2461 = vmatprep.subr.bf16.mxu0 0
        %2462 = vmatpush1.bf16.msra.mxu0 0
        %2463 = vmatprep.subr.bf16.mxu0 0
        %2464 = vmatpush1.bf16.msra.mxu0 0
        %2465 = vmatprep.subr.bf16.mxu0 0
        %2466 = vmatpush1.bf16.msra.mxu0 0
        %2467 = vmatprep.subr.bf16.mxu0 0
        %2468 = vmatpush1.bf16.msra.mxu0 0
        %2469 = vmatprep.subr.bf16.mxu0 0
        %2470 = vmatpush1.bf16.msra.mxu0 0
        %2471 = vmatprep.subr.bf16.mxu0 0
        %2472 = vmatpush1.bf16.msra.mxu0 0
        %2473 = vmatprep.subr.bf16.mxu0 0
        %2474 = vmatpush1.bf16.msra.mxu0 0
        %2475 = vmatprep.subr.bf16.mxu0 0
        %2476 = vmatpush1.bf16.msra.mxu0 0
        %2477 = vmatprep.subr.bf16.mxu0 0
        %2478 = vmatpush1.bf16.msra.mxu0 0
        %2479 = vmatprep.subr.bf16.mxu0 0
        %2480 = vmatpush1.bf16.msra.mxu0 0
        %2481 = vmatprep.subr.bf16.mxu0 0
        %2482 = vmatpush1.bf16.msra.mxu0 0
        %2483 = vmatprep.mubr.bf16.mxu0 0
        %2484 = vmatmul.mubr.bf16.gmra.mrb[0].mxu0 %v1505
        %v2485 = vpop.f32.mrb[0].mxu0
        %v2486 = vadd.f32 %v2414, %v2485
        %v2487 = vpop.f32.mrb[0].mxu0
        %v2488 = vadd.f32 %v2418, %v2487
        %v2489 = vpop.f32.mrb[0].mxu0
        %v2490 = vpop.f32.mrb[0].mxu0
        %2491 = vdwg.mxu0
        %2492 = vmatprep.subr.bf16.mxu0 %v2446
        %2493 = vmatpush1.bf16.msra.mxu0 %v2445
        %2494 = vmatprep.subr.bf16.mxu0 0
        %2495 = vmatpush1.bf16.msra.mxu0 0
        %2496 = vmatprep.subr.bf16.mxu0 0
        %2497 = vmatpush1.bf16.msra.mxu0 0
        %2498 = vmatprep.subr.bf16.mxu0 0
        %2499 = vmatpush1.bf16.msra.mxu0 0
        %2500 = vmatprep.subr.bf16.mxu0 0
        %2501 = vmatpush1.bf16.msra.mxu0 0
        %2502 = vmatprep.subr.bf16.mxu0 0
        %2503 = vmatpush1.bf16.msra.mxu0 0
        %2504 = vmatprep.subr.bf16.mxu0 0
        %2505 = vmatpush1.bf16.msra.mxu0 0
        %2506 = vmatprep.subr.bf16.mxu0 0
        %2507 = vmatpush1.bf16.msra.mxu0 0
        %2508 = vmatprep.subr.bf16.mxu0 0
        %2509 = vmatpush1.bf16.msra.mxu0 0
        %2510 = vmatprep.subr.bf16.mxu0 0
        %2511 = vmatpush1.bf16.msra.mxu0 0
        %2512 = vmatprep.subr.bf16.mxu0 0
        %2513 = vmatpush1.bf16.msra.mxu0 0
        %2514 = vmatprep.subr.bf16.mxu0 0
        %2515 = vmatpush1.bf16.msra.mxu0 0
        %2516 = vmatprep.subr.bf16.mxu0 0
        %2517 = vmatpush1.bf16.msra.mxu0 0
        %2518 = vmatprep.subr.bf16.mxu0 0
        %2519 = vmatpush1.bf16.msra.mxu0 0
        %2520 = vmatprep.subr.bf16.mxu0 0
        %2521 = vmatpush1.bf16.msra.mxu0 0
        %2522 = vmatprep.subr.bf16.mxu0 0
        %2523 = vmatpush1.bf16.msra.mxu0 0
        %2524 = vmatprep.mubr.bf16.mxu0 0
        %2525 = vmatmul.mubr.bf16.gmra.mrb[0].mxu0 %v1505
        %v2526 = vpop.f32.mrb[0].mxu0
        %v2527 = vadd.f32 %v2422, %v2526
        %v2528 = vpop.f32.mrb[0].mxu0
        %v2529 = vadd.f32 %v2426, %v2528
        %v2530 = vpop.f32.mrb[0].mxu0
        %v2531 = vpop.f32.mrb[0].mxu0
        %2532 = vdwg.mxu0
        %v2533 = vmax.f32 %v2486, 0.0
        %v2534 = vmax.f32 %v2488, 0.0
        %v2535 = vmax.f32 %v2527, 0.0
        %v2536 = vmax.f32 %v2529, 0.0
        %v2537 = vpack.c.bf16 %v2533, %v2533
        %v2538 = vpack.c.bf16 %v2534, %v2534
        %v2539 = vpack.c.bf16 %v2535, %v2535
        %v2540 = vpack.c.bf16 %v2536, %v2536
        %v2605 = vunpack.c.l.b16 %v2346
        %v2606 = vunpack.c.l.b16 %v2347
        %v2607 = vunpack.c.l.b16 %v2348
        %v2608 = vunpack.c.l.b16 %v2349
        %v2609 = vunpack.c.l.b16 %v2350
        %v2610 = vunpack.c.l.b16 %v2351
        %v2611 = vunpack.c.l.b16 %v2352
        %v2612 = vunpack.c.l.b16 %v2353
        %v2613 = vunpack.c.l.b16 %v2354
        %v2614 = vunpack.c.l.b16 %v2355
        %v2615 = vunpack.c.l.b16 %v2356
        %v2616 = vunpack.c.l.b16 %v2357
        %v2617 = vunpack.c.l.b16 %v2358
        %v2618 = vunpack.c.l.b16 %v2359
        %v2619 = vunpack.c.l.b16 %v2360
        %v2620 = vunpack.c.l.b16 %v2361
        %v2621 = vunpack.c.l.b16 %v2362
        %v2622 = vunpack.c.l.b16 %v2363
        %v2623 = vunpack.c.l.b16 %v2364
        %v2624 = vunpack.c.l.b16 %v2365
        %v2625 = vunpack.c.l.b16 %v2366
        %v2626 = vunpack.c.l.b16 %v2367
        %v2627 = vunpack.c.l.b16 %v2368
        %v2628 = vunpack.c.l.b16 %v2369
        %v2629 = vunpack.c.l.b16 %v2370
        %v2630 = vunpack.c.l.b16 %v2371
        %v2631 = vunpack.c.l.b16 %v2372
        %v2632 = vunpack.c.l.b16 %v2373
        %v2633 = vunpack.c.l.b16 %v2374
        %v2634 = vunpack.c.l.b16 %v2375
        %v2635 = vunpack.c.l.b16 %v2376
        %v2636 = vunpack.c.l.b16 %v2377
        %v2637 = vunpack.c.l.b16 %v2378
        %v2638 = vunpack.c.l.b16 %v2379
        %v2639 = vunpack.c.l.b16 %v2380
        %v2640 = vunpack.c.l.b16 %v2381
        %v2641 = vunpack.c.l.b16 %v2382
        %v2642 = vunpack.c.l.b16 %v2383
        %v2643 = vunpack.c.l.b16 %v2384
        %v2644 = vunpack.c.l.b16 %v2385
        %v2645 = vunpack.c.l.b16 %v2386
        %v2646 = vunpack.c.l.b16 %v2387
        %v2647 = vunpack.c.l.b16 %v2388
        %v2648 = vunpack.c.l.b16 %v2389
        %v2649 = vunpack.c.l.b16 %v2390
        %v2650 = vunpack.c.l.b16 %v2391
        %v2651 = vunpack.c.l.b16 %v2392
        %v2652 = vunpack.c.l.b16 %v2393
        %v2653 = vunpack.c.l.b16 %v2394
        %v2654 = vunpack.c.l.b16 %v2395
        %v2655 = vunpack.c.l.b16 %v2396
        %v2656 = vunpack.c.l.b16 %v2397
        %v2657 = vunpack.c.l.b16 %v2398
        %v2658 = vunpack.c.l.b16 %v2399
        %v2659 = vunpack.c.l.b16 %v2400
        %v2660 = vunpack.c.l.b16 %v2401
        %v2661 = vunpack.c.l.b16 %v2402
        %v2662 = vunpack.c.l.b16 %v2403
        %v2663 = vunpack.c.l.b16 %v2404
        %v2664 = vunpack.c.l.b16 %v2405
        %v2665 = vunpack.c.l.b16 %v2406
        %v2666 = vunpack.c.l.b16 %v2407
        %v2667 = vunpack.c.l.b16 %v2408
        %v2668 = vunpack.c.l.b16 %v2409
        %v2669 = vpack.c.b16 %v2606, %v2605
        %v2670 = vpack.c.b16 %v2608, %v2607
        %v2671 = vpack.c.b16 %v2610, %v2609
        %v2672 = vpack.c.b16 %v2612, %v2611
        %v2673 = vpack.c.b16 %v2614, %v2613
        %v2674 = vpack.c.b16 %v2616, %v2615
        %v2675 = vpack.c.b16 %v2618, %v2617
        %v2676 = vpack.c.b16 %v2620, %v2619
        %v2677 = vpack.c.b16 %v2622, %v2621
        %v2678 = vpack.c.b16 %v2624, %v2623
        %v2679 = vpack.c.b16 %v2626, %v2625
        %v2680 = vpack.c.b16 %v2628, %v2627
        %v2681 = vpack.c.b16 %v2630, %v2629
        %v2682 = vpack.c.b16 %v2632, %v2631
        %v2683 = vpack.c.b16 %v2634, %v2633
        %v2684 = vpack.c.b16 %v2636, %v2635
        %v2685 = vpack.c.b16 %v2638, %v2637
        %v2686 = vpack.c.b16 %v2640, %v2639
        %v2687 = vpack.c.b16 %v2642, %v2641
        %v2688 = vpack.c.b16 %v2644, %v2643
        %v2689 = vpack.c.b16 %v2646, %v2645
        %v2690 = vpack.c.b16 %v2648, %v2647
        %v2691 = vpack.c.b16 %v2650, %v2649
        %v2692 = vpack.c.b16 %v2652, %v2651
        %v2693 = vpack.c.b16 %v2654, %v2653
        %v2694 = vpack.c.b16 %v2656, %v2655
        %v2695 = vpack.c.b16 %v2658, %v2657
        %v2696 = vpack.c.b16 %v2660, %v2659
        %v2697 = vpack.c.b16 %v2662, %v2661
        %v2698 = vpack.c.b16 %v2664, %v2663
        %v2699 = vpack.c.b16 %v2666, %v2665
        %v2700 = vpack.c.b16 %v2668, %v2667
        %2733 = vmatprep.subr.bf16.mxu0 0
        %2734 = vmatpush1.bf16.msra.mxu0 %v2669
        %2735 = vmatprep.subr.bf16.mxu0 0
        %2736 = vmatpush1.bf16.msra.mxu0 %v2670
        %2737 = vmatprep.subr.bf16.mxu0 0
        %2738 = vmatpush1.bf16.msra.mxu0 %v2671
        %2739 = vmatprep.subr.bf16.mxu0 0
        %2740 = vmatpush1.bf16.msra.mxu0 %v2672
        %2741 = vmatprep.subr.bf16.mxu0 0
        %2742 = vmatpush1.bf16.msra.mxu0 %v2673
        %2743 = vmatprep.subr.bf16.mxu0 0
        %2744 = vmatpush1.bf16.msra.mxu0 %v2674
        %2745 = vmatprep.subr.bf16.mxu0 0
        %2746 = vmatpush1.bf16.msra.mxu0 %v2675
        %2747 = vmatprep.subr.bf16.mxu0 0
        %2748 = vmatpush1.bf16.msra.mxu0 %v2676
        %2749 = vmatprep.subr.bf16.mxu0 0
        %2750 = vmatpush1.bf16.msra.mxu0 %v2677
        %2751 = vmatprep.subr.bf16.mxu0 0
        %2752 = vmatpush1.bf16.msra.mxu0 %v2678
        %2753 = vmatprep.subr.bf16.mxu0 0
        %2754 = vmatpush1.bf16.msra.mxu0 %v2679
        %2755 = vmatprep.subr.bf16.mxu0 0
        %2756 = vmatpush1.bf16.msra.mxu0 %v2680
        %2757 = vmatprep.subr.bf16.mxu0 0
        %2758 = vmatpush1.bf16.msra.mxu0 %v2681
        %2759 = vmatprep.subr.bf16.mxu0 0
        %2760 = vmatpush1.bf16.msra.mxu0 %v2682
        %2761 = vmatprep.subr.bf16.mxu0 0
        %2762 = vmatpush1.bf16.msra.mxu0 %v2683
        %2763 = vmatprep.subr.bf16.mxu0 0
        %2764 = vmatpush1.bf16.msra.mxu0 %v2684
        %2765 = vmatprep.mubr.bf16.mxu0 %v2538
        %2766 = vmatmul.mubr.bf16.gmra.mrb[0].mxu0 %v2537
        %v2767 = vpop.f32.mrb[0].mxu0
        %v2768 = vadd.f32 0.0, %v2767
        %v2769 = vpop.f32.mrb[0].mxu0
        %v2770 = vpop.f32.mrb[0].mxu0
        %v2771 = vpop.f32.mrb[0].mxu0
        %2772 = vdwg.mxu0
        %2773 = vmatprep.subr.bf16.mxu0 0
        %2774 = vmatpush1.bf16.msra.mxu0 %v2685
        %2775 = vmatprep.subr.bf16.mxu0 0
        %2776 = vmatpush1.bf16.msra.mxu0 %v2686
        %2777 = vmatprep.subr.bf16.mxu0 0
        %2778 = vmatpush1.bf16.msra.mxu0 %v2687
        %2779 = vmatprep.subr.bf16.mxu0 0
        %2780 = vmatpush1.bf16.msra.mxu0 %v2688
        %2781 = vmatprep.subr.bf16.mxu0 0
        %2782 = vmatpush1.bf16.msra.mxu0 %v2689
        %2783 = vmatprep.subr.bf16.mxu0 0
        %2784 = vmatpush1.bf16.msra.mxu0 %v2690
        %2785 = vmatprep.subr.bf16.mxu0 0
        %2786 = vmatpush1.bf16.msra.mxu0 %v2691
        %2787 = vmatprep.subr.bf16.mxu0 0
        %2788 = vmatpush1.bf16.msra.mxu0 %v2692
        %2789 = vmatprep.subr.bf16.mxu0 0
        %2790 = vmatpush1.bf16.msra.mxu0 %v2693
        %2791 = vmatprep.subr.bf16.mxu0 0
        %2792 = vmatpush1.bf16.msra.mxu0 %v2694
        %2793 = vmatprep.subr.bf16.mxu0 0
        %2794 = vmatpush1.bf16.msra.mxu0 %v2695
        %2795 = vmatprep.subr.bf16.mxu0 0
        %2796 = vmatpush1.bf16.msra.mxu0 %v2696
        %2797 = vmatprep.subr.bf16.mxu0 0
        %2798 = vmatpush1.bf16.msra.mxu0 %v2697
        %2799 = vmatprep.subr.bf16.mxu0 0
        %2800 = vmatpush1.bf16.msra.mxu0 %v2698
        %2801 = vmatprep.subr.bf16.mxu0 0
        %2802 = vmatpush1.bf16.msra.mxu0 %v2699
        %2803 = vmatprep.subr.bf16.mxu0 0
        %2804 = vmatpush1.bf16.msra.mxu0 %v2700
        %2805 = vmatprep.mubr.bf16.mxu0 %v2540
        %2806 = vmatmul.mubr.bf16.gmra.mrb[0].mxu0 %v2539
        %v2807 = vpop.f32.mrb[0].mxu0
        %v2808 = vadd.f32 %v2768, %v2807
        %v2809 = vpop.f32.mrb[0].mxu0
        %v2810 = vpop.f32.mrb[0].mxu0
        %v2811 = vpop.f32.mrb[0].mxu0
        %2812 = vdwg.mxu0
        %v2813 = vadd.f32 %v2336, %v2808
        %v2814 = vld [vmem:[%s8 + $0x30] sm:$0xff]
        %v2815 = vld [vmem:[%s8 + $0x38] sm:$0xff]
        %v2816 = vld [vmem:[%s8 + $0x70] sm:$0xff]
        %v2817 = vld [vmem:[%s8 + $0x78] sm:$0xff]
        %v2818 = vld [vmem:[%s9 + $0xc] sm:$0xf]
        %v2819 = vld [vmem:[%s10 + $0x300] sm:$0xf]
        %v2820 = vld [vmem:[%s10 + $0x304] sm:$0xf]
        %v2821 = vld [vmem:[%s10 + $0x308] sm:$0xf]
        %v2822 = vld [vmem:[%s10 + $0x30c] sm:$0xf]
        %v2823 = vld [vmem:[%s10 + $0x310] sm:$0xf]
        %v2824 = vld [vmem:[%s10 + $0x314] sm:$0xf]
        %v2825 = vld [vmem:[%s10 + $0x318] sm:$0xf]
        %v2826 = vld [vmem:[%s10 + $0x31c] sm:$0xf]
        %v2827 = vld [vmem:[%s10 + $0x320] sm:$0xf]
        %v2828 = vld [vmem:[%s10 + $0x324] sm:$0xf]
        %v2829 = vld [vmem:[%s10 + $0x328] sm:$0xf]
        %v2830 = vld [vmem:[%s10 + $0x32c] sm:$0xf]
        %v2831 = vld [vmem:[%s10 + $0x330] sm:$0xf]
        %v2832 = vld [vmem:[%s10 + $0x334] sm:$0xf]
        %v2833 = vld [vmem:[%s10 + $0x338] sm:$0xf]
        %v2834 = vld [vmem:[%s10 + $0x33c] sm:$0xf]
        %v2835 = vld [vmem:[%s10 + $0x340] sm:$0xf]
        %v2836 = vld [vmem:[%s10 + $0x344] sm:$0xf]
        %v2837 = vld [vmem:[%s10 + $0x348] sm:$0xf]
        %v2838 = vld [vmem:[%s10 + $0x34c] sm:$0xf]
        %v2839 = vld [vmem:[%s10 + $0x350] sm:$0xf]
        %v2840 = vld [vmem:[%s10 + $0x354] sm:$0xf]
        %v2841 = vld [vmem:[%s10 + $0x358] sm:$0xf]
        %v2842 = vld [vmem:[%s10 + $0x35c] sm:$0xf]
        %v2843 = vld [vmem:[%s10 + $0x360] sm:$0xf]
        %v2844 = vld [vmem:[%s10 + $0x364] sm:$0xf]
        %v2845 = vld [vmem:[%s10 + $0x368] sm:$0xf]
        %v2846 = vld [vmem:[%s10 + $0x36c] sm:$0xf]
        %v2847 = vld [vmem:[%s10 + $0x370] sm:$0xf]
        %v2848 = vld [vmem:[%s10 + $0x374] sm:$0xf]
        %v2849 = vld [vmem:[%s10 + $0x378] sm:$0xf]
        %v2850 = vld [vmem:[%s10 + $0x37c] sm:$0xf]
        %v2851 = vld [vmem:[%s10 + $0x380] sm:$0xf]
        %v2852 = vld [vmem:[%s10 + $0x384] sm:$0xf]
        %v2853 = vld [vmem:[%s10 + $0x388] sm:$0xf]
        %v2854 = vld [vmem:[%s10 + $0x38c] sm:$0xf]
        %v2855 = vld [vmem:[%s10 + $0x390] sm:$0xf]
        %v2856 = vld [vmem:[%s10 + $0x394] sm:$0xf]
        %v2857 = vld [vmem:[%s10 + $0x398] sm:$0xf]
        %v2858 = vld [vmem:[%s10 + $0x39c] sm:$0xf]
        %v2859 = vld [vmem:[%s10 + $0x3a0] sm:$0xf]
        %v2860 = vld [vmem:[%s10 + $0x3a4] sm:$0xf]
        %v2861 = vld [vmem:[%s10 + $0x3a8] sm:$0xf]
        %v2862 = vld [vmem:[%s10 + $0x3ac] sm:$0xf]
        %v2863 = vld [vmem:[%s10 + $0x3b0] sm:$0xf]
        %v2864 = vld [vmem:[%s10 + $0x3b4] sm:$0xf]
        %v2865 = vld [vmem:[%s10 + $0x3b8] sm:$0xf]
        %v2866 = vld [vmem:[%s10 + $0x3bc] sm:$0xf]
        %v2867 = vld [vmem:[%s10 + $0x3c0] sm:$0xf]
        %v2868 = vld [vmem:[%s10 + $0x3c4] sm:$0xf]
        %v2869 = vld [vmem:[%s10 + $0x3c8] sm:$0xf]
        %v2870 = vld [vmem:[%s10 + $0x3cc] sm:$0xf]
        %v2871 = vld [vmem:[%s10 + $0x3d0] sm:$0xf]
        %v2872 = vld [vmem:[%s10 + $0x3d4] sm:$0xf]
        %v2873 = vld [vmem:[%s10 + $0x3d8] sm:$0xf]
        %v2874 = vld [vmem:[%s10 + $0x3dc] sm:$0xf]
        %v2875 = vld [vmem:[%s10 + $0x3e0] sm:$0xf]
        %v2876 = vld [vmem:[%s10 + $0x3e4] sm:$0xf]
        %v2877 = vld [vmem:[%s10 + $0x3e8] sm:$0xf]
        %v2878 = vld [vmem:[%s10 + $0x3ec] sm:$0xf]
        %v2879 = vld [vmem:[%s10 + $0x3f0] sm:$0xf]
        %v2880 = vld [vmem:[%s10 + $0x3f4] sm:$0xf]
        %v2881 = vld [vmem:[%s10 + $0x3f8] sm:$0xf]
        %v2882 = vld [vmem:[%s10 + $0x3fc] sm:$0xf]
        %v2884 = vlaneseq
        %v2885 = vshrl.u32 %v2884, 7
        %v2886 = vsub.s32 0, %v2885
        %v2887 = vrot.slane %v2818, %v2886
        %v2888 = vlaneseq
        %v2889 = vshrl.u32 %v2888, 7
        %v2890 = vsub.s32 1, %v2889
        %v2891 = vrot.slane %v2818, %v2890
        %v2892 = vlaneseq
        %v2893 = vshrl.u32 %v2892, 7
        %v2894 = vsub.s32 2, %v2893
        %v2895 = vrot.slane %v2818, %v2894
        %v2896 = vlaneseq
        %v2897 = vshrl.u32 %v2896, 7
        %v2898 = vsub.s32 3, %v2897
        %v2899 = vrot.slane %v2818, %v2898
        %v2908 = vunpack.c.l.b16 %v2814
        %v2909 = vunpack.c.h.b16 %v2814
        %v2910 = vunpack.c.l.b16 %v2815
        %v2911 = vunpack.c.h.b16 %v2815
        %v2912 = vunpack.c.l.b16 %v2816
        %v2913 = vunpack.c.h.b16 %v2816
        %v2914 = vunpack.c.l.b16 %v2817
        %v2915 = vunpack.c.h.b16 %v2817
        %v2916 = vpack.c.b16 %v2912, %v2908
        %v2917 = vpack.c.b16 %v2913, %v2909
        %v2918 = vpack.c.b16 %v2914, %v2910
        %v2919 = vpack.c.b16 %v2915, %v2911
        %2924 = vmatprep.subr.bf16.mxu0 %v2917
        %2925 = vmatpush1.bf16.msra.mxu0 %v2916
        %2926 = vmatprep.subr.bf16.mxu0 0
        %2927 = vmatpush1.bf16.msra.mxu0 0
        %2928 = vmatprep.subr.bf16.mxu0 0
        %2929 = vmatpush1.bf16.msra.mxu0 0
        %2930 = vmatprep.subr.bf16.mxu0 0
        %2931 = vmatpush1.bf16.msra.mxu0 0
        %2932 = vmatprep.subr.bf16.mxu0 0
        %2933 = vmatpush1.bf16.msra.mxu0 0
        %2934 = vmatprep.subr.bf16.mxu0 0
        %2935 = vmatpush1.bf16.msra.mxu0 0
        %2936 = vmatprep.subr.bf16.mxu0 0
        %2937 = vmatpush1.bf16.msra.mxu0 0
        %2938 = vmatprep.subr.bf16.mxu0 0
        %2939 = vmatpush1.bf16.msra.mxu0 0
        %2940 = vmatprep.subr.bf16.mxu0 0
        %2941 = vmatpush1.bf16.msra.mxu0 0
        %2942 = vmatprep.subr.bf16.mxu0 0
        %2943 = vmatpush1.bf16.msra.mxu0 0
        %2944 = vmatprep.subr.bf16.mxu0 0
        %2945 = vmatpush1.bf16.msra.mxu0 0
        %2946 = vmatprep.subr.bf16.mxu0 0
        %2947 = vmatpush1.bf16.msra.mxu0 0
        %2948 = vmatprep.subr.bf16.mxu0 0
        %2949 = vmatpush1.bf16.msra.mxu0 0
        %2950 = vmatprep.subr.bf16.mxu0 0
        %2951 = vmatpush1.bf16.msra.mxu0 0
        %2952 = vmatprep.subr.bf16.mxu0 0
        %2953 = vmatpush1.bf16.msra.mxu0 0
        %2954 = vmatprep.subr.bf16.mxu0 0
        %2955 = vmatpush1.bf16.msra.mxu0 0
        %2956 = vmatprep.mubr.bf16.mxu0 0
        %2957 = vmatmul.mubr.bf16.gmra.mrb[0].mxu0 %v1505
        %v2958 = vpop.f32.mrb[0].mxu0
        %v2959 = vadd.f32 %v2887, %v2958
        %v2960 = vpop.f32.mrb[0].mxu0
        %v2961 = vadd.f32 %v2891, %v2960
        %v2962 = vpop.f32.mrb[0].mxu0
        %v2963 = vpop.f32.mrb[0].mxu0
        %2964 = vdwg.mxu0
        %2965 = vmatprep.subr.bf16.mxu0 %v2919
        %2966 = vmatpush1.bf16.msra.mxu0 %v2918
        %2967 = vmatprep.subr.bf16.mxu0 0
        %2968 = vmatpush1.bf16.msra.mxu0 0
        %2969 = vmatprep.subr.bf16.mxu0 0
        %2970 = vmatpush1.bf16.msra.mxu0 0
        %2971 = vmatprep.subr.bf16.mxu0 0
        %2972 = vmatpush1.bf16.msra.mxu0 0
        %2973 = vmatprep.subr.bf16.mxu0 0
        %2974 = vmatpush1.bf16.msra.mxu0 0
        %2975 = vmatprep.subr.bf16.mxu0 0
        %2976 = vmatpush1.bf16.msra.mxu0 0
        %2977 = vmatprep.subr.bf16.mxu0 0
        %2978 = vmatpush1.bf16.msra.mxu0 0
        %2979 = vmatprep.subr.bf16.mxu0 0
        %2980 = vmatpush1.bf16.msra.mxu0 0
        %2981 = vmatprep.subr.bf16.mxu0 0
        %2982 = vmatpush1.bf16.msra.mxu0 0
        %2983 = vmatprep.subr.bf16.mxu0 0
        %2984 = vmatpush1.bf16.msra.mxu0 0
        %2985 = vmatprep.subr.bf16.mxu0 0
        %2986 = vmatpush1.bf16.msra.mxu0 0
        %2987 = vmatprep.subr.bf16.mxu0 0
        %2988 = vmatpush1.bf16.msra.mxu0 0
        %2989 = vmatprep.subr.bf16.mxu0 0
        %2990 = vmatpush1.bf16.msra.mxu0 0
        %2991 = vmatprep.subr.bf16.mxu0 0
        %2992 = vmatpush1.bf16.msra.mxu0 0
        %2993 = vmatprep.subr.bf16.mxu0 0
        %2994 = vmatpush1.bf16.msra.mxu0 0
        %2995 = vmatprep.subr.bf16.mxu0 0
        %2996 = vmatpush1.bf16.msra.mxu0 0
        %2997 = vmatprep.mubr.bf16.mxu0 0
        %2998 = vmatmul.mubr.bf16.gmra.mrb[0].mxu0 %v1505
        %v2999 = vpop.f32.mrb[0].mxu0
        %v3000 = vadd.f32 %v2895, %v2999
        %v3001 = vpop.f32.mrb[0].mxu0
        %v3002 = vadd.f32 %v2899, %v3001
        %v3003 = vpop.f32.mrb[0].mxu0
        %v3004 = vpop.f32.mrb[0].mxu0
        %3005 = vdwg.mxu0
        %v3006 = vmax.f32 %v2959, 0.0
        %v3007 = vmax.f32 %v2961, 0.0
        %v3008 = vmax.f32 %v3000, 0.0
        %v3009 = vmax.f32 %v3002, 0.0
        %v3010 = vpack.c.bf16 %v3006, %v3006
        %v3011 = vpack.c.bf16 %v3007, %v3007
        %v3012 = vpack.c.bf16 %v3008, %v3008
        %v3013 = vpack.c.bf16 %v3009, %v3009
        %v3078 = vunpack.c.l.b16 %v2819
        %v3079 = vunpack.c.l.b16 %v2820
        %v3080 = vunpack.c.l.b16 %v2821
        %v3081 = vunpack.c.l.b16 %v2822
        %v3082 = vunpack.c.l.b16 %v2823
        %v3083 = vunpack.c.l.b16 %v2824
        %v3084 = vunpack.c.l.b16 %v2825
        %v3085 = vunpack.c.l.b16 %v2826
        %v3086 = vunpack.c.l.b16 %v2827
        %v3087 = vunpack.c.l.b16 %v2828
        %v3088 = vunpack.c.l.b16 %v2829
        %v3089 = vunpack.c.l.b16 %v2830
        %v3090 = vunpack.c.l.b16 %v2831
        %v3091 = vunpack.c.l.b16 %v2832
        %v3092 = vunpack.c.l.b16 %v2833
        %v3093 = vunpack.c.l.b16 %v2834
        %v3094 = vunpack.c.l.b16 %v2835
        %v3095 = vunpack.c.l.b16 %v2836
        %v3096 = vunpack.c.l.b16 %v2837
        %v3097 = vunpack.c.l.b16 %v2838
        %v3098 = vunpack.c.l.b16 %v2839
        %v3099 = vunpack.c.l.b16 %v2840
        %v3100 = vunpack.c.l.b16 %v2841
        %v3101 = vunpack.c.l.b16 %v2842
        %v3102 = vunpack.c.l.b16 %v2843
        %v3103 = vunpack.c.l.b16 %v2844
        %v3104 = vunpack.c.l.b16 %v2845
        %v3105 = vunpack.c.l.b16 %v2846
        %v3106 = vunpack.c.l.b16 %v2847
        %v3107 = vunpack.c.l.b16 %v2848
        %v3108 = vunpack.c.l.b16 %v2849
        %v3109 = vunpack.c.l.b16 %v2850
        %v3110 = vunpack.c.l.b16 %v2851
        %v3111 = vunpack.c.l.b16 %v2852
        %v3112 = vunpack.c.l.b16 %v2853
        %v3113 = vunpack.c.l.b16 %v2854
        %v3114 = vunpack.c.l.b16 %v2855
        %v3115 = vunpack.c.l.b16 %v2856
        %v3116 = vunpack.c.l.b16 %v2857
        %v3117 = vunpack.c.l.b16 %v2858
        %v3118 = vunpack.c.l.b16 %v2859
        %v3119 = vunpack.c.l.b16 %v2860
        %v3120 = vunpack.c.l.b16 %v2861
        %v3121 = vunpack.c.l.b16 %v2862
        %v3122 = vunpack.c.l.b16 %v2863
        %v3123 = vunpack.c.l.b16 %v2864
        %v3124 = vunpack.c.l.b16 %v2865
        %v3125 = vunpack.c.l.b16 %v2866
        %v3126 = vunpack.c.l.b16 %v2867
        %v3127 = vunpack.c.l.b16 %v2868
        %v3128 = vunpack.c.l.b16 %v2869
        %v3129 = vunpack.c.l.b16 %v2870
        %v3130 = vunpack.c.l.b16 %v2871
        %v3131 = vunpack.c.l.b16 %v2872
        %v3132 = vunpack.c.l.b16 %v2873
        %v3133 = vunpack.c.l.b16 %v2874
        %v3134 = vunpack.c.l.b16 %v2875
        %v3135 = vunpack.c.l.b16 %v2876
        %v3136 = vunpack.c.l.b16 %v2877
        %v3137 = vunpack.c.l.b16 %v2878
        %v3138 = vunpack.c.l.b16 %v2879
        %v3139 = vunpack.c.l.b16 %v2880
        %v3140 = vunpack.c.l.b16 %v2881
        %v3141 = vunpack.c.l.b16 %v2882
        %v3142 = vpack.c.b16 %v3079, %v3078
        %v3143 = vpack.c.b16 %v3081, %v3080
        %v3144 = vpack.c.b16 %v3083, %v3082
        %v3145 = vpack.c.b16 %v3085, %v3084
        %v3146 = vpack.c.b16 %v3087, %v3086
        %v3147 = vpack.c.b16 %v3089, %v3088
        %v3148 = vpack.c.b16 %v3091, %v3090
        %v3149 = vpack.c.b16 %v3093, %v3092
        %v3150 = vpack.c.b16 %v3095, %v3094
        %v3151 = vpack.c.b16 %v3097, %v3096
        %v3152 = vpack.c.b16 %v3099, %v3098
        %v3153 = vpack.c.b16 %v3101, %v3100
        %v3154 = vpack.c.b16 %v3103, %v3102
        %v3155 = vpack.c.b16 %v3105, %v3104
        %v3156 = vpack.c.b16 %v3107, %v3106
        %v3157 = vpack.c.b16 %v3109, %v3108
        %v3158 = vpack.c.b16 %v3111, %v3110
        %v3159 = vpack.c.b16 %v3113, %v3112
        %v3160 = vpack.c.b16 %v3115, %v3114
        %v3161 = vpack.c.b16 %v3117, %v3116
        %v3162 = vpack.c.b16 %v3119, %v3118
        %v3163 = vpack.c.b16 %v3121, %v3120
        %v3164 = vpack.c.b16 %v3123, %v3122
        %v3165 = vpack.c.b16 %v3125, %v3124
        %v3166 = vpack.c.b16 %v3127, %v3126
        %v3167 = vpack.c.b16 %v3129, %v3128
        %v3168 = vpack.c.b16 %v3131, %v3130
        %v3169 = vpack.c.b16 %v3133, %v3132
        %v3170 = vpack.c.b16 %v3135, %v3134
        %v3171 = vpack.c.b16 %v3137, %v3136
        %v3172 = vpack.c.b16 %v3139, %v3138
        %v3173 = vpack.c.b16 %v3141, %v3140
        %3206 = vmatprep.subr.bf16.mxu0 0
        %3207 = vmatpush1.bf16.msra.mxu0 %v3142
        %3208 = vmatprep.subr.bf16.mxu0 0
        %3209 = vmatpush1.bf16.msra.mxu0 %v3143
        %3210 = vmatprep.subr.bf16.mxu0 0
        %3211 = vmatpush1.bf16.msra.mxu0 %v3144
        %3212 = vmatprep.subr.bf16.mxu0 0
        %3213 = vmatpush1.bf16.msra.mxu0 %v3145
        %3214 = vmatprep.subr.bf16.mxu0 0
        %3215 = vmatpush1.bf16.msra.mxu0 %v3146
        %3216 = vmatprep.subr.bf16.mxu0 0
        %3217 = vmatpush1.bf16.msra.mxu0 %v3147
        %3218 = vmatprep.subr.bf16.mxu0 0
        %3219 = vmatpush1.bf16.msra.mxu0 %v3148
        %3220 = vmatprep.subr.bf16.mxu0 0
        %3221 = vmatpush1.bf16.msra.mxu0 %v3149
        %3222 = vmatprep.subr.bf16.mxu0 0
        %3223 = vmatpush1.bf16.msra.mxu0 %v3150
        %3224 = vmatprep.subr.bf16.mxu0 0
        %3225 = vmatpush1.bf16.msra.mxu0 %v3151
        %3226 = vmatprep.subr.bf16.mxu0 0
        %3227 = vmatpush1.bf16.msra.mxu0 %v3152
        %3228 = vmatprep.subr.bf16.mxu0 0
        %3229 = vmatpush1.bf16.msra.mxu0 %v3153
        %3230 = vmatprep.subr.bf16.mxu0 0
        %3231 = vmatpush1.bf16.msra.mxu0 %v3154
        %3232 = vmatprep.subr.bf16.mxu0 0
        %3233 = vmatpush1.bf16.msra.mxu0 %v3155
        %3234 = vmatprep.subr.bf16.mxu0 0
        %3235 = vmatpush1.bf16.msra.mxu0 %v3156
        %3236 = vmatprep.subr.bf16.mxu0 0
        %3237 = vmatpush1.bf16.msra.mxu0 %v3157
        %3238 = vmatprep.mubr.bf16.mxu0 %v3011
        %3239 = vmatmul.mubr.bf16.gmra.mrb[0].mxu0 %v3010
        %v3240 = vpop.f32.mrb[0].mxu0
        %v3241 = vadd.f32 0.0, %v3240
        %v3242 = vpop.f32.mrb[0].mxu0
        %v3243 = vpop.f32.mrb[0].mxu0
        %v3244 = vpop.f32.mrb[0].mxu0
        %3245 = vdwg.mxu0
        %3246 = vmatprep.subr.bf16.mxu0 0
        %3247 = vmatpush1.bf16.msra.mxu0 %v3158
        %3248 = vmatprep.subr.bf16.mxu0 0
        %3249 = vmatpush1.bf16.msra.mxu0 %v3159
        %3250 = vmatprep.subr.bf16.mxu0 0
        %3251 = vmatpush1.bf16.msra.mxu0 %v3160
        %3252 = vmatprep.subr.bf16.mxu0 0
        %3253 = vmatpush1.bf16.msra.mxu0 %v3161
        %3254 = vmatprep.subr.bf16.mxu0 0
        %3255 = vmatpush1.bf16.msra.mxu0 %v3162
        %3256 = vmatprep.subr.bf16.mxu0 0
        %3257 = vmatpush1.bf16.msra.mxu0 %v3163
        %3258 = vmatprep.subr.bf16.mxu0 0
        %3259 = vmatpush1.bf16.msra.mxu0 %v3164
        %3260 = vmatprep.subr.bf16.mxu0 0
        %3261 = vmatpush1.bf16.msra.mxu0 %v3165
        %3262 = vmatprep.subr.bf16.mxu0 0
        %3263 = vmatpush1.bf16.msra.mxu0 %v3166
        %3264 = vmatprep.subr.bf16.mxu0 0
        %3265 = vmatpush1.bf16.msra.mxu0 %v3167
        %3266 = vmatprep.subr.bf16.mxu0 0
        %3267 = vmatpush1.bf16.msra.mxu0 %v3168
        %3268 = vmatprep.subr.bf16.mxu0 0
        %3269 = vmatpush1.bf16.msra.mxu0 %v3169
        %3270 = vmatprep.subr.bf16.mxu0 0
        %3271 = vmatpush1.bf16.msra.mxu0 %v3170
        %3272 = vmatprep.subr.bf16.mxu0 0
        %3273 = vmatpush1.bf16.msra.mxu0 %v3171
        %3274 = vmatprep.subr.bf16.mxu0 0
        %3275 = vmatpush1.bf16.msra.mxu0 %v3172
        %3276 = vmatprep.subr.bf16.mxu0 0
        %3277 = vmatpush1.bf16.msra.mxu0 %v3173
        %3278 = vmatprep.mubr.bf16.mxu0 %v3013
        %3279 = vmatmul.mubr.bf16.gmra.mrb[0].mxu0 %v3012
        %v3280 = vpop.f32.mrb[0].mxu0
        %v3281 = vadd.f32 %v3241, %v3280
        %v3282 = vpop.f32.mrb[0].mxu0
        %v3283 = vpop.f32.mrb[0].mxu0
        %v3284 = vpop.f32.mrb[0].mxu0
        %3285 = vdwg.mxu0
        %v3286 = vadd.f32 %v2813, %v3281
        %v3287 = vld [vmem:[%s11] sm:$0x1]
        %v3289 = vlaneseq
        %v3290 = vshrl.u32 %v3289, 7
        %v3291 = vsub.s32 0, %v3290
        %v3292 = vrot.slane %v3287, %v3291
        %v3294 = vadd.f32 %v3286, %v3292
        %v3295 = vadd.f32 %v1392, %v3294
        %v3296 = vld [vmem:[%s12] sm:$0x1]
        %v3297 = vld [vmem:[%s13] sm:$0x1]
        %v3298 = vsel %vm529, %v3295, 0.0
        %3299 = vadd.xlane.f32.xlu0 %v3298
        %v3300 = vpop.xlane.xlu0 %3299
        %v3301 = vmul.f32 %v3300, %v1368
        %v3302 = vsub.f32 %v3295, %v3301
        %v3303 = vmul.f32 %v3302, %v3302
        %v3304 = vsel %vm529, %v3303, 0.0
        %3305 = vadd.xlane.f32.xlu0 %v3304
        %v3306 = vpop.xlane.xlu0 %3305
        %v3307 = vmul.f32 %v3306, %v1368
        %v3308 = vadd.f32 %v3307, 1e-05
        %v3309 = vrsqrt.pop %v3308
        %v3310 = vmul.f32 %v3302, %v3309
        %v3312 = vlaneseq
        %v3313 = vshrl.u32 %v3312, 7
        %v3314 = vsub.s32 0, %v3313
        %v3315 = vrot.slane %v3296, %v3314
        %v3317 = vmul.f32 %v3310, %v3315
        %v3319 = vlaneseq
        %v3320 = vshrl.u32 %v3319, 7
        %v3321 = vsub.s32 0, %v3320
        %v3322 = vrot.slane %v3297, %v3321
        %v3324 = vadd.f32 %v3317, %v3322
        %s3325 = scalar_lea.vmem %s2, 16
        %v3326 = vld [vmem:[%s3325] sm:$0xff]
        %v3327 = vld [vmem:[%s3325 + $0x8] sm:$0xff]
        %s3328 = scalar_lea.vmem %s3, 1
        %v3329 = vld [vmem:[%s3328] sm:$0x1]
        %v3331 = vlaneseq
        %v3332 = vshrl.u32 %v3331, 7
        %v3333 = vsub.s32 0, %v3332
        %v3334 = vrot.slane %v3329, %v3333
        %v3337 = vsel %vm529, %v3324, 0
        %3339 = vmatprep.subr.mxu0 0.0
        %3340 = vmatpush1.msra.mxu0 %v3326
        %3341 = vmatprep.subr.mxu0 0.0
        %3342 = vmatpush1.msra.mxu0 %v3327
        %3343 = vmatprep.subr.mxu0 0.0
        %3344 = vmatpush1.msra.mxu0 0.0
        %3345 = vmatprep.subr.mxu0 0.0
        %3346 = vmatpush1.msra.mxu0 0.0
        %3347 = vmatprep.subr.mxu0 0.0
        %3348 = vmatpush1.msra.mxu0 0.0
        %3349 = vmatprep.subr.mxu0 0.0
        %3350 = vmatpush1.msra.mxu0 0.0
        %3351 = vmatprep.subr.mxu0 0.0
        %3352 = vmatpush1.msra.mxu0 0.0
        %3353 = vmatprep.subr.mxu0 0.0
        %3354 = vmatpush1.msra.mxu0 0.0
        %3355 = vmatprep.subr.mxu0 0.0
        %3356 = vmatpush1.msra.mxu0 0.0
        %3357 = vmatprep.subr.mxu0 0.0
        %3358 = vmatpush1.msra.mxu0 0.0
        %3359 = vmatprep.subr.mxu0 0.0
        %3360 = vmatpush1.msra.mxu0 0.0
        %3361 = vmatprep.subr.mxu0 0.0
        %3362 = vmatpush1.msra.mxu0 0.0
        %3363 = vmatprep.subr.mxu0 0.0
        %3364 = vmatpush1.msra.mxu0 0.0
        %3365 = vmatprep.subr.mxu0 0.0
        %3366 = vmatpush1.msra.mxu0 0.0
        %3367 = vmatprep.subr.mxu0 0.0
        %3368 = vmatpush1.msra.mxu0 0.0
        %3369 = vmatprep.subr.mxu0 0.0
        %3370 = vmatpush1.msra.mxu0 0.0
        %3371 = vmatprep.subr.mxu0 0.0
        %3372 = vmatpush1.msra.mxu0 0.0
        %3373 = vmatprep.subr.mxu0 0.0
        %3374 = vmatpush1.msra.mxu0 0.0
        %3375 = vmatprep.subr.mxu0 0.0
        %3376 = vmatpush1.msra.mxu0 0.0
        %3377 = vmatprep.subr.mxu0 0.0
        %3378 = vmatpush1.msra.mxu0 0.0
        %3379 = vmatprep.subr.mxu0 0.0
        %3380 = vmatpush1.msra.mxu0 0.0
        %3381 = vmatprep.subr.mxu0 0.0
        %3382 = vmatpush1.msra.mxu0 0.0
        %3383 = vmatprep.subr.mxu0 0.0
        %3384 = vmatpush1.msra.mxu0 0.0
        %3385 = vmatprep.subr.mxu0 0.0
        %3386 = vmatpush1.msra.mxu0 0.0
        %3387 = vmatprep.subr.mxu0 0.0
        %3388 = vmatpush1.msra.mxu0 0.0
        %3389 = vmatprep.subr.mxu0 0.0
        %3390 = vmatpush1.msra.mxu0 0.0
        %3391 = vmatprep.subr.mxu0 0.0
        %3392 = vmatpush1.msra.mxu0 0.0
        %3393 = vmatprep.subr.mxu0 0.0
        %3394 = vmatpush1.msra.mxu0 0.0
        %3395 = vmatprep.subr.mxu0 0.0
        %3396 = vmatpush1.msra.mxu0 0.0
        %3397 = vmatprep.subr.mxu0 0.0
        %3398 = vmatpush1.msra.mxu0 0.0
        %3399 = vmatprep.subr.mxu0 0.0
        %3400 = vmatpush1.msra.mxu0 0.0
        %3401 = vmatprep.subr.mxu0 0.0
        %3402 = vmatpush1.msra.mxu0 0.0
        %3403 = vmatprep.mubr.f32.mxu0 0.0
        %3404 = vmatmul.mubr.f32.gmra.mrb[0].mxu0 %v3337
        %v3405 = vpop.f32.mrb[0].mxu0
        %v3406 = vadd.f32 %v3334, %v3405
        %v3407 = vpop.f32.mrb[0].mxu0
        %3408 = vdwg.mxu0
        %3410 = vrot.lane.b32.xlu0 %v3406, 112
        %v3411 = vpop.permute.xlu0 %3410
        %v3412 = vsel %vm606, %v3406, 0
        %v3414 = vsel %vm606, %v3411, 0
        %3416 = vmatprep.subr.mxu0 0.0
        %3417 = vmatpush1.xpose.msra.mxu0 %v3414
        %3418 = vmatprep.subr.mxu0 0.0
        %3419 = vmatpush1.xpose.msra.mxu0 0.0
        %3420 = vmatprep.subr.mxu0 0.0
        %3421 = vmatpush1.xpose.msra.mxu0 0.0
        %3422 = vmatprep.subr.mxu0 0.0
        %3423 = vmatpush1.xpose.msra.mxu0 0.0
        %3424 = vmatprep.subr.mxu0 0.0
        %3425 = vmatpush1.xpose.msra.mxu0 0.0
        %3426 = vmatprep.subr.mxu0 0.0
        %3427 = vmatpush1.xpose.msra.mxu0 0.0
        %3428 = vmatprep.subr.mxu0 0.0
        %3429 = vmatpush1.xpose.msra.mxu0 0.0
        %3430 = vmatprep.subr.mxu0 0.0
        %3431 = vmatpush1.xpose.msra.mxu0 0.0
        %3432 = vmatprep.subr.mxu0 0.0
        %3433 = vmatpush1.xpose.msra.mxu0 0.0
        %3434 = vmatprep.subr.mxu0 0.0
        %3435 = vmatpush1.xpose.msra.mxu0 0.0
        %3436 = vmatprep.subr.mxu0 0.0
        %3437 = vmatpush1.xpose.msra.mxu0 0.0
        %3438 = vmatprep.subr.mxu0 0.0
        %3439 = vmatpush1.xpose.msra.mxu0 0.0
        %3440 = vmatprep.subr.mxu0 0.0
        %3441 = vmatpush1.xpose.msra.mxu0 0.0
        %3442 = vmatprep.subr.mxu0 0.0
        %3443 = vmatpush1.xpose.msra.mxu0 0.0
        %3444 = vmatprep.subr.mxu0 0.0
        %3445 = vmatpush1.xpose.msra.mxu0 0.0
        %3446 = vmatprep.subr.mxu0 0.0
        %3447 = vmatpush1.xpose.msra.mxu0 0.0
        %3448 = vmatprep.subr.mxu0 0.0
        %3449 = vmatpush1.xpose.msra.mxu0 0.0
        %3450 = vmatprep.subr.mxu0 0.0
        %3451 = vmatpush1.xpose.msra.mxu0 0.0
        %3452 = vmatprep.subr.mxu0 0.0
        %3453 = vmatpush1.xpose.msra.mxu0 0.0
        %3454 = vmatprep.subr.mxu0 0.0
        %3455 = vmatpush1.xpose.msra.mxu0 0.0
        %3456 = vmatprep.subr.mxu0 0.0
        %3457 = vmatpush1.xpose.msra.mxu0 0.0
        %3458 = vmatprep.subr.mxu0 0.0
        %3459 = vmatpush1.xpose.msra.mxu0 0.0
        %3460 = vmatprep.subr.mxu0 0.0
        %3461 = vmatpush1.xpose.msra.mxu0 0.0
        %3462 = vmatprep.subr.mxu0 0.0
        %3463 = vmatpush1.xpose.msra.mxu0 0.0
        %3464 = vmatprep.subr.mxu0 0.0
        %3465 = vmatpush1.xpose.msra.mxu0 0.0
        %3466 = vmatprep.subr.mxu0 0.0
        %3467 = vmatpush1.xpose.msra.mxu0 0.0
        %3468 = vmatprep.subr.mxu0 0.0
        %3469 = vmatpush1.xpose.msra.mxu0 0.0
        %3470 = vmatprep.subr.mxu0 0.0
        %3471 = vmatpush1.xpose.msra.mxu0 0.0
        %3472 = vmatprep.subr.mxu0 0.0
        %3473 = vmatpush1.xpose.msra.mxu0 0.0
        %3474 = vmatprep.subr.mxu0 0.0
        %3475 = vmatpush1.xpose.msra.mxu0 0.0
        %3476 = vmatprep.subr.mxu0 0.0
        %3477 = vmatpush1.xpose.msra.mxu0 0.0
        %3478 = vmatprep.subr.mxu0 0.0
        %3479 = vmatpush1.xpose.msra.mxu0 0.0
        %3480 = vmatprep.mubr.f32.mxu0 0.0
        %3481 = vmatmul.mubr.f32.gmra.mrb[0].mxu0 %v3412
        %v3482 = vpop.f32.mrb[0].mxu0
        %v3483 = vadd.f32 0.0, %v3482
        %v3484 = vpop.f32.mrb[0].mxu0
        %3485 = vdwg.mxu0
        %v3486 = vsel %vm681, %v3483, -inf
        %3487 = vmax.xlane.f32.xlu0 %v3486
        %v3488 = vpop.xlane.xlu0 %3487
        %v3489 = vsub.f32 %v3483, %v3488
        %v3490 = vmul.f32 %v3489, 1.442695
        %v3491 = vpow.pop %v3490
        %v3492 = vsel %vm681, %v3491, 0.0
        %3493 = vadd.xlane.f32.xlu0 %v3492
        %v3494 = vpop.xlane.xlu0 %3493
        %v3495 = vrcp.pop %v3494
        %v3496 = vmul.f32 %v3491, %v3495
        %3497 = vrot.lane.b32.xlu0 %v3406, 96
        %v3498 = vpop.permute.xlu0 %3497
        %v3501 = vsel %vm681, %v3496, 0
        %3503 = vmatprep.subr.mxu0 0.0
        %3504 = vmatpush1.msra.mxu0 %v3498
        %3505 = vmatprep.subr.mxu0 0.0
        %3506 = vmatpush1.msra.mxu0 0.0
        %3507 = vmatprep.subr.mxu0 0.0
        %3508 = vmatpush1.msra.mxu0 0.0
        %3509 = vmatprep.subr.mxu0 0.0
        %3510 = vmatpush1.msra.mxu0 0.0
        %3511 = vmatprep.subr.mxu0 0.0
        %3512 = vmatpush1.msra.mxu0 0.0
        %3513 = vmatprep.subr.mxu0 0.0
        %3514 = vmatpush1.msra.mxu0 0.0
        %3515 = vmatprep.subr.mxu0 0.0
        %3516 = vmatpush1.msra.mxu0 0.0
        %3517 = vmatprep.subr.mxu0 0.0
        %3518 = vmatpush1.msra.mxu0 0.0
        %3519 = vmatprep.subr.mxu0 0.0
        %3520 = vmatpush1.msra.mxu0 0.0
        %3521 = vmatprep.subr.mxu0 0.0
        %3522 = vmatpush1.msra.mxu0 0.0
        %3523 = vmatprep.subr.mxu0 0.0
        %3524 = vmatpush1.msra.mxu0 0.0
        %3525 = vmatprep.subr.mxu0 0.0
        %3526 = vmatpush1.msra.mxu0 0.0
        %3527 = vmatprep.subr.mxu0 0.0
        %3528 = vmatpush1.msra.mxu0 0.0
        %3529 = vmatprep.subr.mxu0 0.0
        %3530 = vmatpush1.msra.mxu0 0.0
        %3531 = vmatprep.subr.mxu0 0.0
        %3532 = vmatpush1.msra.mxu0 0.0
        %3533 = vmatprep.subr.mxu0 0.0
        %3534 = vmatpush1.msra.mxu0 0.0
        %3535 = vmatprep.subr.mxu0 0.0
        %3536 = vmatpush1.msra.mxu0 0.0
        %3537 = vmatprep.subr.mxu0 0.0
        %3538 = vmatpush1.msra.mxu0 0.0
        %3539 = vmatprep.subr.mxu0 0.0
        %3540 = vmatpush1.msra.mxu0 0.0
        %3541 = vmatprep.subr.mxu0 0.0
        %3542 = vmatpush1.msra.mxu0 0.0
        %3543 = vmatprep.subr.mxu0 0.0
        %3544 = vmatpush1.msra.mxu0 0.0
        %3545 = vmatprep.subr.mxu0 0.0
        %3546 = vmatpush1.msra.mxu0 0.0
        %3547 = vmatprep.subr.mxu0 0.0
        %3548 = vmatpush1.msra.mxu0 0.0
        %3549 = vmatprep.subr.mxu0 0.0
        %3550 = vmatpush1.msra.mxu0 0.0
        %3551 = vmatprep.subr.mxu0 0.0
        %3552 = vmatpush1.msra.mxu0 0.0
        %3553 = vmatprep.subr.mxu0 0.0
        %3554 = vmatpush1.msra.mxu0 0.0
        %3555 = vmatprep.subr.mxu0 0.0
        %3556 = vmatpush1.msra.mxu0 0.0
        %3557 = vmatprep.subr.mxu0 0.0
        %3558 = vmatpush1.msra.mxu0 0.0
        %3559 = vmatprep.subr.mxu0 0.0
        %3560 = vmatpush1.msra.mxu0 0.0
        %3561 = vmatprep.subr.mxu0 0.0
        %3562 = vmatpush1.msra.mxu0 0.0
        %3563 = vmatprep.subr.mxu0 0.0
        %3564 = vmatpush1.msra.mxu0 0.0
        %3565 = vmatprep.subr.mxu0 0.0
        %3566 = vmatpush1.msra.mxu0 0.0
        %3567 = vmatprep.mubr.f32.mxu0 0.0
        %3568 = vmatmul.mubr.f32.gmra.mrb[0].mxu0 %v3501
        %v3569 = vpop.f32.mrb[0].mxu0
        %v3570 = vadd.f32 0.0, %v3569
        %v3571 = vpop.f32.mrb[0].mxu0
        %3572 = vdwg.mxu0
        %3573 = vrot.lane.b32.xlu0 %v3406, 124
        %v3574 = vpop.permute.xlu0 %3573
        %3575 = vrot.lane.b32.xlu0 %v3406, 108
        %v3576 = vpop.permute.xlu0 %3575
        %v3577 = vsel %vm606, %v3574, 0
        %v3579 = vsel %vm606, %v3576, 0
        %3581 = vmatprep.subr.mxu0 0.0
        %3582 = vmatpush1.xpose.msra.mxu0 %v3579
        %3583 = vmatprep.subr.mxu0 0.0
        %3584 = vmatpush1.xpose.msra.mxu0 0.0
        %3585 = vmatprep.subr.mxu0 0.0
        %3586 = vmatpush1.xpose.msra.mxu0 0.0
        %3587 = vmatprep.subr.mxu0 0.0
        %3588 = vmatpush1.xpose.msra.mxu0 0.0
        %3589 = vmatprep.subr.mxu0 0.0
        %3590 = vmatpush1.xpose.msra.mxu0 0.0
        %3591 = vmatprep.subr.mxu0 0.0
        %3592 = vmatpush1.xpose.msra.mxu0 0.0
        %3593 = vmatprep.subr.mxu0 0.0
        %3594 = vmatpush1.xpose.msra.mxu0 0.0
        %3595 = vmatprep.subr.mxu0 0.0
        %3596 = vmatpush1.xpose.msra.mxu0 0.0
        %3597 = vmatprep.subr.mxu0 0.0
        %3598 = vmatpush1.xpose.msra.mxu0 0.0
        %3599 = vmatprep.subr.mxu0 0.0
        %3600 = vmatpush1.xpose.msra.mxu0 0.0
        %3601 = vmatprep.subr.mxu0 0.0
        %3602 = vmatpush1.xpose.msra.mxu0 0.0
        %3603 = vmatprep.subr.mxu0 0.0
        %3604 = vmatpush1.xpose.msra.mxu0 0.0
        %3605 = vmatprep.subr.mxu0 0.0
        %3606 = vmatpush1.xpose.msra.mxu0 0.0
        %3607 = vmatprep.subr.mxu0 0.0
        %3608 = vmatpush1.xpose.msra.mxu0 0.0
        %3609 = vmatprep.subr.mxu0 0.0
        %3610 = vmatpush1.xpose.msra.mxu0 0.0
        %3611 = vmatprep.subr.mxu0 0.0
        %3612 = vmatpush1.xpose.msra.mxu0 0.0
        %3613 = vmatprep.subr.mxu0 0.0
        %3614 = vmatpush1.xpose.msra.mxu0 0.0
        %3615 = vmatprep.subr.mxu0 0.0
        %3616 = vmatpush1.xpose.msra.mxu0 0.0
        %3617 = vmatprep.subr.mxu0 0.0
        %3618 = vmatpush1.xpose.msra.mxu0 0.0
        %3619 = vmatprep.subr.mxu0 0.0
        %3620 = vmatpush1.xpose.msra.mxu0 0.0
        %3621 = vmatprep.subr.mxu0 0.0
        %3622 = vmatpush1.xpose.msra.mxu0 0.0
        %3623 = vmatprep.subr.mxu0 0.0
        %3624 = vmatpush1.xpose.msra.mxu0 0.0
        %3625 = vmatprep.subr.mxu0 0.0
        %3626 = vmatpush1.xpose.msra.mxu0 0.0
        %3627 = vmatprep.subr.mxu0 0.0
        %3628 = vmatpush1.xpose.msra.mxu0 0.0
        %3629 = vmatprep.subr.mxu0 0.0
        %3630 = vmatpush1.xpose.msra.mxu0 0.0
        %3631 = vmatprep.subr.mxu0 0.0
        %3632 = vmatpush1.xpose.msra.mxu0 0.0
        %3633 = vmatprep.subr.mxu0 0.0
        %3634 = vmatpush1.xpose.msra.mxu0 0.0
        %3635 = vmatprep.subr.mxu0 0.0
        %3636 = vmatpush1.xpose.msra.mxu0 0.0
        %3637 = vmatprep.subr.mxu0 0.0
        %3638 = vmatpush1.xpose.msra.mxu0 0.0
        %3639 = vmatprep.subr.mxu0 0.0
        %3640 = vmatpush1.xpose.msra.mxu0 0.0
        %3641 = vmatprep.subr.mxu0 0.0
        %3642 = vmatpush1.xpose.msra.mxu0 0.0
        %3643 = vmatprep.subr.mxu0 0.0
        %3644 = vmatpush1.xpose.msra.mxu0 0.0
        %3645 = vmatprep.mubr.f32.mxu0 0.0
        %3646 = vmatmul.mubr.f32.gmra.mrb[0].mxu0 %v3577
        %v3647 = vpop.f32.mrb[0].mxu0
        %v3648 = vadd.f32 0.0, %v3647
        %v3649 = vpop.f32.mrb[0].mxu0
        %3650 = vdwg.mxu0
        %v3651 = vsel %vm681, %v3648, -inf
        %3652 = vmax.xlane.f32.xlu0 %v3651
        %v3653 = vpop.xlane.xlu0 %3652
        %v3654 = vsub.f32 %v3648, %v3653
        %v3655 = vmul.f32 %v3654, 1.442695
        %v3656 = vpow.pop %v3655
        %v3657 = vsel %vm681, %v3656, 0.0
        %3658 = vadd.xlane.f32.xlu0 %v3657
        %v3659 = vpop.xlane.xlu0 %3658
        %v3660 = vrcp.pop %v3659
        %v3661 = vmul.f32 %v3656, %v3660
        %3662 = vrot.lane.b32.xlu0 %v3406, 92
        %v3663 = vpop.permute.xlu0 %3662
        %v3666 = vsel %vm681, %v3661, 0
        %3668 = vmatprep.subr.mxu0 0.0
        %3669 = vmatpush1.msra.mxu0 %v3663
        %3670 = vmatprep.subr.mxu0 0.0
        %3671 = vmatpush1.msra.mxu0 0.0
        %3672 = vmatprep.subr.mxu0 0.0
        %3673 = vmatpush1.msra.mxu0 0.0
        %3674 = vmatprep.subr.mxu0 0.0
        %3675 = vmatpush1.msra.mxu0 0.0
        %3676 = vmatprep.subr.mxu0 0.0
        %3677 = vmatpush1.msra.mxu0 0.0
        %3678 = vmatprep.subr.mxu0 0.0
        %3679 = vmatpush1.msra.mxu0 0.0
        %3680 = vmatprep.subr.mxu0 0.0
        %3681 = vmatpush1.msra.mxu0 0.0
        %3682 = vmatprep.subr.mxu0 0.0
        %3683 = vmatpush1.msra.mxu0 0.0
        %3684 = vmatprep.subr.mxu0 0.0
        %3685 = vmatpush1.msra.mxu0 0.0
        %3686 = vmatprep.subr.mxu0 0.0
        %3687 = vmatpush1.msra.mxu0 0.0
        %3688 = vmatprep.subr.mxu0 0.0
        %3689 = vmatpush1.msra.mxu0 0.0
        %3690 = vmatprep.subr.mxu0 0.0
        %3691 = vmatpush1.msra.mxu0 0.0
        %3692 = vmatprep.subr.mxu0 0.0
        %3693 = vmatpush1.msra.mxu0 0.0
        %3694 = vmatprep.subr.mxu0 0.0
        %3695 = vmatpush1.msra.mxu0 0.0
        %3696 = vmatprep.subr.mxu0 0.0
        %3697 = vmatpush1.msra.mxu0 0.0
        %3698 = vmatprep.subr.mxu0 0.0
        %3699 = vmatpush1.msra.mxu0 0.0
        %3700 = vmatprep.subr.mxu0 0.0
        %3701 = vmatpush1.msra.mxu0 0.0
        %3702 = vmatprep.subr.mxu0 0.0
        %3703 = vmatpush1.msra.mxu0 0.0
        %3704 = vmatprep.subr.mxu0 0.0
        %3705 = vmatpush1.msra.mxu0 0.0
        %3706 = vmatprep.subr.mxu0 0.0
        %3707 = vmatpush1.msra.mxu0 0.0
        %3708 = vmatprep.subr.mxu0 0.0
        %3709 = vmatpush1.msra.mxu0 0.0
        %3710 = vmatprep.subr.mxu0 0.0
        %3711 = vmatpush1.msra.mxu0 0.0
        %3712 = vmatprep.subr.mxu0 0.0
        %3713 = vmatpush1.msra.mxu0 0.0
        %3714 = vmatprep.subr.mxu0 0.0
        %3715 = vmatpush1.msra.mxu0 0.0
        %3716 = vmatprep.subr.mxu0 0.0
        %3717 = vmatpush1.msra.mxu0 0.0
        %3718 = vmatprep.subr.mxu0 0.0
        %3719 = vmatpush1.msra.mxu0 0.0
        %3720 = vmatprep.subr.mxu0 0.0
        %3721 = vmatpush1.msra.mxu0 0.0
        %3722 = vmatprep.subr.mxu0 0.0
        %3723 = vmatpush1.msra.mxu0 0.0
        %3724 = vmatprep.subr.mxu0 0.0
        %3725 = vmatpush1.msra.mxu0 0.0
        %3726 = vmatprep.subr.mxu0 0.0
        %3727 = vmatpush1.msra.mxu0 0.0
        %3728 = vmatprep.subr.mxu0 0.0
        %3729 = vmatpush1.msra.mxu0 0.0
        %3730 = vmatprep.subr.mxu0 0.0
        %3731 = vmatpush1.msra.mxu0 0.0
        %3732 = vmatprep.mubr.f32.mxu0 0.0
        %3733 = vmatmul.mubr.f32.gmra.mrb[0].mxu0 %v3666
        %v3734 = vpop.f32.mrb[0].mxu0
        %v3735 = vadd.f32 0.0, %v3734
        %v3736 = vpop.f32.mrb[0].mxu0
        %3737 = vdwg.mxu0
        %3738 = vrot.lane.b32.xlu0 %v3406, 120
        %v3739 = vpop.permute.xlu0 %3738
        %3740 = vrot.lane.b32.xlu0 %v3406, 104
        %v3741 = vpop.permute.xlu0 %3740
        %v3742 = vsel %vm606, %v3739, 0
        %v3744 = vsel %vm606, %v3741, 0
        %3746 = vmatprep.subr.mxu0 0.0
        %3747 = vmatpush1.xpose.msra.mxu0 %v3744
        %3748 = vmatprep.subr.mxu0 0.0
        %3749 = vmatpush1.xpose.msra.mxu0 0.0
        %3750 = vmatprep.subr.mxu0 0.0
        %3751 = vmatpush1.xpose.msra.mxu0 0.0
        %3752 = vmatprep.subr.mxu0 0.0
        %3753 = vmatpush1.xpose.msra.mxu0 0.0
        %3754 = vmatprep.subr.mxu0 0.0
        %3755 = vmatpush1.xpose.msra.mxu0 0.0
        %3756 = vmatprep.subr.mxu0 0.0
        %3757 = vmatpush1.xpose.msra.mxu0 0.0
        %3758 = vmatprep.subr.mxu0 0.0
        %3759 = vmatpush1.xpose.msra.mxu0 0.0
        %3760 = vmatprep.subr.mxu0 0.0
        %3761 = vmatpush1.xpose.msra.mxu0 0.0
        %3762 = vmatprep.subr.mxu0 0.0
        %3763 = vmatpush1.xpose.msra.mxu0 0.0
        %3764 = vmatprep.subr.mxu0 0.0
        %3765 = vmatpush1.xpose.msra.mxu0 0.0
        %3766 = vmatprep.subr.mxu0 0.0
        %3767 = vmatpush1.xpose.msra.mxu0 0.0
        %3768 = vmatprep.subr.mxu0 0.0
        %3769 = vmatpush1.xpose.msra.mxu0 0.0
        %3770 = vmatprep.subr.mxu0 0.0
        %3771 = vmatpush1.xpose.msra.mxu0 0.0
        %3772 = vmatprep.subr.mxu0 0.0
        %3773 = vmatpush1.xpose.msra.mxu0 0.0
        %3774 = vmatprep.subr.mxu0 0.0
        %3775 = vmatpush1.xpose.msra.mxu0 0.0
        %3776 = vmatprep.subr.mxu0 0.0
        %3777 = vmatpush1.xpose.msra.mxu0 0.0
        %3778 = vmatprep.subr.mxu0 0.0
        %3779 = vmatpush1.xpose.msra.mxu0 0.0
        %3780 = vmatprep.subr.mxu0 0.0
        %3781 = vmatpush1.xpose.msra.mxu0 0.0
        %3782 = vmatprep.subr.mxu0 0.0
        %3783 = vmatpush1.xpose.msra.mxu0 0.0
        %3784 = vmatprep.subr.mxu0 0.0
        %3785 = vmatpush1.xpose.msra.mxu0 0.0
        %3786 = vmatprep.subr.mxu0 0.0
        %3787 = vmatpush1.xpose.msra.mxu0 0.0
        %3788 = vmatprep.subr.mxu0 0.0
        %3789 = vmatpush1.xpose.msra.mxu0 0.0
        %3790 = vmatprep.subr.mxu0 0.0
        %3791 = vmatpush1.xpose.msra.mxu0 0.0
        %3792 = vmatprep.subr.mxu0 0.0
        %3793 = vmatpush1.xpose.msra.mxu0 0.0
        %3794 = vmatprep.subr.mxu0 0.0
        %3795 = vmatpush1.xpose.msra.mxu0 0.0
        %3796 = vmatprep.subr.mxu0 0.0
        %3797 = vmatpush1.xpose.msra.mxu0 0.0
        %3798 = vmatprep.subr.mxu0 0.0
        %3799 = vmatpush1.xpose.msra.mxu0 0.0
        %3800 = vmatprep.subr.mxu0 0.0
        %3801 = vmatpush1.xpose.msra.mxu0 0.0
        %3802 = vmatprep.subr.mxu0 0.0
        %3803 = vmatpush1.xpose.msra.mxu0 0.0
        %3804 = vmatprep.subr.mxu0 0.0
        %3805 = vmatpush1.xpose.msra.mxu0 0.0
        %3806 = vmatprep.subr.mxu0 0.0
        %3807 = vmatpush1.xpose.msra.mxu0 0.0
        %3808 = vmatprep.subr.mxu0 0.0
        %3809 = vmatpush1.xpose.msra.mxu0 0.0
        %3810 = vmatprep.mubr.f32.mxu0 0.0
        %3811 = vmatmul.mubr.f32.gmra.mrb[0].mxu0 %v3742
        %v3812 = vpop.f32.mrb[0].mxu0
        %v3813 = vadd.f32 0.0, %v3812
        %v3814 = vpop.f32.mrb[0].mxu0
        %3815 = vdwg.mxu0
        %v3816 = vsel %vm681, %v3813, -inf
        %3817 = vmax.xlane.f32.xlu0 %v3816
        %v3818 = vpop.xlane.xlu0 %3817
        %v3819 = vsub.f32 %v3813, %v3818
        %v3820 = vmul.f32 %v3819, 1.442695
        %v3821 = vpow.pop %v3820
        %v3822 = vsel %vm681, %v3821, 0.0
        %3823 = vadd.xlane.f32.xlu0 %v3822
        %v3824 = vpop.xlane.xlu0 %3823
        %v3825 = vrcp.pop %v3824
        %v3826 = vmul.f32 %v3821, %v3825
        %3827 = vrot.lane.b32.xlu0 %v3406, 88
        %v3828 = vpop.permute.xlu0 %3827
        %v3831 = vsel %vm681, %v3826, 0
        %3833 = vmatprep.subr.mxu0 0.0
        %3834 = vmatpush1.msra.mxu0 %v3828
        %3835 = vmatprep.subr.mxu0 0.0
        %3836 = vmatpush1.msra.mxu0 0.0
        %3837 = vmatprep.subr.mxu0 0.0
        %3838 = vmatpush1.msra.mxu0 0.0
        %3839 = vmatprep.subr.mxu0 0.0
        %3840 = vmatpush1.msra.mxu0 0.0
        %3841 = vmatprep.subr.mxu0 0.0
        %3842 = vmatpush1.msra.mxu0 0.0
        %3843 = vmatprep.subr.mxu0 0.0
        %3844 = vmatpush1.msra.mxu0 0.0
        %3845 = vmatprep.subr.mxu0 0.0
        %3846 = vmatpush1.msra.mxu0 0.0
        %3847 = vmatprep.subr.mxu0 0.0
        %3848 = vmatpush1.msra.mxu0 0.0
        %3849 = vmatprep.subr.mxu0 0.0
        %3850 = vmatpush1.msra.mxu0 0.0
        %3851 = vmatprep.subr.mxu0 0.0
        %3852 = vmatpush1.msra.mxu0 0.0
        %3853 = vmatprep.subr.mxu0 0.0
        %3854 = vmatpush1.msra.mxu0 0.0
        %3855 = vmatprep.subr.mxu0 0.0
        %3856 = vmatpush1.msra.mxu0 0.0
        %3857 = vmatprep.subr.mxu0 0.0
        %3858 = vmatpush1.msra.mxu0 0.0
        %3859 = vmatprep.subr.mxu0 0.0
        %3860 = vmatpush1.msra.mxu0 0.0
        %3861 = vmatprep.subr.mxu0 0.0
        %3862 = vmatpush1.msra.mxu0 0.0
        %3863 = vmatprep.subr.mxu0 0.0
        %3864 = vmatpush1.msra.mxu0 0.0
        %3865 = vmatprep.subr.mxu0 0.0
        %3866 = vmatpush1.msra.mxu0 0.0
        %3867 = vmatprep.subr.mxu0 0.0
        %3868 = vmatpush1.msra.mxu0 0.0
        %3869 = vmatprep.subr.mxu0 0.0
        %3870 = vmatpush1.msra.mxu0 0.0
        %3871 = vmatprep.subr.mxu0 0.0
        %3872 = vmatpush1.msra.mxu0 0.0
        %3873 = vmatprep.subr.mxu0 0.0
        %3874 = vmatpush1.msra.mxu0 0.0
        %3875 = vmatprep.subr.mxu0 0.0
        %3876 = vmatpush1.msra.mxu0 0.0
        %3877 = vmatprep.subr.mxu0 0.0
        %3878 = vmatpush1.msra.mxu0 0.0
        %3879 = vmatprep.subr.mxu0 0.0
        %3880 = vmatpush1.msra.mxu0 0.0
        %3881 = vmatprep.subr.mxu0 0.0
        %3882 = vmatpush1.msra.mxu0 0.0
        %3883 = vmatprep.subr.mxu0 0.0
        %3884 = vmatpush1.msra.mxu0 0.0
        %3885 = vmatprep.subr.mxu0 0.0
        %3886 = vmatpush1.msra.mxu0 0.0
        %3887 = vmatprep.subr.mxu0 0.0
        %3888 = vmatpush1.msra.mxu0 0.0
        %3889 = vmatprep.subr.mxu0 0.0
        %3890 = vmatpush1.msra.mxu0 0.0
        %3891 = vmatprep.subr.mxu0 0.0
        %3892 = vmatpush1.msra.mxu0 0.0
        %3893 = vmatprep.subr.mxu0 0.0
        %3894 = vmatpush1.msra.mxu0 0.0
        %3895 = vmatprep.subr.mxu0 0.0
        %3896 = vmatpush1.msra.mxu0 0.0
        %3897 = vmatprep.mubr.f32.mxu0 0.0
        %3898 = vmatmul.mubr.f32.gmra.mrb[0].mxu0 %v3831
        %v3899 = vpop.f32.mrb[0].mxu0
        %v3900 = vadd.f32 0.0, %v3899
        %v3901 = vpop.f32.mrb[0].mxu0
        %3902 = vdwg.mxu0
        %3903 = vrot.lane.b32.xlu0 %v3406, 116
        %v3904 = vpop.permute.xlu0 %3903
        %3905 = vrot.lane.b32.xlu0 %v3406, 100
        %v3906 = vpop.permute.xlu0 %3905
        %v3907 = vsel %vm606, %v3904, 0
        %v3909 = vsel %vm606, %v3906, 0
        %3911 = vmatprep.subr.mxu0 0.0
        %3912 = vmatpush1.xpose.msra.mxu0 %v3909
        %3913 = vmatprep.subr.mxu0 0.0
        %3914 = vmatpush1.xpose.msra.mxu0 0.0
        %3915 = vmatprep.subr.mxu0 0.0
        %3916 = vmatpush1.xpose.msra.mxu0 0.0
        %3917 = vmatprep.subr.mxu0 0.0
        %3918 = vmatpush1.xpose.msra.mxu0 0.0
        %3919 = vmatprep.subr.mxu0 0.0
        %3920 = vmatpush1.xpose.msra.mxu0 0.0
        %3921 = vmatprep.subr.mxu0 0.0
        %3922 = vmatpush1.xpose.msra.mxu0 0.0
        %3923 = vmatprep.subr.mxu0 0.0
        %3924 = vmatpush1.xpose.msra.mxu0 0.0
        %3925 = vmatprep.subr.mxu0 0.0
        %3926 = vmatpush1.xpose.msra.mxu0 0.0
        %3927 = vmatprep.subr.mxu0 0.0
        %3928 = vmatpush1.xpose.msra.mxu0 0.0
        %3929 = vmatprep.subr.mxu0 0.0
        %3930 = vmatpush1.xpose.msra.mxu0 0.0
        %3931 = vmatprep.subr.mxu0 0.0
        %3932 = vmatpush1.xpose.msra.mxu0 0.0
        %3933 = vmatprep.subr.mxu0 0.0
        %3934 = vmatpush1.xpose.msra.mxu0 0.0
        %3935 = vmatprep.subr.mxu0 0.0
        %3936 = vmatpush1.xpose.msra.mxu0 0.0
        %3937 = vmatprep.subr.mxu0 0.0
        %3938 = vmatpush1.xpose.msra.mxu0 0.0
        %3939 = vmatprep.subr.mxu0 0.0
        %3940 = vmatpush1.xpose.msra.mxu0 0.0
        %3941 = vmatprep.subr.mxu0 0.0
        %3942 = vmatpush1.xpose.msra.mxu0 0.0
        %3943 = vmatprep.subr.mxu0 0.0
        %3944 = vmatpush1.xpose.msra.mxu0 0.0
        %3945 = vmatprep.subr.mxu0 0.0
        %3946 = vmatpush1.xpose.msra.mxu0 0.0
        %3947 = vmatprep.subr.mxu0 0.0
        %3948 = vmatpush1.xpose.msra.mxu0 0.0
        %3949 = vmatprep.subr.mxu0 0.0
        %3950 = vmatpush1.xpose.msra.mxu0 0.0
        %3951 = vmatprep.subr.mxu0 0.0
        %3952 = vmatpush1.xpose.msra.mxu0 0.0
        %3953 = vmatprep.subr.mxu0 0.0
        %3954 = vmatpush1.xpose.msra.mxu0 0.0
        %3955 = vmatprep.subr.mxu0 0.0
        %3956 = vmatpush1.xpose.msra.mxu0 0.0
        %3957 = vmatprep.subr.mxu0 0.0
        %3958 = vmatpush1.xpose.msra.mxu0 0.0
        %3959 = vmatprep.subr.mxu0 0.0
        %3960 = vmatpush1.xpose.msra.mxu0 0.0
        %3961 = vmatprep.subr.mxu0 0.0
        %3962 = vmatpush1.xpose.msra.mxu0 0.0
        %3963 = vmatprep.subr.mxu0 0.0
        %3964 = vmatpush1.xpose.msra.mxu0 0.0
        %3965 = vmatprep.subr.mxu0 0.0
        %3966 = vmatpush1.xpose.msra.mxu0 0.0
        %3967 = vmatprep.subr.mxu0 0.0
        %3968 = vmatpush1.xpose.msra.mxu0 0.0
        %3969 = vmatprep.subr.mxu0 0.0
        %3970 = vmatpush1.xpose.msra.mxu0 0.0
        %3971 = vmatprep.subr.mxu0 0.0
        %3972 = vmatpush1.xpose.msra.mxu0 0.0
        %3973 = vmatprep.subr.mxu0 0.0
        %3974 = vmatpush1.xpose.msra.mxu0 0.0
        %3975 = vmatprep.mubr.f32.mxu0 0.0
        %3976 = vmatmul.mubr.f32.gmra.mrb[0].mxu0 %v3907
        %v3977 = vpop.f32.mrb[0].mxu0
        %v3978 = vadd.f32 0.0, %v3977
        %v3979 = vpop.f32.mrb[0].mxu0
        %3980 = vdwg.mxu0
        %v3981 = vsel %vm681, %v3978, -inf
        %3982 = vmax.xlane.f32.xlu0 %v3981
        %v3983 = vpop.xlane.xlu0 %3982
        %v3984 = vsub.f32 %v3978, %v3983
        %v3985 = vmul.f32 %v3984, 1.442695
        %v3986 = vpow.pop %v3985
        %v3987 = vsel %vm681, %v3986, 0.0
        %3988 = vadd.xlane.f32.xlu0 %v3987
        %v3989 = vpop.xlane.xlu0 %3988
        %v3990 = vrcp.pop %v3989
        %v3991 = vmul.f32 %v3986, %v3990
        %3992 = vrot.lane.b32.xlu0 %v3406, 84
        %v3993 = vpop.permute.xlu0 %3992
        %v3996 = vsel %vm681, %v3991, 0
        %3998 = vmatprep.subr.mxu0 0.0
        %3999 = vmatpush1.msra.mxu0 %v3993
        %4000 = vmatprep.subr.mxu0 0.0
        %4001 = vmatpush1.msra.mxu0 0.0
        %4002 = vmatprep.subr.mxu0 0.0
        %4003 = vmatpush1.msra.mxu0 0.0
        %4004 = vmatprep.subr.mxu0 0.0
        %4005 = vmatpush1.msra.mxu0 0.0
        %4006 = vmatprep.subr.mxu0 0.0
        %4007 = vmatpush1.msra.mxu0 0.0
        %4008 = vmatprep.subr.mxu0 0.0
        %4009 = vmatpush1.msra.mxu0 0.0
        %4010 = vmatprep.subr.mxu0 0.0
        %4011 = vmatpush1.msra.mxu0 0.0
        %4012 = vmatprep.subr.mxu0 0.0
        %4013 = vmatpush1.msra.mxu0 0.0
        %4014 = vmatprep.subr.mxu0 0.0
        %4015 = vmatpush1.msra.mxu0 0.0
        %4016 = vmatprep.subr.mxu0 0.0
        %4017 = vmatpush1.msra.mxu0 0.0
        %4018 = vmatprep.subr.mxu0 0.0
        %4019 = vmatpush1.msra.mxu0 0.0
        %4020 = vmatprep.subr.mxu0 0.0
        %4021 = vmatpush1.msra.mxu0 0.0
        %4022 = vmatprep.subr.mxu0 0.0
        %4023 = vmatpush1.msra.mxu0 0.0
        %4024 = vmatprep.subr.mxu0 0.0
        %4025 = vmatpush1.msra.mxu0 0.0
        %4026 = vmatprep.subr.mxu0 0.0
        %4027 = vmatpush1.msra.mxu0 0.0
        %4028 = vmatprep.subr.mxu0 0.0
        %4029 = vmatpush1.msra.mxu0 0.0
        %4030 = vmatprep.subr.mxu0 0.0
        %4031 = vmatpush1.msra.mxu0 0.0
        %4032 = vmatprep.subr.mxu0 0.0
        %4033 = vmatpush1.msra.mxu0 0.0
        %4034 = vmatprep.subr.mxu0 0.0
        %4035 = vmatpush1.msra.mxu0 0.0
        %4036 = vmatprep.subr.mxu0 0.0
        %4037 = vmatpush1.msra.mxu0 0.0
        %4038 = vmatprep.subr.mxu0 0.0
        %4039 = vmatpush1.msra.mxu0 0.0
        %4040 = vmatprep.subr.mxu0 0.0
        %4041 = vmatpush1.msra.mxu0 0.0
        %4042 = vmatprep.subr.mxu0 0.0
        %4043 = vmatpush1.msra.mxu0 0.0
        %4044 = vmatprep.subr.mxu0 0.0
        %4045 = vmatpush1.msra.mxu0 0.0
        %4046 = vmatprep.subr.mxu0 0.0
        %4047 = vmatpush1.msra.mxu0 0.0
        %4048 = vmatprep.subr.mxu0 0.0
        %4049 = vmatpush1.msra.mxu0 0.0
        %4050 = vmatprep.subr.mxu0 0.0
        %4051 = vmatpush1.msra.mxu0 0.0
        %4052 = vmatprep.subr.mxu0 0.0
        %4053 = vmatpush1.msra.mxu0 0.0
        %4054 = vmatprep.subr.mxu0 0.0
        %4055 = vmatpush1.msra.mxu0 0.0
        %4056 = vmatprep.subr.mxu0 0.0
        %4057 = vmatpush1.msra.mxu0 0.0
        %4058 = vmatprep.subr.mxu0 0.0
        %4059 = vmatpush1.msra.mxu0 0.0
        %4060 = vmatprep.subr.mxu0 0.0
        %4061 = vmatpush1.msra.mxu0 0.0
        %4062 = vmatprep.mubr.f32.mxu0 0.0
        %4063 = vmatmul.mubr.f32.gmra.mrb[0].mxu0 %v3996
        %v4064 = vpop.f32.mrb[0].mxu0
        %v4065 = vadd.f32 0.0, %v4064
        %v4066 = vpop.f32.mrb[0].mxu0
        %4067 = vdwg.mxu0
        %4069 = vrot.lane.b32.xlu0 %v3735, 4
        %v4070 = vpop.permute.xlu0 %4069
        %4073 = vrot.lane.b32.xlu0 %v3900, 8
        %v4074 = vpop.permute.xlu0 %4073
        %4077 = vrot.lane.b32.xlu0 %v4065, 12
        %v4078 = vpop.permute.xlu0 %4077
        %v4080 = vsel %vm606, %v3570, %v4070
        %v4081 = vsel %vm681, %v4080, %v4074
        %v4082 = vsel %vm1278, %v4081, %v4078
        %s4083 = scalar_lea.vmem %s4, 16
        %v4084 = vld [vmem:[%s4083] sm:$0xff]
        %v4085 = vld [vmem:[%s4083 + $0x8] sm:$0xff]
        %s4086 = scalar_lea.vmem %s5, 1
        %v4087 = vld [vmem:[%s4086] sm:$0x1]
        %v4089 = vlaneseq
        %v4090 = vshrl.u32 %v4089, 7
        %v4091 = vsub.s32 0, %v4090
        %v4092 = vrot.slane %v4087, %v4091
        %v4095 = vsel %vm529, %v4082, 0
        %4097 = vmatprep.subr.mxu0 0.0
        %4098 = vmatpush1.msra.mxu0 %v4084
        %4099 = vmatprep.subr.mxu0 0.0
        %4100 = vmatpush1.msra.mxu0 %v4085
        %4101 = vmatprep.subr.mxu0 0.0
        %4102 = vmatpush1.msra.mxu0 0.0
        %4103 = vmatprep.subr.mxu0 0.0
        %4104 = vmatpush1.msra.mxu0 0.0
        %4105 = vmatprep.subr.mxu0 0.0
        %4106 = vmatpush1.msra.mxu0 0.0
        %4107 = vmatprep.subr.mxu0 0.0
        %4108 = vmatpush1.msra.mxu0 0.0
        %4109 = vmatprep.subr.mxu0 0.0
        %4110 = vmatpush1.msra.mxu0 0.0
        %4111 = vmatprep.subr.mxu0 0.0
        %4112 = vmatpush1.msra.mxu0 0.0
        %4113 = vmatprep.subr.mxu0 0.0
        %4114 = vmatpush1.msra.mxu0 0.0
        %4115 = vmatprep.subr.mxu0 0.0
        %4116 = vmatpush1.msra.mxu0 0.0
        %4117 = vmatprep.subr.mxu0 0.0
        %4118 = vmatpush1.msra.mxu0 0.0
        %4119 = vmatprep.subr.mxu0 0.0
        %4120 = vmatpush1.msra.mxu0 0.0
        %4121 = vmatprep.subr.mxu0 0.0
        %4122 = vmatpush1.msra.mxu0 0.0
        %4123 = vmatprep.subr.mxu0 0.0
        %4124 = vmatpush1.msra.mxu0 0.0
        %4125 = vmatprep.subr.mxu0 0.0
        %4126 = vmatpush1.msra.mxu0 0.0
        %4127 = vmatprep.subr.mxu0 0.0
        %4128 = vmatpush1.msra.mxu0 0.0
        %4129 = vmatprep.subr.mxu0 0.0
        %4130 = vmatpush1.msra.mxu0 0.0
        %4131 = vmatprep.subr.mxu0 0.0
        %4132 = vmatpush1.msra.mxu0 0.0
        %4133 = vmatprep.subr.mxu0 0.0
        %4134 = vmatpush1.msra.mxu0 0.0
        %4135 = vmatprep.subr.mxu0 0.0
        %4136 = vmatpush1.msra.mxu0 0.0
        %4137 = vmatprep.subr.mxu0 0.0
        %4138 = vmatpush1.msra.mxu0 0.0
        %4139 = vmatprep.subr.mxu0 0.0
        %4140 = vmatpush1.msra.mxu0 0.0
        %4141 = vmatprep.subr.mxu0 0.0
        %4142 = vmatpush1.msra.mxu0 0.0
        %4143 = vmatprep.subr.mxu0 0.0
        %4144 = vmatpush1.msra.mxu0 0.0
        %4145 = vmatprep.subr.mxu0 0.0
        %4146 = vmatpush1.msra.mxu0 0.0
        %4147 = vmatprep.subr.mxu0 0.0
        %4148 = vmatpush1.msra.mxu0 0.0
        %4149 = vmatprep.subr.mxu0 0.0
        %4150 = vmatpush1.msra.mxu0 0.0
        %4151 = vmatprep.subr.mxu0 0.0
        %4152 = vmatpush1.msra.mxu0 0.0
        %4153 = vmatprep.subr.mxu0 0.0
        %4154 = vmatpush1.msra.mxu0 0.0
        %4155 = vmatprep.subr.mxu0 0.0
        %4156 = vmatpush1.msra.mxu0 0.0
        %4157 = vmatprep.subr.mxu0 0.0
        %4158 = vmatpush1.msra.mxu0 0.0
        %4159 = vmatprep.subr.mxu0 0.0
        %4160 = vmatpush1.msra.mxu0 0.0
        %4161 = vmatprep.mubr.f32.mxu0 0.0
        %4162 = vmatmul.mubr.f32.gmra.mrb[0].mxu0 %v4095
        %v4163 = vpop.f32.mrb[0].mxu0
        %v4164 = vadd.f32 %v4092, %v4163
        %v4165 = vpop.f32.mrb[0].mxu0
        %4166 = vdwg.mxu0
        %v4167 = vadd.f32 %v3324, %v4164
        %s4168 = scalar_lea.vmem %s6, 1
        %v4169 = vld [vmem:[%s4168] sm:$0x1]
        %s4170 = scalar_lea.vmem %s7, 1
        %v4171 = vld [vmem:[%s4170] sm:$0x1]
        %v4172 = vsel %vm529, %v4167, 0.0
        %4173 = vadd.xlane.f32.xlu0 %v4172
        %v4174 = vpop.xlane.xlu0 %4173
        %v4175 = vmul.f32 %v4174, %v1368
        %v4176 = vsub.f32 %v4167, %v4175
        %v4177 = vmul.f32 %v4176, %v4176
        %v4178 = vsel %vm529, %v4177, 0.0
        %4179 = vadd.xlane.f32.xlu0 %v4178
        %v4180 = vpop.xlane.xlu0 %4179
        %v4181 = vmul.f32 %v4180, %v1368
        %v4182 = vadd.f32 %v4181, 1e-05
        %v4183 = vrsqrt.pop %v4182
        %v4184 = vmul.f32 %v4176, %v4183
        %v4186 = vlaneseq
        %v4187 = vshrl.u32 %v4186, 7
        %v4188 = vsub.s32 0, %v4187
        %v4189 = vrot.slane %v4169, %v4188
        %v4191 = vmul.f32 %v4184, %v4189
        %v4193 = vlaneseq
        %v4194 = vshrl.u32 %v4193, 7
        %v4195 = vsub.s32 0, %v4194
        %v4196 = vrot.slane %v4171, %v4195
        %v4198 = vadd.f32 %v4191, %v4196
        %v4199 = vpack.c.bf16 %v4198, %v4198
        %s4200 = scalar_lea.vmem %s8, 128
        %v4201 = vld [vmem:[%s4200] sm:$0xff]
        %v4202 = vld [vmem:[%s4200 + $0x8] sm:$0xff]
        %v4203 = vld [vmem:[%s4200 + $0x40] sm:$0xff]
        %v4204 = vld [vmem:[%s4200 + $0x48] sm:$0xff]
        %s4205 = scalar_lea.vmem %s9, 16
        %v4206 = vld [vmem:[%s4205] sm:$0xf]
        %s4207 = scalar_lea.vmem %s10, 1024
        %v4208 = vld [vmem:[%s4207] sm:$0xf]
        %v4209 = vld [vmem:[%s4207 + $0x4] sm:$0xf]
        %v4210 = vld [vmem:[%s4207 + $0x8] sm:$0xf]
        %v4211 = vld [vmem:[%s4207 + $0xc] sm:$0xf]
        %v4212 = vld [vmem:[%s4207 + $0x10] sm:$0xf]
        %v4213 = vld [vmem:[%s4207 + $0x14] sm:$0xf]
        %v4214 = vld [vmem:[%s4207 + $0x18] sm:$0xf]
        %v4215 = vld [vmem:[%s4207 + $0x1c] sm:$0xf]
        %v4216 = vld [vmem:[%s4207 + $0x20] sm:$0xf]
        %v4217 = vld [vmem:[%s4207 + $0x24] sm:$0xf]
        %v4218 = vld [vmem:[%s4207 + $0x28] sm:$0xf]
        %v4219 = vld [vmem:[%s4207 + $0x2c] sm:$0xf]
        %v4220 = vld [vmem:[%s4207 + $0x30] sm:$0xf]
        %v4221 = vld [vmem:[%s4207 + $0x34] sm:$0xf]
        %v4222 = vld [vmem:[%s4207 + $0x38] sm:$0xf]
        %v4223 = vld [vmem:[%s4207 + $0x3c] sm:$0xf]
        %v4224 = vld [vmem:[%s4207 + $0x40] sm:$0xf]
        %v4225 = vld [vmem:[%s4207 + $0x44] sm:$0xf]
        %v4226 = vld [vmem:[%s4207 + $0x48] sm:$0xf]
        %v4227 = vld [vmem:[%s4207 + $0x4c] sm:$0xf]
        %v4228 = vld [vmem:[%s4207 + $0x50] sm:$0xf]
        %v4229 = vld [vmem:[%s4207 + $0x54] sm:$0xf]
        %v4230 = vld [vmem:[%s4207 + $0x58] sm:$0xf]
        %v4231 = vld [vmem:[%s4207 + $0x5c] sm:$0xf]
        %v4232 = vld [vmem:[%s4207 + $0x60] sm:$0xf]
        %v4233 = vld [vmem:[%s4207 + $0x64] sm:$0xf]
        %v4234 = vld [vmem:[%s4207 + $0x68] sm:$0xf]
        %v4235 = vld [vmem:[%s4207 + $0x6c] sm:$0xf]
        %v4236 = vld [vmem:[%s4207 + $0x70] sm:$0xf]
        %v4237 = vld [vmem:[%s4207 + $0x74] sm:$0xf]
        %v4238 = vld [vmem:[%s4207 + $0x78] sm:$0xf]
        %v4239 = vld [vmem:[%s4207 + $0x7c] sm:$0xf]
        %v4240 = vld [vmem:[%s4207 + $0x80] sm:$0xf]
        %v4241 = vld [vmem:[%s4207 + $0x84] sm:$0xf]
        %v4242 = vld [vmem:[%s4207 + $0x88] sm:$0xf]
        %v4243 = vld [vmem:[%s4207 + $0x8c] sm:$0xf]
        %v4244 = vld [vmem:[%s4207 + $0x90] sm:$0xf]
        %v4245 = vld [vmem:[%s4207 + $0x94] sm:$0xf]
        %v4246 = vld [vmem:[%s4207 + $0x98] sm:$0xf]
        %v4247 = vld [vmem:[%s4207 + $0x9c] sm:$0xf]
        %v4248 = vld [vmem:[%s4207 + $0xa0] sm:$0xf]
        %v4249 = vld [vmem:[%s4207 + $0xa4] sm:$0xf]
        %v4250 = vld [vmem:[%s4207 + $0xa8] sm:$0xf]
        %v4251 = vld [vmem:[%s4207 + $0xac] sm:$0xf]
        %v4252 = vld [vmem:[%s4207 + $0xb0] sm:$0xf]
        %v4253 = vld [vmem:[%s4207 + $0xb4] sm:$0xf]
        %v4254 = vld [vmem:[%s4207 + $0xb8] sm:$0xf]
        %v4255 = vld [vmem:[%s4207 + $0xbc] sm:$0xf]
        %v4256 = vld [vmem:[%s4207 + $0xc0] sm:$0xf]
        %v4257 = vld [vmem:[%s4207 + $0xc4] sm:$0xf]
        %v4258 = vld [vmem:[%s4207 + $0xc8] sm:$0xf]
        %v4259 = vld [vmem:[%s4207 + $0xcc] sm:$0xf]
        %v4260 = vld [vmem:[%s4207 + $0xd0] sm:$0xf]
        %v4261 = vld [vmem:[%s4207 + $0xd4] sm:$0xf]
        %v4262 = vld [vmem:[%s4207 + $0xd8] sm:$0xf]
        %v4263 = vld [vmem:[%s4207 + $0xdc] sm:$0xf]
        %v4264 = vld [vmem:[%s4207 + $0xe0] sm:$0xf]
        %v4265 = vld [vmem:[%s4207 + $0xe4] sm:$0xf]
        %v4266 = vld [vmem:[%s4207 + $0xe8] sm:$0xf]
        %v4267 = vld [vmem:[%s4207 + $0xec] sm:$0xf]
        %v4268 = vld [vmem:[%s4207 + $0xf0] sm:$0xf]
        %v4269 = vld [vmem:[%s4207 + $0xf4] sm:$0xf]
        %v4270 = vld [vmem:[%s4207 + $0xf8] sm:$0xf]
        %v4271 = vld [vmem:[%s4207 + $0xfc] sm:$0xf]
        %v4273 = vlaneseq
        %v4274 = vshrl.u32 %v4273, 7
        %v4275 = vsub.s32 0, %v4274
        %v4276 = vrot.slane %v4206, %v4275
        %v4277 = vlaneseq
        %v4278 = vshrl.u32 %v4277, 7
        %v4279 = vsub.s32 1, %v4278
        %v4280 = vrot.slane %v4206, %v4279
        %v4281 = vlaneseq
        %v4282 = vshrl.u32 %v4281, 7
        %v4283 = vsub.s32 2, %v4282
        %v4284 = vrot.slane %v4206, %v4283
        %v4285 = vlaneseq
        %v4286 = vshrl.u32 %v4285, 7
        %v4287 = vsub.s32 3, %v4286
        %v4288 = vrot.slane %v4206, %v4287
        %v4297 = vunpack.c.l.b16 %v4201
        %v4298 = vunpack.c.h.b16 %v4201
        %v4299 = vunpack.c.l.b16 %v4202
        %v4300 = vunpack.c.h.b16 %v4202
        %v4301 = vunpack.c.l.b16 %v4203
        %v4302 = vunpack.c.h.b16 %v4203
        %v4303 = vunpack.c.l.b16 %v4204
        %v4304 = vunpack.c.h.b16 %v4204
        %v4305 = vpack.c.b16 %v4301, %v4297
        %v4306 = vpack.c.b16 %v4302, %v4298
        %v4307 = vpack.c.b16 %v4303, %v4299
        %v4308 = vpack.c.b16 %v4304, %v4300
        %v4314 = vsel %vm529, %v4199, 0
        %4316 = vmatprep.subr.bf16.mxu0 %v4306
        %4317 = vmatpush1.bf16.msra.mxu0 %v4305
        %4318 = vmatprep.subr.bf16.mxu0 0
        %4319 = vmatpush1.bf16.msra.mxu0 0
        %4320 = vmatprep.subr.bf16.mxu0 0
        %4321 = vmatpush1.bf16.msra.mxu0 0
        %4322 = vmatprep.subr.bf16.mxu0 0
        %4323 = vmatpush1.bf16.msra.mxu0 0
        %4324 = vmatprep.subr.bf16.mxu0 0
        %4325 = vmatpush1.bf16.msra.mxu0 0
        %4326 = vmatprep.subr.bf16.mxu0 0
        %4327 = vmatpush1.bf16.msra.mxu0 0
        %4328 = vmatprep.subr.bf16.mxu0 0
        %4329 = vmatpush1.bf16.msra.mxu0 0
        %4330 = vmatprep.subr.bf16.mxu0 0
        %4331 = vmatpush1.bf16.msra.mxu0 0
        %4332 = vmatprep.subr.bf16.mxu0 0
        %4333 = vmatpush1.bf16.msra.mxu0 0
        %4334 = vmatprep.subr.bf16.mxu0 0
        %4335 = vmatpush1.bf16.msra.mxu0 0
        %4336 = vmatprep.subr.bf16.mxu0 0
        %4337 = vmatpush1.bf16.msra.mxu0 0
        %4338 = vmatprep.subr.bf16.mxu0 0
        %4339 = vmatpush1.bf16.msra.mxu0 0
        %4340 = vmatprep.subr.bf16.mxu0 0
        %4341 = vmatpush1.bf16.msra.mxu0 0
        %4342 = vmatprep.subr.bf16.mxu0 0
        %4343 = vmatpush1.bf16.msra.mxu0 0
        %4344 = vmatprep.subr.bf16.mxu0 0
        %4345 = vmatpush1.bf16.msra.mxu0 0
        %4346 = vmatprep.subr.bf16.mxu0 0
        %4347 = vmatpush1.bf16.msra.mxu0 0
        %4348 = vmatprep.mubr.bf16.mxu0 0
        %4349 = vmatmul.mubr.bf16.gmra.mrb[0].mxu0 %v4314
        %v4350 = vpop.f32.mrb[0].mxu0
        %v4351 = vadd.f32 %v4276, %v4350
        %v4352 = vpop.f32.mrb[0].mxu0
        %v4353 = vadd.f32 %v4280, %v4352
        %v4354 = vpop.f32.mrb[0].mxu0
        %v4355 = vpop.f32.mrb[0].mxu0
        %4356 = vdwg.mxu0
        %4357 = vmatprep.subr.bf16.mxu0 %v4308
        %4358 = vmatpush1.bf16.msra.mxu0 %v4307
        %4359 = vmatprep.subr.bf16.mxu0 0
        %4360 = vmatpush1.bf16.msra.mxu0 0
        %4361 = vmatprep.subr.bf16.mxu0 0
        %4362 = vmatpush1.bf16.msra.mxu0 0
        %4363 = vmatprep.subr.bf16.mxu0 0
        %4364 = vmatpush1.bf16.msra.mxu0 0
        %4365 = vmatprep.subr.bf16.mxu0 0
        %4366 = vmatpush1.bf16.msra.mxu0 0
        %4367 = vmatprep.subr.bf16.mxu0 0
        %4368 = vmatpush1.bf16.msra.mxu0 0
        %4369 = vmatprep.subr.bf16.mxu0 0
        %4370 = vmatpush1.bf16.msra.mxu0 0
        %4371 = vmatprep.subr.bf16.mxu0 0
        %4372 = vmatpush1.bf16.msra.mxu0 0
        %4373 = vmatprep.subr.bf16.mxu0 0
        %4374 = vmatpush1.bf16.msra.mxu0 0
        %4375 = vmatprep.subr.bf16.mxu0 0
        %4376 = vmatpush1.bf16.msra.mxu0 0
        %4377 = vmatprep.subr.bf16.mxu0 0
        %4378 = vmatpush1.bf16.msra.mxu0 0
        %4379 = vmatprep.subr.bf16.mxu0 0
        %4380 = vmatpush1.bf16.msra.mxu0 0
        %4381 = vmatprep.subr.bf16.mxu0 0
        %4382 = vmatpush1.bf16.msra.mxu0 0
        %4383 = vmatprep.subr.bf16.mxu0 0
        %4384 = vmatpush1.bf16.msra.mxu0 0
        %4385 = vmatprep.subr.bf16.mxu0 0
        %4386 = vmatpush1.bf16.msra.mxu0 0
        %4387 = vmatprep.subr.bf16.mxu0 0
        %4388 = vmatpush1.bf16.msra.mxu0 0
        %4389 = vmatprep.mubr.bf16.mxu0 0
        %4390 = vmatmul.mubr.bf16.gmra.mrb[0].mxu0 %v4314
        %v4391 = vpop.f32.mrb[0].mxu0
        %v4392 = vadd.f32 %v4284, %v4391
        %v4393 = vpop.f32.mrb[0].mxu0
        %v4394 = vadd.f32 %v4288, %v4393
        %v4395 = vpop.f32.mrb[0].mxu0
        %v4396 = vpop.f32.mrb[0].mxu0
        %4397 = vdwg.mxu0
        %v4398 = vmax.f32 %v4351, 0.0
        %v4399 = vmax.f32 %v4353, 0.0
        %v4400 = vmax.f32 %v4392, 0.0
        %v4401 = vmax.f32 %v4394, 0.0
        %v4402 = vpack.c.bf16 %v4398, %v4398
        %v4403 = vpack.c.bf16 %v4399, %v4399
        %v4404 = vpack.c.bf16 %v4400, %v4400
        %v4405 = vpack.c.bf16 %v4401, %v4401
        %v4406 = vld [vmem:[%s4200 + $0x10] sm:$0xff]
        %v4407 = vld [vmem:[%s4200 + $0x18] sm:$0xff]
        %v4408 = vld [vmem:[%s4200 + $0x50] sm:$0xff]
        %v4409 = vld [vmem:[%s4200 + $0x58] sm:$0xff]
        %v4410 = vld [vmem:[%s4205 + $0x4] sm:$0xf]
        %v4411 = vld [vmem:[%s4207 + $0x100] sm:$0xf]
        %v4412 = vld [vmem:[%s4207 + $0x104] sm:$0xf]
        %v4413 = vld [vmem:[%s4207 + $0x108] sm:$0xf]
        %v4414 = vld [vmem:[%s4207 + $0x10c] sm:$0xf]
        %v4415 = vld [vmem:[%s4207 + $0x110] sm:$0xf]
        %v4416 = vld [vmem:[%s4207 + $0x114] sm:$0xf]
        %v4417 = vld [vmem:[%s4207 + $0x118] sm:$0xf]
        %v4418 = vld [vmem:[%s4207 + $0x11c] sm:$0xf]
        %v4419 = vld [vmem:[%s4207 + $0x120] sm:$0xf]
        %v4420 = vld [vmem:[%s4207 + $0x124] sm:$0xf]
        %v4421 = vld [vmem:[%s4207 + $0x128] sm:$0xf]
        %v4422 = vld [vmem:[%s4207 + $0x12c] sm:$0xf]
        %v4423 = vld [vmem:[%s4207 + $0x130] sm:$0xf]
        %v4424 = vld [vmem:[%s4207 + $0x134] sm:$0xf]
        %v4425 = vld [vmem:[%s4207 + $0x138] sm:$0xf]
        %v4426 = vld [vmem:[%s4207 + $0x13c] sm:$0xf]
        %v4427 = vld [vmem:[%s4207 + $0x140] sm:$0xf]
        %v4428 = vld [vmem:[%s4207 + $0x144] sm:$0xf]
        %v4429 = vld [vmem:[%s4207 + $0x148] sm:$0xf]
        %v4430 = vld [vmem:[%s4207 + $0x14c] sm:$0xf]
        %v4431 = vld [vmem:[%s4207 + $0x150] sm:$0xf]
        %v4432 = vld [vmem:[%s4207 + $0x154] sm:$0xf]
        %v4433 = vld [vmem:[%s4207 + $0x158] sm:$0xf]
        %v4434 = vld [vmem:[%s4207 + $0x15c] sm:$0xf]
        %v4435 = vld [vmem:[%s4207 + $0x160] sm:$0xf]
        %v4436 = vld [vmem:[%s4207 + $0x164] sm:$0xf]
        %v4437 = vld [vmem:[%s4207 + $0x168] sm:$0xf]
        %v4438 = vld [vmem:[%s4207 + $0x16c] sm:$0xf]
        %v4439 = vld [vmem:[%s4207 + $0x170] sm:$0xf]
        %v4440 = vld [vmem:[%s4207 + $0x174] sm:$0xf]
        %v4441 = vld [vmem:[%s4207 + $0x178] sm:$0xf]
        %v4442 = vld [vmem:[%s4207 + $0x17c] sm:$0xf]
        %v4443 = vld [vmem:[%s4207 + $0x180] sm:$0xf]
        %v4444 = vld [vmem:[%s4207 + $0x184] sm:$0xf]
        %v4445 = vld [vmem:[%s4207 + $0x188] sm:$0xf]
        %v4446 = vld [vmem:[%s4207 + $0x18c] sm:$0xf]
        %v4447 = vld [vmem:[%s4207 + $0x190] sm:$0xf]
        %v4448 = vld [vmem:[%s4207 + $0x194] sm:$0xf]
        %v4449 = vld [vmem:[%s4207 + $0x198] sm:$0xf]
        %v4450 = vld [vmem:[%s4207 + $0x19c] sm:$0xf]
        %v4451 = vld [vmem:[%s4207 + $0x1a0] sm:$0xf]
        %v4452 = vld [vmem:[%s4207 + $0x1a4] sm:$0xf]
        %v4453 = vld [vmem:[%s4207 + $0x1a8] sm:$0xf]
        %v4454 = vld [vmem:[%s4207 + $0x1ac] sm:$0xf]
        %v4455 = vld [vmem:[%s4207 + $0x1b0] sm:$0xf]
        %v4456 = vld [vmem:[%s4207 + $0x1b4] sm:$0xf]
        %v4457 = vld [vmem:[%s4207 + $0x1b8] sm:$0xf]
        %v4458 = vld [vmem:[%s4207 + $0x1bc] sm:$0xf]
        %v4459 = vld [vmem:[%s4207 + $0x1c0] sm:$0xf]
        %v4460 = vld [vmem:[%s4207 + $0x1c4] sm:$0xf]
        %v4461 = vld [vmem:[%s4207 + $0x1c8] sm:$0xf]
        %v4462 = vld [vmem:[%s4207 + $0x1cc] sm:$0xf]
        %v4463 = vld [vmem:[%s4207 + $0x1d0] sm:$0xf]
        %v4464 = vld [vmem:[%s4207 + $0x1d4] sm:$0xf]
        %v4465 = vld [vmem:[%s4207 + $0x1d8] sm:$0xf]
        %v4466 = vld [vmem:[%s4207 + $0x1dc] sm:$0xf]
        %v4467 = vld [vmem:[%s4207 + $0x1e0] sm:$0xf]
        %v4468 = vld [vmem:[%s4207 + $0x1e4] sm:$0xf]
        %v4469 = vld [vmem:[%s4207 + $0x1e8] sm:$0xf]
        %v4470 = vld [vmem:[%s4207 + $0x1ec] sm:$0xf]
        %v4471 = vld [vmem:[%s4207 + $0x1f0] sm:$0xf]
        %v4472 = vld [vmem:[%s4207 + $0x1f4] sm:$0xf]
        %v4473 = vld [vmem:[%s4207 + $0x1f8] sm:$0xf]
        %v4474 = vld [vmem:[%s4207 + $0x1fc] sm:$0xf]
        %v4476 = vlaneseq
        %v4477 = vshrl.u32 %v4476, 7
        %v4478 = vsub.s32 0, %v4477
        %v4479 = vrot.slane %v4410, %v4478
        %v4480 = vlaneseq
        %v4481 = vshrl.u32 %v4480, 7
        %v4482 = vsub.s32 1, %v4481
        %v4483 = vrot.slane %v4410, %v4482
        %v4484 = vlaneseq
        %v4485 = vshrl.u32 %v4484, 7
        %v4486 = vsub.s32 2, %v4485
        %v4487 = vrot.slane %v4410, %v4486
        %v4488 = vlaneseq
        %v4489 = vshrl.u32 %v4488, 7
        %v4490 = vsub.s32 3, %v4489
        %v4491 = vrot.slane %v4410, %v4490
        %v4500 = vunpack.c.l.b16 %v4406
        %v4501 = vunpack.c.h.b16 %v4406
        %v4502 = vunpack.c.l.b16 %v4407
        %v4503 = vunpack.c.h.b16 %v4407
        %v4504 = vunpack.c.l.b16 %v4408
        %v4505 = vunpack.c.h.b16 %v4408
        %v4506 = vunpack.c.l.b16 %v4409
        %v4507 = vunpack.c.h.b16 %v4409
        %v4508 = vpack.c.b16 %v4504, %v4500
        %v4509 = vpack.c.b16 %v4505, %v4501
        %v4510 = vpack.c.b16 %v4506, %v4502
        %v4511 = vpack.c.b16 %v4507, %v4503
        %4516 = vmatprep.subr.bf16.mxu0 %v4509
        %4517 = vmatpush1.bf16.msra.mxu0 %v4508
        %4518 = vmatprep.subr.bf16.mxu0 0
        %4519 = vmatpush1.bf16.msra.mxu0 0
        %4520 = vmatprep.subr.bf16.mxu0 0
        %4521 = vmatpush1.bf16.msra.mxu0 0
        %4522 = vmatprep.subr.bf16.mxu0 0
        %4523 = vmatpush1.bf16.msra.mxu0 0
        %4524 = vmatprep.subr.bf16.mxu0 0
        %4525 = vmatpush1.bf16.msra.mxu0 0
        %4526 = vmatprep.subr.bf16.mxu0 0
        %4527 = vmatpush1.bf16.msra.mxu0 0
        %4528 = vmatprep.subr.bf16.mxu0 0
        %4529 = vmatpush1.bf16.msra.mxu0 0
        %4530 = vmatprep.subr.bf16.mxu0 0
        %4531 = vmatpush1.bf16.msra.mxu0 0
        %4532 = vmatprep.subr.bf16.mxu0 0
        %4533 = vmatpush1.bf16.msra.mxu0 0
        %4534 = vmatprep.subr.bf16.mxu0 0
        %4535 = vmatpush1.bf16.msra.mxu0 0
        %4536 = vmatprep.subr.bf16.mxu0 0
        %4537 = vmatpush1.bf16.msra.mxu0 0
        %4538 = vmatprep.subr.bf16.mxu0 0
        %4539 = vmatpush1.bf16.msra.mxu0 0
        %4540 = vmatprep.subr.bf16.mxu0 0
        %4541 = vmatpush1.bf16.msra.mxu0 0
        %4542 = vmatprep.subr.bf16.mxu0 0
        %4543 = vmatpush1.bf16.msra.mxu0 0
        %4544 = vmatprep.subr.bf16.mxu0 0
        %4545 = vmatpush1.bf16.msra.mxu0 0
        %4546 = vmatprep.subr.bf16.mxu0 0
        %4547 = vmatpush1.bf16.msra.mxu0 0
        %4548 = vmatprep.mubr.bf16.mxu0 0
        %4549 = vmatmul.mubr.bf16.gmra.mrb[0].mxu0 %v4314
        %v4550 = vpop.f32.mrb[0].mxu0
        %v4551 = vadd.f32 %v4479, %v4550
        %v4552 = vpop.f32.mrb[0].mxu0
        %v4553 = vadd.f32 %v4483, %v4552
        %v4554 = vpop.f32.mrb[0].mxu0
        %v4555 = vpop.f32.mrb[0].mxu0
        %4556 = vdwg.mxu0
        %4557 = vmatprep.subr.bf16.mxu0 %v4511
        %4558 = vmatpush1.bf16.msra.mxu0 %v4510
        %4559 = vmatprep.subr.bf16.mxu0 0
        %4560 = vmatpush1.bf16.msra.mxu0 0
        %4561 = vmatprep.subr.bf16.mxu0 0
        %4562 = vmatpush1.bf16.msra.mxu0 0
        %4563 = vmatprep.subr.bf16.mxu0 0
        %4564 = vmatpush1.bf16.msra.mxu0 0
        %4565 = vmatprep.subr.bf16.mxu0 0
        %4566 = vmatpush1.bf16.msra.mxu0 0
        %4567 = vmatprep.subr.bf16.mxu0 0
        %4568 = vmatpush1.bf16.msra.mxu0 0
        %4569 = vmatprep.subr.bf16.mxu0 0
        %4570 = vmatpush1.bf16.msra.mxu0 0
        %4571 = vmatprep.subr.bf16.mxu0 0
        %4572 = vmatpush1.bf16.msra.mxu0 0
        %4573 = vmatprep.subr.bf16.mxu0 0
        %4574 = vmatpush1.bf16.msra.mxu0 0
        %4575 = vmatprep.subr.bf16.mxu0 0
        %4576 = vmatpush1.bf16.msra.mxu0 0
        %4577 = vmatprep.subr.bf16.mxu0 0
        %4578 = vmatpush1.bf16.msra.mxu0 0
        %4579 = vmatprep.subr.bf16.mxu0 0
        %4580 = vmatpush1.bf16.msra.mxu0 0
        %4581 = vmatprep.subr.bf16.mxu0 0
        %4582 = vmatpush1.bf16.msra.mxu0 0
        %4583 = vmatprep.subr.bf16.mxu0 0
        %4584 = vmatpush1.bf16.msra.mxu0 0
        %4585 = vmatprep.subr.bf16.mxu0 0
        %4586 = vmatpush1.bf16.msra.mxu0 0
        %4587 = vmatprep.subr.bf16.mxu0 0
        %4588 = vmatpush1.bf16.msra.mxu0 0
        %4589 = vmatprep.mubr.bf16.mxu0 0
        %4590 = vmatmul.mubr.bf16.gmra.mrb[0].mxu0 %v4314
        %v4591 = vpop.f32.mrb[0].mxu0
        %v4592 = vadd.f32 %v4487, %v4591
        %v4593 = vpop.f32.mrb[0].mxu0
        %v4594 = vadd.f32 %v4491, %v4593
        %v4595 = vpop.f32.mrb[0].mxu0
        %v4596 = vpop.f32.mrb[0].mxu0
        %4597 = vdwg.mxu0
        %v4598 = vmax.f32 %v4551, 0.0
        %v4599 = vmax.f32 %v4553, 0.0
        %v4600 = vmax.f32 %v4592, 0.0
        %v4601 = vmax.f32 %v4594, 0.0
        %v4602 = vpack.c.bf16 %v4598, %v4598
        %v4603 = vpack.c.bf16 %v4599, %v4599
        %v4604 = vpack.c.bf16 %v4600, %v4600
        %v4605 = vpack.c.bf16 %v4601, %v4601
        %v4670 = vunpack.c.l.b16 %v4411
        %v4671 = vunpack.c.l.b16 %v4412
        %v4672 = vunpack.c.l.b16 %v4413
        %v4673 = vunpack.c.l.b16 %v4414
        %v4674 = vunpack.c.l.b16 %v4415
        %v4675 = vunpack.c.l.b16 %v4416
        %v4676 = vunpack.c.l.b16 %v4417
        %v4677 = vunpack.c.l.b16 %v4418
        %v4678 = vunpack.c.l.b16 %v4419
        %v4679 = vunpack.c.l.b16 %v4420
        %v4680 = vunpack.c.l.b16 %v4421
        %v4681 = vunpack.c.l.b16 %v4422
        %v4682 = vunpack.c.l.b16 %v4423
        %v4683 = vunpack.c.l.b16 %v4424
        %v4684 = vunpack.c.l.b16 %v4425
        %v4685 = vunpack.c.l.b16 %v4426
        %v4686 = vunpack.c.l.b16 %v4427
        %v4687 = vunpack.c.l.b16 %v4428
        %v4688 = vunpack.c.l.b16 %v4429
        %v4689 = vunpack.c.l.b16 %v4430
        %v4690 = vunpack.c.l.b16 %v4431
        %v4691 = vunpack.c.l.b16 %v4432
        %v4692 = vunpack.c.l.b16 %v4433
        %v4693 = vunpack.c.l.b16 %v4434
        %v4694 = vunpack.c.l.b16 %v4435
        %v4695 = vunpack.c.l.b16 %v4436
        %v4696 = vunpack.c.l.b16 %v4437
        %v4697 = vunpack.c.l.b16 %v4438
        %v4698 = vunpack.c.l.b16 %v4439
        %v4699 = vunpack.c.l.b16 %v4440
        %v4700 = vunpack.c.l.b16 %v4441
        %v4701 = vunpack.c.l.b16 %v4442
        %v4702 = vunpack.c.l.b16 %v4443
        %v4703 = vunpack.c.l.b16 %v4444
        %v4704 = vunpack.c.l.b16 %v4445
        %v4705 = vunpack.c.l.b16 %v4446
        %v4706 = vunpack.c.l.b16 %v4447
        %v4707 = vunpack.c.l.b16 %v4448
        %v4708 = vunpack.c.l.b16 %v4449
        %v4709 = vunpack.c.l.b16 %v4450
        %v4710 = vunpack.c.l.b16 %v4451
        %v4711 = vunpack.c.l.b16 %v4452
        %v4712 = vunpack.c.l.b16 %v4453
        %v4713 = vunpack.c.l.b16 %v4454
        %v4714 = vunpack.c.l.b16 %v4455
        %v4715 = vunpack.c.l.b16 %v4456
        %v4716 = vunpack.c.l.b16 %v4457
        %v4717 = vunpack.c.l.b16 %v4458
        %v4718 = vunpack.c.l.b16 %v4459
        %v4719 = vunpack.c.l.b16 %v4460
        %v4720 = vunpack.c.l.b16 %v4461
        %v4721 = vunpack.c.l.b16 %v4462
        %v4722 = vunpack.c.l.b16 %v4463
        %v4723 = vunpack.c.l.b16 %v4464
        %v4724 = vunpack.c.l.b16 %v4465
        %v4725 = vunpack.c.l.b16 %v4466
        %v4726 = vunpack.c.l.b16 %v4467
        %v4727 = vunpack.c.l.b16 %v4468
        %v4728 = vunpack.c.l.b16 %v4469
        %v4729 = vunpack.c.l.b16 %v4470
        %v4730 = vunpack.c.l.b16 %v4471
        %v4731 = vunpack.c.l.b16 %v4472
        %v4732 = vunpack.c.l.b16 %v4473
        %v4733 = vunpack.c.l.b16 %v4474
        %v4734 = vpack.c.b16 %v4671, %v4670
        %v4735 = vpack.c.b16 %v4673, %v4672
        %v4736 = vpack.c.b16 %v4675, %v4674
        %v4737 = vpack.c.b16 %v4677, %v4676
        %v4738 = vpack.c.b16 %v4679, %v4678
        %v4739 = vpack.c.b16 %v4681, %v4680
        %v4740 = vpack.c.b16 %v4683, %v4682
        %v4741 = vpack.c.b16 %v4685, %v4684
        %v4742 = vpack.c.b16 %v4687, %v4686
        %v4743 = vpack.c.b16 %v4689, %v4688
        %v4744 = vpack.c.b16 %v4691, %v4690
        %v4745 = vpack.c.b16 %v4693, %v4692
        %v4746 = vpack.c.b16 %v4695, %v4694
        %v4747 = vpack.c.b16 %v4697, %v4696
        %v4748 = vpack.c.b16 %v4699, %v4698
        %v4749 = vpack.c.b16 %v4701, %v4700
        %v4750 = vpack.c.b16 %v4703, %v4702
        %v4751 = vpack.c.b16 %v4705, %v4704
        %v4752 = vpack.c.b16 %v4707, %v4706
        %v4753 = vpack.c.b16 %v4709, %v4708
        %v4754 = vpack.c.b16 %v4711, %v4710
        %v4755 = vpack.c.b16 %v4713, %v4712
        %v4756 = vpack.c.b16 %v4715, %v4714
        %v4757 = vpack.c.b16 %v4717, %v4716
        %v4758 = vpack.c.b16 %v4719, %v4718
        %v4759 = vpack.c.b16 %v4721, %v4720
        %v4760 = vpack.c.b16 %v4723, %v4722
        %v4761 = vpack.c.b16 %v4725, %v4724
        %v4762 = vpack.c.b16 %v4727, %v4726
        %v4763 = vpack.c.b16 %v4729, %v4728
        %v4764 = vpack.c.b16 %v4731, %v4730
        %v4765 = vpack.c.b16 %v4733, %v4732
        %4798 = vmatprep.subr.bf16.mxu0 0
        %4799 = vmatpush1.bf16.msra.mxu0 %v4734
        %4800 = vmatprep.subr.bf16.mxu0 0
        %4801 = vmatpush1.bf16.msra.mxu0 %v4735
        %4802 = vmatprep.subr.bf16.mxu0 0
        %4803 = vmatpush1.bf16.msra.mxu0 %v4736
        %4804 = vmatprep.subr.bf16.mxu0 0
        %4805 = vmatpush1.bf16.msra.mxu0 %v4737
        %4806 = vmatprep.subr.bf16.mxu0 0
        %4807 = vmatpush1.bf16.msra.mxu0 %v4738
        %4808 = vmatprep.subr.bf16.mxu0 0
        %4809 = vmatpush1.bf16.msra.mxu0 %v4739
        %4810 = vmatprep.subr.bf16.mxu0 0
        %4811 = vmatpush1.bf16.msra.mxu0 %v4740
        %4812 = vmatprep.subr.bf16.mxu0 0
        %4813 = vmatpush1.bf16.msra.mxu0 %v4741
        %4814 = vmatprep.subr.bf16.mxu0 0
        %4815 = vmatpush1.bf16.msra.mxu0 %v4742
        %4816 = vmatprep.subr.bf16.mxu0 0
        %4817 = vmatpush1.bf16.msra.mxu0 %v4743
        %4818 = vmatprep.subr.bf16.mxu0 0
        %4819 = vmatpush1.bf16.msra.mxu0 %v4744
        %4820 = vmatprep.subr.bf16.mxu0 0
        %4821 = vmatpush1.bf16.msra.mxu0 %v4745
        %4822 = vmatprep.subr.bf16.mxu0 0
        %4823 = vmatpush1.bf16.msra.mxu0 %v4746
        %4824 = vmatprep.subr.bf16.mxu0 0
        %4825 = vmatpush1.bf16.msra.mxu0 %v4747
        %4826 = vmatprep.subr.bf16.mxu0 0
        %4827 = vmatpush1.bf16.msra.mxu0 %v4748
        %4828 = vmatprep.subr.bf16.mxu0 0
        %4829 = vmatpush1.bf16.msra.mxu0 %v4749
        %4830 = vmatprep.mubr.bf16.mxu0 %v4603
        %4831 = vmatmul.mubr.bf16.gmra.mrb[0].mxu0 %v4602
        %v4832 = vpop.f32.mrb[0].mxu0
        %v4833 = vadd.f32 0.0, %v4832
        %v4834 = vpop.f32.mrb[0].mxu0
        %v4835 = vpop.f32.mrb[0].mxu0
        %v4836 = vpop.f32.mrb[0].mxu0
        %4837 = vdwg.mxu0
        %4838 = vmatprep.subr.bf16.mxu0 0
        %4839 = vmatpush1.bf16.msra.mxu0 %v4750
        %4840 = vmatprep.subr.bf16.mxu0 0
        %4841 = vmatpush1.bf16.msra.mxu0 %v4751
        %4842 = vmatprep.subr.bf16.mxu0 0
        %4843 = vmatpush1.bf16.msra.mxu0 %v4752
        %4844 = vmatprep.subr.bf16.mxu0 0
        %4845 = vmatpush1.bf16.msra.mxu0 %v4753
        %4846 = vmatprep.subr.bf16.mxu0 0
        %4847 = vmatpush1.bf16.msra.mxu0 %v4754
        %4848 = vmatprep.subr.bf16.mxu0 0
        %4849 = vmatpush1.bf16.msra.mxu0 %v4755
        %4850 = vmatprep.subr.bf16.mxu0 0
        %4851 = vmatpush1.bf16.msra.mxu0 %v4756
        %4852 = vmatprep.subr.bf16.mxu0 0
        %4853 = vmatpush1.bf16.msra.mxu0 %v4757
        %4854 = vmatprep.subr.bf16.mxu0 0
        %4855 = vmatpush1.bf16.msra.mxu0 %v4758
        %4856 = vmatprep.subr.bf16.mxu0 0
        %4857 = vmatpush1.bf16.msra.mxu0 %v4759
        %4858 = vmatprep.subr.bf16.mxu0 0
        %4859 = vmatpush1.bf16.msra.mxu0 %v4760
        %4860 = vmatprep.subr.bf16.mxu0 0
        %4861 = vmatpush1.bf16.msra.mxu0 %v4761
        %4862 = vmatprep.subr.bf16.mxu0 0
        %4863 = vmatpush1.bf16.msra.mxu0 %v4762
        %4864 = vmatprep.subr.bf16.mxu0 0
        %4865 = vmatpush1.bf16.msra.mxu0 %v4763
        %4866 = vmatprep.subr.bf16.mxu0 0
        %4867 = vmatpush1.bf16.msra.mxu0 %v4764
        %4868 = vmatprep.subr.bf16.mxu0 0
        %4869 = vmatpush1.bf16.msra.mxu0 %v4765
        %4870 = vmatprep.mubr.bf16.mxu0 %v4605
        %4871 = vmatmul.mubr.bf16.gmra.mrb[0].mxu0 %v4604
        %v4872 = vpop.f32.mrb[0].mxu0
        %v4873 = vadd.f32 %v4833, %v4872
        %v4874 = vpop.f32.mrb[0].mxu0
        %v4875 = vpop.f32.mrb[0].mxu0
        %v4876 = vpop.f32.mrb[0].mxu0
        %4877 = vdwg.mxu0
        %v4942 = vunpack.c.l.b16 %v4208
        %v4943 = vunpack.c.l.b16 %v4209
        %v4944 = vunpack.c.l.b16 %v4210
        %v4945 = vunpack.c.l.b16 %v4211
        %v4946 = vunpack.c.l.b16 %v4212
        %v4947 = vunpack.c.l.b16 %v4213
        %v4948 = vunpack.c.l.b16 %v4214
        %v4949 = vunpack.c.l.b16 %v4215
        %v4950 = vunpack.c.l.b16 %v4216
        %v4951 = vunpack.c.l.b16 %v4217
        %v4952 = vunpack.c.l.b16 %v4218
        %v4953 = vunpack.c.l.b16 %v4219
        %v4954 = vunpack.c.l.b16 %v4220
        %v4955 = vunpack.c.l.b16 %v4221
        %v4956 = vunpack.c.l.b16 %v4222
        %v4957 = vunpack.c.l.b16 %v4223
        %v4958 = vunpack.c.l.b16 %v4224
        %v4959 = vunpack.c.l.b16 %v4225
        %v4960 = vunpack.c.l.b16 %v4226
        %v4961 = vunpack.c.l.b16 %v4227
        %v4962 = vunpack.c.l.b16 %v4228
        %v4963 = vunpack.c.l.b16 %v4229
        %v4964 = vunpack.c.l.b16 %v4230
        %v4965 = vunpack.c.l.b16 %v4231
        %v4966 = vunpack.c.l.b16 %v4232
        %v4967 = vunpack.c.l.b16 %v4233
        %v4968 = vunpack.c.l.b16 %v4234
        %v4969 = vunpack.c.l.b16 %v4235
        %v4970 = vunpack.c.l.b16 %v4236
        %v4971 = vunpack.c.l.b16 %v4237
        %v4972 = vunpack.c.l.b16 %v4238
        %v4973 = vunpack.c.l.b16 %v4239
        %v4974 = vunpack.c.l.b16 %v4240
        %v4975 = vunpack.c.l.b16 %v4241
        %v4976 = vunpack.c.l.b16 %v4242
        %v4977 = vunpack.c.l.b16 %v4243
        %v4978 = vunpack.c.l.b16 %v4244
        %v4979 = vunpack.c.l.b16 %v4245
        %v4980 = vunpack.c.l.b16 %v4246
        %v4981 = vunpack.c.l.b16 %v4247
        %v4982 = vunpack.c.l.b16 %v4248
        %v4983 = vunpack.c.l.b16 %v4249
        %v4984 = vunpack.c.l.b16 %v4250
        %v4985 = vunpack.c.l.b16 %v4251
        %v4986 = vunpack.c.l.b16 %v4252
        %v4987 = vunpack.c.l.b16 %v4253
        %v4988 = vunpack.c.l.b16 %v4254
        %v4989 = vunpack.c.l.b16 %v4255
        %v4990 = vunpack.c.l.b16 %v4256
        %v4991 = vunpack.c.l.b16 %v4257
        %v4992 = vunpack.c.l.b16 %v4258
        %v4993 = vunpack.c.l.b16 %v4259
        %v4994 = vunpack.c.l.b16 %v4260
        %v4995 = vunpack.c.l.b16 %v4261
        %v4996 = vunpack.c.l.b16 %v4262
        %v4997 = vunpack.c.l.b16 %v4263
        %v4998 = vunpack.c.l.b16 %v4264
        %v4999 = vunpack.c.l.b16 %v4265
        %v5000 = vunpack.c.l.b16 %v4266
        %v5001 = vunpack.c.l.b16 %v4267
        %v5002 = vunpack.c.l.b16 %v4268
        %v5003 = vunpack.c.l.b16 %v4269
        %v5004 = vunpack.c.l.b16 %v4270
        %v5005 = vunpack.c.l.b16 %v4271
        %v5006 = vpack.c.b16 %v4943, %v4942
        %v5007 = vpack.c.b16 %v4945, %v4944
        %v5008 = vpack.c.b16 %v4947, %v4946
        %v5009 = vpack.c.b16 %v4949, %v4948
        %v5010 = vpack.c.b16 %v4951, %v4950
        %v5011 = vpack.c.b16 %v4953, %v4952
        %v5012 = vpack.c.b16 %v4955, %v4954
        %v5013 = vpack.c.b16 %v4957, %v4956
        %v5014 = vpack.c.b16 %v4959, %v4958
        %v5015 = vpack.c.b16 %v4961, %v4960
        %v5016 = vpack.c.b16 %v4963, %v4962
        %v5017 = vpack.c.b16 %v4965, %v4964
        %v5018 = vpack.c.b16 %v4967, %v4966
        %v5019 = vpack.c.b16 %v4969, %v4968
        %v5020 = vpack.c.b16 %v4971, %v4970
        %v5021 = vpack.c.b16 %v4973, %v4972
        %v5022 = vpack.c.b16 %v4975, %v4974
        %v5023 = vpack.c.b16 %v4977, %v4976
        %v5024 = vpack.c.b16 %v4979, %v4978
        %v5025 = vpack.c.b16 %v4981, %v4980
        %v5026 = vpack.c.b16 %v4983, %v4982
        %v5027 = vpack.c.b16 %v4985, %v4984
        %v5028 = vpack.c.b16 %v4987, %v4986
        %v5029 = vpack.c.b16 %v4989, %v4988
        %v5030 = vpack.c.b16 %v4991, %v4990
        %v5031 = vpack.c.b16 %v4993, %v4992
        %v5032 = vpack.c.b16 %v4995, %v4994
        %v5033 = vpack.c.b16 %v4997, %v4996
        %v5034 = vpack.c.b16 %v4999, %v4998
        %v5035 = vpack.c.b16 %v5001, %v5000
        %v5036 = vpack.c.b16 %v5003, %v5002
        %v5037 = vpack.c.b16 %v5005, %v5004
        %5070 = vmatprep.subr.bf16.mxu0 0
        %5071 = vmatpush1.bf16.msra.mxu0 %v5006
        %5072 = vmatprep.subr.bf16.mxu0 0
        %5073 = vmatpush1.bf16.msra.mxu0 %v5007
        %5074 = vmatprep.subr.bf16.mxu0 0
        %5075 = vmatpush1.bf16.msra.mxu0 %v5008
        %5076 = vmatprep.subr.bf16.mxu0 0
        %5077 = vmatpush1.bf16.msra.mxu0 %v5009
        %5078 = vmatprep.subr.bf16.mxu0 0
        %5079 = vmatpush1.bf16.msra.mxu0 %v5010
        %5080 = vmatprep.subr.bf16.mxu0 0
        %5081 = vmatpush1.bf16.msra.mxu0 %v5011
        %5082 = vmatprep.subr.bf16.mxu0 0
        %5083 = vmatpush1.bf16.msra.mxu0 %v5012
        %5084 = vmatprep.subr.bf16.mxu0 0
        %5085 = vmatpush1.bf16.msra.mxu0 %v5013
        %5086 = vmatprep.subr.bf16.mxu0 0
        %5087 = vmatpush1.bf16.msra.mxu0 %v5014
        %5088 = vmatprep.subr.bf16.mxu0 0
        %5089 = vmatpush1.bf16.msra.mxu0 %v5015
        %5090 = vmatprep.subr.bf16.mxu0 0
        %5091 = vmatpush1.bf16.msra.mxu0 %v5016
        %5092 = vmatprep.subr.bf16.mxu0 0
        %5093 = vmatpush1.bf16.msra.mxu0 %v5017
        %5094 = vmatprep.subr.bf16.mxu0 0
        %5095 = vmatpush1.bf16.msra.mxu0 %v5018
        %5096 = vmatprep.subr.bf16.mxu0 0
        %5097 = vmatpush1.bf16.msra.mxu0 %v5019
        %5098 = vmatprep.subr.bf16.mxu0 0
        %5099 = vmatpush1.bf16.msra.mxu0 %v5020
        %5100 = vmatprep.subr.bf16.mxu0 0
        %5101 = vmatpush1.bf16.msra.mxu0 %v5021
        %5102 = vmatprep.mubr.bf16.mxu0 %v4403
        %5103 = vmatmul.mubr.bf16.gmra.mrb[0].mxu0 %v4402
        %v5104 = vpop.f32.mrb[0].mxu0
        %v5105 = vadd.f32 %v4873, %v5104
        %v5106 = vpop.f32.mrb[0].mxu0
        %v5107 = vpop.f32.mrb[0].mxu0
        %v5108 = vpop.f32.mrb[0].mxu0
        %5109 = vdwg.mxu0
        %5110 = vmatprep.subr.bf16.mxu0 0
        %5111 = vmatpush1.bf16.msra.mxu0 %v5022
        %5112 = vmatprep.subr.bf16.mxu0 0
        %5113 = vmatpush1.bf16.msra.mxu0 %v5023
        %5114 = vmatprep.subr.bf16.mxu0 0
        %5115 = vmatpush1.bf16.msra.mxu0 %v5024
        %5116 = vmatprep.subr.bf16.mxu0 0
        %5117 = vmatpush1.bf16.msra.mxu0 %v5025
        %5118 = vmatprep.subr.bf16.mxu0 0
        %5119 = vmatpush1.bf16.msra.mxu0 %v5026
        %5120 = vmatprep.subr.bf16.mxu0 0
        %5121 = vmatpush1.bf16.msra.mxu0 %v5027
        %5122 = vmatprep.subr.bf16.mxu0 0
        %5123 = vmatpush1.bf16.msra.mxu0 %v5028
        %5124 = vmatprep.subr.bf16.mxu0 0
        %5125 = vmatpush1.bf16.msra.mxu0 %v5029
        %5126 = vmatprep.subr.bf16.mxu0 0
        %5127 = vmatpush1.bf16.msra.mxu0 %v5030
        %5128 = vmatprep.subr.bf16.mxu0 0
        %5129 = vmatpush1.bf16.msra.mxu0 %v5031
        %5130 = vmatprep.subr.bf16.mxu0 0
        %5131 = vmatpush1.bf16.msra.mxu0 %v5032
        %5132 = vmatprep.subr.bf16.mxu0 0
        %5133 = vmatpush1.bf16.msra.mxu0 %v5033
        %5134 = vmatprep.subr.bf16.mxu0 0
        %5135 = vmatpush1.bf16.msra.mxu0 %v5034
        %5136 = vmatprep.subr.bf16.mxu0 0
        %5137 = vmatpush1.bf16.msra.mxu0 %v5035
        %5138 = vmatprep.subr.bf16.mxu0 0
        %5139 = vmatpush1.bf16.msra.mxu0 %v5036
        %5140 = vmatprep.subr.bf16.mxu0 0
        %5141 = vmatpush1.bf16.msra.mxu0 %v5037
        %5142 = vmatprep.mubr.bf16.mxu0 %v4405
        %5143 = vmatmul.mubr.bf16.gmra.mrb[0].mxu0 %v4404
        %v5144 = vpop.f32.mrb[0].mxu0
        %v5145 = vadd.f32 %v5105, %v5144
        %v5146 = vpop.f32.mrb[0].mxu0
        %v5147 = vpop.f32.mrb[0].mxu0
        %v5148 = vpop.f32.mrb[0].mxu0
        %5149 = vdwg.mxu0
        %v5150 = vld [vmem:[%s4200 + $0x20] sm:$0xff]
        %v5151 = vld [vmem:[%s4200 + $0x28] sm:$0xff]
        %v5152 = vld [vmem:[%s4200 + $0x60] sm:$0xff]
        %v5153 = vld [vmem:[%s4200 + $0x68] sm:$0xff]
        %v5154 = vld [vmem:[%s4205 + $0x8] sm:$0xf]
        %v5155 = vld [vmem:[%s4207 + $0x200] sm:$0xf]
        %v5156 = vld [vmem:[%s4207 + $0x204] sm:$0xf]
        %v5157 = vld [vmem:[%s4207 + $0x208] sm:$0xf]
        %v5158 = vld [vmem:[%s4207 + $0x20c] sm:$0xf]
        %v5159 = vld [vmem:[%s4207 + $0x210] sm:$0xf]
        %v5160 = vld [vmem:[%s4207 + $0x214] sm:$0xf]
        %v5161 = vld [vmem:[%s4207 + $0x218] sm:$0xf]
        %v5162 = vld [vmem:[%s4207 + $0x21c] sm:$0xf]
        %v5163 = vld [vmem:[%s4207 + $0x220] sm:$0xf]
        %v5164 = vld [vmem:[%s4207 + $0x224] sm:$0xf]
        %v5165 = vld [vmem:[%s4207 + $0x228] sm:$0xf]
        %v5166 = vld [vmem:[%s4207 + $0x22c] sm:$0xf]
        %v5167 = vld [vmem:[%s4207 + $0x230] sm:$0xf]
        %v5168 = vld [vmem:[%s4207 + $0x234] sm:$0xf]
        %v5169 = vld [vmem:[%s4207 + $0x238] sm:$0xf]
        %v5170 = vld [vmem:[%s4207 + $0x23c] sm:$0xf]
        %v5171 = vld [vmem:[%s4207 + $0x240] sm:$0xf]
        %v5172 = vld [vmem:[%s4207 + $0x244] sm:$0xf]
        %v5173 = vld [vmem:[%s4207 + $0x248] sm:$0xf]
        %v5174 = vld [vmem:[%s4207 + $0x24c] sm:$0xf]
        %v5175 = vld [vmem:[%s4207 + $0x250] sm:$0xf]
        %v5176 = vld [vmem:[%s4207 + $0x254] sm:$0xf]
        %v5177 = vld [vmem:[%s4207 + $0x258] sm:$0xf]
        %v5178 = vld [vmem:[%s4207 + $0x25c] sm:$0xf]
        %v5179 = vld [vmem:[%s4207 + $0x260] sm:$0xf]
        %v5180 = vld [vmem:[%s4207 + $0x264] sm:$0xf]
        %v5181 = vld [vmem:[%s4207 + $0x268] sm:$0xf]
        %v5182 = vld [vmem:[%s4207 + $0x26c] sm:$0xf]
        %v5183 = vld [vmem:[%s4207 + $0x270] sm:$0xf]
        %v5184 = vld [vmem:[%s4207 + $0x274] sm:$0xf]
        %v5185 = vld [vmem:[%s4207 + $0x278] sm:$0xf]
        %v5186 = vld [vmem:[%s4207 + $0x27c] sm:$0xf]
        %v5187 = vld [vmem:[%s4207 + $0x280] sm:$0xf]
        %v5188 = vld [vmem:[%s4207 + $0x284] sm:$0xf]
        %v5189 = vld [vmem:[%s4207 + $0x288] sm:$0xf]
        %v5190 = vld [vmem:[%s4207 + $0x28c] sm:$0xf]
        %v5191 = vld [vmem:[%s4207 + $0x290] sm:$0xf]
        %v5192 = vld [vmem:[%s4207 + $0x294] sm:$0xf]
        %v5193 = vld [vmem:[%s4207 + $0x298] sm:$0xf]
        %v5194 = vld [vmem:[%s4207 + $0x29c] sm:$0xf]
        %v5195 = vld [vmem:[%s4207 + $0x2a0] sm:$0xf]
        %v5196 = vld [vmem:[%s4207 + $0x2a4] sm:$0xf]
        %v5197 = vld [vmem:[%s4207 + $0x2a8] sm:$0xf]
        %v5198 = vld [vmem:[%s4207 + $0x2ac] sm:$0xf]
        %v5199 = vld [vmem:[%s4207 + $0x2b0] sm:$0xf]
        %v5200 = vld [vmem:[%s4207 + $0x2b4] sm:$0xf]
        %v5201 = vld [vmem:[%s4207 + $0x2b8] sm:$0xf]
        %v5202 = vld [vmem:[%s4207 + $0x2bc] sm:$0xf]
        %v5203 = vld [vmem:[%s4207 + $0x2c0] sm:$0xf]
        %v5204 = vld [vmem:[%s4207 + $0x2c4] sm:$0xf]
        %v5205 = vld [vmem:[%s4207 + $0x2c8] sm:$0xf]
        %v5206 = vld [vmem:[%s4207 + $0x2cc] sm:$0xf]
        %v5207 = vld [vmem:[%s4207 + $0x2d0] sm:$0xf]
        %v5208 = vld [vmem:[%s4207 + $0x2d4] sm:$0xf]
        %v5209 = vld [vmem:[%s4207 + $0x2d8] sm:$0xf]
        %v5210 = vld [vmem:[%s4207 + $0x2dc] sm:$0xf]
        %v5211 = vld [vmem:[%s4207 + $0x2e0] sm:$0xf]
        %v5212 = vld [vmem:[%s4207 + $0x2e4] sm:$0xf]
        %v5213 = vld [vmem:[%s4207 + $0x2e8] sm:$0xf]
        %v5214 = vld [vmem:[%s4207 + $0x2ec] sm:$0xf]
        %v5215 = vld [vmem:[%s4207 + $0x2f0] sm:$0xf]
        %v5216 = vld [vmem:[%s4207 + $0x2f4] sm:$0xf]
        %v5217 = vld [vmem:[%s4207 + $0x2f8] sm:$0xf]
        %v5218 = vld [vmem:[%s4207 + $0x2fc] sm:$0xf]
        %v5220 = vlaneseq
        %v5221 = vshrl.u32 %v5220, 7
        %v5222 = vsub.s32 0, %v5221
        %v5223 = vrot.slane %v5154, %v5222
        %v5224 = vlaneseq
        %v5225 = vshrl.u32 %v5224, 7
        %v5226 = vsub.s32 1, %v5225
        %v5227 = vrot.slane %v5154, %v5226
        %v5228 = vlaneseq
        %v5229 = vshrl.u32 %v5228, 7
        %v5230 = vsub.s32 2, %v5229
        %v5231 = vrot.slane %v5154, %v5230
        %v5232 = vlaneseq
        %v5233 = vshrl.u32 %v5232, 7
        %v5234 = vsub.s32 3, %v5233
        %v5235 = vrot.slane %v5154, %v5234
        %v5244 = vunpack.c.l.b16 %v5150
        %v5245 = vunpack.c.h.b16 %v5150
        %v5246 = vunpack.c.l.b16 %v5151
        %v5247 = vunpack.c.h.b16 %v5151
        %v5248 = vunpack.c.l.b16 %v5152
        %v5249 = vunpack.c.h.b16 %v5152
        %v5250 = vunpack.c.l.b16 %v5153
        %v5251 = vunpack.c.h.b16 %v5153
        %v5252 = vpack.c.b16 %v5248, %v5244
        %v5253 = vpack.c.b16 %v5249, %v5245
        %v5254 = vpack.c.b16 %v5250, %v5246
        %v5255 = vpack.c.b16 %v5251, %v5247
        %5260 = vmatprep.subr.bf16.mxu0 %v5253
        %5261 = vmatpush1.bf16.msra.mxu0 %v5252
        %5262 = vmatprep.subr.bf16.mxu0 0
        %5263 = vmatpush1.bf16.msra.mxu0 0
        %5264 = vmatprep.subr.bf16.mxu0 0
        %5265 = vmatpush1.bf16.msra.mxu0 0
        %5266 = vmatprep.subr.bf16.mxu0 0
        %5267 = vmatpush1.bf16.msra.mxu0 0
        %5268 = vmatprep.subr.bf16.mxu0 0
        %5269 = vmatpush1.bf16.msra.mxu0 0
        %5270 = vmatprep.subr.bf16.mxu0 0
        %5271 = vmatpush1.bf16.msra.mxu0 0
        %5272 = vmatprep.subr.bf16.mxu0 0
        %5273 = vmatpush1.bf16.msra.mxu0 0
        %5274 = vmatprep.subr.bf16.mxu0 0
        %5275 = vmatpush1.bf16.msra.mxu0 0
        %5276 = vmatprep.subr.bf16.mxu0 0
        %5277 = vmatpush1.bf16.msra.mxu0 0
        %5278 = vmatprep.subr.bf16.mxu0 0
        %5279 = vmatpush1.bf16.msra.mxu0 0
        %5280 = vmatprep.subr.bf16.mxu0 0
        %5281 = vmatpush1.bf16.msra.mxu0 0
        %5282 = vmatprep.subr.bf16.mxu0 0
        %5283 = vmatpush1.bf16.msra.mxu0 0
        %5284 = vmatprep.subr.bf16.mxu0 0
        %5285 = vmatpush1.bf16.msra.mxu0 0
        %5286 = vmatprep.subr.bf16.mxu0 0
        %5287 = vmatpush1.bf16.msra.mxu0 0
        %5288 = vmatprep.subr.bf16.mxu0 0
        %5289 = vmatpush1.bf16.msra.mxu0 0
        %5290 = vmatprep.subr.bf16.mxu0 0
        %5291 = vmatpush1.bf16.msra.mxu0 0
        %5292 = vmatprep.mubr.bf16.mxu0 0
        %5293 = vmatmul.mubr.bf16.gmra.mrb[0].mxu0 %v4314
        %v5294 = vpop.f32.mrb[0].mxu0
        %v5295 = vadd.f32 %v5223, %v5294
        %v5296 = vpop.f32.mrb[0].mxu0
        %v5297 = vadd.f32 %v5227, %v5296
        %v5298 = vpop.f32.mrb[0].mxu0
        %v5299 = vpop.f32.mrb[0].mxu0
        %5300 = vdwg.mxu0
        %5301 = vmatprep.subr.bf16.mxu0 %v5255
        %5302 = vmatpush1.bf16.msra.mxu0 %v5254
        %5303 = vmatprep.subr.bf16.mxu0 0
        %5304 = vmatpush1.bf16.msra.mxu0 0
        %5305 = vmatprep.subr.bf16.mxu0 0
        %5306 = vmatpush1.bf16.msra.mxu0 0
        %5307 = vmatprep.subr.bf16.mxu0 0
        %5308 = vmatpush1.bf16.msra.mxu0 0
        %5309 = vmatprep.subr.bf16.mxu0 0
        %5310 = vmatpush1.bf16.msra.mxu0 0
        %5311 = vmatprep.subr.bf16.mxu0 0
        %5312 = vmatpush1.bf16.msra.mxu0 0
        %5313 = vmatprep.subr.bf16.mxu0 0
        %5314 = vmatpush1.bf16.msra.mxu0 0
        %5315 = vmatprep.subr.bf16.mxu0 0
        %5316 = vmatpush1.bf16.msra.mxu0 0
        %5317 = vmatprep.subr.bf16.mxu0 0
        %5318 = vmatpush1.bf16.msra.mxu0 0
        %5319 = vmatprep.subr.bf16.mxu0 0
        %5320 = vmatpush1.bf16.msra.mxu0 0
        %5321 = vmatprep.subr.bf16.mxu0 0
        %5322 = vmatpush1.bf16.msra.mxu0 0
        %5323 = vmatprep.subr.bf16.mxu0 0
        %5324 = vmatpush1.bf16.msra.mxu0 0
        %5325 = vmatprep.subr.bf16.mxu0 0
        %5326 = vmatpush1.bf16.msra.mxu0 0
        %5327 = vmatprep.subr.bf16.mxu0 0
        %5328 = vmatpush1.bf16.msra.mxu0 0
        %5329 = vmatprep.subr.bf16.mxu0 0
        %5330 = vmatpush1.bf16.msra.mxu0 0
        %5331 = vmatprep.subr.bf16.mxu0 0
        %5332 = vmatpush1.bf16.msra.mxu0 0
        %5333 = vmatprep.mubr.bf16.mxu0 0
        %5334 = vmatmul.mubr.bf16.gmra.mrb[0].mxu0 %v4314
        %v5335 = vpop.f32.mrb[0].mxu0
        %v5336 = vadd.f32 %v5231, %v5335
        %v5337 = vpop.f32.mrb[0].mxu0
        %v5338 = vadd.f32 %v5235, %v5337
        %v5339 = vpop.f32.mrb[0].mxu0
        %v5340 = vpop.f32.mrb[0].mxu0
        %5341 = vdwg.mxu0
        %v5342 = vmax.f32 %v5295, 0.0
        %v5343 = vmax.f32 %v5297, 0.0
        %v5344 = vmax.f32 %v5336, 0.0
        %v5345 = vmax.f32 %v5338, 0.0
        %v5346 = vpack.c.bf16 %v5342, %v5342
        %v5347 = vpack.c.bf16 %v5343, %v5343
        %v5348 = vpack.c.bf16 %v5344, %v5344
        %v5349 = vpack.c.bf16 %v5345, %v5345
        %v5414 = vunpack.c.l.b16 %v5155
        %v5415 = vunpack.c.l.b16 %v5156
        %v5416 = vunpack.c.l.b16 %v5157
        %v5417 = vunpack.c.l.b16 %v5158
        %v5418 = vunpack.c.l.b16 %v5159
        %v5419 = vunpack.c.l.b16 %v5160
        %v5420 = vunpack.c.l.b16 %v5161
        %v5421 = vunpack.c.l.b16 %v5162
        %v5422 = vunpack.c.l.b16 %v5163
        %v5423 = vunpack.c.l.b16 %v5164
        %v5424 = vunpack.c.l.b16 %v5165
        %v5425 = vunpack.c.l.b16 %v5166
        %v5426 = vunpack.c.l.b16 %v5167
        %v5427 = vunpack.c.l.b16 %v5168
        %v5428 = vunpack.c.l.b16 %v5169
        %v5429 = vunpack.c.l.b16 %v5170
        %v5430 = vunpack.c.l.b16 %v5171
        %v5431 = vunpack.c.l.b16 %v5172
        %v5432 = vunpack.c.l.b16 %v5173
        %v5433 = vunpack.c.l.b16 %v5174
        %v5434 = vunpack.c.l.b16 %v5175
        %v5435 = vunpack.c.l.b16 %v5176
        %v5436 = vunpack.c.l.b16 %v5177
        %v5437 = vunpack.c.l.b16 %v5178
        %v5438 = vunpack.c.l.b16 %v5179
        %v5439 = vunpack.c.l.b16 %v5180
        %v5440 = vunpack.c.l.b16 %v5181
        %v5441 = vunpack.c.l.b16 %v5182
        %v5442 = vunpack.c.l.b16 %v5183
        %v5443 = vunpack.c.l.b16 %v5184
        %v5444 = vunpack.c.l.b16 %v5185
        %v5445 = vunpack.c.l.b16 %v5186
        %v5446 = vunpack.c.l.b16 %v5187
        %v5447 = vunpack.c.l.b16 %v5188
        %v5448 = vunpack.c.l.b16 %v5189
        %v5449 = vunpack.c.l.b16 %v5190
        %v5450 = vunpack.c.l.b16 %v5191
        %v5451 = vunpack.c.l.b16 %v5192
        %v5452 = vunpack.c.l.b16 %v5193
        %v5453 = vunpack.c.l.b16 %v5194
        %v5454 = vunpack.c.l.b16 %v5195
        %v5455 = vunpack.c.l.b16 %v5196
        %v5456 = vunpack.c.l.b16 %v5197
        %v5457 = vunpack.c.l.b16 %v5198
        %v5458 = vunpack.c.l.b16 %v5199
        %v5459 = vunpack.c.l.b16 %v5200
        %v5460 = vunpack.c.l.b16 %v5201
        %v5461 = vunpack.c.l.b16 %v5202
        %v5462 = vunpack.c.l.b16 %v5203
        %v5463 = vunpack.c.l.b16 %v5204
        %v5464 = vunpack.c.l.b16 %v5205
        %v5465 = vunpack.c.l.b16 %v5206
        %v5466 = vunpack.c.l.b16 %v5207
        %v5467 = vunpack.c.l.b16 %v5208
        %v5468 = vunpack.c.l.b16 %v5209
        %v5469 = vunpack.c.l.b16 %v5210
        %v5470 = vunpack.c.l.b16 %v5211
        %v5471 = vunpack.c.l.b16 %v5212
        %v5472 = vunpack.c.l.b16 %v5213
        %v5473 = vunpack.c.l.b16 %v5214
        %v5474 = vunpack.c.l.b16 %v5215
        %v5475 = vunpack.c.l.b16 %v5216
        %v5476 = vunpack.c.l.b16 %v5217
        %v5477 = vunpack.c.l.b16 %v5218
        %v5478 = vpack.c.b16 %v5415, %v5414
        %v5479 = vpack.c.b16 %v5417, %v5416
        %v5480 = vpack.c.b16 %v5419, %v5418
        %v5481 = vpack.c.b16 %v5421, %v5420
        %v5482 = vpack.c.b16 %v5423, %v5422
        %v5483 = vpack.c.b16 %v5425, %v5424
        %v5484 = vpack.c.b16 %v5427, %v5426
        %v5485 = vpack.c.b16 %v5429, %v5428
        %v5486 = vpack.c.b16 %v5431, %v5430
        %v5487 = vpack.c.b16 %v5433, %v5432
        %v5488 = vpack.c.b16 %v5435, %v5434
        %v5489 = vpack.c.b16 %v5437, %v5436
        %v5490 = vpack.c.b16 %v5439, %v5438
        %v5491 = vpack.c.b16 %v5441, %v5440
        %v5492 = vpack.c.b16 %v5443, %v5442
        %v5493 = vpack.c.b16 %v5445, %v5444
        %v5494 = vpack.c.b16 %v5447, %v5446
        %v5495 = vpack.c.b16 %v5449, %v5448
        %v5496 = vpack.c.b16 %v5451, %v5450
        %v5497 = vpack.c.b16 %v5453, %v5452
        %v5498 = vpack.c.b16 %v5455, %v5454
        %v5499 = vpack.c.b16 %v5457, %v5456
        %v5500 = vpack.c.b16 %v5459, %v5458
        %v5501 = vpack.c.b16 %v5461, %v5460
        %v5502 = vpack.c.b16 %v5463, %v5462
        %v5503 = vpack.c.b16 %v5465, %v5464
        %v5504 = vpack.c.b16 %v5467, %v5466
        %v5505 = vpack.c.b16 %v5469, %v5468
        %v5506 = vpack.c.b16 %v5471, %v5470
        %v5507 = vpack.c.b16 %v5473, %v5472
        %v5508 = vpack.c.b16 %v5475, %v5474
        %v5509 = vpack.c.b16 %v5477, %v5476
        %5542 = vmatprep.subr.bf16.mxu0 0
        %5543 = vmatpush1.bf16.msra.mxu0 %v5478
        %5544 = vmatprep.subr.bf16.mxu0 0
        %5545 = vmatpush1.bf16.msra.mxu0 %v5479
        %5546 = vmatprep.subr.bf16.mxu0 0
        %5547 = vmatpush1.bf16.msra.mxu0 %v5480
        %5548 = vmatprep.subr.bf16.mxu0 0
        %5549 = vmatpush1.bf16.msra.mxu0 %v5481
        %5550 = vmatprep.subr.bf16.mxu0 0
        %5551 = vmatpush1.bf16.msra.mxu0 %v5482
        %5552 = vmatprep.subr.bf16.mxu0 0
        %5553 = vmatpush1.bf16.msra.mxu0 %v5483
        %5554 = vmatprep.subr.bf16.mxu0 0
        %5555 = vmatpush1.bf16.msra.mxu0 %v5484
        %5556 = vmatprep.subr.bf16.mxu0 0
        %5557 = vmatpush1.bf16.msra.mxu0 %v5485
        %5558 = vmatprep.subr.bf16.mxu0 0
        %5559 = vmatpush1.bf16.msra.mxu0 %v5486
        %5560 = vmatprep.subr.bf16.mxu0 0
        %5561 = vmatpush1.bf16.msra.mxu0 %v5487
        %5562 = vmatprep.subr.bf16.mxu0 0
        %5563 = vmatpush1.bf16.msra.mxu0 %v5488
        %5564 = vmatprep.subr.bf16.mxu0 0
        %5565 = vmatpush1.bf16.msra.mxu0 %v5489
        %5566 = vmatprep.subr.bf16.mxu0 0
        %5567 = vmatpush1.bf16.msra.mxu0 %v5490
        %5568 = vmatprep.subr.bf16.mxu0 0
        %5569 = vmatpush1.bf16.msra.mxu0 %v5491
        %5570 = vmatprep.subr.bf16.mxu0 0
        %5571 = vmatpush1.bf16.msra.mxu0 %v5492
        %5572 = vmatprep.subr.bf16.mxu0 0
        %5573 = vmatpush1.bf16.msra.mxu0 %v5493
        %5574 = vmatprep.mubr.bf16.mxu0 %v5347
        %5575 = vmatmul.mubr.bf16.gmra.mrb[0].mxu0 %v5346
        %v5576 = vpop.f32.mrb[0].mxu0
        %v5577 = vadd.f32 0.0, %v5576
        %v5578 = vpop.f32.mrb[0].mxu0
        %v5579 = vpop.f32.mrb[0].mxu0
        %v5580 = vpop.f32.mrb[0].mxu0
        %5581 = vdwg.mxu0
        %5582 = vmatprep.subr.bf16.mxu0 0
        %5583 = vmatpush1.bf16.msra.mxu0 %v5494
        %5584 = vmatprep.subr.bf16.mxu0 0
        %5585 = vmatpush1.bf16.msra.mxu0 %v5495
        %5586 = vmatprep.subr.bf16.mxu0 0
        %5587 = vmatpush1.bf16.msra.mxu0 %v5496
        %5588 = vmatprep.subr.bf16.mxu0 0
        %5589 = vmatpush1.bf16.msra.mxu0 %v5497
        %5590 = vmatprep.subr.bf16.mxu0 0
        %5591 = vmatpush1.bf16.msra.mxu0 %v5498
        %5592 = vmatprep.subr.bf16.mxu0 0
        %5593 = vmatpush1.bf16.msra.mxu0 %v5499
        %5594 = vmatprep.subr.bf16.mxu0 0
        %5595 = vmatpush1.bf16.msra.mxu0 %v5500
        %5596 = vmatprep.subr.bf16.mxu0 0
        %5597 = vmatpush1.bf16.msra.mxu0 %v5501
        %5598 = vmatprep.subr.bf16.mxu0 0
        %5599 = vmatpush1.bf16.msra.mxu0 %v5502
        %5600 = vmatprep.subr.bf16.mxu0 0
        %5601 = vmatpush1.bf16.msra.mxu0 %v5503
        %5602 = vmatprep.subr.bf16.mxu0 0
        %5603 = vmatpush1.bf16.msra.mxu0 %v5504
        %5604 = vmatprep.subr.bf16.mxu0 0
        %5605 = vmatpush1.bf16.msra.mxu0 %v5505
        %5606 = vmatprep.subr.bf16.mxu0 0
        %5607 = vmatpush1.bf16.msra.mxu0 %v5506
        %5608 = vmatprep.subr.bf16.mxu0 0
        %5609 = vmatpush1.bf16.msra.mxu0 %v5507
        %5610 = vmatprep.subr.bf16.mxu0 0
        %5611 = vmatpush1.bf16.msra.mxu0 %v5508
        %5612 = vmatprep.subr.bf16.mxu0 0
        %5613 = vmatpush1.bf16.msra.mxu0 %v5509
        %5614 = vmatprep.mubr.bf16.mxu0 %v5349
        %5615 = vmatmul.mubr.bf16.gmra.mrb[0].mxu0 %v5348
        %v5616 = vpop.f32.mrb[0].mxu0
        %v5617 = vadd.f32 %v5577, %v5616
        %v5618 = vpop.f32.mrb[0].mxu0
        %v5619 = vpop.f32.mrb[0].mxu0
        %v5620 = vpop.f32.mrb[0].mxu0
        %5621 = vdwg.mxu0
        %v5622 = vadd.f32 %v5145, %v5617
        %v5623 = vld [vmem:[%s4200 + $0x30] sm:$0xff]
        %v5624 = vld [vmem:[%s4200 + $0x38] sm:$0xff]
        %v5625 = vld [vmem:[%s4200 + $0x70] sm:$0xff]
        %v5626 = vld [vmem:[%s4200 + $0x78] sm:$0xff]
        %v5627 = vld [vmem:[%s4205 + $0xc] sm:$0xf]
        %v5628 = vld [vmem:[%s4207 + $0x300] sm:$0xf]
        %v5629 = vld [vmem:[%s4207 + $0x304] sm:$0xf]
        %v5630 = vld [vmem:[%s4207 + $0x308] sm:$0xf]
        %v5631 = vld [vmem:[%s4207 + $0x30c] sm:$0xf]
        %v5632 = vld [vmem:[%s4207 + $0x310] sm:$0xf]
        %v5633 = vld [vmem:[%s4207 + $0x314] sm:$0xf]
        %v5634 = vld [vmem:[%s4207 + $0x318] sm:$0xf]
        %v5635 = vld [vmem:[%s4207 + $0x31c] sm:$0xf]
        %v5636 = vld [vmem:[%s4207 + $0x320] sm:$0xf]
        %v5637 = vld [vmem:[%s4207 + $0x324] sm:$0xf]
        %v5638 = vld [vmem:[%s4207 + $0x328] sm:$0xf]
        %v5639 = vld [vmem:[%s4207 + $0x32c] sm:$0xf]
        %v5640 = vld [vmem:[%s4207 + $0x330] sm:$0xf]
        %v5641 = vld [vmem:[%s4207 + $0x334] sm:$0xf]
        %v5642 = vld [vmem:[%s4207 + $0x338] sm:$0xf]
        %v5643 = vld [vmem:[%s4207 + $0x33c] sm:$0xf]
        %v5644 = vld [vmem:[%s4207 + $0x340] sm:$0xf]
        %v5645 = vld [vmem:[%s4207 + $0x344] sm:$0xf]
        %v5646 = vld [vmem:[%s4207 + $0x348] sm:$0xf]
        %v5647 = vld [vmem:[%s4207 + $0x34c] sm:$0xf]
        %v5648 = vld [vmem:[%s4207 + $0x350] sm:$0xf]
        %v5649 = vld [vmem:[%s4207 + $0x354] sm:$0xf]
        %v5650 = vld [vmem:[%s4207 + $0x358] sm:$0xf]
        %v5651 = vld [vmem:[%s4207 + $0x35c] sm:$0xf]
        %v5652 = vld [vmem:[%s4207 + $0x360] sm:$0xf]
        %v5653 = vld [vmem:[%s4207 + $0x364] sm:$0xf]
        %v5654 = vld [vmem:[%s4207 + $0x368] sm:$0xf]
        %v5655 = vld [vmem:[%s4207 + $0x36c] sm:$0xf]
        %v5656 = vld [vmem:[%s4207 + $0x370] sm:$0xf]
        %v5657 = vld [vmem:[%s4207 + $0x374] sm:$0xf]
        %v5658 = vld [vmem:[%s4207 + $0x378] sm:$0xf]
        %v5659 = vld [vmem:[%s4207 + $0x37c] sm:$0xf]
        %v5660 = vld [vmem:[%s4207 + $0x380] sm:$0xf]
        %v5661 = vld [vmem:[%s4207 + $0x384] sm:$0xf]
        %v5662 = vld [vmem:[%s4207 + $0x388] sm:$0xf]
        %v5663 = vld [vmem:[%s4207 + $0x38c] sm:$0xf]
        %v5664 = vld [vmem:[%s4207 + $0x390] sm:$0xf]
        %v5665 = vld [vmem:[%s4207 + $0x394] sm:$0xf]
        %v5666 = vld [vmem:[%s4207 + $0x398] sm:$0xf]
        %v5667 = vld [vmem:[%s4207 + $0x39c] sm:$0xf]
        %v5668 = vld [vmem:[%s4207 + $0x3a0] sm:$0xf]
        %v5669 = vld [vmem:[%s4207 + $0x3a4] sm:$0xf]
        %v5670 = vld [vmem:[%s4207 + $0x3a8] sm:$0xf]
        %v5671 = vld [vmem:[%s4207 + $0x3ac] sm:$0xf]
        %v5672 = vld [vmem:[%s4207 + $0x3b0] sm:$0xf]
        %v5673 = vld [vmem:[%s4207 + $0x3b4] sm:$0xf]
        %v5674 = vld [vmem:[%s4207 + $0x3b8] sm:$0xf]
        %v5675 = vld [vmem:[%s4207 + $0x3bc] sm:$0xf]
        %v5676 = vld [vmem:[%s4207 + $0x3c0] sm:$0xf]
        %v5677 = vld [vmem:[%s4207 + $0x3c4] sm:$0xf]
        %v5678 = vld [vmem:[%s4207 + $0x3c8] sm:$0xf]
        %v5679 = vld [vmem:[%s4207 + $0x3cc] sm:$0xf]
        %v5680 = vld [vmem:[%s4207 + $0x3d0] sm:$0xf]
        %v5681 = vld [vmem:[%s4207 + $0x3d4] sm:$0xf]
        %v5682 = vld [vmem:[%s4207 + $0x3d8] sm:$0xf]
        %v5683 = vld [vmem:[%s4207 + $0x3dc] sm:$0xf]
        %v5684 = vld [vmem:[%s4207 + $0x3e0] sm:$0xf]
        %v5685 = vld [vmem:[%s4207 + $0x3e4] sm:$0xf]
        %v5686 = vld [vmem:[%s4207 + $0x3e8] sm:$0xf]
        %v5687 = vld [vmem:[%s4207 + $0x3ec] sm:$0xf]
        %v5688 = vld [vmem:[%s4207 + $0x3f0] sm:$0xf]
        %v5689 = vld [vmem:[%s4207 + $0x3f4] sm:$0xf]
        %v5690 = vld [vmem:[%s4207 + $0x3f8] sm:$0xf]
        %v5691 = vld [vmem:[%s4207 + $0x3fc] sm:$0xf]
        %v5693 = vlaneseq
        %v5694 = vshrl.u32 %v5693, 7
        %v5695 = vsub.s32 0, %v5694
        %v5696 = vrot.slane %v5627, %v5695
        %v5697 = vlaneseq
        %v5698 = vshrl.u32 %v5697, 7
        %v5699 = vsub.s32 1, %v5698
        %v5700 = vrot.slane %v5627, %v5699
        %v5701 = vlaneseq
        %v5702 = vshrl.u32 %v5701, 7
        %v5703 = vsub.s32 2, %v5702
        %v5704 = vrot.slane %v5627, %v5703
        %v5705 = vlaneseq
        %v5706 = vshrl.u32 %v5705, 7
        %v5707 = vsub.s32 3, %v5706
        %v5708 = vrot.slane %v5627, %v5707
        %v5717 = vunpack.c.l.b16 %v5623
        %v5718 = vunpack.c.h.b16 %v5623
        %v5719 = vunpack.c.l.b16 %v5624
        %v5720 = vunpack.c.h.b16 %v5624
        %v5721 = vunpack.c.l.b16 %v5625
        %v5722 = vunpack.c.h.b16 %v5625
        %v5723 = vunpack.c.l.b16 %v5626
        %v5724 = vunpack.c.h.b16 %v5626
        %v5725 = vpack.c.b16 %v5721, %v5717
        %v5726 = vpack.c.b16 %v5722, %v5718
        %v5727 = vpack.c.b16 %v5723, %v5719
        %v5728 = vpack.c.b16 %v5724, %v5720
        %5733 = vmatprep.subr.bf16.mxu0 %v5726
        %5734 = vmatpush1.bf16.msra.mxu0 %v5725
        %5735 = vmatprep.subr.bf16.mxu0 0
        %5736 = vmatpush1.bf16.msra.mxu0 0
        %5737 = vmatprep.subr.bf16.mxu0 0
        %5738 = vmatpush1.bf16.msra.mxu0 0
        %5739 = vmatprep.subr.bf16.mxu0 0
        %5740 = vmatpush1.bf16.msra.mxu0 0
        %5741 = vmatprep.subr.bf16.mxu0 0
        %5742 = vmatpush1.bf16.msra.mxu0 0
        %5743 = vmatprep.subr.bf16.mxu0 0
        %5744 = vmatpush1.bf16.msra.mxu0 0
        %5745 = vmatprep.subr.bf16.mxu0 0
        %5746 = vmatpush1.bf16.msra.mxu0 0
        %5747 = vmatprep.subr.bf16.mxu0 0
        %5748 = vmatpush1.bf16.msra.mxu0 0
        %5749 = vmatprep.subr.bf16.mxu0 0
        %5750 = vmatpush1.bf16.msra.mxu0 0
        %5751 = vmatprep.subr.bf16.mxu0 0
        %5752 = vmatpush1.bf16.msra.mxu0 0
        %5753 = vmatprep.subr.bf16.mxu0 0
        %5754 = vmatpush1.bf16.msra.mxu0 0
        %5755 = vmatprep.subr.bf16.mxu0 0
        %5756 = vmatpush1.bf16.msra.mxu0 0
        %5757 = vmatprep.subr.bf16.mxu0 0
        %5758 = vmatpush1.bf16.msra.mxu0 0
        %5759 = vmatprep.subr.bf16.mxu0 0
        %5760 = vmatpush1.bf16.msra.mxu0 0
        %5761 = vmatprep.subr.bf16.mxu0 0
        %5762 = vmatpush1.bf16.msra.mxu0 0
        %5763 = vmatprep.subr.bf16.mxu0 0
        %5764 = vmatpush1.bf16.msra.mxu0 0
        %5765 = vmatprep.mubr.bf16.mxu0 0
        %5766 = vmatmul.mubr.bf16.gmra.mrb[0].mxu0 %v4314
        %v5767 = vpop.f32.mrb[0].mxu0
        %v5768 = vadd.f32 %v5696, %v5767
        %v5769 = vpop.f32.mrb[0].mxu0
        %v5770 = vadd.f32 %v5700, %v5769
        %v5771 = vpop.f32.mrb[0].mxu0
        %v5772 = vpop.f32.mrb[0].mxu0
        %5773 = vdwg.mxu0
        %5774 = vmatprep.subr.bf16.mxu0 %v5728
        %5775 = vmatpush1.bf16.msra.mxu0 %v5727
        %5776 = vmatprep.subr.bf16.mxu0 0
        %5777 = vmatpush1.bf16.msra.mxu0 0
        %5778 = vmatprep.subr.bf16.mxu0 0
        %5779 = vmatpush1.bf16.msra.mxu0 0
        %5780 = vmatprep.subr.bf16.mxu0 0
        %5781 = vmatpush1.bf16.msra.mxu0 0
        %5782 = vmatprep.subr.bf16.mxu0 0
        %5783 = vmatpush1.bf16.msra.mxu0 0
        %5784 = vmatprep.subr.bf16.mxu0 0
        %5785 = vmatpush1.bf16.msra.mxu0 0
        %5786 = vmatprep.subr.bf16.mxu0 0
        %5787 = vmatpush1.bf16.msra.mxu0 0
        %5788 = vmatprep.subr.bf16.mxu0 0
        %5789 = vmatpush1.bf16.msra.mxu0 0
        %5790 = vmatprep.subr.bf16.mxu0 0
        %5791 = vmatpush1.bf16.msra.mxu0 0
        %5792 = vmatprep.subr.bf16.mxu0 0
        %5793 = vmatpush1.bf16.msra.mxu0 0
        %5794 = vmatprep.subr.bf16.mxu0 0
        %5795 = vmatpush1.bf16.msra.mxu0 0
        %5796 = vmatprep.subr.bf16.mxu0 0
        %5797 = vmatpush1.bf16.msra.mxu0 0
        %5798 = vmatprep.subr.bf16.mxu0 0
        %5799 = vmatpush1.bf16.msra.mxu0 0
        %5800 = vmatprep.subr.bf16.mxu0 0
        %5801 = vmatpush1.bf16.msra.mxu0 0
        %5802 = vmatprep.subr.bf16.mxu0 0
        %5803 = vmatpush1.bf16.msra.mxu0 0
        %5804 = vmatprep.subr.bf16.mxu0 0
        %5805 = vmatpush1.bf16.msra.mxu0 0
        %5806 = vmatprep.mubr.bf16.mxu0 0
        %5807 = vmatmul.mubr.bf16.gmra.mrb[0].mxu0 %v4314
        %v5808 = vpop.f32.mrb[0].mxu0
        %v5809 = vadd.f32 %v5704, %v5808
        %v5810 = vpop.f32.mrb[0].mxu0
        %v5811 = vadd.f32 %v5708, %v5810
        %v5812 = vpop.f32.mrb[0].mxu0
        %v5813 = vpop.f32.mrb[0].mxu0
        %5814 = vdwg.mxu0
        %v5815 = vmax.f32 %v5768, 0.0
        %v5816 = vmax.f32 %v5770, 0.0
        %v5817 = vmax.f32 %v5809, 0.0
        %v5818 = vmax.f32 %v5811, 0.0
        %v5819 = vpack.c.bf16 %v5815, %v5815
        %v5820 = vpack.c.bf16 %v5816, %v5816
        %v5821 = vpack.c.bf16 %v5817, %v5817
        %v5822 = vpack.c.bf16 %v5818, %v5818
        %v5887 = vunpack.c.l.b16 %v5628
        %v5888 = vunpack.c.l.b16 %v5629
        %v5889 = vunpack.c.l.b16 %v5630
        %v5890 = vunpack.c.l.b16 %v5631
        %v5891 = vunpack.c.l.b16 %v5632
        %v5892 = vunpack.c.l.b16 %v5633
        %v5893 = vunpack.c.l.b16 %v5634
        %v5894 = vunpack.c.l.b16 %v5635
        %v5895 = vunpack.c.l.b16 %v5636
        %v5896 = vunpack.c.l.b16 %v5637
        %v5897 = vunpack.c.l.b16 %v5638
        %v5898 = vunpack.c.l.b16 %v5639
        %v5899 = vunpack.c.l.b16 %v5640
        %v5900 = vunpack.c.l.b16 %v5641
        %v5901 = vunpack.c.l.b16 %v5642
        %v5902 = vunpack.c.l.b16 %v5643
        %v5903 = vunpack.c.l.b16 %v5644
        %v5904 = vunpack.c.l.b16 %v5645
        %v5905 = vunpack.c.l.b16 %v5646
        %v5906 = vunpack.c.l.b16 %v5647
        %v5907 = vunpack.c.l.b16 %v5648
        %v5908 = vunpack.c.l.b16 %v5649
        %v5909 = vunpack.c.l.b16 %v5650
        %v5910 = vunpack.c.l.b16 %v5651
        %v5911 = vunpack.c.l.b16 %v5652
        %v5912 = vunpack.c.l.b16 %v5653
        %v5913 = vunpack.c.l.b16 %v5654
        %v5914 = vunpack.c.l.b16 %v5655
        %v5915 = vunpack.c.l.b16 %v5656
        %v5916 = vunpack.c.l.b16 %v5657
        %v5917 = vunpack.c.l.b16 %v5658
        %v5918 = vunpack.c.l.b16 %v5659
        %v5919 = vunpack.c.l.b16 %v5660
        %v5920 = vunpack.c.l.b16 %v5661
        %v5921 = vunpack.c.l.b16 %v5662
        %v5922 = vunpack.c.l.b16 %v5663
        %v5923 = vunpack.c.l.b16 %v5664
        %v5924 = vunpack.c.l.b16 %v5665
        %v5925 = vunpack.c.l.b16 %v5666
        %v5926 = vunpack.c.l.b16 %v5667
        %v5927 = vunpack.c.l.b16 %v5668
        %v5928 = vunpack.c.l.b16 %v5669
        %v5929 = vunpack.c.l.b16 %v5670
        %v5930 = vunpack.c.l.b16 %v5671
        %v5931 = vunpack.c.l.b16 %v5672
        %v5932 = vunpack.c.l.b16 %v5673
        %v5933 = vunpack.c.l.b16 %v5674
        %v5934 = vunpack.c.l.b16 %v5675
        %v5935 = vunpack.c.l.b16 %v5676
        %v5936 = vunpack.c.l.b16 %v5677
        %v5937 = vunpack.c.l.b16 %v5678
        %v5938 = vunpack.c.l.b16 %v5679
        %v5939 = vunpack.c.l.b16 %v5680
        %v5940 = vunpack.c.l.b16 %v5681
        %v5941 = vunpack.c.l.b16 %v5682
        %v5942 = vunpack.c.l.b16 %v5683
        %v5943 = vunpack.c.l.b16 %v5684
        %v5944 = vunpack.c.l.b16 %v5685
        %v5945 = vunpack.c.l.b16 %v5686
        %v5946 = vunpack.c.l.b16 %v5687
        %v5947 = vunpack.c.l.b16 %v5688
        %v5948 = vunpack.c.l.b16 %v5689
        %v5949 = vunpack.c.l.b16 %v5690
        %v5950 = vunpack.c.l.b16 %v5691
        %v5951 = vpack.c.b16 %v5888, %v5887
        %v5952 = vpack.c.b16 %v5890, %v5889
        %v5953 = vpack.c.b16 %v5892, %v5891
        %v5954 = vpack.c.b16 %v5894, %v5893
        %v5955 = vpack.c.b16 %v5896, %v5895
        %v5956 = vpack.c.b16 %v5898, %v5897
        %v5957 = vpack.c.b16 %v5900, %v5899
        %v5958 = vpack.c.b16 %v5902, %v5901
        %v5959 = vpack.c.b16 %v5904, %v5903
        %v5960 = vpack.c.b16 %v5906, %v5905
        %v5961 = vpack.c.b16 %v5908, %v5907
        %v5962 = vpack.c.b16 %v5910, %v5909
        %v5963 = vpack.c.b16 %v5912, %v5911
        %v5964 = vpack.c.b16 %v5914, %v5913
        %v5965 = vpack.c.b16 %v5916, %v5915
        %v5966 = vpack.c.b16 %v5918, %v5917
        %v5967 = vpack.c.b16 %v5920, %v5919
        %v5968 = vpack.c.b16 %v5922, %v5921
        %v5969 = vpack.c.b16 %v5924, %v5923
        %v5970 = vpack.c.b16 %v5926, %v5925
        %v5971 = vpack.c.b16 %v5928, %v5927
        %v5972 = vpack.c.b16 %v5930, %v5929
        %v5973 = vpack.c.b16 %v5932, %v5931
        %v5974 = vpack.c.b16 %v5934, %v5933
        %v5975 = vpack.c.b16 %v5936, %v5935
        %v5976 = vpack.c.b16 %v5938, %v5937
        %v5977 = vpack.c.b16 %v5940, %v5939
        %v5978 = vpack.c.b16 %v5942, %v5941
        %v5979 = vpack.c.b16 %v5944, %v5943
        %v5980 = vpack.c.b16 %v5946, %v5945
        %v5981 = vpack.c.b16 %v5948, %v5947
        %v5982 = vpack.c.b16 %v5950, %v5949
        %6015 = vmatprep.subr.bf16.mxu0 0
        %6016 = vmatpush1.bf16.msra.mxu0 %v5951
        %6017 = vmatprep.subr.bf16.mxu0 0
        %6018 = vmatpush1.bf16.msra.mxu0 %v5952
        %6019 = vmatprep.subr.bf16.mxu0 0
        %6020 = vmatpush1.bf16.msra.mxu0 %v5953
        %6021 = vmatprep.subr.bf16.mxu0 0
        %6022 = vmatpush1.bf16.msra.mxu0 %v5954
        %6023 = vmatprep.subr.bf16.mxu0 0
        %6024 = vmatpush1.bf16.msra.mxu0 %v5955
        %6025 = vmatprep.subr.bf16.mxu0 0
        %6026 = vmatpush1.bf16.msra.mxu0 %v5956
        %6027 = vmatprep.subr.bf16.mxu0 0
        %6028 = vmatpush1.bf16.msra.mxu0 %v5957
        %6029 = vmatprep.subr.bf16.mxu0 0
        %6030 = vmatpush1.bf16.msra.mxu0 %v5958
        %6031 = vmatprep.subr.bf16.mxu0 0
        %6032 = vmatpush1.bf16.msra.mxu0 %v5959
        %6033 = vmatprep.subr.bf16.mxu0 0
        %6034 = vmatpush1.bf16.msra.mxu0 %v5960
        %6035 = vmatprep.subr.bf16.mxu0 0
        %6036 = vmatpush1.bf16.msra.mxu0 %v5961
        %6037 = vmatprep.subr.bf16.mxu0 0
        %6038 = vmatpush1.bf16.msra.mxu0 %v5962
        %6039 = vmatprep.subr.bf16.mxu0 0
        %6040 = vmatpush1.bf16.msra.mxu0 %v5963
        %6041 = vmatprep.subr.bf16.mxu0 0
        %6042 = vmatpush1.bf16.msra.mxu0 %v5964
        %6043 = vmatprep.subr.bf16.mxu0 0
        %6044 = vmatpush1.bf16.msra.mxu0 %v5965
        %6045 = vmatprep.subr.bf16.mxu0 0
        %6046 = vmatpush1.bf16.msra.mxu0 %v5966
        %6047 = vmatprep.mubr.bf16.mxu0 %v5820
        %6048 = vmatmul.mubr.bf16.gmra.mrb[0].mxu0 %v5819
        %v6049 = vpop.f32.mrb[0].mxu0
        %v6050 = vadd.f32 0.0, %v6049
        %v6051 = vpop.f32.mrb[0].mxu0
        %v6052 = vpop.f32.mrb[0].mxu0
        %v6053 = vpop.f32.mrb[0].mxu0
        %6054 = vdwg.mxu0
        %6055 = vmatprep.subr.bf16.mxu0 0
        %6056 = vmatpush1.bf16.msra.mxu0 %v5967
        %6057 = vmatprep.subr.bf16.mxu0 0
        %6058 = vmatpush1.bf16.msra.mxu0 %v5968
        %6059 = vmatprep.subr.bf16.mxu0 0
        %6060 = vmatpush1.bf16.msra.mxu0 %v5969
        %6061 = vmatprep.subr.bf16.mxu0 0
        %6062 = vmatpush1.bf16.msra.mxu0 %v5970
        %6063 = vmatprep.subr.bf16.mxu0 0
        %6064 = vmatpush1.bf16.msra.mxu0 %v5971
        %6065 = vmatprep.subr.bf16.mxu0 0
        %6066 = vmatpush1.bf16.msra.mxu0 %v5972
        %6067 = vmatprep.subr.bf16.mxu0 0
        %6068 = vmatpush1.bf16.msra.mxu0 %v5973
        %6069 = vmatprep.subr.bf16.mxu0 0
        %6070 = vmatpush1.bf16.msra.mxu0 %v5974
        %6071 = vmatprep.subr.bf16.mxu0 0
        %6072 = vmatpush1.bf16.msra.mxu0 %v5975
        %6073 = vmatprep.subr.bf16.mxu0 0
        %6074 = vmatpush1.bf16.msra.mxu0 %v5976
        %6075 = vmatprep.subr.bf16.mxu0 0
        %6076 = vmatpush1.bf16.msra.mxu0 %v5977
        %6077 = vmatprep.subr.bf16.mxu0 0
        %6078 = vmatpush1.bf16.msra.mxu0 %v5978
        %6079 = vmatprep.subr.bf16.mxu0 0
        %6080 = vmatpush1.bf16.msra.mxu0 %v5979
        %6081 = vmatprep.subr.bf16.mxu0 0
        %6082 = vmatpush1.bf16.msra.mxu0 %v5980
        %6083 = vmatprep.subr.bf16.mxu0 0
        %6084 = vmatpush1.bf16.msra.mxu0 %v5981
        %6085 = vmatprep.subr.bf16.mxu0 0
        %6086 = vmatpush1.bf16.msra.mxu0 %v5982
        %6087 = vmatprep.mubr.bf16.mxu0 %v5822
        %6088 = vmatmul.mubr.bf16.gmra.mrb[0].mxu0 %v5821
        %v6089 = vpop.f32.mrb[0].mxu0
        %v6090 = vadd.f32 %v6050, %v6089
        %v6091 = vpop.f32.mrb[0].mxu0
        %v6092 = vpop.f32.mrb[0].mxu0
        %v6093 = vpop.f32.mrb[0].mxu0
        %6094 = vdwg.mxu0
        %v6095 = vadd.f32 %v5622, %v6090
        %s6096 = scalar_lea.vmem %s11, 1
        %v6097 = vld [vmem:[%s6096] sm:$0x1]
        %v6099 = vlaneseq
        %v6100 = vshrl.u32 %v6099, 7
        %v6101 = vsub.s32 0, %v6100
        %v6102 = vrot.slane %v6097, %v6101
        %v6104 = vadd.f32 %v6095, %v6102
        %v6105 = vadd.f32 %v4198, %v6104
        %s6106 = scalar_lea.vmem %s12, 1
        %v6107 = vld [vmem:[%s6106] sm:$0x1]
        %s6108 = scalar_lea.vmem %s13, 1
        %v6109 = vld [vmem:[%s6108] sm:$0x1]
        %v6110 = vsel %vm529, %v6105, 0.0
        %6111 = vadd.xlane.f32.xlu0 %v6110
        %v6112 = vpop.xlane.xlu0 %6111
        %v6113 = vmul.f32 %v6112, %v1368
        %v6114 = vsub.f32 %v6105, %v6113
        %v6115 = vmul.f32 %v6114, %v6114
        %v6116 = vsel %vm529, %v6115, 0.0
        %6117 = vadd.xlane.f32.xlu0 %v6116
        %v6118 = vpop.xlane.xlu0 %6117
        %v6119 = vmul.f32 %v6118, %v1368
        %v6120 = vadd.f32 %v6119, 1e-05
        %v6121 = vrsqrt.pop %v6120
        %v6122 = vmul.f32 %v6114, %v6121
        %v6124 = vlaneseq
        %v6125 = vshrl.u32 %v6124, 7
        %v6126 = vsub.s32 0, %v6125
        %v6127 = vrot.slane %v6107, %v6126
        %v6129 = vmul.f32 %v6122, %v6127
        %v6131 = vlaneseq
        %v6132 = vshrl.u32 %v6131, 7
        %v6133 = vsub.s32 0, %v6132
        %v6134 = vrot.slane %v6109, %v6133
        %v6136 = vadd.f32 %v6129, %v6134
        %v6137 = vsel %vm529, %v6136, 0.0
        %v6138 = vrot.slane %v6137, 4
        %v6139 = vadd.f32 %v6137, %v6138
        %v6140 = vrot.slane %v6139, 2
        %v6141 = vadd.f32 %v6139, %v6140
        %v6142 = vrot.slane %v6141, 1
        %v6143 = vadd.f32 %v6141, %v6142
        %v6144 = vrcp.pop 8.0
        %v6145 = vmul.f32 %v6143, %v6144
        %v6146 = vld [vmem:[%s14] sm:$0xff]
        %v6147 = vld [vmem:[%s14 + $0x8] sm:$0xff]
        %v6148 = vld [vmem:[%s15] sm:$0x1]
        %v6150 = vsel %vm529, %v6145, 0
        %6152 = vmatprep.subr.mxu0 0.0
        %6153 = vmatpush1.msra.mxu0 %v6146
        %6154 = vmatprep.subr.mxu0 0.0
        %6155 = vmatpush1.msra.mxu0 %v6147
        %6156 = vmatprep.subr.mxu0 0.0
        %6157 = vmatpush1.msra.mxu0 0.0
        %6158 = vmatprep.subr.mxu0 0.0
        %6159 = vmatpush1.msra.mxu0 0.0
        %6160 = vmatprep.subr.mxu0 0.0
        %6161 = vmatpush1.msra.mxu0 0.0
        %6162 = vmatprep.subr.mxu0 0.0
        %6163 = vmatpush1.msra.mxu0 0.0
        %6164 = vmatprep.subr.mxu0 0.0
        %6165 = vmatpush1.msra.mxu0 0.0
        %6166 = vmatprep.subr.mxu0 0.0
        %6167 = vmatpush1.msra.mxu0 0.0
        %6168 = vmatprep.subr.mxu0 0.0
        %6169 = vmatpush1.msra.mxu0 0.0
        %6170 = vmatprep.subr.mxu0 0.0
        %6171 = vmatpush1.msra.mxu0 0.0
        %6172 = vmatprep.subr.mxu0 0.0
        %6173 = vmatpush1.msra.mxu0 0.0
        %6174 = vmatprep.subr.mxu0 0.0
        %6175 = vmatpush1.msra.mxu0 0.0
        %6176 = vmatprep.subr.mxu0 0.0
        %6177 = vmatpush1.msra.mxu0 0.0
        %6178 = vmatprep.subr.mxu0 0.0
        %6179 = vmatpush1.msra.mxu0 0.0
        %6180 = vmatprep.subr.mxu0 0.0
        %6181 = vmatpush1.msra.mxu0 0.0
        %6182 = vmatprep.subr.mxu0 0.0
        %6183 = vmatpush1.msra.mxu0 0.0
        %6184 = vmatprep.subr.mxu0 0.0
        %6185 = vmatpush1.msra.mxu0 0.0
        %6186 = vmatprep.subr.mxu0 0.0
        %6187 = vmatpush1.msra.mxu0 0.0
        %6188 = vmatprep.subr.mxu0 0.0
        %6189 = vmatpush1.msra.mxu0 0.0
        %6190 = vmatprep.subr.mxu0 0.0
        %6191 = vmatpush1.msra.mxu0 0.0
        %6192 = vmatprep.subr.mxu0 0.0
        %6193 = vmatpush1.msra.mxu0 0.0
        %6194 = vmatprep.subr.mxu0 0.0
        %6195 = vmatpush1.msra.mxu0 0.0
        %6196 = vmatprep.subr.mxu0 0.0
        %6197 = vmatpush1.msra.mxu0 0.0
        %6198 = vmatprep.subr.mxu0 0.0
        %6199 = vmatpush1.msra.mxu0 0.0
        %6200 = vmatprep.subr.mxu0 0.0
        %6201 = vmatpush1.msra.mxu0 0.0
        %6202 = vmatprep.subr.mxu0 0.0
        %6203 = vmatpush1.msra.mxu0 0.0
        %6204 = vmatprep.subr.mxu0 0.0
        %6205 = vmatpush1.msra.mxu0 0.0
        %6206 = vmatprep.subr.mxu0 0.0
        %6207 = vmatpush1.msra.mxu0 0.0
        %6208 = vmatprep.subr.mxu0 0.0
        %6209 = vmatpush1.msra.mxu0 0.0
        %6210 = vmatprep.subr.mxu0 0.0
        %6211 = vmatpush1.msra.mxu0 0.0
        %6212 = vmatprep.subr.mxu0 0.0
        %6213 = vmatpush1.msra.mxu0 0.0
        %6214 = vmatprep.subr.mxu0 0.0
        %6215 = vmatpush1.msra.mxu0 0.0
        %6216 = vmatprep.mubr.f32.mxu0 0.0
        %6217 = vmatmul.mubr.f32.gmra.mrb[0].mxu0 %v6150
        %v6218 = vpop.f32.mrb[0].mxu0
        %v6219 = vadd.f32 %v6148, %v6218
        %v6220 = vpop.f32.mrb[0].mxu0
        %6221 = vdwg.mxu0
        %v6222 = vxor.u32 %v6219, 2147483648
        %v6223 = vmul.f32 %v6222, 1.442695
        %v6224 = vpow.pop %v6223
        %v6225 = vadd.f32 %v6224, 1.0
        %v6226 = vrcp.pop %v6225
        %v6227 = vmul.f32 1.0, %v6226
        %vm6228 = vcmask 8192
        %6229 = vst.msk [vmem:[%s511] sm:$0x1] %vm6228, %v6227
        %s6230 = sand.u32 %s379, 1
        %s6231 = scalar_lea.sflag [#allocation3], %s6230
        %s6232 = sand.u32 %s379, 1
        %s6233 = scalar_lea.vmem [#allocation2], %s6232
        // Predicated region
        $region85: #{transformer_classifier.1} parent=83 // pred_check
          %p6234 = pneg %p389
        $region86: #{transformer_classifier.1} parent=83 // pred_check_branch
          %6236 = sbr.rel (%p6234) target = $region88
        $region87: #{transformer_classifier.1} parent=83 // pred_region
          %s6238 = ssub.s32 16, 16
          %6239 = vsyncadd %s6231, %s6238
          %s6240 = smul.addr %s30, 16
          %s6241 = scalar_lea.hbm %s16, %s6240
          %s6243 = sshll.u32 %s6233, 4
          %s6244 = int_to_ptr.vmem [resolvable:$true] %s6243
          %6246 = dma.vmem_to_hbm [thread:$0]  %s6244, 16, %s6241, %s6231
        $region88: #{transformer_classifier.1} parent=83 // pred_fallthru
          _
      $region84: #{transformer_classifier.1} parent=5 // pred_fallthru
        _
      %p6247 = scmp.le.s32.totalorder 2, %s25
      // Predicated region
      $region89: #{transformer_classifier.1} parent=5 // pred_check
        %p6248 = pneg %p6247
      $region90: #{transformer_classifier.1} parent=5 // pred_check_branch
        %6250 = sbr.rel (%p6248) target = $region92
      $region91: #{transformer_classifier.1} parent=5 // pred_region
        %s6251 = ssub.s32 %s25, 2
        // Predicated region
        $region93: #{transformer_classifier.1} parent=91 // pred_check
          %p6252 = pneg %p395
        $region94: #{transformer_classifier.1} parent=91 // pred_check_branch
          %6254 = sbr.rel (%p6252) target = $region96
        $region95: #{transformer_classifier.1} parent=91 // pred_region
          %s6255 = sand.u32 %s380, 1
          %s6256 = scalar_lea.sflag [#allocation3], %s6255
          %s6257 = sand.u32 %s380, 1
          %s6258 = scalar_lea.vmem [#allocation2], %s6257
          %6259 = dma.done %s6256, 16
        $region96: #{transformer_classifier.1} parent=91 // pred_fallthru
          _
      $region92: #{transformer_classifier.1} parent=5 // pred_fallthru
        _
    $region6: #{transformer_classifier.1} parent=1 // loop_footer
      %s29 = sadd.s32 1, %s25
    $region7: #{transformer_classifier.1} parent=1 // loop_footer_branch
      %24 = sbr.rel target = $region3
    $region8: #{transformer_classifier.1} parent=1 // loop_exit
      _
    %6260 = vsyncpa [#allocation3], 1
    %s6261 = scalar_lea.sflag [#allocation3], 1
    %6262 = vsyncpa %s6261, 1

</llo_original>
